<compile_context>
chip_gen: v7x
topology: tpu7x:2x2x1
jax: 0.10.0
libtpu: 0.0.40
codegen_flags: <defaults>
</compile_context>

<pallas_src>
import math

import jax
import jax.numpy as jnp
from jax.experimental import pallas as pl
from jax.experimental.pallas import tpu as pltpu


# Fixed on-chip layout constants.
BP = 8            # batch padded to a full sublane group
HP = 128          # one full lane group per gate: [fwd 0:H | rev H:2H | zeros]
GW = 3 * HP       # fused gate width for (r, z, n)


# ----------------------------------------------------------------------------
# Kernel
# ----------------------------------------------------------------------------
def gru_stack_kernel(ids_ref,                              # SMEM (B, T) int32
                     embA_ref, embB_ref,                   # (V, GW) f32
                     whh0_ref, bhn0_ref,                   # (HP, GW) bf16 / (1, HP) f32
                     msame1_ref, mswap1_ref, bpre1_ref, whh1_ref, bhn1_ref,
                     msame2_ref, mswap2_ref, bpre2_ref, whh2_ref, bhn2_ref,
                     fcw_ref, fcb_ref,                     # (1, HP) / (1, 1) f32
                     out_ref,                              # (B, 1) f32
                     gi_ref, gj_ref, s_ref):               # VMEM scratch
    B, T = ids_ref.shape

    # ---- Layer 0 input projection == row gather of the pre-projected
    #      embedding tables (bias for ALL gates/directions folded into embA).
    #      gi row t*BP+b : forward-direction gate inputs for time t (+ bias)
    #      gj row t*BP+b : reverse-direction gate inputs for time t
    gi_ref[...] = jnp.zeros_like(gi_ref)
    gj_ref[...] = jnp.zeros_like(gj_ref)
    for t in range(T):
        for b in range(B):
            row = ids_ref[b, t]
            gi_ref[pl.ds(t * BP + b, 1), :] = embA_ref[pl.ds(row, 1), :]
            gj_ref[pl.ds(t * BP + b, 1), :] = embB_ref[pl.ds(row, 1), :]

    def run_layer(whh_ref, bhn_ref):
        """T fused (fwd+rev) GRU steps.  At loop step s the fused state holds the
        forward hidden for time s and the reverse hidden for time T-1-s; it is
        stored into s_ref row-block s.  gx = gi[s] + gj[T-1-s]."""
        whh = whh_ref[...]                                        # (HP, GW) bf16
        bhn = jnp.broadcast_to(bhn_ref[...], (BP, HP))            # hoisted out of loop
        h = jnp.zeros((BP, HP), jnp.float32)
        for s in range(T):                                        # static unroll
            gx = (gi_ref[pl.ds(s * BP, BP), :]
                  + gj_ref[pl.ds((T - 1 - s) * BP, BP), :])       # (BP, GW) f32
            gh = jnp.dot(h.astype(jnp.bfloat16), whh,
                         preferred_element_type=jnp.float32)       # one MXU pass
            rz = jax.nn.sigmoid(gx[:, :2 * HP] + gh[:, :2 * HP])   # lane-group aligned
            r, z = rz[:, :HP], rz[:, HP:]
            n = jnp.tanh(gx[:, 2 * HP:] + r * (gh[:, 2 * HP:] + bhn))
            h = (1.0 - z) * n + z * h
            s_ref[pl.ds(s * BP, BP), :] = h                        # aligned 128-lane store

    def project(msame_ref, mswap_ref, bpre_ref):
        """Hoisted input projection for the next layer: GI = S @ M_same + bias,
        GJ = S @ M_swap.  The reverse-time reordering of the previous layer's
        output is absorbed into reading GJ at time T-1-s inside run_layer."""
        s_bf = s_ref[...].astype(jnp.bfloat16)
        gi_ref[...] = (jnp.dot(s_bf, msame_ref[...],
                               preferred_element_type=jnp.float32) + bpre_ref[...])
        gj_ref[...] = jnp.dot(s_bf, mswap_ref[...],
                              preferred_element_type=jnp.float32)

    run_layer(whh0_ref, bhn0_ref)                   # nn.GRU layer 0 (input E)
    project(msame1_ref, mswap1_ref, bpre1_ref)
    run_layer(whh1_ref, bhn1_ref)                   # nn.GRU layer 1 (input 2H)
    project(msame2_ref, mswap2_ref, bpre2_ref)
    run_layer(whh2_ref, bhn2_ref)                   # GRU_1        (input 2H)

    # ---- mean over time + Linear(2H, 1).  The mean is order-independent, so
    #      the reverse half being stored time-reversed does not matter.
    sv = s_ref[...].reshape(T, BP, HP)              # tile-preserving split of sublanes
    m = jnp.sum(sv, axis=0) * (1.0 / T)             # (BP, HP): [mean h_f | mean h_r | 0]
    res = jnp.sum(m * fcw_ref[...], axis=-1, keepdims=True) + fcb_ref[...]
    out_ref[...] = res[:B, :]


# ----------------------------------------------------------------------------
# Wrapper — no XLA ops besides the pallas_call itself.
# ----------------------------------------------------------------------------
def rnn_forward(token_ids, params):
    B, T = token_ids.shape
    assert B <= BP
    vspec = pl.BlockSpec(memory_space=pltpu.MemorySpace.VMEM)
    sspec = pl.BlockSpec(memory_space=pltpu.MemorySpace.SMEM)
    args = [token_ids,
            params["embA"], params["embB"], params["whh0"], params["bhn0"],
            params["msame1"], params["mswap1"], params["bpre1"],
            params["whh1"], params["bhn1"],
            params["msame2"], params["mswap2"], params["bpre2"],
            params["whh2"], params["bhn2"],
            params["fc_w"], params["fc_b"]]
    return pl.pallas_call(
        gru_stack_kernel,
        out_shape=jax.ShapeDtypeStruct((B, 1), jnp.float32),
        in_specs=[sspec] + [vspec] * (len(args) - 1),
        out_specs=vspec,
        scratch_shapes=[
            pltpu.VMEM((T * BP, GW), jnp.float32),   # GI (fused gate inputs)
            pltpu.VMEM((T * BP, GW), jnp.float32),   # GJ (time-reversed contribution)
            pltpu.VMEM((T * BP, HP), jnp.float32),   # per-layer fused hidden states
        ],
    )(*args)


# ----------------------------------------------------------------------------
# Deterministic parameter init: raw PyTorch-layout GRU weights, then pre-fused
# and lane/sublane-padded into the kernel layout (all host-side, one-time).
# ----------------------------------------------------------------------------
def _uniform(key, shape, scale):
    return jax.random.uniform(key, shape, jnp.float32, -scale, scale)


def _raw_gru_dir(key, din, h):
    s = 1.0 / math.sqrt(h)
    k = jax.random.split(key, 4)
    return {
        "w_ih": _uniform(k[0], (3 * h, din), s),   # rows [r; z; n]
        "w_hh": _uniform(k[1], (3 * h, h), s),
        "b_ih": _uniform(k[2], (3 * h,), s),
        "b_hh": _uniform(k[3], (3 * h,), s),
    }


def _pack_whh(fwd, rev, h):
    """Block-diagonal fused recurrent weight (HP, GW):
       rows 0:h = h_f, rows h:2h = h_r; cols g*HP+[0:h]=fwd gate g, [h:2h]=rev."""
    w = jnp.zeros((HP, GW), jnp.float32)
    for g in range(3):
        w = w.at[0:h, g * HP:g * HP + h].set(fwd["w_hh"][g * h:(g + 1) * h, :].T)
        w = w.at[h:2 * h, g * HP + h:g * HP + 2 * h].set(rev["w_hh"][g * h:(g + 1) * h, :].T)
    return w.astype(jnp.bfloat16)


def _pack_bpre(fwd, rev, h):
    """bih (+ bhh for r,z only) in the fused gate layout."""
    b = jnp.zeros((1, GW), jnp.float32)
    for g in range(3):
        bf = fwd["b_ih"][g * h:(g + 1) * h]
        br = rev["b_ih"][g * h:(g + 1) * h]
        if g < 2:  # bhh of r/z folds in; bhh_n stays inside r*(...)
            bf = bf + fwd["b_hh"][g * h:(g + 1) * h]
            br = br + rev["b_hh"][g * h:(g + 1) * h]
        b = b.at[0, g * HP:g * HP + h].set(bf)
        b = b.at[0, g * HP + h:g * HP + 2 * h].set(br)
    return b


def _pack_bhn(fwd, rev, h):
    b = jnp.zeros((1, HP), jnp.float32)
    b = b.at[0, 0:h].set(fwd["b_hh"][2 * h:3 * h])
    b = b.at[0, h:2 * h].set(rev["b_hh"][2 * h:3 * h])
    return b


def _pack_l0_inproj(fwd, rev, emb, h, bpre0):
    """Fold the embedding table into the layer-0 input projection:
       embA[v] = emb[v] @ Wih_fwd^T placed in fwd lanes (+ full fused bias),
       embB[v] = emb[v] @ Wih_rev^T placed in rev lanes."""
    e = emb.shape[1]
    A = jnp.zeros((e, GW), jnp.float32)
    Bm = jnp.zeros((e, GW), jnp.float32)
    for g in range(3):
        A = A.at[:, g * HP:g * HP + h].set(fwd["w_ih"][g * h:(g + 1) * h, :].T)
        Bm = Bm.at[:, g * HP + h:g * HP + 2 * h].set(rev["w_ih"][g * h:(g + 1) * h, :].T)
    return emb @ A + bpre0, emb @ Bm


def _pack_mid_inproj(fwd, rev, h):
    """Row-split input projections for layers whose input is the previous
       bidirectional layer's fused state S (S[s] = [prev_fwd(s) | prev_rev(T-1-s)]):
       GI = S @ M_same carries same-time contributions, GJ = S @ M_swap carries
       the contributions that must be read time-reversed."""
    Ms = jnp.zeros((HP, GW), jnp.float32)
    Mw = jnp.zeros((HP, GW), jnp.float32)
    for g in range(3):
        wf = fwd["w_ih"][g * h:(g + 1) * h, :]          # (h, 2h)
        wr = rev["w_ih"][g * h:(g + 1) * h, :]
        Ms = Ms.at[0:h, g * HP:g * HP + h].set(wf[:, 0:h].T)
        Ms = Ms.at[h:2 * h, g * HP + h:g * HP + 2 * h].set(wr[:, h:2 * h].T)
        Mw = Mw.at[0:h, g * HP + h:g * HP + 2 * h].set(wr[:, 0:h].T)
        Mw = Mw.at[h:2 * h, g * HP:g * HP + h].set(wf[:, h:2 * h].T)
    return Ms.astype(jnp.bfloat16), Mw.astype(jnp.bfloat16)


def init_params(key, vocab_size, embed_size, hidden_size):
    h = hidden_size
    assert 2 * h <= HP, "hidden_size must satisfy 2*H <= 128 for this layout"
    keys = jax.random.split(key, 9)
    emb = jax.random.normal(keys[0], (vocab_size, embed_size), jnp.float32)
    l0f = _raw_gru_dir(keys[1], embed_size, h)
    l0r = _raw_gru_dir(keys[2], embed_size, h)
    l1f = _raw_gru_dir(keys[3], 2 * h, h)
    l1r = _raw_gru_dir(keys[4], 2 * h, h)
    l2f = _raw_gru_dir(keys[5], 2 * h, h)
    l2r = _raw_gru_dir(keys[6], 2 * h, h)
    s = 1.0 / math.sqrt(2 * h)
    fc_w = _uniform(keys[7], (1, 2 * h), s)
    fc_b = _uniform(keys[8], (1, 1), s)

    bpre0 = _pack_bpre(l0f, l0r, h)
    embA, embB = _pack_l0_inproj(l0f, l0r, emb, h, bpre0)
    msame1, mswap1 = _pack_mid_inproj(l1f, l1r, h)
    msame2, mswap2 = _pack_mid_inproj(l2f, l2r, h)
    fcw_pad = jnp.zeros((1, HP), jnp.float32).at[0, :2 * h].set(fc_w[0])
    return {
        "embA": embA, "embB": embB,
        "whh0": _pack_whh(l0f, l0r, h), "bhn0": _pack_bhn(l0f, l0r, h),
        "msame1": msame1, "mswap1": mswap1, "bpre1": _pack_bpre(l1f, l1r, h),
        "whh1": _pack_whh(l1f, l1r, h), "bhn1": _pack_bhn(l1f, l1r, h),
        "msame2": msame2, "mswap2": mswap2, "bpre2": _pack_bpre(l2f, l2r, h),
        "whh2": _pack_whh(l2f, l2r, h), "bhn2": _pack_bhn(l2f, l2r, h),
        "fc_w": fcw_pad, "fc_b": fc_b,
    }


# ----------------------------------------------------------------------------
if __name__ == "__main__":
    vocab_size, embed_size, hidden_size = 50, 16, 32
    batch, seq = 2, 8

    params = init_params(jax.random.PRNGKey(0), vocab_size, embed_size, hidden_size)
    token_ids = jax.random.randint(jax.random.PRNGKey(1), (batch, seq), 0, vocab_size,
                                   dtype=jnp.int32)

    out = jax.jit(rnn_forward)(token_ids, params)
    out = jax.block_until_ready(out)
    assert out.shape == (batch, 1) and out.dtype == jnp.float32
    print("KERNEL_OK")
</pallas_src>

<mosaic_0001>
module attributes {stable_mosaic.version = 11 : i64} {
  func.func @gru_stack_kernel(%arg0: memref<2x8xi32, #tpu.memory_space<smem>>, %arg1: memref<50x384xf32, #tpu.memory_space<vmem>>, %arg2: memref<50x384xf32, #tpu.memory_space<vmem>>, %arg3: memref<128x384xbf16, #tpu.memory_space<vmem>>, %arg4: memref<1x128xf32, #tpu.memory_space<vmem>>, %arg5: memref<128x384xbf16, #tpu.memory_space<vmem>>, %arg6: memref<128x384xbf16, #tpu.memory_space<vmem>>, %arg7: memref<1x384xf32, #tpu.memory_space<vmem>>, %arg8: memref<128x384xbf16, #tpu.memory_space<vmem>>, %arg9: memref<1x128xf32, #tpu.memory_space<vmem>>, %arg10: memref<128x384xbf16, #tpu.memory_space<vmem>>, %arg11: memref<128x384xbf16, #tpu.memory_space<vmem>>, %arg12: memref<1x384xf32, #tpu.memory_space<vmem>>, %arg13: memref<128x384xbf16, #tpu.memory_space<vmem>>, %arg14: memref<1x128xf32, #tpu.memory_space<vmem>>, %arg15: memref<1x128xf32, #tpu.memory_space<vmem>>, %arg16: memref<1x1xf32, #tpu.memory_space<vmem>>, %arg17: memref<2x1xf32, #tpu.memory_space<vmem>>, %arg18: memref<64x384xf32, #tpu.memory_space<vmem>>, %arg19: memref<64x384xf32, #tpu.memory_space<vmem>>, %arg20: memref<64x128xf32, #tpu.memory_space<vmem>>) attributes {dimension_semantics = [], scalar_prefetch = 0 : i64, scratch_operands = 3 : i64, tpu.core_type = #tpu.core_type<tc>} {
    %cst = arith.constant 0.000000e+00 : f32
    %0 = vector.broadcast %cst : f32 to vector<64x384xf32>
    %c0 = arith.constant 0 : index
    %c0_0 = arith.constant 0 : index
    %1 = vector.load %arg18[%c0, %c0_0] : memref<64x384xf32, #tpu.memory_space<vmem>>, vector<64x384xf32>
    tpu.vector_store %arg18[%c0, %c0_0], %0 {strides = array<i32>} : memref<64x384xf32, #tpu.memory_space<vmem>>, vector<64x384xf32>,
    %cst_1 = arith.constant 0.000000e+00 : f32
    %2 = vector.broadcast %cst_1 : f32 to vector<64x384xf32>
    %c0_2 = arith.constant 0 : index
    %c0_3 = arith.constant 0 : index
    %3 = vector.load %arg19[%c0_2, %c0_3] : memref<64x384xf32, #tpu.memory_space<vmem>>, vector<64x384xf32>
    tpu.vector_store %arg19[%c0_2, %c0_3], %2 {strides = array<i32>} : memref<64x384xf32, #tpu.memory_space<vmem>>, vector<64x384xf32>,
    %c0_4 = arith.constant 0 : index
    %c0_5 = arith.constant 0 : index
    %4 = memref.load %arg0[%c0_4, %c0_5] : memref<2x8xi32, #tpu.memory_space<smem>>
    %5 = arith.index_cast %4 : i32 to index
    %c0_6 = arith.constant 0 : index
    %6 = vector.load %arg1[%5, %c0_6] : memref<50x384xf32, #tpu.memory_space<vmem>>, vector<1x384xf32>
    %c0_7 = arith.constant 0 : index
    %c0_8 = arith.constant 0 : index
    %7 = vector.load %arg18[%c0_7, %c0_8] : memref<64x384xf32, #tpu.memory_space<vmem>>, vector<1x384xf32>
    tpu.vector_store %arg18[%c0_7, %c0_8], %6 {strides = array<i32>} : memref<64x384xf32, #tpu.memory_space<vmem>>, vector<1x384xf32>,
    %8 = arith.index_cast %4 : i32 to index
    %c0_9 = arith.constant 0 : index
    %9 = vector.load %arg2[%8, %c0_9] : memref<50x384xf32, #tpu.memory_space<vmem>>, vector<1x384xf32>
    %c0_10 = arith.constant 0 : index
    %c0_11 = arith.constant 0 : index
    %10 = vector.load %arg19[%c0_10, %c0_11] : memref<64x384xf32, #tpu.memory_space<vmem>>, vector<1x384xf32>
    tpu.vector_store %arg19[%c0_10, %c0_11], %9 {strides = array<i32>} : memref<64x384xf32, #tpu.memory_space<vmem>>, vector<1x384xf32>,
    %c1 = arith.constant 1 : index
    %c0_12 = arith.constant 0 : index
    %11 = memref.load %arg0[%c1, %c0_12] : memref<2x8xi32, #tpu.memory_space<smem>>
    %12 = arith.index_cast %11 : i32 to index
    %c0_13 = arith.constant 0 : index
    %13 = vector.load %arg1[%12, %c0_13] : memref<50x384xf32, #tpu.memory_space<vmem>>, vector<1x384xf32>
    %c1_14 = arith.constant 1 : index
    %c0_15 = arith.constant 0 : index
    %14 = vector.load %arg18[%c1_14, %c0_15] : memref<64x384xf32, #tpu.memory_space<vmem>>, vector<1x384xf32>
    tpu.vector_store %arg18[%c1_14, %c0_15], %13 {strides = array<i32>} : memref<64x384xf32, #tpu.memory_space<vmem>>, vector<1x384xf32>,
    %15 = arith.index_cast %11 : i32 to index
    %c0_16 = arith.constant 0 : index
    %16 = vector.load %arg2[%15, %c0_16] : memref<50x384xf32, #tpu.memory_space<vmem>>, vector<1x384xf32>
    %c1_17 = arith.constant 1 : index
    %c0_18 = arith.constant 0 : index
    %17 = vector.load %arg19[%c1_17, %c0_18] : memref<64x384xf32, #tpu.memory_space<vmem>>, vector<1x384xf32>
    tpu.vector_store %arg19[%c1_17, %c0_18], %16 {strides = array<i32>} : memref<64x384xf32, #tpu.memory_space<vmem>>, vector<1x384xf32>,
    %c0_19 = arith.constant 0 : index
    %c1_20 = arith.constant 1 : index
    %18 = memref.load %arg0[%c0_19, %c1_20] : memref<2x8xi32, #tpu.memory_space<smem>>
    %19 = arith.index_cast %18 : i32 to index
    %c0_21 = arith.constant 0 : index
    %20 = vector.load %arg1[%19, %c0_21] : memref<50x384xf32, #tpu.memory_space<vmem>>, vector<1x384xf32>
    %c8 = arith.constant 8 : index
    %c0_22 = arith.constant 0 : index
    %21 = vector.load %arg18[%c8, %c0_22] : memref<64x384xf32, #tpu.memory_space<vmem>>, vector<1x384xf32>
    tpu.vector_store %arg18[%c8, %c0_22], %20 {strides = array<i32>} : memref<64x384xf32, #tpu.memory_space<vmem>>, vector<1x384xf32>,
    %22 = arith.index_cast %18 : i32 to index
    %c0_23 = arith.constant 0 : index
    %23 = vector.load %arg2[%22, %c0_23] : memref<50x384xf32, #tpu.memory_space<vmem>>, vector<1x384xf32>
    %c8_24 = arith.constant 8 : index
    %c0_25 = arith.constant 0 : index
    %24 = vector.load %arg19[%c8_24, %c0_25] : memref<64x384xf32, #tpu.memory_space<vmem>>, vector<1x384xf32>
    tpu.vector_store %arg19[%c8_24, %c0_25], %23 {strides = array<i32>} : memref<64x384xf32, #tpu.memory_space<vmem>>, vector<1x384xf32>,
    %c1_26 = arith.constant 1 : index
    %c1_27 = arith.constant 1 : index
    %25 = memref.load %arg0[%c1_26, %c1_27] : memref<2x8xi32, #tpu.memory_space<smem>>
    %26 = arith.index_cast %25 : i32 to index
    %c0_28 = arith.constant 0 : index
    %27 = vector.load %arg1[%26, %c0_28] : memref<50x384xf32, #tpu.memory_space<vmem>>, vector<1x384xf32>
    %c9 = arith.constant 9 : index
    %c0_29 = arith.constant 0 : index
    %28 = vector.load %arg18[%c9, %c0_29] : memref<64x384xf32, #tpu.memory_space<vmem>>, vector<1x384xf32>
    tpu.vector_store %arg18[%c9, %c0_29], %27 {strides = array<i32>} : memref<64x384xf32, #tpu.memory_space<vmem>>, vector<1x384xf32>,
    %29 = arith.index_cast %25 : i32 to index
    %c0_30 = arith.constant 0 : index
    %30 = vector.load %arg2[%29, %c0_30] : memref<50x384xf32, #tpu.memory_space<vmem>>, vector<1x384xf32>
    %c9_31 = arith.constant 9 : index
    %c0_32 = arith.constant 0 : index
    %31 = vector.load %arg19[%c9_31, %c0_32] : memref<64x384xf32, #tpu.memory_space<vmem>>, vector<1x384xf32>
    tpu.vector_store %arg19[%c9_31, %c0_32], %30 {strides = array<i32>} : memref<64x384xf32, #tpu.memory_space<vmem>>, vector<1x384xf32>,
    %c0_33 = arith.constant 0 : index
    %c2 = arith.constant 2 : index
    %32 = memref.load %arg0[%c0_33, %c2] : memref<2x8xi32, #tpu.memory_space<smem>>
    %33 = arith.index_cast %32 : i32 to index
    %c0_34 = arith.constant 0 : index
    %34 = vector.load %arg1[%33, %c0_34] : memref<50x384xf32, #tpu.memory_space<vmem>>, vector<1x384xf32>
    %c16 = arith.constant 16 : index
    %c0_35 = arith.constant 0 : index
    %35 = vector.load %arg18[%c16, %c0_35] : memref<64x384xf32, #tpu.memory_space<vmem>>, vector<1x384xf32>
    tpu.vector_store %arg18[%c16, %c0_35], %34 {strides = array<i32>} : memref<64x384xf32, #tpu.memory_space<vmem>>, vector<1x384xf32>,
    %36 = arith.index_cast %32 : i32 to index
    %c0_36 = arith.constant 0 : index
    %37 = vector.load %arg2[%36, %c0_36] : memref<50x384xf32, #tpu.memory_space<vmem>>, vector<1x384xf32>
    %c16_37 = arith.constant 16 : index
    %c0_38 = arith.constant 0 : index
    %38 = vector.load %arg19[%c16_37, %c0_38] : memref<64x384xf32, #tpu.memory_space<vmem>>, vector<1x384xf32>
    tpu.vector_store %arg19[%c16_37, %c0_38], %37 {strides = array<i32>} : memref<64x384xf32, #tpu.memory_space<vmem>>, vector<1x384xf32>,
    %c1_39 = arith.constant 1 : index
    %c2_40 = arith.constant 2 : index
    %39 = memref.load %arg0[%c1_39, %c2_40] : memref<2x8xi32, #tpu.memory_space<smem>>
    %40 = arith.index_cast %39 : i32 to index
    %c0_41 = arith.constant 0 : index
    %41 = vector.load %arg1[%40, %c0_41] : memref<50x384xf32, #tpu.memory_space<vmem>>, vector<1x384xf32>
    %c17 = arith.constant 17 : index
    %c0_42 = arith.constant 0 : index
    %42 = vector.load %arg18[%c17, %c0_42] : memref<64x384xf32, #tpu.memory_space<vmem>>, vector<1x384xf32>
    tpu.vector_store %arg18[%c17, %c0_42], %41 {strides = array<i32>} : memref<64x384xf32, #tpu.memory_space<vmem>>, vector<1x384xf32>,
    %43 = arith.index_cast %39 : i32 to index
    %c0_43 = arith.constant 0 : index
    %44 = vector.load %arg2[%43, %c0_43] : memref<50x384xf32, #tpu.memory_space<vmem>>, vector<1x384xf32>
    %c17_44 = arith.constant 17 : index
    %c0_45 = arith.constant 0 : index
    %45 = vector.load %arg19[%c17_44, %c0_45] : memref<64x384xf32, #tpu.memory_space<vmem>>, vector<1x384xf32>
    tpu.vector_store %arg19[%c17_44, %c0_45], %44 {strides = array<i32>} : memref<64x384xf32, #tpu.memory_space<vmem>>, vector<1x384xf32>,
    %c0_46 = arith.constant 0 : index
    %c3 = arith.constant 3 : index
    %46 = memref.load %arg0[%c0_46, %c3] : memref<2x8xi32, #tpu.memory_space<smem>>
    %47 = arith.index_cast %46 : i32 to index
    %c0_47 = arith.constant 0 : index
    %48 = vector.load %arg1[%47, %c0_47] : memref<50x384xf32, #tpu.memory_space<vmem>>, vector<1x384xf32>
    %c24 = arith.constant 24 : index
    %c0_48 = arith.constant 0 : index
    %49 = vector.load %arg18[%c24, %c0_48] : memref<64x384xf32, #tpu.memory_space<vmem>>, vector<1x384xf32>
    tpu.vector_store %arg18[%c24, %c0_48], %48 {strides = array<i32>} : memref<64x384xf32, #tpu.memory_space<vmem>>, vector<1x384xf32>,
    %50 = arith.index_cast %46 : i32 to index
    %c0_49 = arith.constant 0 : index
    %51 = vector.load %arg2[%50, %c0_49] : memref<50x384xf32, #tpu.memory_space<vmem>>, vector<1x384xf32>
    %c24_50 = arith.constant 24 : index
    %c0_51 = arith.constant 0 : index
    %52 = vector.load %arg19[%c24_50, %c0_51] : memref<64x384xf32, #tpu.memory_space<vmem>>, vector<1x384xf32>
    tpu.vector_store %arg19[%c24_50, %c0_51], %51 {strides = array<i32>} : memref<64x384xf32, #tpu.memory_space<vmem>>, vector<1x384xf32>,
    %c1_52 = arith.constant 1 : index
    %c3_53 = arith.constant 3 : index
    %53 = memref.load %arg0[%c1_52, %c3_53] : memref<2x8xi32, #tpu.memory_space<smem>>
    %54 = arith.index_cast %53 : i32 to index
    %c0_54 = arith.constant 0 : index
    %55 = vector.load %arg1[%54, %c0_54] : memref<50x384xf32, #tpu.memory_space<vmem>>, vector<1x384xf32>
    %c25 = arith.constant 25 : index
    %c0_55 = arith.constant 0 : index
    %56 = vector.load %arg18[%c25, %c0_55] : memref<64x384xf32, #tpu.memory_space<vmem>>, vector<1x384xf32>
    tpu.vector_store %arg18[%c25, %c0_55], %55 {strides = array<i32>} : memref<64x384xf32, #tpu.memory_space<vmem>>, vector<1x384xf32>,
    %57 = arith.index_cast %53 : i32 to index
    %c0_56 = arith.constant 0 : index
    %58 = vector.load %arg2[%57, %c0_56] : memref<50x384xf32, #tpu.memory_space<vmem>>, vector<1x384xf32>
    %c25_57 = arith.constant 25 : index
    %c0_58 = arith.constant 0 : index
    %59 = vector.load %arg19[%c25_57, %c0_58] : memref<64x384xf32, #tpu.memory_space<vmem>>, vector<1x384xf32>
    tpu.vector_store %arg19[%c25_57, %c0_58], %58 {strides = array<i32>} : memref<64x384xf32, #tpu.memory_space<vmem>>, vector<1x384xf32>,
    %c0_59 = arith.constant 0 : index
    %c4 = arith.constant 4 : index
    %60 = memref.load %arg0[%c0_59, %c4] : memref<2x8xi32, #tpu.memory_space<smem>>
    %61 = arith.index_cast %60 : i32 to index
    %c0_60 = arith.constant 0 : index
    %62 = vector.load %arg1[%61, %c0_60] : memref<50x384xf32, #tpu.memory_space<vmem>>, vector<1x384xf32>
    %c32 = arith.constant 32 : index
    %c0_61 = arith.constant 0 : index
    %63 = vector.load %arg18[%c32, %c0_61] : memref<64x384xf32, #tpu.memory_space<vmem>>, vector<1x384xf32>
    tpu.vector_store %arg18[%c32, %c0_61], %62 {strides = array<i32>} : memref<64x384xf32, #tpu.memory_space<vmem>>, vector<1x384xf32>,
    %64 = arith.index_cast %60 : i32 to index
    %c0_62 = arith.constant 0 : index
    %65 = vector.load %arg2[%64, %c0_62] : memref<50x384xf32, #tpu.memory_space<vmem>>, vector<1x384xf32>
    %c32_63 = arith.constant 32 : index
    %c0_64 = arith.constant 0 : index
    %66 = vector.load %arg19[%c32_63, %c0_64] : memref<64x384xf32, #tpu.memory_space<vmem>>, vector<1x384xf32>
    tpu.vector_store %arg19[%c32_63, %c0_64], %65 {strides = array<i32>} : memref<64x384xf32, #tpu.memory_space<vmem>>, vector<1x384xf32>,
    %c1_65 = arith.constant 1 : index
    %c4_66 = arith.constant 4 : index
    %67 = memref.load %arg0[%c1_65, %c4_66] : memref<2x8xi32, #tpu.memory_space<smem>>
    %68 = arith.index_cast %67 : i32 to index
    %c0_67 = arith.constant 0 : index
    %69 = vector.load %arg1[%68, %c0_67] : memref<50x384xf32, #tpu.memory_space<vmem>>, vector<1x384xf32>
    %c33 = arith.constant 33 : index
    %c0_68 = arith.constant 0 : index
    %70 = vector.load %arg18[%c33, %c0_68] : memref<64x384xf32, #tpu.memory_space<vmem>>, vector<1x384xf32>
    tpu.vector_store %arg18[%c33, %c0_68], %69 {strides = array<i32>} : memref<64x384xf32, #tpu.memory_space<vmem>>, vector<1x384xf32>,
    %71 = arith.index_cast %67 : i32 to index
    %c0_69 = arith.constant 0 : index
    %72 = vector.load %arg2[%71, %c0_69] : memref<50x384xf32, #tpu.memory_space<vmem>>, vector<1x384xf32>
    %c33_70 = arith.constant 33 : index
    %c0_71 = arith.constant 0 : index
    %73 = vector.load %arg19[%c33_70, %c0_71] : memref<64x384xf32, #tpu.memory_space<vmem>>, vector<1x384xf32>
    tpu.vector_store %arg19[%c33_70, %c0_71], %72 {strides = array<i32>} : memref<64x384xf32, #tpu.memory_space<vmem>>, vector<1x384xf32>,
    %c0_72 = arith.constant 0 : index
    %c5 = arith.constant 5 : index
    %74 = memref.load %arg0[%c0_72, %c5] : memref<2x8xi32, #tpu.memory_space<smem>>
    %75 = arith.index_cast %74 : i32 to index
    %c0_73 = arith.constant 0 : index
    %76 = vector.load %arg1[%75, %c0_73] : memref<50x384xf32, #tpu.memory_space<vmem>>, vector<1x384xf32>
    %c40 = arith.constant 40 : index
    %c0_74 = arith.constant 0 : index
    %77 = vector.load %arg18[%c40, %c0_74] : memref<64x384xf32, #tpu.memory_space<vmem>>, vector<1x384xf32>
    tpu.vector_store %arg18[%c40, %c0_74], %76 {strides = array<i32>} : memref<64x384xf32, #tpu.memory_space<vmem>>, vector<1x384xf32>,
    %78 = arith.index_cast %74 : i32 to index
    %c0_75 = arith.constant 0 : index
    %79 = vector.load %arg2[%78, %c0_75] : memref<50x384xf32, #tpu.memory_space<vmem>>, vector<1x384xf32>
    %c40_76 = arith.constant 40 : index
    %c0_77 = arith.constant 0 : index
    %80 = vector.load %arg19[%c40_76, %c0_77] : memref<64x384xf32, #tpu.memory_space<vmem>>, vector<1x384xf32>
    tpu.vector_store %arg19[%c40_76, %c0_77], %79 {strides = array<i32>} : memref<64x384xf32, #tpu.memory_space<vmem>>, vector<1x384xf32>,
    %c1_78 = arith.constant 1 : index
    %c5_79 = arith.constant 5 : index
    %81 = memref.load %arg0[%c1_78, %c5_79] : memref<2x8xi32, #tpu.memory_space<smem>>
    %82 = arith.index_cast %81 : i32 to index
    %c0_80 = arith.constant 0 : index
    %83 = vector.load %arg1[%82, %c0_80] : memref<50x384xf32, #tpu.memory_space<vmem>>, vector<1x384xf32>
    %c41 = arith.constant 41 : index
    %c0_81 = arith.constant 0 : index
    %84 = vector.load %arg18[%c41, %c0_81] : memref<64x384xf32, #tpu.memory_space<vmem>>, vector<1x384xf32>
    tpu.vector_store %arg18[%c41, %c0_81], %83 {strides = array<i32>} : memref<64x384xf32, #tpu.memory_space<vmem>>, vector<1x384xf32>,
    %85 = arith.index_cast %81 : i32 to index
    %c0_82 = arith.constant 0 : index
    %86 = vector.load %arg2[%85, %c0_82] : memref<50x384xf32, #tpu.memory_space<vmem>>, vector<1x384xf32>
    %c41_83 = arith.constant 41 : index
    %c0_84 = arith.constant 0 : index
    %87 = vector.load %arg19[%c41_83, %c0_84] : memref<64x384xf32, #tpu.memory_space<vmem>>, vector<1x384xf32>
    tpu.vector_store %arg19[%c41_83, %c0_84], %86 {strides = array<i32>} : memref<64x384xf32, #tpu.memory_space<vmem>>, vector<1x384xf32>,
    %c0_85 = arith.constant 0 : index
    %c6 = arith.constant 6 : index
    %88 = memref.load %arg0[%c0_85, %c6] : memref<2x8xi32, #tpu.memory_space<smem>>
    %89 = arith.index_cast %88 : i32 to index
    %c0_86 = arith.constant 0 : index
    %90 = vector.load %arg1[%89, %c0_86] : memref<50x384xf32, #tpu.memory_space<vmem>>, vector<1x384xf32>
    %c48 = arith.constant 48 : index
    %c0_87 = arith.constant 0 : index
    %91 = vector.load %arg18[%c48, %c0_87] : memref<64x384xf32, #tpu.memory_space<vmem>>, vector<1x384xf32>
    tpu.vector_store %arg18[%c48, %c0_87], %90 {strides = array<i32>} : memref<64x384xf32, #tpu.memory_space<vmem>>, vector<1x384xf32>,
    %92 = arith.index_cast %88 : i32 to index
    %c0_88 = arith.constant 0 : index
    %93 = vector.load %arg2[%92, %c0_88] : memref<50x384xf32, #tpu.memory_space<vmem>>, vector<1x384xf32>
    %c48_89 = arith.constant 48 : index
    %c0_90 = arith.constant 0 : index
    %94 = vector.load %arg19[%c48_89, %c0_90] : memref<64x384xf32, #tpu.memory_space<vmem>>, vector<1x384xf32>
    tpu.vector_store %arg19[%c48_89, %c0_90], %93 {strides = array<i32>} : memref<64x384xf32, #tpu.memory_space<vmem>>, vector<1x384xf32>,
    %c1_91 = arith.constant 1 : index
    %c6_92 = arith.constant 6 : index
    %95 = memref.load %arg0[%c1_91, %c6_92] : memref<2x8xi32, #tpu.memory_space<smem>>
    %96 = arith.index_cast %95 : i32 to index
    %c0_93 = arith.constant 0 : index
    %97 = vector.load %arg1[%96, %c0_93] : memref<50x384xf32, #tpu.memory_space<vmem>>, vector<1x384xf32>
    %c49 = arith.constant 49 : index
    %c0_94 = arith.constant 0 : index
    %98 = vector.load %arg18[%c49, %c0_94] : memref<64x384xf32, #tpu.memory_space<vmem>>, vector<1x384xf32>
    tpu.vector_store %arg18[%c49, %c0_94], %97 {strides = array<i32>} : memref<64x384xf32, #tpu.memory_space<vmem>>, vector<1x384xf32>,
    %99 = arith.index_cast %95 : i32 to index
    %c0_95 = arith.constant 0 : index
    %100 = vector.load %arg2[%99, %c0_95] : memref<50x384xf32, #tpu.memory_space<vmem>>, vector<1x384xf32>
    %c49_96 = arith.constant 49 : index
    %c0_97 = arith.constant 0 : index
    %101 = vector.load %arg19[%c49_96, %c0_97] : memref<64x384xf32, #tpu.memory_space<vmem>>, vector<1x384xf32>
    tpu.vector_store %arg19[%c49_96, %c0_97], %100 {strides = array<i32>} : memref<64x384xf32, #tpu.memory_space<vmem>>, vector<1x384xf32>,
    %c0_98 = arith.constant 0 : index
    %c7 = arith.constant 7 : index
    %102 = memref.load %arg0[%c0_98, %c7] : memref<2x8xi32, #tpu.memory_space<smem>>
    %103 = arith.index_cast %102 : i32 to index
    %c0_99 = arith.constant 0 : index
    %104 = vector.load %arg1[%103, %c0_99] : memref<50x384xf32, #tpu.memory_space<vmem>>, vector<1x384xf32>
    %c56 = arith.constant 56 : index
    %c0_100 = arith.constant 0 : index
    %105 = vector.load %arg18[%c56, %c0_100] : memref<64x384xf32, #tpu.memory_space<vmem>>, vector<1x384xf32>
    tpu.vector_store %arg18[%c56, %c0_100], %104 {strides = array<i32>} : memref<64x384xf32, #tpu.memory_space<vmem>>, vector<1x384xf32>,
    %106 = arith.index_cast %102 : i32 to index
    %c0_101 = arith.constant 0 : index
    %107 = vector.load %arg2[%106, %c0_101] : memref<50x384xf32, #tpu.memory_space<vmem>>, vector<1x384xf32>
    %c56_102 = arith.constant 56 : index
    %c0_103 = arith.constant 0 : index
    %108 = vector.load %arg19[%c56_102, %c0_103] : memref<64x384xf32, #tpu.memory_space<vmem>>, vector<1x384xf32>
    tpu.vector_store %arg19[%c56_102, %c0_103], %107 {strides = array<i32>} : memref<64x384xf32, #tpu.memory_space<vmem>>, vector<1x384xf32>,
    %c1_104 = arith.constant 1 : index
    %c7_105 = arith.constant 7 : index
    %109 = memref.load %arg0[%c1_104, %c7_105] : memref<2x8xi32, #tpu.memory_space<smem>>
    %110 = arith.index_cast %109 : i32 to index
    %c0_106 = arith.constant 0 : index
    %111 = vector.load %arg1[%110, %c0_106] : memref<50x384xf32, #tpu.memory_space<vmem>>, vector<1x384xf32>
    %c57 = arith.constant 57 : index
    %c0_107 = arith.constant 0 : index
    %112 = vector.load %arg18[%c57, %c0_107] : memref<64x384xf32, #tpu.memory_space<vmem>>, vector<1x384xf32>
    tpu.vector_store %arg18[%c57, %c0_107], %111 {strides = array<i32>} : memref<64x384xf32, #tpu.memory_space<vmem>>, vector<1x384xf32>,
    %113 = arith.index_cast %109 : i32 to index
    %c0_108 = arith.constant 0 : index
    %114 = vector.load %arg2[%113, %c0_108] : memref<50x384xf32, #tpu.memory_space<vmem>>, vector<1x384xf32>
    %c57_109 = arith.constant 57 : index
    %c0_110 = arith.constant 0 : index
    %115 = vector.load %arg19[%c57_109, %c0_110] : memref<64x384xf32, #tpu.memory_space<vmem>>, vector<1x384xf32>
    tpu.vector_store %arg19[%c57_109, %c0_110], %114 {strides = array<i32>} : memref<64x384xf32, #tpu.memory_space<vmem>>, vector<1x384xf32>,
    %c0_111 = arith.constant 0 : index
    %c0_112 = arith.constant 0 : index
    %116 = vector.load %arg3[%c0_111, %c0_112] : memref<128x384xbf16, #tpu.memory_space<vmem>>, vector<128x384xbf16>
    %c0_113 = arith.constant 0 : index
    %c0_114 = arith.constant 0 : index
    %117 = vector.load %arg4[%c0_113, %c0_114] : memref<1x128xf32, #tpu.memory_space<vmem>>, vector<1x128xf32>
    %118 = vector.shape_cast %117 : vector<1x128xf32> to vector<1x128xf32>
    %119 = vector.broadcast %118 : vector<1x128xf32> to vector<8x128xf32>
    %cst_115 = arith.constant 0.000000e+00 : f32
    %120 = vector.broadcast %cst_115 : f32 to vector<8x128xf32>
    %c0_116 = arith.constant 0 : index
    %c0_117 = arith.constant 0 : index
    %121 = vector.load %arg18[%c0_116, %c0_117] : memref<64x384xf32, #tpu.memory_space<vmem>>, vector<8x384xf32>
    %c56_118 = arith.constant 56 : index
    %c0_119 = arith.constant 0 : index
    %122 = vector.load %arg19[%c56_118, %c0_119] : memref<64x384xf32, #tpu.memory_space<vmem>>, vector<8x384xf32>
    %123 = arith.addf %121, %122 : vector<8x384xf32>
    %124 = arith.truncf %120 : vector<8x128xf32> to vector<8x128xbf16>
    %cst_120 = arith.constant dense<0.000000e+00> : vector<8x384xf32>
    %125 = tpu.matmul %124, %116, %cst_120 {dimension_numbers = #tpu.dot_dimension_numbers<[1], [0], [0], [1], [0, 0, 1, 1], [], []>} : vector<8x128xbf16>, vector<128x384xbf16>, vector<8x384xf32> -> vector<8x384xf32>
    %126 = vector.extract_strided_slice %123 {offsets = [0, 0], sizes = [8, 256], strides = [1, 1]} : vector<8x384xf32> to vector<8x256xf32>
    %127 = vector.extract_strided_slice %125 {offsets = [0, 0], sizes = [8, 256], strides = [1, 1]} : vector<8x384xf32> to vector<8x256xf32>
    %128 = arith.addf %126, %127 : vector<8x256xf32>
    %129 = arith.negf %128 : vector<8x256xf32>
    %130 = math.exp %129 : vector<8x256xf32>
    %cst_121 = arith.constant 1.000000e+00 : f32
    %131 = vector.broadcast %cst_121 : f32 to vector<8x256xf32>
    %132 = arith.addf %131, %130 : vector<8x256xf32>
    %133 = arith.divf %131, %132 : vector<8x256xf32>
    %134 = vector.extract_strided_slice %133 {offsets = [0, 0], sizes = [8, 128], strides = [1, 1]} : vector<8x256xf32> to vector<8x128xf32>
    %135 = vector.extract_strided_slice %133 {offsets = [0, 128], sizes = [8, 128], strides = [1, 1]} : vector<8x256xf32> to vector<8x128xf32>
    %136 = vector.extract_strided_slice %123 {offsets = [0, 256], sizes = [8, 128], strides = [1, 1]} : vector<8x384xf32> to vector<8x128xf32>
    %137 = vector.extract_strided_slice %125 {offsets = [0, 256], sizes = [8, 128], strides = [1, 1]} : vector<8x384xf32> to vector<8x128xf32>
    %138 = arith.addf %137, %119 : vector<8x128xf32>
    %139 = arith.mulf %134, %138 : vector<8x128xf32>
    %140 = arith.addf %136, %139 : vector<8x128xf32>
    %141 = math.tanh %140 : vector<8x128xf32>
    %cst_122 = arith.constant 1.000000e+00 : f32
    %142 = vector.broadcast %cst_122 : f32 to vector<8x128xf32>
    %143 = arith.subf %142, %135 : vector<8x128xf32>
    %144 = arith.mulf %143, %141 : vector<8x128xf32>
    %145 = arith.mulf %135, %120 : vector<8x128xf32>
    %146 = arith.addf %144, %145 : vector<8x128xf32>
    %c0_123 = arith.constant 0 : index
    %c0_124 = arith.constant 0 : index
    %147 = vector.load %arg20[%c0_123, %c0_124] : memref<64x128xf32, #tpu.memory_space<vmem>>, vector<8x128xf32>
    tpu.vector_store %arg20[%c0_123, %c0_124], %146 {strides = array<i32>} : memref<64x128xf32, #tpu.memory_space<vmem>>, vector<8x128xf32>,
    %c8_125 = arith.constant 8 : index
    %c0_126 = arith.constant 0 : index
    %148 = vector.load %arg18[%c8_125, %c0_126] : memref<64x384xf32, #tpu.memory_space<vmem>>, vector<8x384xf32>
    %c48_127 = arith.constant 48 : index
    %c0_128 = arith.constant 0 : index
    %149 = vector.load %arg19[%c48_127, %c0_128] : memref<64x384xf32, #tpu.memory_space<vmem>>, vector<8x384xf32>
    %150 = arith.addf %148, %149 : vector<8x384xf32>
    %151 = arith.truncf %146 : vector<8x128xf32> to vector<8x128xbf16>
    %cst_129 = arith.constant dense<0.000000e+00> : vector<8x384xf32>
    %152 = tpu.matmul %151, %116, %cst_129 {dimension_numbers = #tpu.dot_dimension_numbers<[1], [0], [0], [1], [0, 0, 1, 1], [], []>} : vector<8x128xbf16>, vector<128x384xbf16>, vector<8x384xf32> -> vector<8x384xf32>
    %153 = vector.extract_strided_slice %150 {offsets = [0, 0], sizes = [8, 256], strides = [1, 1]} : vector<8x384xf32> to vector<8x256xf32>
    %154 = vector.extract_strided_slice %152 {offsets = [0, 0], sizes = [8, 256], strides = [1, 1]} : vector<8x384xf32> to vector<8x256xf32>
    %155 = arith.addf %153, %154 : vector<8x256xf32>
    %156 = arith.negf %155 : vector<8x256xf32>
    %157 = math.exp %156 : vector<8x256xf32>
    %cst_130 = arith.constant 1.000000e+00 : f32
    %158 = vector.broadcast %cst_130 : f32 to vector<8x256xf32>
    %159 = arith.addf %158, %157 : vector<8x256xf32>
    %160 = arith.divf %158, %159 : vector<8x256xf32>
    %161 = vector.extract_strided_slice %160 {offsets = [0, 0], sizes = [8, 128], strides = [1, 1]} : vector<8x256xf32> to vector<8x128xf32>
    %162 = vector.extract_strided_slice %160 {offsets = [0, 128], sizes = [8, 128], strides = [1, 1]} : vector<8x256xf32> to vector<8x128xf32>
    %163 = vector.extract_strided_slice %150 {offsets = [0, 256], sizes = [8, 128], strides = [1, 1]} : vector<8x384xf32> to vector<8x128xf32>
    %164 = vector.extract_strided_slice %152 {offsets = [0, 256], sizes = [8, 128], strides = [1, 1]} : vector<8x384xf32> to vector<8x128xf32>
    %165 = arith.addf %164, %119 : vector<8x128xf32>
    %166 = arith.mulf %161, %165 : vector<8x128xf32>
    %167 = arith.addf %163, %166 : vector<8x128xf32>
    %168 = math.tanh %167 : vector<8x128xf32>
    %cst_131 = arith.constant 1.000000e+00 : f32
    %169 = vector.broadcast %cst_131 : f32 to vector<8x128xf32>
    %170 = arith.subf %169, %162 : vector<8x128xf32>
    %171 = arith.mulf %170, %168 : vector<8x128xf32>
    %172 = arith.mulf %162, %146 : vector<8x128xf32>
    %173 = arith.addf %171, %172 : vector<8x128xf32>
    %c8_132 = arith.constant 8 : index
    %c0_133 = arith.constant 0 : index
    %174 = vector.load %arg20[%c8_132, %c0_133] : memref<64x128xf32, #tpu.memory_space<vmem>>, vector<8x128xf32>
    tpu.vector_store %arg20[%c8_132, %c0_133], %173 {strides = array<i32>} : memref<64x128xf32, #tpu.memory_space<vmem>>, vector<8x128xf32>,
    %c16_134 = arith.constant 16 : index
    %c0_135 = arith.constant 0 : index
    %175 = vector.load %arg18[%c16_134, %c0_135] : memref<64x384xf32, #tpu.memory_space<vmem>>, vector<8x384xf32>
    %c40_136 = arith.constant 40 : index
    %c0_137 = arith.constant 0 : index
    %176 = vector.load %arg19[%c40_136, %c0_137] : memref<64x384xf32, #tpu.memory_space<vmem>>, vector<8x384xf32>
    %177 = arith.addf %175, %176 : vector<8x384xf32>
    %178 = arith.truncf %173 : vector<8x128xf32> to vector<8x128xbf16>
    %cst_138 = arith.constant dense<0.000000e+00> : vector<8x384xf32>
    %179 = tpu.matmul %178, %116, %cst_138 {dimension_numbers = #tpu.dot_dimension_numbers<[1], [0], [0], [1], [0, 0, 1, 1], [], []>} : vector<8x128xbf16>, vector<128x384xbf16>, vector<8x384xf32> -> vector<8x384xf32>
    %180 = vector.extract_strided_slice %177 {offsets = [0, 0], sizes = [8, 256], strides = [1, 1]} : vector<8x384xf32> to vector<8x256xf32>
    %181 = vector.extract_strided_slice %179 {offsets = [0, 0], sizes = [8, 256], strides = [1, 1]} : vector<8x384xf32> to vector<8x256xf32>
    %182 = arith.addf %180, %181 : vector<8x256xf32>
    %183 = arith.negf %182 : vector<8x256xf32>
    %184 = math.exp %183 : vector<8x256xf32>
    %cst_139 = arith.constant 1.000000e+00 : f32
    %185 = vector.broadcast %cst_139 : f32 to vector<8x256xf32>
    %186 = arith.addf %185, %184 : vector<8x256xf32>
    %187 = arith.divf %185, %186 : vector<8x256xf32>
    %188 = vector.extract_strided_slice %187 {offsets = [0, 0], sizes = [8, 128], strides = [1, 1]} : vector<8x256xf32> to vector<8x128xf32>
    %189 = vector.extract_strided_slice %187 {offsets = [0, 128], sizes = [8, 128], strides = [1, 1]} : vector<8x256xf32> to vector<8x128xf32>
    %190 = vector.extract_strided_slice %177 {offsets = [0, 256], sizes = [8, 128], strides = [1, 1]} : vector<8x384xf32> to vector<8x128xf32>
    %191 = vector.extract_strided_slice %179 {offsets = [0, 256], sizes = [8, 128], strides = [1, 1]} : vector<8x384xf32> to vector<8x128xf32>
    %192 = arith.addf %191, %119 : vector<8x128xf32>
    %193 = arith.mulf %188, %192 : vector<8x128xf32>
    %194 = arith.addf %190, %193 : vector<8x128xf32>
    %195 = math.tanh %194 : vector<8x128xf32>
    %cst_140 = arith.constant 1.000000e+00 : f32
    %196 = vector.broadcast %cst_140 : f32 to vector<8x128xf32>
    %197 = arith.subf %196, %189 : vector<8x128xf32>
    %198 = arith.mulf %197, %195 : vector<8x128xf32>
    %199 = arith.mulf %189, %173 : vector<8x128xf32>
    %200 = arith.addf %198, %199 : vector<8x128xf32>
    %c16_141 = arith.constant 16 : index
    %c0_142 = arith.constant 0 : index
    %201 = vector.load %arg20[%c16_141, %c0_142] : memref<64x128xf32, #tpu.memory_space<vmem>>, vector<8x128xf32>
    tpu.vector_store %arg20[%c16_141, %c0_142], %200 {strides = array<i32>} : memref<64x128xf32, #tpu.memory_space<vmem>>, vector<8x128xf32>,
    %c24_143 = arith.constant 24 : index
    %c0_144 = arith.constant 0 : index
    %202 = vector.load %arg18[%c24_143, %c0_144] : memref<64x384xf32, #tpu.memory_space<vmem>>, vector<8x384xf32>
    %c32_145 = arith.constant 32 : index
    %c0_146 = arith.constant 0 : index
    %203 = vector.load %arg19[%c32_145, %c0_146] : memref<64x384xf32, #tpu.memory_space<vmem>>, vector<8x384xf32>
    %204 = arith.addf %202, %203 : vector<8x384xf32>
    %205 = arith.truncf %200 : vector<8x128xf32> to vector<8x128xbf16>
    %cst_147 = arith.constant dense<0.000000e+00> : vector<8x384xf32>
    %206 = tpu.matmul %205, %116, %cst_147 {dimension_numbers = #tpu.dot_dimension_numbers<[1], [0], [0], [1], [0, 0, 1, 1], [], []>} : vector<8x128xbf16>, vector<128x384xbf16>, vector<8x384xf32> -> vector<8x384xf32>
    %207 = vector.extract_strided_slice %204 {offsets = [0, 0], sizes = [8, 256], strides = [1, 1]} : vector<8x384xf32> to vector<8x256xf32>
    %208 = vector.extract_strided_slice %206 {offsets = [0, 0], sizes = [8, 256], strides = [1, 1]} : vector<8x384xf32> to vector<8x256xf32>
    %209 = arith.addf %207, %208 : vector<8x256xf32>
    %210 = arith.negf %209 : vector<8x256xf32>
    %211 = math.exp %210 : vector<8x256xf32>
    %cst_148 = arith.constant 1.000000e+00 : f32
    %212 = vector.broadcast %cst_148 : f32 to vector<8x256xf32>
    %213 = arith.addf %212, %211 : vector<8x256xf32>
    %214 = arith.divf %212, %213 : vector<8x256xf32>
    %215 = vector.extract_strided_slice %214 {offsets = [0, 0], sizes = [8, 128], strides = [1, 1]} : vector<8x256xf32> to vector<8x128xf32>
    %216 = vector.extract_strided_slice %214 {offsets = [0, 128], sizes = [8, 128], strides = [1, 1]} : vector<8x256xf32> to vector<8x128xf32>
    %217 = vector.extract_strided_slice %204 {offsets = [0, 256], sizes = [8, 128], strides = [1, 1]} : vector<8x384xf32> to vector<8x128xf32>
    %218 = vector.extract_strided_slice %206 {offsets = [0, 256], sizes = [8, 128], strides = [1, 1]} : vector<8x384xf32> to vector<8x128xf32>
    %219 = arith.addf %218, %119 : vector<8x128xf32>
    %220 = arith.mulf %215, %219 : vector<8x128xf32>
    %221 = arith.addf %217, %220 : vector<8x128xf32>
    %222 = math.tanh %221 : vector<8x128xf32>
    %cst_149 = arith.constant 1.000000e+00 : f32
    %223 = vector.broadcast %cst_149 : f32 to vector<8x128xf32>
    %224 = arith.subf %223, %216 : vector<8x128xf32>
    %225 = arith.mulf %224, %222 : vector<8x128xf32>
    %226 = arith.mulf %216, %200 : vector<8x128xf32>
    %227 = arith.addf %225, %226 : vector<8x128xf32>
    %c24_150 = arith.constant 24 : index
    %c0_151 = arith.constant 0 : index
    %228 = vector.load %arg20[%c24_150, %c0_151] : memref<64x128xf32, #tpu.memory_space<vmem>>, vector<8x128xf32>
    tpu.vector_store %arg20[%c24_150, %c0_151], %227 {strides = array<i32>} : memref<64x128xf32, #tpu.memory_space<vmem>>, vector<8x128xf32>,
    %c32_152 = arith.constant 32 : index
    %c0_153 = arith.constant 0 : index
    %229 = vector.load %arg18[%c32_152, %c0_153] : memref<64x384xf32, #tpu.memory_space<vmem>>, vector<8x384xf32>
    %c24_154 = arith.constant 24 : index
    %c0_155 = arith.constant 0 : index
    %230 = vector.load %arg19[%c24_154, %c0_155] : memref<64x384xf32, #tpu.memory_space<vmem>>, vector<8x384xf32>
    %231 = arith.addf %229, %230 : vector<8x384xf32>
    %232 = arith.truncf %227 : vector<8x128xf32> to vector<8x128xbf16>
    %cst_156 = arith.constant dense<0.000000e+00> : vector<8x384xf32>
    %233 = tpu.matmul %232, %116, %cst_156 {dimension_numbers = #tpu.dot_dimension_numbers<[1], [0], [0], [1], [0, 0, 1, 1], [], []>} : vector<8x128xbf16>, vector<128x384xbf16>, vector<8x384xf32> -> vector<8x384xf32>
    %234 = vector.extract_strided_slice %231 {offsets = [0, 0], sizes = [8, 256], strides = [1, 1]} : vector<8x384xf32> to vector<8x256xf32>
    %235 = vector.extract_strided_slice %233 {offsets = [0, 0], sizes = [8, 256], strides = [1, 1]} : vector<8x384xf32> to vector<8x256xf32>
    %236 = arith.addf %234, %235 : vector<8x256xf32>
    %237 = arith.negf %236 : vector<8x256xf32>
    %238 = math.exp %237 : vector<8x256xf32>
    %cst_157 = arith.constant 1.000000e+00 : f32
    %239 = vector.broadcast %cst_157 : f32 to vector<8x256xf32>
    %240 = arith.addf %239, %238 : vector<8x256xf32>
    %241 = arith.divf %239, %240 : vector<8x256xf32>
    %242 = vector.extract_strided_slice %241 {offsets = [0, 0], sizes = [8, 128], strides = [1, 1]} : vector<8x256xf32> to vector<8x128xf32>
    %243 = vector.extract_strided_slice %241 {offsets = [0, 128], sizes = [8, 128], strides = [1, 1]} : vector<8x256xf32> to vector<8x128xf32>
    %244 = vector.extract_strided_slice %231 {offsets = [0, 256], sizes = [8, 128], strides = [1, 1]} : vector<8x384xf32> to vector<8x128xf32>
    %245 = vector.extract_strided_slice %233 {offsets = [0, 256], sizes = [8, 128], strides = [1, 1]} : vector<8x384xf32> to vector<8x128xf32>
    %246 = arith.addf %245, %119 : vector<8x128xf32>
    %247 = arith.mulf %242, %246 : vector<8x128xf32>
    %248 = arith.addf %244, %247 : vector<8x128xf32>
    %249 = math.tanh %248 : vector<8x128xf32>
    %cst_158 = arith.constant 1.000000e+00 : f32
    %250 = vector.broadcast %cst_158 : f32 to vector<8x128xf32>
    %251 = arith.subf %250, %243 : vector<8x128xf32>
    %252 = arith.mulf %251, %249 : vector<8x128xf32>
    %253 = arith.mulf %243, %227 : vector<8x128xf32>
    %254 = arith.addf %252, %253 : vector<8x128xf32>
    %c32_159 = arith.constant 32 : index
    %c0_160 = arith.constant 0 : index
    %255 = vector.load %arg20[%c32_159, %c0_160] : memref<64x128xf32, #tpu.memory_space<vmem>>, vector<8x128xf32>
    tpu.vector_store %arg20[%c32_159, %c0_160], %254 {strides = array<i32>} : memref<64x128xf32, #tpu.memory_space<vmem>>, vector<8x128xf32>,
    %c40_161 = arith.constant 40 : index
    %c0_162 = arith.constant 0 : index
    %256 = vector.load %arg18[%c40_161, %c0_162] : memref<64x384xf32, #tpu.memory_space<vmem>>, vector<8x384xf32>
    %c16_163 = arith.constant 16 : index
    %c0_164 = arith.constant 0 : index
    %257 = vector.load %arg19[%c16_163, %c0_164] : memref<64x384xf32, #tpu.memory_space<vmem>>, vector<8x384xf32>
    %258 = arith.addf %256, %257 : vector<8x384xf32>
    %259 = arith.truncf %254 : vector<8x128xf32> to vector<8x128xbf16>
    %cst_165 = arith.constant dense<0.000000e+00> : vector<8x384xf32>
    %260 = tpu.matmul %259, %116, %cst_165 {dimension_numbers = #tpu.dot_dimension_numbers<[1], [0], [0], [1], [0, 0, 1, 1], [], []>} : vector<8x128xbf16>, vector<128x384xbf16>, vector<8x384xf32> -> vector<8x384xf32>
    %261 = vector.extract_strided_slice %258 {offsets = [0, 0], sizes = [8, 256], strides = [1, 1]} : vector<8x384xf32> to vector<8x256xf32>
    %262 = vector.extract_strided_slice %260 {offsets = [0, 0], sizes = [8, 256], strides = [1, 1]} : vector<8x384xf32> to vector<8x256xf32>
    %263 = arith.addf %261, %262 : vector<8x256xf32>
    %264 = arith.negf %263 : vector<8x256xf32>
    %265 = math.exp %264 : vector<8x256xf32>
    %cst_166 = arith.constant 1.000000e+00 : f32
    %266 = vector.broadcast %cst_166 : f32 to vector<8x256xf32>
    %267 = arith.addf %266, %265 : vector<8x256xf32>
    %268 = arith.divf %266, %267 : vector<8x256xf32>
    %269 = vector.extract_strided_slice %268 {offsets = [0, 0], sizes = [8, 128], strides = [1, 1]} : vector<8x256xf32> to vector<8x128xf32>
    %270 = vector.extract_strided_slice %268 {offsets = [0, 128], sizes = [8, 128], strides = [1, 1]} : vector<8x256xf32> to vector<8x128xf32>
    %271 = vector.extract_strided_slice %258 {offsets = [0, 256], sizes = [8, 128], strides = [1, 1]} : vector<8x384xf32> to vector<8x128xf32>
    %272 = vector.extract_strided_slice %260 {offsets = [0, 256], sizes = [8, 128], strides = [1, 1]} : vector<8x384xf32> to vector<8x128xf32>
    %273 = arith.addf %272, %119 : vector<8x128xf32>
    %274 = arith.mulf %269, %273 : vector<8x128xf32>
    %275 = arith.addf %271, %274 : vector<8x128xf32>
    %276 = math.tanh %275 : vector<8x128xf32>
    %cst_167 = arith.constant 1.000000e+00 : f32
    %277 = vector.broadcast %cst_167 : f32 to vector<8x128xf32>
    %278 = arith.subf %277, %270 : vector<8x128xf32>
    %279 = arith.mulf %278, %276 : vector<8x128xf32>
    %280 = arith.mulf %270, %254 : vector<8x128xf32>
    %281 = arith.addf %279, %280 : vector<8x128xf32>
    %c40_168 = arith.constant 40 : index
    %c0_169 = arith.constant 0 : index
    %282 = vector.load %arg20[%c40_168, %c0_169] : memref<64x128xf32, #tpu.memory_space<vmem>>, vector<8x128xf32>
    tpu.vector_store %arg20[%c40_168, %c0_169], %281 {strides = array<i32>} : memref<64x128xf32, #tpu.memory_space<vmem>>, vector<8x128xf32>,
    %c48_170 = arith.constant 48 : index
    %c0_171 = arith.constant 0 : index
    %283 = vector.load %arg18[%c48_170, %c0_171] : memref<64x384xf32, #tpu.memory_space<vmem>>, vector<8x384xf32>
    %c8_172 = arith.constant 8 : index
    %c0_173 = arith.constant 0 : index
    %284 = vector.load %arg19[%c8_172, %c0_173] : memref<64x384xf32, #tpu.memory_space<vmem>>, vector<8x384xf32>
    %285 = arith.addf %283, %284 : vector<8x384xf32>
    %286 = arith.truncf %281 : vector<8x128xf32> to vector<8x128xbf16>
    %cst_174 = arith.constant dense<0.000000e+00> : vector<8x384xf32>
    %287 = tpu.matmul %286, %116, %cst_174 {dimension_numbers = #tpu.dot_dimension_numbers<[1], [0], [0], [1], [0, 0, 1, 1], [], []>} : vector<8x128xbf16>, vector<128x384xbf16>, vector<8x384xf32> -> vector<8x384xf32>
    %288 = vector.extract_strided_slice %285 {offsets = [0, 0], sizes = [8, 256], strides = [1, 1]} : vector<8x384xf32> to vector<8x256xf32>
    %289 = vector.extract_strided_slice %287 {offsets = [0, 0], sizes = [8, 256], strides = [1, 1]} : vector<8x384xf32> to vector<8x256xf32>
    %290 = arith.addf %288, %289 : vector<8x256xf32>
    %291 = arith.negf %290 : vector<8x256xf32>
    %292 = math.exp %291 : vector<8x256xf32>
    %cst_175 = arith.constant 1.000000e+00 : f32
    %293 = vector.broadcast %cst_175 : f32 to vector<8x256xf32>
    %294 = arith.addf %293, %292 : vector<8x256xf32>
    %295 = arith.divf %293, %294 : vector<8x256xf32>
    %296 = vector.extract_strided_slice %295 {offsets = [0, 0], sizes = [8, 128], strides = [1, 1]} : vector<8x256xf32> to vector<8x128xf32>
    %297 = vector.extract_strided_slice %295 {offsets = [0, 128], sizes = [8, 128], strides = [1, 1]} : vector<8x256xf32> to vector<8x128xf32>
    %298 = vector.extract_strided_slice %285 {offsets = [0, 256], sizes = [8, 128], strides = [1, 1]} : vector<8x384xf32> to vector<8x128xf32>
    %299 = vector.extract_strided_slice %287 {offsets = [0, 256], sizes = [8, 128], strides = [1, 1]} : vector<8x384xf32> to vector<8x128xf32>
    %300 = arith.addf %299, %119 : vector<8x128xf32>
    %301 = arith.mulf %296, %300 : vector<8x128xf32>
    %302 = arith.addf %298, %301 : vector<8x128xf32>
    %303 = math.tanh %302 : vector<8x128xf32>
    %cst_176 = arith.constant 1.000000e+00 : f32
    %304 = vector.broadcast %cst_176 : f32 to vector<8x128xf32>
    %305 = arith.subf %304, %297 : vector<8x128xf32>
    %306 = arith.mulf %305, %303 : vector<8x128xf32>
    %307 = arith.mulf %297, %281 : vector<8x128xf32>
    %308 = arith.addf %306, %307 : vector<8x128xf32>
    %c48_177 = arith.constant 48 : index
    %c0_178 = arith.constant 0 : index
    %309 = vector.load %arg20[%c48_177, %c0_178] : memref<64x128xf32, #tpu.memory_space<vmem>>, vector<8x128xf32>
    tpu.vector_store %arg20[%c48_177, %c0_178], %308 {strides = array<i32>} : memref<64x128xf32, #tpu.memory_space<vmem>>, vector<8x128xf32>,
    %c56_179 = arith.constant 56 : index
    %c0_180 = arith.constant 0 : index
    %310 = vector.load %arg18[%c56_179, %c0_180] : memref<64x384xf32, #tpu.memory_space<vmem>>, vector<8x384xf32>
    %c0_181 = arith.constant 0 : index
    %c0_182 = arith.constant 0 : index
    %311 = vector.load %arg19[%c0_181, %c0_182] : memref<64x384xf32, #tpu.memory_space<vmem>>, vector<8x384xf32>
    %312 = arith.addf %310, %311 : vector<8x384xf32>
    %313 = arith.truncf %308 : vector<8x128xf32> to vector<8x128xbf16>
    %cst_183 = arith.constant dense<0.000000e+00> : vector<8x384xf32>
    %314 = tpu.matmul %313, %116, %cst_183 {dimension_numbers = #tpu.dot_dimension_numbers<[1], [0], [0], [1], [0, 0, 1, 1], [], []>} : vector<8x128xbf16>, vector<128x384xbf16>, vector<8x384xf32> -> vector<8x384xf32>
    %315 = vector.extract_strided_slice %312 {offsets = [0, 0], sizes = [8, 256], strides = [1, 1]} : vector<8x384xf32> to vector<8x256xf32>
    %316 = vector.extract_strided_slice %314 {offsets = [0, 0], sizes = [8, 256], strides = [1, 1]} : vector<8x384xf32> to vector<8x256xf32>
    %317 = arith.addf %315, %316 : vector<8x256xf32>
    %318 = arith.negf %317 : vector<8x256xf32>
    %319 = math.exp %318 : vector<8x256xf32>
    %cst_184 = arith.constant 1.000000e+00 : f32
    %320 = vector.broadcast %cst_184 : f32 to vector<8x256xf32>
    %321 = arith.addf %320, %319 : vector<8x256xf32>
    %322 = arith.divf %320, %321 : vector<8x256xf32>
    %323 = vector.extract_strided_slice %322 {offsets = [0, 0], sizes = [8, 128], strides = [1, 1]} : vector<8x256xf32> to vector<8x128xf32>
    %324 = vector.extract_strided_slice %322 {offsets = [0, 128], sizes = [8, 128], strides = [1, 1]} : vector<8x256xf32> to vector<8x128xf32>
    %325 = vector.extract_strided_slice %312 {offsets = [0, 256], sizes = [8, 128], strides = [1, 1]} : vector<8x384xf32> to vector<8x128xf32>
    %326 = vector.extract_strided_slice %314 {offsets = [0, 256], sizes = [8, 128], strides = [1, 1]} : vector<8x384xf32> to vector<8x128xf32>
    %327 = arith.addf %326, %119 : vector<8x128xf32>
    %328 = arith.mulf %323, %327 : vector<8x128xf32>
    %329 = arith.addf %325, %328 : vector<8x128xf32>
    %330 = math.tanh %329 : vector<8x128xf32>
    %cst_185 = arith.constant 1.000000e+00 : f32
    %331 = vector.broadcast %cst_185 : f32 to vector<8x128xf32>
    %332 = arith.subf %331, %324 : vector<8x128xf32>
    %333 = arith.mulf %332, %330 : vector<8x128xf32>
    %334 = arith.mulf %324, %308 : vector<8x128xf32>
    %335 = arith.addf %333, %334 : vector<8x128xf32>
    %c56_186 = arith.constant 56 : index
    %c0_187 = arith.constant 0 : index
    %336 = vector.load %arg20[%c56_186, %c0_187] : memref<64x128xf32, #tpu.memory_space<vmem>>, vector<8x128xf32>
    tpu.vector_store %arg20[%c56_186, %c0_187], %335 {strides = array<i32>} : memref<64x128xf32, #tpu.memory_space<vmem>>, vector<8x128xf32>,
    %c0_188 = arith.constant 0 : index
    %c0_189 = arith.constant 0 : index
    %337 = vector.load %arg20[%c0_188, %c0_189] : memref<64x128xf32, #tpu.memory_space<vmem>>, vector<64x128xf32>
    %338 = arith.truncf %337 : vector<64x128xf32> to vector<64x128xbf16>
    %c0_190 = arith.constant 0 : index
    %c0_191 = arith.constant 0 : index
    %339 = vector.load %arg5[%c0_190, %c0_191] : memref<128x384xbf16, #tpu.memory_space<vmem>>, vector<128x384xbf16>
    %cst_192 = arith.constant dense<0.000000e+00> : vector<64x384xf32>
    %340 = tpu.matmul %338, %339, %cst_192 {dimension_numbers = #tpu.dot_dimension_numbers<[1], [0], [0], [1], [0, 0, 1, 1], [], []>} : vector<64x128xbf16>, vector<128x384xbf16>, vector<64x384xf32> -> vector<64x384xf32>
    %c0_193 = arith.constant 0 : index
    %c0_194 = arith.constant 0 : index
    %341 = vector.load %arg7[%c0_193, %c0_194] : memref<1x384xf32, #tpu.memory_space<vmem>>, vector<1x384xf32>
    %342 = vector.broadcast %341 : vector<1x384xf32> to vector<64x384xf32>
    %343 = arith.addf %340, %342 : vector<64x384xf32>
    %c0_195 = arith.constant 0 : index
    %c0_196 = arith.constant 0 : index
    %344 = vector.load %arg18[%c0_195, %c0_196] : memref<64x384xf32, #tpu.memory_space<vmem>>, vector<64x384xf32>
    tpu.vector_store %arg18[%c0_195, %c0_196], %343 {strides = array<i32>} : memref<64x384xf32, #tpu.memory_space<vmem>>, vector<64x384xf32>,
    %c0_197 = arith.constant 0 : index
    %c0_198 = arith.constant 0 : index
    %345 = vector.load %arg6[%c0_197, %c0_198] : memref<128x384xbf16, #tpu.memory_space<vmem>>, vector<128x384xbf16>
    %cst_199 = arith.constant dense<0.000000e+00> : vector<64x384xf32>
    %346 = tpu.matmul %338, %345, %cst_199 {dimension_numbers = #tpu.dot_dimension_numbers<[1], [0], [0], [1], [0, 0, 1, 1], [], []>} : vector<64x128xbf16>, vector<128x384xbf16>, vector<64x384xf32> -> vector<64x384xf32>
    %c0_200 = arith.constant 0 : index
    %c0_201 = arith.constant 0 : index
    %347 = vector.load %arg19[%c0_200, %c0_201] : memref<64x384xf32, #tpu.memory_space<vmem>>, vector<64x384xf32>
    tpu.vector_store %arg19[%c0_200, %c0_201], %346 {strides = array<i32>} : memref<64x384xf32, #tpu.memory_space<vmem>>, vector<64x384xf32>,
    %c0_202 = arith.constant 0 : index
    %c0_203 = arith.constant 0 : index
    %348 = vector.load %arg8[%c0_202, %c0_203] : memref<128x384xbf16, #tpu.memory_space<vmem>>, vector<128x384xbf16>
    %c0_204 = arith.constant 0 : index
    %c0_205 = arith.constant 0 : index
    %349 = vector.load %arg9[%c0_204, %c0_205] : memref<1x128xf32, #tpu.memory_space<vmem>>, vector<1x128xf32>
    %350 = vector.shape_cast %349 : vector<1x128xf32> to vector<1x128xf32>
    %351 = vector.broadcast %350 : vector<1x128xf32> to vector<8x128xf32>
    %cst_206 = arith.constant 0.000000e+00 : f32
    %352 = vector.broadcast %cst_206 : f32 to vector<8x128xf32>
    %c0_207 = arith.constant 0 : index
    %c0_208 = arith.constant 0 : index
    %353 = vector.load %arg18[%c0_207, %c0_208] : memref<64x384xf32, #tpu.memory_space<vmem>>, vector<8x384xf32>
    %c56_209 = arith.constant 56 : index
    %c0_210 = arith.constant 0 : index
    %354 = vector.load %arg19[%c56_209, %c0_210] : memref<64x384xf32, #tpu.memory_space<vmem>>, vector<8x384xf32>
    %355 = arith.addf %353, %354 : vector<8x384xf32>
    %356 = arith.truncf %352 : vector<8x128xf32> to vector<8x128xbf16>
    %cst_211 = arith.constant dense<0.000000e+00> : vector<8x384xf32>
    %357 = tpu.matmul %356, %348, %cst_211 {dimension_numbers = #tpu.dot_dimension_numbers<[1], [0], [0], [1], [0, 0, 1, 1], [], []>} : vector<8x128xbf16>, vector<128x384xbf16>, vector<8x384xf32> -> vector<8x384xf32>
    %358 = vector.extract_strided_slice %355 {offsets = [0, 0], sizes = [8, 256], strides = [1, 1]} : vector<8x384xf32> to vector<8x256xf32>
    %359 = vector.extract_strided_slice %357 {offsets = [0, 0], sizes = [8, 256], strides = [1, 1]} : vector<8x384xf32> to vector<8x256xf32>
    %360 = arith.addf %358, %359 : vector<8x256xf32>
    %361 = arith.negf %360 : vector<8x256xf32>
    %362 = math.exp %361 : vector<8x256xf32>
    %cst_212 = arith.constant 1.000000e+00 : f32
    %363 = vector.broadcast %cst_212 : f32 to vector<8x256xf32>
    %364 = arith.addf %363, %362 : vector<8x256xf32>
    %365 = arith.divf %363, %364 : vector<8x256xf32>
    %366 = vector.extract_strided_slice %365 {offsets = [0, 0], sizes = [8, 128], strides = [1, 1]} : vector<8x256xf32> to vector<8x128xf32>
    %367 = vector.extract_strided_slice %365 {offsets = [0, 128], sizes = [8, 128], strides = [1, 1]} : vector<8x256xf32> to vector<8x128xf32>
    %368 = vector.extract_strided_slice %355 {offsets = [0, 256], sizes = [8, 128], strides = [1, 1]} : vector<8x384xf32> to vector<8x128xf32>
    %369 = vector.extract_strided_slice %357 {offsets = [0, 256], sizes = [8, 128], strides = [1, 1]} : vector<8x384xf32> to vector<8x128xf32>
    %370 = arith.addf %369, %351 : vector<8x128xf32>
    %371 = arith.mulf %366, %370 : vector<8x128xf32>
    %372 = arith.addf %368, %371 : vector<8x128xf32>
    %373 = math.tanh %372 : vector<8x128xf32>
    %cst_213 = arith.constant 1.000000e+00 : f32
    %374 = vector.broadcast %cst_213 : f32 to vector<8x128xf32>
    %375 = arith.subf %374, %367 : vector<8x128xf32>
    %376 = arith.mulf %375, %373 : vector<8x128xf32>
    %377 = arith.mulf %367, %352 : vector<8x128xf32>
    %378 = arith.addf %376, %377 : vector<8x128xf32>
    %c0_214 = arith.constant 0 : index
    %c0_215 = arith.constant 0 : index
    %379 = vector.load %arg20[%c0_214, %c0_215] : memref<64x128xf32, #tpu.memory_space<vmem>>, vector<8x128xf32>
    tpu.vector_store %arg20[%c0_214, %c0_215], %378 {strides = array<i32>} : memref<64x128xf32, #tpu.memory_space<vmem>>, vector<8x128xf32>,
    %c8_216 = arith.constant 8 : index
    %c0_217 = arith.constant 0 : index
    %380 = vector.load %arg18[%c8_216, %c0_217] : memref<64x384xf32, #tpu.memory_space<vmem>>, vector<8x384xf32>
    %c48_218 = arith.constant 48 : index
    %c0_219 = arith.constant 0 : index
    %381 = vector.load %arg19[%c48_218, %c0_219] : memref<64x384xf32, #tpu.memory_space<vmem>>, vector<8x384xf32>
    %382 = arith.addf %380, %381 : vector<8x384xf32>
    %383 = arith.truncf %378 : vector<8x128xf32> to vector<8x128xbf16>
    %cst_220 = arith.constant dense<0.000000e+00> : vector<8x384xf32>
    %384 = tpu.matmul %383, %348, %cst_220 {dimension_numbers = #tpu.dot_dimension_numbers<[1], [0], [0], [1], [0, 0, 1, 1], [], []>} : vector<8x128xbf16>, vector<128x384xbf16>, vector<8x384xf32> -> vector<8x384xf32>
    %385 = vector.extract_strided_slice %382 {offsets = [0, 0], sizes = [8, 256], strides = [1, 1]} : vector<8x384xf32> to vector<8x256xf32>
    %386 = vector.extract_strided_slice %384 {offsets = [0, 0], sizes = [8, 256], strides = [1, 1]} : vector<8x384xf32> to vector<8x256xf32>
    %387 = arith.addf %385, %386 : vector<8x256xf32>
    %388 = arith.negf %387 : vector<8x256xf32>
    %389 = math.exp %388 : vector<8x256xf32>
    %cst_221 = arith.constant 1.000000e+00 : f32
    %390 = vector.broadcast %cst_221 : f32 to vector<8x256xf32>
    %391 = arith.addf %390, %389 : vector<8x256xf32>
    %392 = arith.divf %390, %391 : vector<8x256xf32>
    %393 = vector.extract_strided_slice %392 {offsets = [0, 0], sizes = [8, 128], strides = [1, 1]} : vector<8x256xf32> to vector<8x128xf32>
    %394 = vector.extract_strided_slice %392 {offsets = [0, 128], sizes = [8, 128], strides = [1, 1]} : vector<8x256xf32> to vector<8x128xf32>
    %395 = vector.extract_strided_slice %382 {offsets = [0, 256], sizes = [8, 128], strides = [1, 1]} : vector<8x384xf32> to vector<8x128xf32>
    %396 = vector.extract_strided_slice %384 {offsets = [0, 256], sizes = [8, 128], strides = [1, 1]} : vector<8x384xf32> to vector<8x128xf32>
    %397 = arith.addf %396, %351 : vector<8x128xf32>
    %398 = arith.mulf %393, %397 : vector<8x128xf32>
    %399 = arith.addf %395, %398 : vector<8x128xf32>
    %400 = math.tanh %399 : vector<8x128xf32>
    %cst_222 = arith.constant 1.000000e+00 : f32
    %401 = vector.broadcast %cst_222 : f32 to vector<8x128xf32>
    %402 = arith.subf %401, %394 : vector<8x128xf32>
    %403 = arith.mulf %402, %400 : vector<8x128xf32>
    %404 = arith.mulf %394, %378 : vector<8x128xf32>
    %405 = arith.addf %403, %404 : vector<8x128xf32>
    %c8_223 = arith.constant 8 : index
    %c0_224 = arith.constant 0 : index
    %406 = vector.load %arg20[%c8_223, %c0_224] : memref<64x128xf32, #tpu.memory_space<vmem>>, vector<8x128xf32>
    tpu.vector_store %arg20[%c8_223, %c0_224], %405 {strides = array<i32>} : memref<64x128xf32, #tpu.memory_space<vmem>>, vector<8x128xf32>,
    %c16_225 = arith.constant 16 : index
    %c0_226 = arith.constant 0 : index
    %407 = vector.load %arg18[%c16_225, %c0_226] : memref<64x384xf32, #tpu.memory_space<vmem>>, vector<8x384xf32>
    %c40_227 = arith.constant 40 : index
    %c0_228 = arith.constant 0 : index
    %408 = vector.load %arg19[%c40_227, %c0_228] : memref<64x384xf32, #tpu.memory_space<vmem>>, vector<8x384xf32>
    %409 = arith.addf %407, %408 : vector<8x384xf32>
    %410 = arith.truncf %405 : vector<8x128xf32> to vector<8x128xbf16>
    %cst_229 = arith.constant dense<0.000000e+00> : vector<8x384xf32>
    %411 = tpu.matmul %410, %348, %cst_229 {dimension_numbers = #tpu.dot_dimension_numbers<[1], [0], [0], [1], [0, 0, 1, 1], [], []>} : vector<8x128xbf16>, vector<128x384xbf16>, vector<8x384xf32> -> vector<8x384xf32>
    %412 = vector.extract_strided_slice %409 {offsets = [0, 0], sizes = [8, 256], strides = [1, 1]} : vector<8x384xf32> to vector<8x256xf32>
    %413 = vector.extract_strided_slice %411 {offsets = [0, 0], sizes = [8, 256], strides = [1, 1]} : vector<8x384xf32> to vector<8x256xf32>
    %414 = arith.addf %412, %413 : vector<8x256xf32>
    %415 = arith.negf %414 : vector<8x256xf32>
    %416 = math.exp %415 : vector<8x256xf32>
    %cst_230 = arith.constant 1.000000e+00 : f32
    %417 = vector.broadcast %cst_230 : f32 to vector<8x256xf32>
    %418 = arith.addf %417, %416 : vector<8x256xf32>
    %419 = arith.divf %417, %418 : vector<8x256xf32>
    %420 = vector.extract_strided_slice %419 {offsets = [0, 0], sizes = [8, 128], strides = [1, 1]} : vector<8x256xf32> to vector<8x128xf32>
    %421 = vector.extract_strided_slice %419 {offsets = [0, 128], sizes = [8, 128], strides = [1, 1]} : vector<8x256xf32> to vector<8x128xf32>
    %422 = vector.extract_strided_slice %409 {offsets = [0, 256], sizes = [8, 128], strides = [1, 1]} : vector<8x384xf32> to vector<8x128xf32>
    %423 = vector.extract_strided_slice %411 {offsets = [0, 256], sizes = [8, 128], strides = [1, 1]} : vector<8x384xf32> to vector<8x128xf32>
    %424 = arith.addf %423, %351 : vector<8x128xf32>
    %425 = arith.mulf %420, %424 : vector<8x128xf32>
    %426 = arith.addf %422, %425 : vector<8x128xf32>
    %427 = math.tanh %426 : vector<8x128xf32>
    %cst_231 = arith.constant 1.000000e+00 : f32
    %428 = vector.broadcast %cst_231 : f32 to vector<8x128xf32>
    %429 = arith.subf %428, %421 : vector<8x128xf32>
    %430 = arith.mulf %429, %427 : vector<8x128xf32>
    %431 = arith.mulf %421, %405 : vector<8x128xf32>
    %432 = arith.addf %430, %431 : vector<8x128xf32>
    %c16_232 = arith.constant 16 : index
    %c0_233 = arith.constant 0 : index
    %433 = vector.load %arg20[%c16_232, %c0_233] : memref<64x128xf32, #tpu.memory_space<vmem>>, vector<8x128xf32>
    tpu.vector_store %arg20[%c16_232, %c0_233], %432 {strides = array<i32>} : memref<64x128xf32, #tpu.memory_space<vmem>>, vector<8x128xf32>,
    %c24_234 = arith.constant 24 : index
    %c0_235 = arith.constant 0 : index
    %434 = vector.load %arg18[%c24_234, %c0_235] : memref<64x384xf32, #tpu.memory_space<vmem>>, vector<8x384xf32>
    %c32_236 = arith.constant 32 : index
    %c0_237 = arith.constant 0 : index
    %435 = vector.load %arg19[%c32_236, %c0_237] : memref<64x384xf32, #tpu.memory_space<vmem>>, vector<8x384xf32>
    %436 = arith.addf %434, %435 : vector<8x384xf32>
    %437 = arith.truncf %432 : vector<8x128xf32> to vector<8x128xbf16>
    %cst_238 = arith.constant dense<0.000000e+00> : vector<8x384xf32>
    %438 = tpu.matmul %437, %348, %cst_238 {dimension_numbers = #tpu.dot_dimension_numbers<[1], [0], [0], [1], [0, 0, 1, 1], [], []>} : vector<8x128xbf16>, vector<128x384xbf16>, vector<8x384xf32> -> vector<8x384xf32>
    %439 = vector.extract_strided_slice %436 {offsets = [0, 0], sizes = [8, 256], strides = [1, 1]} : vector<8x384xf32> to vector<8x256xf32>
    %440 = vector.extract_strided_slice %438 {offsets = [0, 0], sizes = [8, 256], strides = [1, 1]} : vector<8x384xf32> to vector<8x256xf32>
    %441 = arith.addf %439, %440 : vector<8x256xf32>
    %442 = arith.negf %441 : vector<8x256xf32>
    %443 = math.exp %442 : vector<8x256xf32>
    %cst_239 = arith.constant 1.000000e+00 : f32
    %444 = vector.broadcast %cst_239 : f32 to vector<8x256xf32>
    %445 = arith.addf %444, %443 : vector<8x256xf32>
    %446 = arith.divf %444, %445 : vector<8x256xf32>
    %447 = vector.extract_strided_slice %446 {offsets = [0, 0], sizes = [8, 128], strides = [1, 1]} : vector<8x256xf32> to vector<8x128xf32>
    %448 = vector.extract_strided_slice %446 {offsets = [0, 128], sizes = [8, 128], strides = [1, 1]} : vector<8x256xf32> to vector<8x128xf32>
    %449 = vector.extract_strided_slice %436 {offsets = [0, 256], sizes = [8, 128], strides = [1, 1]} : vector<8x384xf32> to vector<8x128xf32>
    %450 = vector.extract_strided_slice %438 {offsets = [0, 256], sizes = [8, 128], strides = [1, 1]} : vector<8x384xf32> to vector<8x128xf32>
    %451 = arith.addf %450, %351 : vector<8x128xf32>
    %452 = arith.mulf %447, %451 : vector<8x128xf32>
    %453 = arith.addf %449, %452 : vector<8x128xf32>
    %454 = math.tanh %453 : vector<8x128xf32>
    %cst_240 = arith.constant 1.000000e+00 : f32
    %455 = vector.broadcast %cst_240 : f32 to vector<8x128xf32>
    %456 = arith.subf %455, %448 : vector<8x128xf32>
    %457 = arith.mulf %456, %454 : vector<8x128xf32>
    %458 = arith.mulf %448, %432 : vector<8x128xf32>
    %459 = arith.addf %457, %458 : vector<8x128xf32>
    %c24_241 = arith.constant 24 : index
    %c0_242 = arith.constant 0 : index
    %460 = vector.load %arg20[%c24_241, %c0_242] : memref<64x128xf32, #tpu.memory_space<vmem>>, vector<8x128xf32>
    tpu.vector_store %arg20[%c24_241, %c0_242], %459 {strides = array<i32>} : memref<64x128xf32, #tpu.memory_space<vmem>>, vector<8x128xf32>,
    %c32_243 = arith.constant 32 : index
    %c0_244 = arith.constant 0 : index
    %461 = vector.load %arg18[%c32_243, %c0_244] : memref<64x384xf32, #tpu.memory_space<vmem>>, vector<8x384xf32>
    %c24_245 = arith.constant 24 : index
    %c0_246 = arith.constant 0 : index
    %462 = vector.load %arg19[%c24_245, %c0_246] : memref<64x384xf32, #tpu.memory_space<vmem>>, vector<8x384xf32>
    %463 = arith.addf %461, %462 : vector<8x384xf32>
    %464 = arith.truncf %459 : vector<8x128xf32> to vector<8x128xbf16>
    %cst_247 = arith.constant dense<0.000000e+00> : vector<8x384xf32>
    %465 = tpu.matmul %464, %348, %cst_247 {dimension_numbers = #tpu.dot_dimension_numbers<[1], [0], [0], [1], [0, 0, 1, 1], [], []>} : vector<8x128xbf16>, vector<128x384xbf16>, vector<8x384xf32> -> vector<8x384xf32>
    %466 = vector.extract_strided_slice %463 {offsets = [0, 0], sizes = [8, 256], strides = [1, 1]} : vector<8x384xf32> to vector<8x256xf32>
    %467 = vector.extract_strided_slice %465 {offsets = [0, 0], sizes = [8, 256], strides = [1, 1]} : vector<8x384xf32> to vector<8x256xf32>
    %468 = arith.addf %466, %467 : vector<8x256xf32>
    %469 = arith.negf %468 : vector<8x256xf32>
    %470 = math.exp %469 : vector<8x256xf32>
    %cst_248 = arith.constant 1.000000e+00 : f32
    %471 = vector.broadcast %cst_248 : f32 to vector<8x256xf32>
    %472 = arith.addf %471, %470 : vector<8x256xf32>
    %473 = arith.divf %471, %472 : vector<8x256xf32>
    %474 = vector.extract_strided_slice %473 {offsets = [0, 0], sizes = [8, 128], strides = [1, 1]} : vector<8x256xf32> to vector<8x128xf32>
    %475 = vector.extract_strided_slice %473 {offsets = [0, 128], sizes = [8, 128], strides = [1, 1]} : vector<8x256xf32> to vector<8x128xf32>
    %476 = vector.extract_strided_slice %463 {offsets = [0, 256], sizes = [8, 128], strides = [1, 1]} : vector<8x384xf32> to vector<8x128xf32>
    %477 = vector.extract_strided_slice %465 {offsets = [0, 256], sizes = [8, 128], strides = [1, 1]} : vector<8x384xf32> to vector<8x128xf32>
    %478 = arith.addf %477, %351 : vector<8x128xf32>
    %479 = arith.mulf %474, %478 : vector<8x128xf32>
    %480 = arith.addf %476, %479 : vector<8x128xf32>
    %481 = math.tanh %480 : vector<8x128xf32>
    %cst_249 = arith.constant 1.000000e+00 : f32
    %482 = vector.broadcast %cst_249 : f32 to vector<8x128xf32>
    %483 = arith.subf %482, %475 : vector<8x128xf32>
    %484 = arith.mulf %483, %481 : vector<8x128xf32>
    %485 = arith.mulf %475, %459 : vector<8x128xf32>
    %486 = arith.addf %484, %485 : vector<8x128xf32>
    %c32_250 = arith.constant 32 : index
    %c0_251 = arith.constant 0 : index
    %487 = vector.load %arg20[%c32_250, %c0_251] : memref<64x128xf32, #tpu.memory_space<vmem>>, vector<8x128xf32>
    tpu.vector_store %arg20[%c32_250, %c0_251], %486 {strides = array<i32>} : memref<64x128xf32, #tpu.memory_space<vmem>>, vector<8x128xf32>,
    %c40_252 = arith.constant 40 : index
    %c0_253 = arith.constant 0 : index
    %488 = vector.load %arg18[%c40_252, %c0_253] : memref<64x384xf32, #tpu.memory_space<vmem>>, vector<8x384xf32>
    %c16_254 = arith.constant 16 : index
    %c0_255 = arith.constant 0 : index
    %489 = vector.load %arg19[%c16_254, %c0_255] : memref<64x384xf32, #tpu.memory_space<vmem>>, vector<8x384xf32>
    %490 = arith.addf %488, %489 : vector<8x384xf32>
    %491 = arith.truncf %486 : vector<8x128xf32> to vector<8x128xbf16>
    %cst_256 = arith.constant dense<0.000000e+00> : vector<8x384xf32>
    %492 = tpu.matmul %491, %348, %cst_256 {dimension_numbers = #tpu.dot_dimension_numbers<[1], [0], [0], [1], [0, 0, 1, 1], [], []>} : vector<8x128xbf16>, vector<128x384xbf16>, vector<8x384xf32> -> vector<8x384xf32>
    %493 = vector.extract_strided_slice %490 {offsets = [0, 0], sizes = [8, 256], strides = [1, 1]} : vector<8x384xf32> to vector<8x256xf32>
    %494 = vector.extract_strided_slice %492 {offsets = [0, 0], sizes = [8, 256], strides = [1, 1]} : vector<8x384xf32> to vector<8x256xf32>
    %495 = arith.addf %493, %494 : vector<8x256xf32>
    %496 = arith.negf %495 : vector<8x256xf32>
    %497 = math.exp %496 : vector<8x256xf32>
    %cst_257 = arith.constant 1.000000e+00 : f32
    %498 = vector.broadcast %cst_257 : f32 to vector<8x256xf32>
    %499 = arith.addf %498, %497 : vector<8x256xf32>
    %500 = arith.divf %498, %499 : vector<8x256xf32>
    %501 = vector.extract_strided_slice %500 {offsets = [0, 0], sizes = [8, 128], strides = [1, 1]} : vector<8x256xf32> to vector<8x128xf32>
    %502 = vector.extract_strided_slice %500 {offsets = [0, 128], sizes = [8, 128], strides = [1, 1]} : vector<8x256xf32> to vector<8x128xf32>
    %503 = vector.extract_strided_slice %490 {offsets = [0, 256], sizes = [8, 128], strides = [1, 1]} : vector<8x384xf32> to vector<8x128xf32>
    %504 = vector.extract_strided_slice %492 {offsets = [0, 256], sizes = [8, 128], strides = [1, 1]} : vector<8x384xf32> to vector<8x128xf32>
    %505 = arith.addf %504, %351 : vector<8x128xf32>
    %506 = arith.mulf %501, %505 : vector<8x128xf32>
    %507 = arith.addf %503, %506 : vector<8x128xf32>
    %508 = math.tanh %507 : vector<8x128xf32>
    %cst_258 = arith.constant 1.000000e+00 : f32
    %509 = vector.broadcast %cst_258 : f32 to vector<8x128xf32>
    %510 = arith.subf %509, %502 : vector<8x128xf32>
    %511 = arith.mulf %510, %508 : vector<8x128xf32>
    %512 = arith.mulf %502, %486 : vector<8x128xf32>
    %513 = arith.addf %511, %512 : vector<8x128xf32>
    %c40_259 = arith.constant 40 : index
    %c0_260 = arith.constant 0 : index
    %514 = vector.load %arg20[%c40_259, %c0_260] : memref<64x128xf32, #tpu.memory_space<vmem>>, vector<8x128xf32>
    tpu.vector_store %arg20[%c40_259, %c0_260], %513 {strides = array<i32>} : memref<64x128xf32, #tpu.memory_space<vmem>>, vector<8x128xf32>,
    %c48_261 = arith.constant 48 : index
    %c0_262 = arith.constant 0 : index
    %515 = vector.load %arg18[%c48_261, %c0_262] : memref<64x384xf32, #tpu.memory_space<vmem>>, vector<8x384xf32>
    %c8_263 = arith.constant 8 : index
    %c0_264 = arith.constant 0 : index
    %516 = vector.load %arg19[%c8_263, %c0_264] : memref<64x384xf32, #tpu.memory_space<vmem>>, vector<8x384xf32>
    %517 = arith.addf %515, %516 : vector<8x384xf32>
    %518 = arith.truncf %513 : vector<8x128xf32> to vector<8x128xbf16>
    %cst_265 = arith.constant dense<0.000000e+00> : vector<8x384xf32>
    %519 = tpu.matmul %518, %348, %cst_265 {dimension_numbers = #tpu.dot_dimension_numbers<[1], [0], [0], [1], [0, 0, 1, 1], [], []>} : vector<8x128xbf16>, vector<128x384xbf16>, vector<8x384xf32> -> vector<8x384xf32>
    %520 = vector.extract_strided_slice %517 {offsets = [0, 0], sizes = [8, 256], strides = [1, 1]} : vector<8x384xf32> to vector<8x256xf32>
    %521 = vector.extract_strided_slice %519 {offsets = [0, 0], sizes = [8, 256], strides = [1, 1]} : vector<8x384xf32> to vector<8x256xf32>
    %522 = arith.addf %520, %521 : vector<8x256xf32>
    %523 = arith.negf %522 : vector<8x256xf32>
    %524 = math.exp %523 : vector<8x256xf32>
    %cst_266 = arith.constant 1.000000e+00 : f32
    %525 = vector.broadcast %cst_266 : f32 to vector<8x256xf32>
    %526 = arith.addf %525, %524 : vector<8x256xf32>
    %527 = arith.divf %525, %526 : vector<8x256xf32>
    %528 = vector.extract_strided_slice %527 {offsets = [0, 0], sizes = [8, 128], strides = [1, 1]} : vector<8x256xf32> to vector<8x128xf32>
    %529 = vector.extract_strided_slice %527 {offsets = [0, 128], sizes = [8, 128], strides = [1, 1]} : vector<8x256xf32> to vector<8x128xf32>
    %530 = vector.extract_strided_slice %517 {offsets = [0, 256], sizes = [8, 128], strides = [1, 1]} : vector<8x384xf32> to vector<8x128xf32>
    %531 = vector.extract_strided_slice %519 {offsets = [0, 256], sizes = [8, 128], strides = [1, 1]} : vector<8x384xf32> to vector<8x128xf32>
    %532 = arith.addf %531, %351 : vector<8x128xf32>
    %533 = arith.mulf %528, %532 : vector<8x128xf32>
    %534 = arith.addf %530, %533 : vector<8x128xf32>
    %535 = math.tanh %534 : vector<8x128xf32>
    %cst_267 = arith.constant 1.000000e+00 : f32
    %536 = vector.broadcast %cst_267 : f32 to vector<8x128xf32>
    %537 = arith.subf %536, %529 : vector<8x128xf32>
    %538 = arith.mulf %537, %535 : vector<8x128xf32>
    %539 = arith.mulf %529, %513 : vector<8x128xf32>
    %540 = arith.addf %538, %539 : vector<8x128xf32>
    %c48_268 = arith.constant 48 : index
    %c0_269 = arith.constant 0 : index
    %541 = vector.load %arg20[%c48_268, %c0_269] : memref<64x128xf32, #tpu.memory_space<vmem>>, vector<8x128xf32>
    tpu.vector_store %arg20[%c48_268, %c0_269], %540 {strides = array<i32>} : memref<64x128xf32, #tpu.memory_space<vmem>>, vector<8x128xf32>,
    %c56_270 = arith.constant 56 : index
    %c0_271 = arith.constant 0 : index
    %542 = vector.load %arg18[%c56_270, %c0_271] : memref<64x384xf32, #tpu.memory_space<vmem>>, vector<8x384xf32>
    %c0_272 = arith.constant 0 : index
    %c0_273 = arith.constant 0 : index
    %543 = vector.load %arg19[%c0_272, %c0_273] : memref<64x384xf32, #tpu.memory_space<vmem>>, vector<8x384xf32>
    %544 = arith.addf %542, %543 : vector<8x384xf32>
    %545 = arith.truncf %540 : vector<8x128xf32> to vector<8x128xbf16>
    %cst_274 = arith.constant dense<0.000000e+00> : vector<8x384xf32>
    %546 = tpu.matmul %545, %348, %cst_274 {dimension_numbers = #tpu.dot_dimension_numbers<[1], [0], [0], [1], [0, 0, 1, 1], [], []>} : vector<8x128xbf16>, vector<128x384xbf16>, vector<8x384xf32> -> vector<8x384xf32>
    %547 = vector.extract_strided_slice %544 {offsets = [0, 0], sizes = [8, 256], strides = [1, 1]} : vector<8x384xf32> to vector<8x256xf32>
    %548 = vector.extract_strided_slice %546 {offsets = [0, 0], sizes = [8, 256], strides = [1, 1]} : vector<8x384xf32> to vector<8x256xf32>
    %549 = arith.addf %547, %548 : vector<8x256xf32>
    %550 = arith.negf %549 : vector<8x256xf32>
    %551 = math.exp %550 : vector<8x256xf32>
    %cst_275 = arith.constant 1.000000e+00 : f32
    %552 = vector.broadcast %cst_275 : f32 to vector<8x256xf32>
    %553 = arith.addf %552, %551 : vector<8x256xf32>
    %554 = arith.divf %552, %553 : vector<8x256xf32>
    %555 = vector.extract_strided_slice %554 {offsets = [0, 0], sizes = [8, 128], strides = [1, 1]} : vector<8x256xf32> to vector<8x128xf32>
    %556 = vector.extract_strided_slice %554 {offsets = [0, 128], sizes = [8, 128], strides = [1, 1]} : vector<8x256xf32> to vector<8x128xf32>
    %557 = vector.extract_strided_slice %544 {offsets = [0, 256], sizes = [8, 128], strides = [1, 1]} : vector<8x384xf32> to vector<8x128xf32>
    %558 = vector.extract_strided_slice %546 {offsets = [0, 256], sizes = [8, 128], strides = [1, 1]} : vector<8x384xf32> to vector<8x128xf32>
    %559 = arith.addf %558, %351 : vector<8x128xf32>
    %560 = arith.mulf %555, %559 : vector<8x128xf32>
    %561 = arith.addf %557, %560 : vector<8x128xf32>
    %562 = math.tanh %561 : vector<8x128xf32>
    %cst_276 = arith.constant 1.000000e+00 : f32
    %563 = vector.broadcast %cst_276 : f32 to vector<8x128xf32>
    %564 = arith.subf %563, %556 : vector<8x128xf32>
    %565 = arith.mulf %564, %562 : vector<8x128xf32>
    %566 = arith.mulf %556, %540 : vector<8x128xf32>
    %567 = arith.addf %565, %566 : vector<8x128xf32>
    %c56_277 = arith.constant 56 : index
    %c0_278 = arith.constant 0 : index
    %568 = vector.load %arg20[%c56_277, %c0_278] : memref<64x128xf32, #tpu.memory_space<vmem>>, vector<8x128xf32>
    tpu.vector_store %arg20[%c56_277, %c0_278], %567 {strides = array<i32>} : memref<64x128xf32, #tpu.memory_space<vmem>>, vector<8x128xf32>,
    %c0_279 = arith.constant 0 : index
    %c0_280 = arith.constant 0 : index
    %569 = vector.load %arg20[%c0_279, %c0_280] : memref<64x128xf32, #tpu.memory_space<vmem>>, vector<64x128xf32>
    %570 = arith.truncf %569 : vector<64x128xf32> to vector<64x128xbf16>
    %c0_281 = arith.constant 0 : index
    %c0_282 = arith.constant 0 : index
    %571 = vector.load %arg10[%c0_281, %c0_282] : memref<128x384xbf16, #tpu.memory_space<vmem>>, vector<128x384xbf16>
    %cst_283 = arith.constant dense<0.000000e+00> : vector<64x384xf32>
    %572 = tpu.matmul %570, %571, %cst_283 {dimension_numbers = #tpu.dot_dimension_numbers<[1], [0], [0], [1], [0, 0, 1, 1], [], []>} : vector<64x128xbf16>, vector<128x384xbf16>, vector<64x384xf32> -> vector<64x384xf32>
    %c0_284 = arith.constant 0 : index
    %c0_285 = arith.constant 0 : index
    %573 = vector.load %arg12[%c0_284, %c0_285] : memref<1x384xf32, #tpu.memory_space<vmem>>, vector<1x384xf32>
    %574 = vector.broadcast %573 : vector<1x384xf32> to vector<64x384xf32>
    %575 = arith.addf %572, %574 : vector<64x384xf32>
    %c0_286 = arith.constant 0 : index
    %c0_287 = arith.constant 0 : index
    %576 = vector.load %arg18[%c0_286, %c0_287] : memref<64x384xf32, #tpu.memory_space<vmem>>, vector<64x384xf32>
    tpu.vector_store %arg18[%c0_286, %c0_287], %575 {strides = array<i32>} : memref<64x384xf32, #tpu.memory_space<vmem>>, vector<64x384xf32>,
    %c0_288 = arith.constant 0 : index
    %c0_289 = arith.constant 0 : index
    %577 = vector.load %arg11[%c0_288, %c0_289] : memref<128x384xbf16, #tpu.memory_space<vmem>>, vector<128x384xbf16>
    %cst_290 = arith.constant dense<0.000000e+00> : vector<64x384xf32>
    %578 = tpu.matmul %570, %577, %cst_290 {dimension_numbers = #tpu.dot_dimension_numbers<[1], [0], [0], [1], [0, 0, 1, 1], [], []>} : vector<64x128xbf16>, vector<128x384xbf16>, vector<64x384xf32> -> vector<64x384xf32>
    %c0_291 = arith.constant 0 : index
    %c0_292 = arith.constant 0 : index
    %579 = vector.load %arg19[%c0_291, %c0_292] : memref<64x384xf32, #tpu.memory_space<vmem>>, vector<64x384xf32>
    tpu.vector_store %arg19[%c0_291, %c0_292], %578 {strides = array<i32>} : memref<64x384xf32, #tpu.memory_space<vmem>>, vector<64x384xf32>,
    %c0_293 = arith.constant 0 : index
    %c0_294 = arith.constant 0 : index
    %580 = vector.load %arg13[%c0_293, %c0_294] : memref<128x384xbf16, #tpu.memory_space<vmem>>, vector<128x384xbf16>
    %c0_295 = arith.constant 0 : index
    %c0_296 = arith.constant 0 : index
    %581 = vector.load %arg14[%c0_295, %c0_296] : memref<1x128xf32, #tpu.memory_space<vmem>>, vector<1x128xf32>
    %582 = vector.shape_cast %581 : vector<1x128xf32> to vector<1x128xf32>
    %583 = vector.broadcast %582 : vector<1x128xf32> to vector<8x128xf32>
    %cst_297 = arith.constant 0.000000e+00 : f32
    %584 = vector.broadcast %cst_297 : f32 to vector<8x128xf32>
    %c0_298 = arith.constant 0 : index
    %c0_299 = arith.constant 0 : index
    %585 = vector.load %arg18[%c0_298, %c0_299] : memref<64x384xf32, #tpu.memory_space<vmem>>, vector<8x384xf32>
    %c56_300 = arith.constant 56 : index
    %c0_301 = arith.constant 0 : index
    %586 = vector.load %arg19[%c56_300, %c0_301] : memref<64x384xf32, #tpu.memory_space<vmem>>, vector<8x384xf32>
    %587 = arith.addf %585, %586 : vector<8x384xf32>
    %588 = arith.truncf %584 : vector<8x128xf32> to vector<8x128xbf16>
    %cst_302 = arith.constant dense<0.000000e+00> : vector<8x384xf32>
    %589 = tpu.matmul %588, %580, %cst_302 {dimension_numbers = #tpu.dot_dimension_numbers<[1], [0], [0], [1], [0, 0, 1, 1], [], []>} : vector<8x128xbf16>, vector<128x384xbf16>, vector<8x384xf32> -> vector<8x384xf32>
    %590 = vector.extract_strided_slice %587 {offsets = [0, 0], sizes = [8, 256], strides = [1, 1]} : vector<8x384xf32> to vector<8x256xf32>
    %591 = vector.extract_strided_slice %589 {offsets = [0, 0], sizes = [8, 256], strides = [1, 1]} : vector<8x384xf32> to vector<8x256xf32>
    %592 = arith.addf %590, %591 : vector<8x256xf32>
    %593 = arith.negf %592 : vector<8x256xf32>
    %594 = math.exp %593 : vector<8x256xf32>
    %cst_303 = arith.constant 1.000000e+00 : f32
    %595 = vector.broadcast %cst_303 : f32 to vector<8x256xf32>
    %596 = arith.addf %595, %594 : vector<8x256xf32>
    %597 = arith.divf %595, %596 : vector<8x256xf32>
    %598 = vector.extract_strided_slice %597 {offsets = [0, 0], sizes = [8, 128], strides = [1, 1]} : vector<8x256xf32> to vector<8x128xf32>
    %599 = vector.extract_strided_slice %597 {offsets = [0, 128], sizes = [8, 128], strides = [1, 1]} : vector<8x256xf32> to vector<8x128xf32>
    %600 = vector.extract_strided_slice %587 {offsets = [0, 256], sizes = [8, 128], strides = [1, 1]} : vector<8x384xf32> to vector<8x128xf32>
    %601 = vector.extract_strided_slice %589 {offsets = [0, 256], sizes = [8, 128], strides = [1, 1]} : vector<8x384xf32> to vector<8x128xf32>
    %602 = arith.addf %601, %583 : vector<8x128xf32>
    %603 = arith.mulf %598, %602 : vector<8x128xf32>
    %604 = arith.addf %600, %603 : vector<8x128xf32>
    %605 = math.tanh %604 : vector<8x128xf32>
    %cst_304 = arith.constant 1.000000e+00 : f32
    %606 = vector.broadcast %cst_304 : f32 to vector<8x128xf32>
    %607 = arith.subf %606, %599 : vector<8x128xf32>
    %608 = arith.mulf %607, %605 : vector<8x128xf32>
    %609 = arith.mulf %599, %584 : vector<8x128xf32>
    %610 = arith.addf %608, %609 : vector<8x128xf32>
    %c0_305 = arith.constant 0 : index
    %c0_306 = arith.constant 0 : index
    %611 = vector.load %arg20[%c0_305, %c0_306] : memref<64x128xf32, #tpu.memory_space<vmem>>, vector<8x128xf32>
    tpu.vector_store %arg20[%c0_305, %c0_306], %610 {strides = array<i32>} : memref<64x128xf32, #tpu.memory_space<vmem>>, vector<8x128xf32>,
    %c8_307 = arith.constant 8 : index
    %c0_308 = arith.constant 0 : index
    %612 = vector.load %arg18[%c8_307, %c0_308] : memref<64x384xf32, #tpu.memory_space<vmem>>, vector<8x384xf32>
    %c48_309 = arith.constant 48 : index
    %c0_310 = arith.constant 0 : index
    %613 = vector.load %arg19[%c48_309, %c0_310] : memref<64x384xf32, #tpu.memory_space<vmem>>, vector<8x384xf32>
    %614 = arith.addf %612, %613 : vector<8x384xf32>
    %615 = arith.truncf %610 : vector<8x128xf32> to vector<8x128xbf16>
    %cst_311 = arith.constant dense<0.000000e+00> : vector<8x384xf32>
    %616 = tpu.matmul %615, %580, %cst_311 {dimension_numbers = #tpu.dot_dimension_numbers<[1], [0], [0], [1], [0, 0, 1, 1], [], []>} : vector<8x128xbf16>, vector<128x384xbf16>, vector<8x384xf32> -> vector<8x384xf32>
    %617 = vector.extract_strided_slice %614 {offsets = [0, 0], sizes = [8, 256], strides = [1, 1]} : vector<8x384xf32> to vector<8x256xf32>
    %618 = vector.extract_strided_slice %616 {offsets = [0, 0], sizes = [8, 256], strides = [1, 1]} : vector<8x384xf32> to vector<8x256xf32>
    %619 = arith.addf %617, %618 : vector<8x256xf32>
    %620 = arith.negf %619 : vector<8x256xf32>
    %621 = math.exp %620 : vector<8x256xf32>
    %cst_312 = arith.constant 1.000000e+00 : f32
    %622 = vector.broadcast %cst_312 : f32 to vector<8x256xf32>
    %623 = arith.addf %622, %621 : vector<8x256xf32>
    %624 = arith.divf %622, %623 : vector<8x256xf32>
    %625 = vector.extract_strided_slice %624 {offsets = [0, 0], sizes = [8, 128], strides = [1, 1]} : vector<8x256xf32> to vector<8x128xf32>
    %626 = vector.extract_strided_slice %624 {offsets = [0, 128], sizes = [8, 128], strides = [1, 1]} : vector<8x256xf32> to vector<8x128xf32>
    %627 = vector.extract_strided_slice %614 {offsets = [0, 256], sizes = [8, 128], strides = [1, 1]} : vector<8x384xf32> to vector<8x128xf32>
    %628 = vector.extract_strided_slice %616 {offsets = [0, 256], sizes = [8, 128], strides = [1, 1]} : vector<8x384xf32> to vector<8x128xf32>
    %629 = arith.addf %628, %583 : vector<8x128xf32>
    %630 = arith.mulf %625, %629 : vector<8x128xf32>
    %631 = arith.addf %627, %630 : vector<8x128xf32>
    %632 = math.tanh %631 : vector<8x128xf32>
    %cst_313 = arith.constant 1.000000e+00 : f32
    %633 = vector.broadcast %cst_313 : f32 to vector<8x128xf32>
    %634 = arith.subf %633, %626 : vector<8x128xf32>
    %635 = arith.mulf %634, %632 : vector<8x128xf32>
    %636 = arith.mulf %626, %610 : vector<8x128xf32>
    %637 = arith.addf %635, %636 : vector<8x128xf32>
    %c8_314 = arith.constant 8 : index
    %c0_315 = arith.constant 0 : index
    %638 = vector.load %arg20[%c8_314, %c0_315] : memref<64x128xf32, #tpu.memory_space<vmem>>, vector<8x128xf32>
    tpu.vector_store %arg20[%c8_314, %c0_315], %637 {strides = array<i32>} : memref<64x128xf32, #tpu.memory_space<vmem>>, vector<8x128xf32>,
    %c16_316 = arith.constant 16 : index
    %c0_317 = arith.constant 0 : index
    %639 = vector.load %arg18[%c16_316, %c0_317] : memref<64x384xf32, #tpu.memory_space<vmem>>, vector<8x384xf32>
    %c40_318 = arith.constant 40 : index
    %c0_319 = arith.constant 0 : index
    %640 = vector.load %arg19[%c40_318, %c0_319] : memref<64x384xf32, #tpu.memory_space<vmem>>, vector<8x384xf32>
    %641 = arith.addf %639, %640 : vector<8x384xf32>
    %642 = arith.truncf %637 : vector<8x128xf32> to vector<8x128xbf16>
    %cst_320 = arith.constant dense<0.000000e+00> : vector<8x384xf32>
    %643 = tpu.matmul %642, %580, %cst_320 {dimension_numbers = #tpu.dot_dimension_numbers<[1], [0], [0], [1], [0, 0, 1, 1], [], []>} : vector<8x128xbf16>, vector<128x384xbf16>, vector<8x384xf32> -> vector<8x384xf32>
    %644 = vector.extract_strided_slice %641 {offsets = [0, 0], sizes = [8, 256], strides = [1, 1]} : vector<8x384xf32> to vector<8x256xf32>
    %645 = vector.extract_strided_slice %643 {offsets = [0, 0], sizes = [8, 256], strides = [1, 1]} : vector<8x384xf32> to vector<8x256xf32>
    %646 = arith.addf %644, %645 : vector<8x256xf32>
    %647 = arith.negf %646 : vector<8x256xf32>
    %648 = math.exp %647 : vector<8x256xf32>
    %cst_321 = arith.constant 1.000000e+00 : f32
    %649 = vector.broadcast %cst_321 : f32 to vector<8x256xf32>
    %650 = arith.addf %649, %648 : vector<8x256xf32>
    %651 = arith.divf %649, %650 : vector<8x256xf32>
    %652 = vector.extract_strided_slice %651 {offsets = [0, 0], sizes = [8, 128], strides = [1, 1]} : vector<8x256xf32> to vector<8x128xf32>
    %653 = vector.extract_strided_slice %651 {offsets = [0, 128], sizes = [8, 128], strides = [1, 1]} : vector<8x256xf32> to vector<8x128xf32>
    %654 = vector.extract_strided_slice %641 {offsets = [0, 256], sizes = [8, 128], strides = [1, 1]} : vector<8x384xf32> to vector<8x128xf32>
    %655 = vector.extract_strided_slice %643 {offsets = [0, 256], sizes = [8, 128], strides = [1, 1]} : vector<8x384xf32> to vector<8x128xf32>
    %656 = arith.addf %655, %583 : vector<8x128xf32>
    %657 = arith.mulf %652, %656 : vector<8x128xf32>
    %658 = arith.addf %654, %657 : vector<8x128xf32>
    %659 = math.tanh %658 : vector<8x128xf32>
    %cst_322 = arith.constant 1.000000e+00 : f32
    %660 = vector.broadcast %cst_322 : f32 to vector<8x128xf32>
    %661 = arith.subf %660, %653 : vector<8x128xf32>
    %662 = arith.mulf %661, %659 : vector<8x128xf32>
    %663 = arith.mulf %653, %637 : vector<8x128xf32>
    %664 = arith.addf %662, %663 : vector<8x128xf32>
    %c16_323 = arith.constant 16 : index
    %c0_324 = arith.constant 0 : index
    %665 = vector.load %arg20[%c16_323, %c0_324] : memref<64x128xf32, #tpu.memory_space<vmem>>, vector<8x128xf32>
    tpu.vector_store %arg20[%c16_323, %c0_324], %664 {strides = array<i32>} : memref<64x128xf32, #tpu.memory_space<vmem>>, vector<8x128xf32>,
    %c24_325 = arith.constant 24 : index
    %c0_326 = arith.constant 0 : index
    %666 = vector.load %arg18[%c24_325, %c0_326] : memref<64x384xf32, #tpu.memory_space<vmem>>, vector<8x384xf32>
    %c32_327 = arith.constant 32 : index
    %c0_328 = arith.constant 0 : index
    %667 = vector.load %arg19[%c32_327, %c0_328] : memref<64x384xf32, #tpu.memory_space<vmem>>, vector<8x384xf32>
    %668 = arith.addf %666, %667 : vector<8x384xf32>
    %669 = arith.truncf %664 : vector<8x128xf32> to vector<8x128xbf16>
    %cst_329 = arith.constant dense<0.000000e+00> : vector<8x384xf32>
    %670 = tpu.matmul %669, %580, %cst_329 {dimension_numbers = #tpu.dot_dimension_numbers<[1], [0], [0], [1], [0, 0, 1, 1], [], []>} : vector<8x128xbf16>, vector<128x384xbf16>, vector<8x384xf32> -> vector<8x384xf32>
    %671 = vector.extract_strided_slice %668 {offsets = [0, 0], sizes = [8, 256], strides = [1, 1]} : vector<8x384xf32> to vector<8x256xf32>
    %672 = vector.extract_strided_slice %670 {offsets = [0, 0], sizes = [8, 256], strides = [1, 1]} : vector<8x384xf32> to vector<8x256xf32>
    %673 = arith.addf %671, %672 : vector<8x256xf32>
    %674 = arith.negf %673 : vector<8x256xf32>
    %675 = math.exp %674 : vector<8x256xf32>
    %cst_330 = arith.constant 1.000000e+00 : f32
    %676 = vector.broadcast %cst_330 : f32 to vector<8x256xf32>
    %677 = arith.addf %676, %675 : vector<8x256xf32>
    %678 = arith.divf %676, %677 : vector<8x256xf32>
    %679 = vector.extract_strided_slice %678 {offsets = [0, 0], sizes = [8, 128], strides = [1, 1]} : vector<8x256xf32> to vector<8x128xf32>
    %680 = vector.extract_strided_slice %678 {offsets = [0, 128], sizes = [8, 128], strides = [1, 1]} : vector<8x256xf32> to vector<8x128xf32>
    %681 = vector.extract_strided_slice %668 {offsets = [0, 256], sizes = [8, 128], strides = [1, 1]} : vector<8x384xf32> to vector<8x128xf32>
    %682 = vector.extract_strided_slice %670 {offsets = [0, 256], sizes = [8, 128], strides = [1, 1]} : vector<8x384xf32> to vector<8x128xf32>
    %683 = arith.addf %682, %583 : vector<8x128xf32>
    %684 = arith.mulf %679, %683 : vector<8x128xf32>
    %685 = arith.addf %681, %684 : vector<8x128xf32>
    %686 = math.tanh %685 : vector<8x128xf32>
    %cst_331 = arith.constant 1.000000e+00 : f32
    %687 = vector.broadcast %cst_331 : f32 to vector<8x128xf32>
    %688 = arith.subf %687, %680 : vector<8x128xf32>
    %689 = arith.mulf %688, %686 : vector<8x128xf32>
    %690 = arith.mulf %680, %664 : vector<8x128xf32>
    %691 = arith.addf %689, %690 : vector<8x128xf32>
    %c24_332 = arith.constant 24 : index
    %c0_333 = arith.constant 0 : index
    %692 = vector.load %arg20[%c24_332, %c0_333] : memref<64x128xf32, #tpu.memory_space<vmem>>, vector<8x128xf32>
    tpu.vector_store %arg20[%c24_332, %c0_333], %691 {strides = array<i32>} : memref<64x128xf32, #tpu.memory_space<vmem>>, vector<8x128xf32>,
    %c32_334 = arith.constant 32 : index
    %c0_335 = arith.constant 0 : index
    %693 = vector.load %arg18[%c32_334, %c0_335] : memref<64x384xf32, #tpu.memory_space<vmem>>, vector<8x384xf32>
    %c24_336 = arith.constant 24 : index
    %c0_337 = arith.constant 0 : index
    %694 = vector.load %arg19[%c24_336, %c0_337] : memref<64x384xf32, #tpu.memory_space<vmem>>, vector<8x384xf32>
    %695 = arith.addf %693, %694 : vector<8x384xf32>
    %696 = arith.truncf %691 : vector<8x128xf32> to vector<8x128xbf16>
    %cst_338 = arith.constant dense<0.000000e+00> : vector<8x384xf32>
    %697 = tpu.matmul %696, %580, %cst_338 {dimension_numbers = #tpu.dot_dimension_numbers<[1], [0], [0], [1], [0, 0, 1, 1], [], []>} : vector<8x128xbf16>, vector<128x384xbf16>, vector<8x384xf32> -> vector<8x384xf32>
    %698 = vector.extract_strided_slice %695 {offsets = [0, 0], sizes = [8, 256], strides = [1, 1]} : vector<8x384xf32> to vector<8x256xf32>
    %699 = vector.extract_strided_slice %697 {offsets = [0, 0], sizes = [8, 256], strides = [1, 1]} : vector<8x384xf32> to vector<8x256xf32>
    %700 = arith.addf %698, %699 : vector<8x256xf32>
    %701 = arith.negf %700 : vector<8x256xf32>
    %702 = math.exp %701 : vector<8x256xf32>
    %cst_339 = arith.constant 1.000000e+00 : f32
    %703 = vector.broadcast %cst_339 : f32 to vector<8x256xf32>
    %704 = arith.addf %703, %702 : vector<8x256xf32>
    %705 = arith.divf %703, %704 : vector<8x256xf32>
    %706 = vector.extract_strided_slice %705 {offsets = [0, 0], sizes = [8, 128], strides = [1, 1]} : vector<8x256xf32> to vector<8x128xf32>
    %707 = vector.extract_strided_slice %705 {offsets = [0, 128], sizes = [8, 128], strides = [1, 1]} : vector<8x256xf32> to vector<8x128xf32>
    %708 = vector.extract_strided_slice %695 {offsets = [0, 256], sizes = [8, 128], strides = [1, 1]} : vector<8x384xf32> to vector<8x128xf32>
    %709 = vector.extract_strided_slice %697 {offsets = [0, 256], sizes = [8, 128], strides = [1, 1]} : vector<8x384xf32> to vector<8x128xf32>
    %710 = arith.addf %709, %583 : vector<8x128xf32>
    %711 = arith.mulf %706, %710 : vector<8x128xf32>
    %712 = arith.addf %708, %711 : vector<8x128xf32>
    %713 = math.tanh %712 : vector<8x128xf32>
    %cst_340 = arith.constant 1.000000e+00 : f32
    %714 = vector.broadcast %cst_340 : f32 to vector<8x128xf32>
    %715 = arith.subf %714, %707 : vector<8x128xf32>
    %716 = arith.mulf %715, %713 : vector<8x128xf32>
    %717 = arith.mulf %707, %691 : vector<8x128xf32>
    %718 = arith.addf %716, %717 : vector<8x128xf32>
    %c32_341 = arith.constant 32 : index
    %c0_342 = arith.constant 0 : index
    %719 = vector.load %arg20[%c32_341, %c0_342] : memref<64x128xf32, #tpu.memory_space<vmem>>, vector<8x128xf32>
    tpu.vector_store %arg20[%c32_341, %c0_342], %718 {strides = array<i32>} : memref<64x128xf32, #tpu.memory_space<vmem>>, vector<8x128xf32>,
    %c40_343 = arith.constant 40 : index
    %c0_344 = arith.constant 0 : index
    %720 = vector.load %arg18[%c40_343, %c0_344] : memref<64x384xf32, #tpu.memory_space<vmem>>, vector<8x384xf32>
    %c16_345 = arith.constant 16 : index
    %c0_346 = arith.constant 0 : index
    %721 = vector.load %arg19[%c16_345, %c0_346] : memref<64x384xf32, #tpu.memory_space<vmem>>, vector<8x384xf32>
    %722 = arith.addf %720, %721 : vector<8x384xf32>
    %723 = arith.truncf %718 : vector<8x128xf32> to vector<8x128xbf16>
    %cst_347 = arith.constant dense<0.000000e+00> : vector<8x384xf32>
    %724 = tpu.matmul %723, %580, %cst_347 {dimension_numbers = #tpu.dot_dimension_numbers<[1], [0], [0], [1], [0, 0, 1, 1], [], []>} : vector<8x128xbf16>, vector<128x384xbf16>, vector<8x384xf32> -> vector<8x384xf32>
    %725 = vector.extract_strided_slice %722 {offsets = [0, 0], sizes = [8, 256], strides = [1, 1]} : vector<8x384xf32> to vector<8x256xf32>
    %726 = vector.extract_strided_slice %724 {offsets = [0, 0], sizes = [8, 256], strides = [1, 1]} : vector<8x384xf32> to vector<8x256xf32>
    %727 = arith.addf %725, %726 : vector<8x256xf32>
    %728 = arith.negf %727 : vector<8x256xf32>
    %729 = math.exp %728 : vector<8x256xf32>
    %cst_348 = arith.constant 1.000000e+00 : f32
    %730 = vector.broadcast %cst_348 : f32 to vector<8x256xf32>
    %731 = arith.addf %730, %729 : vector<8x256xf32>
    %732 = arith.divf %730, %731 : vector<8x256xf32>
    %733 = vector.extract_strided_slice %732 {offsets = [0, 0], sizes = [8, 128], strides = [1, 1]} : vector<8x256xf32> to vector<8x128xf32>
    %734 = vector.extract_strided_slice %732 {offsets = [0, 128], sizes = [8, 128], strides = [1, 1]} : vector<8x256xf32> to vector<8x128xf32>
    %735 = vector.extract_strided_slice %722 {offsets = [0, 256], sizes = [8, 128], strides = [1, 1]} : vector<8x384xf32> to vector<8x128xf32>
    %736 = vector.extract_strided_slice %724 {offsets = [0, 256], sizes = [8, 128], strides = [1, 1]} : vector<8x384xf32> to vector<8x128xf32>
    %737 = arith.addf %736, %583 : vector<8x128xf32>
    %738 = arith.mulf %733, %737 : vector<8x128xf32>
    %739 = arith.addf %735, %738 : vector<8x128xf32>
    %740 = math.tanh %739 : vector<8x128xf32>
    %cst_349 = arith.constant 1.000000e+00 : f32
    %741 = vector.broadcast %cst_349 : f32 to vector<8x128xf32>
    %742 = arith.subf %741, %734 : vector<8x128xf32>
    %743 = arith.mulf %742, %740 : vector<8x128xf32>
    %744 = arith.mulf %734, %718 : vector<8x128xf32>
    %745 = arith.addf %743, %744 : vector<8x128xf32>
    %c40_350 = arith.constant 40 : index
    %c0_351 = arith.constant 0 : index
    %746 = vector.load %arg20[%c40_350, %c0_351] : memref<64x128xf32, #tpu.memory_space<vmem>>, vector<8x128xf32>
    tpu.vector_store %arg20[%c40_350, %c0_351], %745 {strides = array<i32>} : memref<64x128xf32, #tpu.memory_space<vmem>>, vector<8x128xf32>,
    %c48_352 = arith.constant 48 : index
    %c0_353 = arith.constant 0 : index
    %747 = vector.load %arg18[%c48_352, %c0_353] : memref<64x384xf32, #tpu.memory_space<vmem>>, vector<8x384xf32>
    %c8_354 = arith.constant 8 : index
    %c0_355 = arith.constant 0 : index
    %748 = vector.load %arg19[%c8_354, %c0_355] : memref<64x384xf32, #tpu.memory_space<vmem>>, vector<8x384xf32>
    %749 = arith.addf %747, %748 : vector<8x384xf32>
    %750 = arith.truncf %745 : vector<8x128xf32> to vector<8x128xbf16>
    %cst_356 = arith.constant dense<0.000000e+00> : vector<8x384xf32>
    %751 = tpu.matmul %750, %580, %cst_356 {dimension_numbers = #tpu.dot_dimension_numbers<[1], [0], [0], [1], [0, 0, 1, 1], [], []>} : vector<8x128xbf16>, vector<128x384xbf16>, vector<8x384xf32> -> vector<8x384xf32>
    %752 = vector.extract_strided_slice %749 {offsets = [0, 0], sizes = [8, 256], strides = [1, 1]} : vector<8x384xf32> to vector<8x256xf32>
    %753 = vector.extract_strided_slice %751 {offsets = [0, 0], sizes = [8, 256], strides = [1, 1]} : vector<8x384xf32> to vector<8x256xf32>
    %754 = arith.addf %752, %753 : vector<8x256xf32>
    %755 = arith.negf %754 : vector<8x256xf32>
    %756 = math.exp %755 : vector<8x256xf32>
    %cst_357 = arith.constant 1.000000e+00 : f32
    %757 = vector.broadcast %cst_357 : f32 to vector<8x256xf32>
    %758 = arith.addf %757, %756 : vector<8x256xf32>
    %759 = arith.divf %757, %758 : vector<8x256xf32>
    %760 = vector.extract_strided_slice %759 {offsets = [0, 0], sizes = [8, 128], strides = [1, 1]} : vector<8x256xf32> to vector<8x128xf32>
    %761 = vector.extract_strided_slice %759 {offsets = [0, 128], sizes = [8, 128], strides = [1, 1]} : vector<8x256xf32> to vector<8x128xf32>
    %762 = vector.extract_strided_slice %749 {offsets = [0, 256], sizes = [8, 128], strides = [1, 1]} : vector<8x384xf32> to vector<8x128xf32>
    %763 = vector.extract_strided_slice %751 {offsets = [0, 256], sizes = [8, 128], strides = [1, 1]} : vector<8x384xf32> to vector<8x128xf32>
    %764 = arith.addf %763, %583 : vector<8x128xf32>
    %765 = arith.mulf %760, %764 : vector<8x128xf32>
    %766 = arith.addf %762, %765 : vector<8x128xf32>
    %767 = math.tanh %766 : vector<8x128xf32>
    %cst_358 = arith.constant 1.000000e+00 : f32
    %768 = vector.broadcast %cst_358 : f32 to vector<8x128xf32>
    %769 = arith.subf %768, %761 : vector<8x128xf32>
    %770 = arith.mulf %769, %767 : vector<8x128xf32>
    %771 = arith.mulf %761, %745 : vector<8x128xf32>
    %772 = arith.addf %770, %771 : vector<8x128xf32>
    %c48_359 = arith.constant 48 : index
    %c0_360 = arith.constant 0 : index
    %773 = vector.load %arg20[%c48_359, %c0_360] : memref<64x128xf32, #tpu.memory_space<vmem>>, vector<8x128xf32>
    tpu.vector_store %arg20[%c48_359, %c0_360], %772 {strides = array<i32>} : memref<64x128xf32, #tpu.memory_space<vmem>>, vector<8x128xf32>,
    %c56_361 = arith.constant 56 : index
    %c0_362 = arith.constant 0 : index
    %774 = vector.load %arg18[%c56_361, %c0_362] : memref<64x384xf32, #tpu.memory_space<vmem>>, vector<8x384xf32>
    %c0_363 = arith.constant 0 : index
    %c0_364 = arith.constant 0 : index
    %775 = vector.load %arg19[%c0_363, %c0_364] : memref<64x384xf32, #tpu.memory_space<vmem>>, vector<8x384xf32>
    %776 = arith.addf %774, %775 : vector<8x384xf32>
    %777 = arith.truncf %772 : vector<8x128xf32> to vector<8x128xbf16>
    %cst_365 = arith.constant dense<0.000000e+00> : vector<8x384xf32>
    %778 = tpu.matmul %777, %580, %cst_365 {dimension_numbers = #tpu.dot_dimension_numbers<[1], [0], [0], [1], [0, 0, 1, 1], [], []>} : vector<8x128xbf16>, vector<128x384xbf16>, vector<8x384xf32> -> vector<8x384xf32>
    %779 = vector.extract_strided_slice %776 {offsets = [0, 0], sizes = [8, 256], strides = [1, 1]} : vector<8x384xf32> to vector<8x256xf32>
    %780 = vector.extract_strided_slice %778 {offsets = [0, 0], sizes = [8, 256], strides = [1, 1]} : vector<8x384xf32> to vector<8x256xf32>
    %781 = arith.addf %779, %780 : vector<8x256xf32>
    %782 = arith.negf %781 : vector<8x256xf32>
    %783 = math.exp %782 : vector<8x256xf32>
    %cst_366 = arith.constant 1.000000e+00 : f32
    %784 = vector.broadcast %cst_366 : f32 to vector<8x256xf32>
    %785 = arith.addf %784, %783 : vector<8x256xf32>
    %786 = arith.divf %784, %785 : vector<8x256xf32>
    %787 = vector.extract_strided_slice %786 {offsets = [0, 0], sizes = [8, 128], strides = [1, 1]} : vector<8x256xf32> to vector<8x128xf32>
    %788 = vector.extract_strided_slice %786 {offsets = [0, 128], sizes = [8, 128], strides = [1, 1]} : vector<8x256xf32> to vector<8x128xf32>
    %789 = vector.extract_strided_slice %776 {offsets = [0, 256], sizes = [8, 128], strides = [1, 1]} : vector<8x384xf32> to vector<8x128xf32>
    %790 = vector.extract_strided_slice %778 {offsets = [0, 256], sizes = [8, 128], strides = [1, 1]} : vector<8x384xf32> to vector<8x128xf32>
    %791 = arith.addf %790, %583 : vector<8x128xf32>
    %792 = arith.mulf %787, %791 : vector<8x128xf32>
    %793 = arith.addf %789, %792 : vector<8x128xf32>
    %794 = math.tanh %793 : vector<8x128xf32>
    %cst_367 = arith.constant 1.000000e+00 : f32
    %795 = vector.broadcast %cst_367 : f32 to vector<8x128xf32>
    %796 = arith.subf %795, %788 : vector<8x128xf32>
    %797 = arith.mulf %796, %794 : vector<8x128xf32>
    %798 = arith.mulf %788, %772 : vector<8x128xf32>
    %799 = arith.addf %797, %798 : vector<8x128xf32>
    %c56_368 = arith.constant 56 : index
    %c0_369 = arith.constant 0 : index
    %800 = vector.load %arg20[%c56_368, %c0_369] : memref<64x128xf32, #tpu.memory_space<vmem>>, vector<8x128xf32>
    tpu.vector_store %arg20[%c56_368, %c0_369], %799 {strides = array<i32>} : memref<64x128xf32, #tpu.memory_space<vmem>>, vector<8x128xf32>,
    %c0_370 = arith.constant 0 : index
    %c0_371 = arith.constant 0 : index
    %801 = vector.load %arg20[%c0_370, %c0_371] : memref<64x128xf32, #tpu.memory_space<vmem>>, vector<64x128xf32>
    %802 = vector.shape_cast %801 : vector<64x128xf32> to vector<8x8x128xf32>
    %cst_372 = arith.constant dense<0.000000e+00> : vector<8x128xf32>
    %803 = vector.multi_reduction <add>, %802, %cst_372 [0] : vector<8x8x128xf32> to vector<8x128xf32>
    %cst_373 = arith.constant 1.250000e-01 : f32
    %804 = vector.broadcast %cst_373 : f32 to vector<8x128xf32>
    %805 = arith.mulf %803, %804 : vector<8x128xf32>
    %c0_374 = arith.constant 0 : index
    %c0_375 = arith.constant 0 : index
    %806 = vector.load %arg15[%c0_374, %c0_375] : memref<1x128xf32, #tpu.memory_space<vmem>>, vector<1x128xf32>
    %807 = vector.broadcast %806 : vector<1x128xf32> to vector<8x128xf32>
    %808 = arith.mulf %805, %807 : vector<8x128xf32>
    %cst_376 = arith.constant dense<0.000000e+00> : vector<8xf32>
    %809 = vector.multi_reduction <add>, %808, %cst_376 [1] : vector<8x128xf32> to vector<8xf32>
    %810 = vector.shape_cast %809 : vector<8xf32> to vector<8x1xf32>
    %c0_377 = arith.constant 0 : index
    %c0_378 = arith.constant 0 : index
    %811 = vector.load %arg16[%c0_377, %c0_378] : memref<1x1xf32, #tpu.memory_space<vmem>>, vector<1x1xf32>
    %812 = vector.broadcast %811 : vector<1x1xf32> to vector<8x1xf32>
    %813 = arith.addf %810, %812 : vector<8x1xf32>
    %814 = vector.extract_strided_slice %813 {offsets = [0, 0], sizes = [2, 1], strides = [1, 1]} : vector<8x1xf32> to vector<2x1xf32>
    %c0_379 = arith.constant 0 : index
    %c0_380 = arith.constant 0 : index
    %815 = vector.load %arg17[%c0_379, %c0_380] : memref<2x1xf32, #tpu.memory_space<vmem>>, vector<2x1xf32>
    tpu.vector_store %arg17[%c0_379, %c0_380], %814 {strides = array<i32>} : memref<2x1xf32, #tpu.memory_space<vmem>>, vector<2x1xf32>,
    return
  }
}

</mosaic_0001>

<llo_original>
// kernel: rnn_forward.1
$region0: #{rnn_forward.1}
  #allocation0 [shape = 'u32[]', space=smem, size = 0x4, offset = 0x4, fixed_abs, tag = 'smem constant byte address 0x4 - core index']
  #allocation1 [shape = 'u32[144,128]{1,0:T(1,128)}', space=vmem, size = 0x12000, scoped, tag = 'internal scratch']
  #allocation2 [shape = 'f32[64,384]{1,0:T(8,128)}', space=vmem, size = 0x18000, scoped, tag = 'scratch operand']
  #allocation3 [shape = 'f32[64,384]{1,0:T(8,128)}', space=vmem, size = 0x18000, scoped, tag = 'scratch operand']
  #allocation4 [shape = 'f32[64,128]{1,0:T(8,128)}', space=vmem, size = 0x8000, scoped, tag = 'scratch operand']
  #allocation5 [shape = 'f32[1,1]{1,0:T(1,128)S(1)}', space=vmem, size = 0x200, scoped, tag = 'scoped memory for rnn_forward.1']
  %s0 = inlined_call_operand.hbm [shape: s32[2,8], index: 0, kind: input, shape index: {}]
  %s1 = inlined_call_operand.hbm [shape: f32[50,384], index: 1, kind: input, shape index: {}]
  %s2 = inlined_call_operand.hbm [shape: f32[50,384], index: 2, kind: input, shape index: {}]
  %s3 = inlined_call_operand.hbm [shape: bf16[128,384], index: 3, kind: input, shape index: {}]
  %s4 = inlined_call_operand.vmem [shape: f32[1,128], index: 4, kind: input, shape index: {}]
  %s5 = inlined_call_operand.hbm [shape: bf16[128,384], index: 5, kind: input, shape index: {}]
  %s6 = inlined_call_operand.hbm [shape: bf16[128,384], index: 6, kind: input, shape index: {}]
  %s7 = inlined_call_operand.vmem [shape: f32[1,384], index: 7, kind: input, shape index: {}]
  %s8 = inlined_call_operand.hbm [shape: bf16[128,384], index: 8, kind: input, shape index: {}]
  %s9 = inlined_call_operand.vmem [shape: f32[1,128], index: 9, kind: input, shape index: {}]
  %s10 = inlined_call_operand.hbm [shape: bf16[128,384], index: 10, kind: input, shape index: {}]
  %s11 = inlined_call_operand.hbm [shape: bf16[128,384], index: 11, kind: input, shape index: {}]
  %s12 = inlined_call_operand.vmem [shape: f32[1,384], index: 12, kind: input, shape index: {}]
  %s13 = inlined_call_operand.hbm [shape: bf16[128,384], index: 13, kind: input, shape index: {}]
  %s14 = inlined_call_operand.vmem [shape: f32[1,128], index: 14, kind: input, shape index: {}]
  %s15 = inlined_call_operand.vmem [shape: f32[1,128], index: 15, kind: input, shape index: {}]
  %s16 = inlined_call_operand.<no memory space> [shape: f32[1,1], index: 16, kind: input, shape index: {}]
  %s17 = inlined_call_operand.vmem [shape: f32[2,1], index: 17, kind: output, shape index: {}]
  %s18 = sld [smem:[#allocation0]]
  $region118: #{rnn_forward.1} parent=0
    _
  %s20 = ssub.s32 1, %s18
  %s21 = scalar_select 0, %s20, %s18
  %v22 = vstv %s16
  %23 = vst [vmem:[#allocation5] sm:$0x1] %v22
  $region1: #{rnn_forward.1} parent=0
    #allocation6 [shape = 'u8[1024]{0}', space=smem, size = 0x400, scoped, tag = 'input window, operand 0, single buffered']
    #allocation7 [shape = 's32[1]{0}', space=sflag, size = 0x4, scoped, tag = 'scoped memory for rnn_forward.1']
    #allocation8 [shape = 's32[1]{0}', space=sflag, size = 0x4, scoped, tag = 'scoped memory for rnn_forward.1']
    #allocation9 [shape = 'u8[86016]{0}', space=vmem, size = 0x15000, scoped, tag = 'input window, operand 1, single buffered']
    #allocation10 [shape = 'u8[86016]{0}', space=vmem, size = 0x15000, scoped, tag = 'input window, operand 2, single buffered']
    #allocation11 [shape = 's32[1]{0}', space=sflag, size = 0x4, scoped, tag = 'scoped memory for rnn_forward.1']
    #allocation12 [shape = 'u8[98304]{0}', space=vmem, size = 0x18000, scoped, tag = 'input window, operand 3, single buffered']
    #allocation13 [shape = 'u8[98304]{0}', space=vmem, size = 0x18000, scoped, tag = 'input window, operand 5, single buffered']
    #allocation14 [shape = 's32[1]{0}', space=sflag, size = 0x4, scoped, tag = 'scoped memory for rnn_forward.1']
    #allocation15 [shape = 'u8[98304]{0}', space=vmem, size = 0x18000, scoped, tag = 'input window, operand 6, single buffered']
    #allocation16 [shape = 'u8[98304]{0}', space=vmem, size = 0x18000, scoped, tag = 'input window, operand 8, single buffered']
    #allocation17 [shape = 's32[1]{0}', space=sflag, size = 0x4, scoped, tag = 'scoped memory for rnn_forward.1']
    #allocation18 [shape = 'u8[98304]{0}', space=vmem, size = 0x18000, scoped, tag = 'input window, operand 10, single buffered']
    #allocation19 [shape = 'u8[98304]{0}', space=vmem, size = 0x18000, scoped, tag = 'input window, operand 11, single buffered']
    #allocation20 [shape = 's32[1]{0}', space=sflag, size = 0x4, scoped, tag = 'scoped memory for rnn_forward.1']
    #allocation21 [shape = 'u8[98304]{0}', space=vmem, size = 0x18000, scoped, tag = 'input window, operand 13, single buffered']
    %24 = vsyncpa [#allocation8], 0
    %25 = vsyncpa [#allocation7], 0
    %26 = vsyncpa [#allocation11], 0
    %27 = vsyncpa [#allocation14], 0
    %28 = vsyncpa [#allocation17], 0
    %29 = vsyncpa [#allocation20], 0
    // Predicated region
    $region2: #{rnn_forward.1} parent=1 // pred_check
      _
    $region3: #{rnn_forward.1} parent=1 // pred_check_branch
      %31 = sbr.rel (0) target = $region5
    $region4: #{rnn_forward.1} parent=1 // pred_region
      %s33 = ssub.s32 32, 32
      %34 = vsyncadd [#allocation8], %s33
      %37 = dma.hbm_to_smem %s0, 32, [#allocation6], [#allocation8]
    $region5: #{rnn_forward.1} parent=1 // pred_fallthru
      _
    // Predicated region
    $region6: #{rnn_forward.1} parent=1 // pred_check
      _
    $region7: #{rnn_forward.1} parent=1 // pred_check_branch
      %39 = sbr.rel (0) target = $region9
    $region8: #{rnn_forward.1} parent=1 // pred_region
      %s41 = ssub.s32 2688, 2688
      %42 = vsyncadd [#allocation7], %s41
      %s43 = sshll.u32 [#allocation9], 4
      %s44 = int_to_ptr.vmem [resolvable:$true] %s43
      %49 = dma.hbm_to_vmem [thread:$0]  %s1, 2688, %s44, [#allocation7], 384, 384, 24
    $region9: #{rnn_forward.1} parent=1 // pred_fallthru
      _
    // Predicated region
    $region10: #{rnn_forward.1} parent=1 // pred_check
      _
    $region11: #{rnn_forward.1} parent=1 // pred_check_branch
      %51 = sbr.rel (0) target = $region13
    $region12: #{rnn_forward.1} parent=1 // pred_region
      %s53 = ssub.s32 2688, 2688
      %54 = vsyncadd [#allocation11], %s53
      %s55 = sshll.u32 [#allocation10], 4
      %s56 = int_to_ptr.vmem [resolvable:$true] %s55
      %61 = dma.hbm_to_vmem [thread:$0]  %s2, 2688, %s56, [#allocation11], 384, 384, 24
    $region13: #{rnn_forward.1} parent=1 // pred_fallthru
      _
    // Predicated region
    $region14: #{rnn_forward.1} parent=1 // pred_check
      _
    $region15: #{rnn_forward.1} parent=1 // pred_check_branch
      %63 = sbr.rel (0) target = $region17
    $region16: #{rnn_forward.1} parent=1 // pred_region
      %s65 = ssub.s32 3072, 3072
      %66 = vsyncadd [#allocation11], %s65
      %s67 = sshll.u32 [#allocation12], 4
      %s68 = int_to_ptr.vmem [resolvable:$true] %s67
      %73 = dma.hbm_to_vmem [thread:$0]  %s3, 3072, %s68, [#allocation11], 192, 192, 12
    $region17: #{rnn_forward.1} parent=1 // pred_fallthru
      _
    // Predicated region
    $region18: #{rnn_forward.1} parent=1 // pred_check
      _
    $region19: #{rnn_forward.1} parent=1 // pred_check_branch
      %75 = sbr.rel (0) target = $region21
    $region20: #{rnn_forward.1} parent=1 // pred_region
      _
    $region21: #{rnn_forward.1} parent=1 // pred_fallthru
      _
    // Predicated region
    $region22: #{rnn_forward.1} parent=1 // pred_check
      _
    $region23: #{rnn_forward.1} parent=1 // pred_check_branch
      %77 = sbr.rel (0) target = $region25
    $region24: #{rnn_forward.1} parent=1 // pred_region
      %s79 = ssub.s32 3072, 3072
      %80 = vsyncadd [#allocation14], %s79
      %s81 = sshll.u32 [#allocation13], 4
      %s82 = int_to_ptr.vmem [resolvable:$true] %s81
      %87 = dma.hbm_to_vmem [thread:$0]  %s5, 3072, %s82, [#allocation14], 192, 192, 12
    $region25: #{rnn_forward.1} parent=1 // pred_fallthru
      _
    // Predicated region
    $region26: #{rnn_forward.1} parent=1 // pred_check
      _
    $region27: #{rnn_forward.1} parent=1 // pred_check_branch
      %89 = sbr.rel (0) target = $region29
    $region28: #{rnn_forward.1} parent=1 // pred_region
      %s91 = ssub.s32 3072, 3072
      %92 = vsyncadd [#allocation14], %s91
      %s93 = sshll.u32 [#allocation15], 4
      %s94 = int_to_ptr.vmem [resolvable:$true] %s93
      %99 = dma.hbm_to_vmem [thread:$0]  %s6, 3072, %s94, [#allocation14], 192, 192, 12
    $region29: #{rnn_forward.1} parent=1 // pred_fallthru
      _
    // Predicated region
    $region30: #{rnn_forward.1} parent=1 // pred_check
      _
    $region31: #{rnn_forward.1} parent=1 // pred_check_branch
      %101 = sbr.rel (0) target = $region33
    $region32: #{rnn_forward.1} parent=1 // pred_region
      _
    $region33: #{rnn_forward.1} parent=1 // pred_fallthru
      _
    // Predicated region
    $region34: #{rnn_forward.1} parent=1 // pred_check
      _
    $region35: #{rnn_forward.1} parent=1 // pred_check_branch
      %103 = sbr.rel (0) target = $region37
    $region36: #{rnn_forward.1} parent=1 // pred_region
      %s105 = ssub.s32 3072, 3072
      %106 = vsyncadd [#allocation17], %s105
      %s107 = sshll.u32 [#allocation16], 4
      %s108 = int_to_ptr.vmem [resolvable:$true] %s107
      %113 = dma.hbm_to_vmem [thread:$0]  %s8, 3072, %s108, [#allocation17], 192, 192, 12
    $region37: #{rnn_forward.1} parent=1 // pred_fallthru
      _
    // Predicated region
    $region38: #{rnn_forward.1} parent=1 // pred_check
      _
    $region39: #{rnn_forward.1} parent=1 // pred_check_branch
      %115 = sbr.rel (0) target = $region41
    $region40: #{rnn_forward.1} parent=1 // pred_region
      _
    $region41: #{rnn_forward.1} parent=1 // pred_fallthru
      _
    // Predicated region
    $region42: #{rnn_forward.1} parent=1 // pred_check
      _
    $region43: #{rnn_forward.1} parent=1 // pred_check_branch
      %117 = sbr.rel (0) target = $region45
    $region44: #{rnn_forward.1} parent=1 // pred_region
      %s119 = ssub.s32 3072, 3072
      %120 = vsyncadd [#allocation17], %s119
      %s121 = sshll.u32 [#allocation18], 4
      %s122 = int_to_ptr.vmem [resolvable:$true] %s121
      %127 = dma.hbm_to_vmem [thread:$0]  %s10, 3072, %s122, [#allocation17], 192, 192, 12
    $region45: #{rnn_forward.1} parent=1 // pred_fallthru
      _
    // Predicated region
    $region46: #{rnn_forward.1} parent=1 // pred_check
      _
    $region47: #{rnn_forward.1} parent=1 // pred_check_branch
      %129 = sbr.rel (0) target = $region49
    $region48: #{rnn_forward.1} parent=1 // pred_region
      %s131 = ssub.s32 3072, 3072
      %132 = vsyncadd [#allocation20], %s131
      %s133 = sshll.u32 [#allocation19], 4
      %s134 = int_to_ptr.vmem [resolvable:$true] %s133
      %139 = dma.hbm_to_vmem [thread:$0]  %s11, 3072, %s134, [#allocation20], 192, 192, 12
    $region49: #{rnn_forward.1} parent=1 // pred_fallthru
      _
    // Predicated region
    $region50: #{rnn_forward.1} parent=1 // pred_check
      _
    $region51: #{rnn_forward.1} parent=1 // pred_check_branch
      %141 = sbr.rel (0) target = $region53
    $region52: #{rnn_forward.1} parent=1 // pred_region
      _
    $region53: #{rnn_forward.1} parent=1 // pred_fallthru
      _
    // Predicated region
    $region54: #{rnn_forward.1} parent=1 // pred_check
      _
    $region55: #{rnn_forward.1} parent=1 // pred_check_branch
      %143 = sbr.rel (0) target = $region57
    $region56: #{rnn_forward.1} parent=1 // pred_region
      %s145 = ssub.s32 3072, 3072
      %146 = vsyncadd [#allocation20], %s145
      %s147 = sshll.u32 [#allocation21], 4
      %s148 = int_to_ptr.vmem [resolvable:$true] %s147
      %153 = dma.hbm_to_vmem [thread:$0]  %s13, 3072, %s148, [#allocation20], 192, 192, 12
    $region57: #{rnn_forward.1} parent=1 // pred_fallthru
      _
    // Predicated region
    $region58: #{rnn_forward.1} parent=1 // pred_check
      _
    $region59: #{rnn_forward.1} parent=1 // pred_check_branch
      %155 = sbr.rel (0) target = $region61
    $region60: #{rnn_forward.1} parent=1 // pred_region
      _
    $region61: #{rnn_forward.1} parent=1 // pred_fallthru
      _
    // Predicated region
    $region62: #{rnn_forward.1} parent=1 // pred_check
      _
    $region63: #{rnn_forward.1} parent=1 // pred_check_branch
      %157 = sbr.rel (0) target = $region65
    $region64: #{rnn_forward.1} parent=1 // pred_region
      _
    $region65: #{rnn_forward.1} parent=1 // pred_fallthru
      _
    // Predicated region
    $region66: #{rnn_forward.1} parent=1 // pred_check
      _
    $region67: #{rnn_forward.1} parent=1 // pred_check_branch
      %159 = sbr.rel (0) target = $region69
    $region68: #{rnn_forward.1} parent=1 // pred_region
      _
    $region69: #{rnn_forward.1} parent=1 // pred_fallthru
      _
    // Predicated region
    $region70: #{rnn_forward.1} parent=1 // pred_check
      _
    $region71: #{rnn_forward.1} parent=1 // pred_check_branch
      %161 = sbr.rel (0) target = $region73
    $region72: #{rnn_forward.1} parent=1 // pred_region
      %162 = dma.done [#allocation8], 32
    $region73: #{rnn_forward.1} parent=1 // pred_fallthru
      _
    // Predicated region
    $region74: #{rnn_forward.1} parent=1 // pred_check
      _
    $region75: #{rnn_forward.1} parent=1 // pred_check_branch
      %164 = sbr.rel (0) target = $region77
    $region76: #{rnn_forward.1} parent=1 // pred_region
      %165 = dma.done [#allocation7], 2688
    $region77: #{rnn_forward.1} parent=1 // pred_fallthru
      _
    // Predicated region
    $region78: #{rnn_forward.1} parent=1 // pred_check
      _
    $region79: #{rnn_forward.1} parent=1 // pred_check_branch
      %167 = sbr.rel (0) target = $region81
    $region80: #{rnn_forward.1} parent=1 // pred_region
      %168 = dma.done [#allocation11], 2688
    $region81: #{rnn_forward.1} parent=1 // pred_fallthru
      _
    // Predicated region
    $region82: #{rnn_forward.1} parent=1 // pred_check
      _
    $region83: #{rnn_forward.1} parent=1 // pred_check_branch
      %170 = sbr.rel (0) target = $region85
    $region84: #{rnn_forward.1} parent=1 // pred_region
      %171 = dma.done [#allocation11], 3072
    $region85: #{rnn_forward.1} parent=1 // pred_fallthru
      _
    // Predicated region
    $region86: #{rnn_forward.1} parent=1 // pred_check
      _
    $region87: #{rnn_forward.1} parent=1 // pred_check_branch
      %173 = sbr.rel (0) target = $region89
    $region88: #{rnn_forward.1} parent=1 // pred_region
      %174 = dma.done [#allocation14], 3072
    $region89: #{rnn_forward.1} parent=1 // pred_fallthru
      _
    // Predicated region
    $region90: #{rnn_forward.1} parent=1 // pred_check
      _
    $region91: #{rnn_forward.1} parent=1 // pred_check_branch
      %176 = sbr.rel (0) target = $region93
    $region92: #{rnn_forward.1} parent=1 // pred_region
      %177 = dma.done [#allocation14], 3072
    $region93: #{rnn_forward.1} parent=1 // pred_fallthru
      _
    // Predicated region
    $region94: #{rnn_forward.1} parent=1 // pred_check
      _
    $region95: #{rnn_forward.1} parent=1 // pred_check_branch
      %179 = sbr.rel (0) target = $region97
    $region96: #{rnn_forward.1} parent=1 // pred_region
      %180 = dma.done [#allocation17], 3072
    $region97: #{rnn_forward.1} parent=1 // pred_fallthru
      _
    // Predicated region
    $region98: #{rnn_forward.1} parent=1 // pred_check
      _
    $region99: #{rnn_forward.1} parent=1 // pred_check_branch
      %182 = sbr.rel (0) target = $region101
    $region100: #{rnn_forward.1} parent=1 // pred_region
      %183 = dma.done [#allocation17], 3072
    $region101: #{rnn_forward.1} parent=1 // pred_fallthru
      _
    // Predicated region
    $region102: #{rnn_forward.1} parent=1 // pred_check
      _
    $region103: #{rnn_forward.1} parent=1 // pred_check_branch
      %185 = sbr.rel (0) target = $region105
    $region104: #{rnn_forward.1} parent=1 // pred_region
      %186 = dma.done [#allocation20], 3072
    $region105: #{rnn_forward.1} parent=1 // pred_fallthru
      _
    // Predicated region
    $region106: #{rnn_forward.1} parent=1 // pred_check
      _
    $region107: #{rnn_forward.1} parent=1 // pred_check_branch
      %188 = sbr.rel (0) target = $region109
    $region108: #{rnn_forward.1} parent=1 // pred_region
      %189 = dma.done [#allocation20], 3072
    $region109: #{rnn_forward.1} parent=1 // pred_fallthru
      _
    %190 = sfence
    %192 = vst [vmem:[#allocation2] sm:$0xff] 0.0
    %193 = vst [vmem:[#allocation2 + $0x8] sm:$0xff] 0.0
    %194 = vst [vmem:[#allocation2 + $0x10] sm:$0xff] 0.0
    %195 = vst [vmem:[#allocation2 + $0x18] sm:$0xff] 0.0
    %196 = vst [vmem:[#allocation2 + $0x20] sm:$0xff] 0.0
    %197 = vst [vmem:[#allocation2 + $0x28] sm:$0xff] 0.0
    %198 = vst [vmem:[#allocation2 + $0x30] sm:$0xff] 0.0
    %199 = vst [vmem:[#allocation2 + $0x38] sm:$0xff] 0.0
    %200 = vst [vmem:[#allocation2 + $0x40] sm:$0xff] 0.0
    %201 = vst [vmem:[#allocation2 + $0x48] sm:$0xff] 0.0
    %202 = vst [vmem:[#allocation2 + $0x50] sm:$0xff] 0.0
    %203 = vst [vmem:[#allocation2 + $0x58] sm:$0xff] 0.0
    %204 = vst [vmem:[#allocation2 + $0x60] sm:$0xff] 0.0
    %205 = vst [vmem:[#allocation2 + $0x68] sm:$0xff] 0.0
    %206 = vst [vmem:[#allocation2 + $0x70] sm:$0xff] 0.0
    %207 = vst [vmem:[#allocation2 + $0x78] sm:$0xff] 0.0
    %208 = vst [vmem:[#allocation2 + $0x80] sm:$0xff] 0.0
    %209 = vst [vmem:[#allocation2 + $0x88] sm:$0xff] 0.0
    %210 = vst [vmem:[#allocation2 + $0x90] sm:$0xff] 0.0
    %211 = vst [vmem:[#allocation2 + $0x98] sm:$0xff] 0.0
    %212 = vst [vmem:[#allocation2 + $0xa0] sm:$0xff] 0.0
    %213 = vst [vmem:[#allocation2 + $0xa8] sm:$0xff] 0.0
    %214 = vst [vmem:[#allocation2 + $0xb0] sm:$0xff] 0.0
    %215 = vst [vmem:[#allocation2 + $0xb8] sm:$0xff] 0.0
    %216 = vst [vmem:[#allocation3] sm:$0xff] 0.0
    %217 = vst [vmem:[#allocation3 + $0x8] sm:$0xff] 0.0
    %218 = vst [vmem:[#allocation3 + $0x10] sm:$0xff] 0.0
    %219 = vst [vmem:[#allocation3 + $0x18] sm:$0xff] 0.0
    %220 = vst [vmem:[#allocation3 + $0x20] sm:$0xff] 0.0
    %221 = vst [vmem:[#allocation3 + $0x28] sm:$0xff] 0.0
    %222 = vst [vmem:[#allocation3 + $0x30] sm:$0xff] 0.0
    %223 = vst [vmem:[#allocation3 + $0x38] sm:$0xff] 0.0
    %224 = vst [vmem:[#allocation3 + $0x40] sm:$0xff] 0.0
    %225 = vst [vmem:[#allocation3 + $0x48] sm:$0xff] 0.0
    %226 = vst [vmem:[#allocation3 + $0x50] sm:$0xff] 0.0
    %227 = vst [vmem:[#allocation3 + $0x58] sm:$0xff] 0.0
    %228 = vst [vmem:[#allocation3 + $0x60] sm:$0xff] 0.0
    %229 = vst [vmem:[#allocation3 + $0x68] sm:$0xff] 0.0
    %230 = vst [vmem:[#allocation3 + $0x70] sm:$0xff] 0.0
    %231 = vst [vmem:[#allocation3 + $0x78] sm:$0xff] 0.0
    %232 = vst [vmem:[#allocation3 + $0x80] sm:$0xff] 0.0
    %233 = vst [vmem:[#allocation3 + $0x88] sm:$0xff] 0.0
    %234 = vst [vmem:[#allocation3 + $0x90] sm:$0xff] 0.0
    %235 = vst [vmem:[#allocation3 + $0x98] sm:$0xff] 0.0
    %236 = vst [vmem:[#allocation3 + $0xa0] sm:$0xff] 0.0
    %237 = vst [vmem:[#allocation3 + $0xa8] sm:$0xff] 0.0
    %238 = vst [vmem:[#allocation3 + $0xb0] sm:$0xff] 0.0
    %239 = vst [vmem:[#allocation3 + $0xb8] sm:$0xff] 0.0
    %s240 = sld [smem:[#allocation6]]
    %s241 = sshra.s32 %s240, 3
    %s242 = sand.u32 %s240, 7
    %s243 = sshra.s32 %s240, 3
    %s244 = sand.u32 %s240, 7
    %s245 = smul.u32 %s241, 3
    %s246 = smul.u32 %s245, 8
    %s247 = sadd.s32 %s246, %s244
    %s248 = scalar_lea.vmem [#allocation9], %s247
    %v249 = vld [vmem:[%s248] ss:$8 sm:$0x7]
    %v250 = vlaneseq
    %vm251 = vcmp.ge.s32.totalorder %v250, 0
    %vm252 = vcmp.lt.s32.totalorder %v250, 384
    %vm253 = vmand %vm251, %vm252
    %254 = vst.msk [vmem:[#allocation2] ss:$8 sm:$0x7] %vm253, %v249
    %255 = vst.msk [vmem:[#allocation2] ss:$8 sm:$0x0] %vm253, %v249
    %s256 = scalar_lea.vmem [#allocation10], %s247
    %v257 = vld [vmem:[%s256] ss:$8 sm:$0x7]
    %258 = vst.msk [vmem:[#allocation3] ss:$8 sm:$0x7] %vm253, %v257
    %259 = vst.msk [vmem:[#allocation3] ss:$8 sm:$0x0] %vm253, %v257
    %s260 = sld [smem:[#allocation6 + $0x80]]
    %s261 = sshra.s32 %s260, 3
    %s262 = sand.u32 %s260, 7
    %s263 = sshra.s32 %s260, 3
    %s264 = sand.u32 %s260, 7
    %s265 = smul.u32 %s261, 3
    %s266 = smul.u32 %s265, 8
    %s267 = sadd.s32 %s266, %s264
    %s268 = scalar_lea.vmem [#allocation9], %s267
    %v269 = vld [vmem:[%s268] ss:$8 sm:$0x7]
    %s270 = scalar_lea.vmem [#allocation2], 1
    %271 = vst.msk [vmem:[%s270] ss:$8 sm:$0x7] %vm253, %v269
    %272 = vst.msk [vmem:[%s270] ss:$8 sm:$0x0] %vm253, %v269
    %s273 = scalar_lea.vmem [#allocation10], %s267
    %v274 = vld [vmem:[%s273] ss:$8 sm:$0x7]
    %s275 = scalar_lea.vmem [#allocation3], 1
    %276 = vst.msk [vmem:[%s275] ss:$8 sm:$0x7] %vm253, %v274
    %277 = vst.msk [vmem:[%s275] ss:$8 sm:$0x0] %vm253, %v274
    %s278 = sld [smem:[#allocation6 + $0x1]]
    %s279 = sshra.s32 %s278, 3
    %s280 = sand.u32 %s278, 7
    %s281 = sshra.s32 %s278, 3
    %s282 = sand.u32 %s278, 7
    %s283 = smul.u32 %s279, 3
    %s284 = smul.u32 %s283, 8
    %s285 = sadd.s32 %s284, %s282
    %s286 = scalar_lea.vmem [#allocation9], %s285
    %v287 = vld [vmem:[%s286] ss:$8 sm:$0x7]
    %s288 = scalar_lea.vmem [#allocation2], 24
    %289 = vst.msk [vmem:[%s288] ss:$8 sm:$0x7] %vm253, %v287
    %290 = vst.msk [vmem:[%s288] ss:$8 sm:$0x0] %vm253, %v287
    %s291 = scalar_lea.vmem [#allocation10], %s285
    %v292 = vld [vmem:[%s291] ss:$8 sm:$0x7]
    %s293 = scalar_lea.vmem [#allocation3], 24
    %294 = vst.msk [vmem:[%s293] ss:$8 sm:$0x7] %vm253, %v292
    %295 = vst.msk [vmem:[%s293] ss:$8 sm:$0x0] %vm253, %v292
    %s296 = sld [smem:[#allocation6 + $0x81]]
    %s297 = sshra.s32 %s296, 3
    %s298 = sand.u32 %s296, 7
    %s299 = sshra.s32 %s296, 3
    %s300 = sand.u32 %s296, 7
    %s301 = smul.u32 %s297, 3
    %s302 = smul.u32 %s301, 8
    %s303 = sadd.s32 %s302, %s300
    %s304 = scalar_lea.vmem [#allocation9], %s303
    %v305 = vld [vmem:[%s304] ss:$8 sm:$0x7]
    %s306 = scalar_lea.vmem [#allocation2], 25
    %307 = vst.msk [vmem:[%s306] ss:$8 sm:$0x7] %vm253, %v305
    %308 = vst.msk [vmem:[%s306] ss:$8 sm:$0x0] %vm253, %v305
    %s309 = scalar_lea.vmem [#allocation10], %s303
    %v310 = vld [vmem:[%s309] ss:$8 sm:$0x7]
    %s311 = scalar_lea.vmem [#allocation3], 25
    %312 = vst.msk [vmem:[%s311] ss:$8 sm:$0x7] %vm253, %v310
    %313 = vst.msk [vmem:[%s311] ss:$8 sm:$0x0] %vm253, %v310
    %s314 = sld [smem:[#allocation6 + $0x2]]
    %s315 = sshra.s32 %s314, 3
    %s316 = sand.u32 %s314, 7
    %s317 = sshra.s32 %s314, 3
    %s318 = sand.u32 %s314, 7
    %s319 = smul.u32 %s315, 3
    %s320 = smul.u32 %s319, 8
    %s321 = sadd.s32 %s320, %s318
    %s322 = scalar_lea.vmem [#allocation9], %s321
    %v323 = vld [vmem:[%s322] ss:$8 sm:$0x7]
    %s324 = scalar_lea.vmem [#allocation2], 48
    %325 = vst.msk [vmem:[%s324] ss:$8 sm:$0x7] %vm253, %v323
    %326 = vst.msk [vmem:[%s324] ss:$8 sm:$0x0] %vm253, %v323
    %s327 = scalar_lea.vmem [#allocation10], %s321
    %v328 = vld [vmem:[%s327] ss:$8 sm:$0x7]
    %s329 = scalar_lea.vmem [#allocation3], 48
    %330 = vst.msk [vmem:[%s329] ss:$8 sm:$0x7] %vm253, %v328
    %331 = vst.msk [vmem:[%s329] ss:$8 sm:$0x0] %vm253, %v328
    %s332 = sld [smem:[#allocation6 + $0x82]]
    %s333 = sshra.s32 %s332, 3
    %s334 = sand.u32 %s332, 7
    %s335 = sshra.s32 %s332, 3
    %s336 = sand.u32 %s332, 7
    %s337 = smul.u32 %s333, 3
    %s338 = smul.u32 %s337, 8
    %s339 = sadd.s32 %s338, %s336
    %s340 = scalar_lea.vmem [#allocation9], %s339
    %v341 = vld [vmem:[%s340] ss:$8 sm:$0x7]
    %s342 = scalar_lea.vmem [#allocation2], 49
    %343 = vst.msk [vmem:[%s342] ss:$8 sm:$0x7] %vm253, %v341
    %344 = vst.msk [vmem:[%s342] ss:$8 sm:$0x0] %vm253, %v341
    %s345 = scalar_lea.vmem [#allocation10], %s339
    %v346 = vld [vmem:[%s345] ss:$8 sm:$0x7]
    %s347 = scalar_lea.vmem [#allocation3], 49
    %348 = vst.msk [vmem:[%s347] ss:$8 sm:$0x7] %vm253, %v346
    %349 = vst.msk [vmem:[%s347] ss:$8 sm:$0x0] %vm253, %v346
    %s350 = sld [smem:[#allocation6 + $0x3]]
    %s351 = sshra.s32 %s350, 3
    %s352 = sand.u32 %s350, 7
    %s353 = sshra.s32 %s350, 3
    %s354 = sand.u32 %s350, 7
    %s355 = smul.u32 %s351, 3
    %s356 = smul.u32 %s355, 8
    %s357 = sadd.s32 %s356, %s354
    %s358 = scalar_lea.vmem [#allocation9], %s357
    %v359 = vld [vmem:[%s358] ss:$8 sm:$0x7]
    %s360 = scalar_lea.vmem [#allocation2], 72
    %361 = vst.msk [vmem:[%s360] ss:$8 sm:$0x7] %vm253, %v359
    %362 = vst.msk [vmem:[%s360] ss:$8 sm:$0x0] %vm253, %v359
    %s363 = scalar_lea.vmem [#allocation10], %s357
    %v364 = vld [vmem:[%s363] ss:$8 sm:$0x7]
    %s365 = scalar_lea.vmem [#allocation3], 72
    %366 = vst.msk [vmem:[%s365] ss:$8 sm:$0x7] %vm253, %v364
    %367 = vst.msk [vmem:[%s365] ss:$8 sm:$0x0] %vm253, %v364
    %s368 = sld [smem:[#allocation6 + $0x83]]
    %s369 = sshra.s32 %s368, 3
    %s370 = sand.u32 %s368, 7
    %s371 = sshra.s32 %s368, 3
    %s372 = sand.u32 %s368, 7
    %s373 = smul.u32 %s369, 3
    %s374 = smul.u32 %s373, 8
    %s375 = sadd.s32 %s374, %s372
    %s376 = scalar_lea.vmem [#allocation9], %s375
    %v377 = vld [vmem:[%s376] ss:$8 sm:$0x7]
    %s378 = scalar_lea.vmem [#allocation2], 73
    %379 = vst.msk [vmem:[%s378] ss:$8 sm:$0x7] %vm253, %v377
    %380 = vst.msk [vmem:[%s378] ss:$8 sm:$0x0] %vm253, %v377
    %s381 = scalar_lea.vmem [#allocation10], %s375
    %v382 = vld [vmem:[%s381] ss:$8 sm:$0x7]
    %s383 = scalar_lea.vmem [#allocation3], 73
    %384 = vst.msk [vmem:[%s383] ss:$8 sm:$0x7] %vm253, %v382
    %385 = vst.msk [vmem:[%s383] ss:$8 sm:$0x0] %vm253, %v382
    %s386 = sld [smem:[#allocation6 + $0x4]]
    %s387 = sshra.s32 %s386, 3
    %s388 = sand.u32 %s386, 7
    %s389 = sshra.s32 %s386, 3
    %s390 = sand.u32 %s386, 7
    %s391 = smul.u32 %s387, 3
    %s392 = smul.u32 %s391, 8
    %s393 = sadd.s32 %s392, %s390
    %s394 = scalar_lea.vmem [#allocation9], %s393
    %v395 = vld [vmem:[%s394] ss:$8 sm:$0x7]
    %s396 = scalar_lea.vmem [#allocation2], 96
    %397 = vst.msk [vmem:[%s396] ss:$8 sm:$0x7] %vm253, %v395
    %398 = vst.msk [vmem:[%s396] ss:$8 sm:$0x0] %vm253, %v395
    %s399 = scalar_lea.vmem [#allocation10], %s393
    %v400 = vld [vmem:[%s399] ss:$8 sm:$0x7]
    %s401 = scalar_lea.vmem [#allocation3], 96
    %402 = vst.msk [vmem:[%s401] ss:$8 sm:$0x7] %vm253, %v400
    %403 = vst.msk [vmem:[%s401] ss:$8 sm:$0x0] %vm253, %v400
    %s404 = sld [smem:[#allocation6 + $0x84]]
    %s405 = sshra.s32 %s404, 3
    %s406 = sand.u32 %s404, 7
    %s407 = sshra.s32 %s404, 3
    %s408 = sand.u32 %s404, 7
    %s409 = smul.u32 %s405, 3
    %s410 = smul.u32 %s409, 8
    %s411 = sadd.s32 %s410, %s408
    %s412 = scalar_lea.vmem [#allocation9], %s411
    %v413 = vld [vmem:[%s412] ss:$8 sm:$0x7]
    %s414 = scalar_lea.vmem [#allocation2], 97
    %415 = vst.msk [vmem:[%s414] ss:$8 sm:$0x7] %vm253, %v413
    %416 = vst.msk [vmem:[%s414] ss:$8 sm:$0x0] %vm253, %v413
    %s417 = scalar_lea.vmem [#allocation10], %s411
    %v418 = vld [vmem:[%s417] ss:$8 sm:$0x7]
    %s419 = scalar_lea.vmem [#allocation3], 97
    %420 = vst.msk [vmem:[%s419] ss:$8 sm:$0x7] %vm253, %v418
    %421 = vst.msk [vmem:[%s419] ss:$8 sm:$0x0] %vm253, %v418
    %s422 = sld [smem:[#allocation6 + $0x5]]
    %s423 = sshra.s32 %s422, 3
    %s424 = sand.u32 %s422, 7
    %s425 = sshra.s32 %s422, 3
    %s426 = sand.u32 %s422, 7
    %s427 = smul.u32 %s423, 3
    %s428 = smul.u32 %s427, 8
    %s429 = sadd.s32 %s428, %s426
    %s430 = scalar_lea.vmem [#allocation9], %s429
    %v431 = vld [vmem:[%s430] ss:$8 sm:$0x7]
    %s432 = scalar_lea.vmem [#allocation2], 120
    %433 = vst.msk [vmem:[%s432] ss:$8 sm:$0x7] %vm253, %v431
    %434 = vst.msk [vmem:[%s432] ss:$8 sm:$0x0] %vm253, %v431
    %s435 = scalar_lea.vmem [#allocation10], %s429
    %v436 = vld [vmem:[%s435] ss:$8 sm:$0x7]
    %s437 = scalar_lea.vmem [#allocation3], 120
    %438 = vst.msk [vmem:[%s437] ss:$8 sm:$0x7] %vm253, %v436
    %439 = vst.msk [vmem:[%s437] ss:$8 sm:$0x0] %vm253, %v436
    %s440 = sld [smem:[#allocation6 + $0x85]]
    %s441 = sshra.s32 %s440, 3
    %s442 = sand.u32 %s440, 7
    %s443 = sshra.s32 %s440, 3
    %s444 = sand.u32 %s440, 7
    %s445 = smul.u32 %s441, 3
    %s446 = smul.u32 %s445, 8
    %s447 = sadd.s32 %s446, %s444
    %s448 = scalar_lea.vmem [#allocation9], %s447
    %v449 = vld [vmem:[%s448] ss:$8 sm:$0x7]
    %s450 = scalar_lea.vmem [#allocation2], 121
    %451 = vst.msk [vmem:[%s450] ss:$8 sm:$0x7] %vm253, %v449
    %452 = vst.msk [vmem:[%s450] ss:$8 sm:$0x0] %vm253, %v449
    %s453 = scalar_lea.vmem [#allocation10], %s447
    %v454 = vld [vmem:[%s453] ss:$8 sm:$0x7]
    %s455 = scalar_lea.vmem [#allocation3], 121
    %456 = vst.msk [vmem:[%s455] ss:$8 sm:$0x7] %vm253, %v454
    %457 = vst.msk [vmem:[%s455] ss:$8 sm:$0x0] %vm253, %v454
    %s458 = sld [smem:[#allocation6 + $0x6]]
    %s459 = sshra.s32 %s458, 3
    %s460 = sand.u32 %s458, 7
    %s461 = sshra.s32 %s458, 3
    %s462 = sand.u32 %s458, 7
    %s463 = smul.u32 %s459, 3
    %s464 = smul.u32 %s463, 8
    %s465 = sadd.s32 %s464, %s462
    %s466 = scalar_lea.vmem [#allocation9], %s465
    %v467 = vld [vmem:[%s466] ss:$8 sm:$0x7]
    %s468 = scalar_lea.vmem [#allocation2], 144
    %469 = vst.msk [vmem:[%s468] ss:$8 sm:$0x7] %vm253, %v467
    %470 = vst.msk [vmem:[%s468] ss:$8 sm:$0x0] %vm253, %v467
    %s471 = scalar_lea.vmem [#allocation10], %s465
    %v472 = vld [vmem:[%s471] ss:$8 sm:$0x7]
    %s473 = scalar_lea.vmem [#allocation3], 144
    %474 = vst.msk [vmem:[%s473] ss:$8 sm:$0x7] %vm253, %v472
    %475 = vst.msk [vmem:[%s473] ss:$8 sm:$0x0] %vm253, %v472
    %s476 = sld [smem:[#allocation6 + $0x86]]
    %s477 = sshra.s32 %s476, 3
    %s478 = sand.u32 %s476, 7
    %s479 = sshra.s32 %s476, 3
    %s480 = sand.u32 %s476, 7
    %s481 = smul.u32 %s477, 3
    %s482 = smul.u32 %s481, 8
    %s483 = sadd.s32 %s482, %s480
    %s484 = scalar_lea.vmem [#allocation9], %s483
    %v485 = vld [vmem:[%s484] ss:$8 sm:$0x7]
    %s486 = scalar_lea.vmem [#allocation2], 145
    %487 = vst.msk [vmem:[%s486] ss:$8 sm:$0x7] %vm253, %v485
    %488 = vst.msk [vmem:[%s486] ss:$8 sm:$0x0] %vm253, %v485
    %s489 = scalar_lea.vmem [#allocation10], %s483
    %v490 = vld [vmem:[%s489] ss:$8 sm:$0x7]
    %s491 = scalar_lea.vmem [#allocation3], 145
    %492 = vst.msk [vmem:[%s491] ss:$8 sm:$0x7] %vm253, %v490
    %493 = vst.msk [vmem:[%s491] ss:$8 sm:$0x0] %vm253, %v490
    %s494 = sld [smem:[#allocation6 + $0x7]]
    %s495 = sshra.s32 %s494, 3
    %s496 = sand.u32 %s494, 7
    %s497 = sshra.s32 %s494, 3
    %s498 = sand.u32 %s494, 7
    %s499 = smul.u32 %s495, 3
    %s500 = smul.u32 %s499, 8
    %s501 = sadd.s32 %s500, %s498
    %s502 = scalar_lea.vmem [#allocation9], %s501
    %v503 = vld [vmem:[%s502] ss:$8 sm:$0x7]
    %s504 = scalar_lea.vmem [#allocation2], 168
    %505 = vst.msk [vmem:[%s504] ss:$8 sm:$0x7] %vm253, %v503
    %506 = vst.msk [vmem:[%s504] ss:$8 sm:$0x0] %vm253, %v503
    %s507 = scalar_lea.vmem [#allocation10], %s501
    %v508 = vld [vmem:[%s507] ss:$8 sm:$0x7]
    %s509 = scalar_lea.vmem [#allocation3], 168
    %510 = vst.msk [vmem:[%s509] ss:$8 sm:$0x7] %vm253, %v508
    %511 = vst.msk [vmem:[%s509] ss:$8 sm:$0x0] %vm253, %v508
    %s512 = sld [smem:[#allocation6 + $0x87]]
    %s513 = sshra.s32 %s512, 3
    %s514 = sand.u32 %s512, 7
    %s515 = sshra.s32 %s512, 3
    %s516 = sand.u32 %s512, 7
    %s517 = smul.u32 %s513, 3
    %s518 = smul.u32 %s517, 8
    %s519 = sadd.s32 %s518, %s516
    %s520 = scalar_lea.vmem [#allocation9], %s519
    %v521 = vld [vmem:[%s520] ss:$8 sm:$0x7]
    %s522 = scalar_lea.vmem [#allocation2], 169
    %523 = vst.msk [vmem:[%s522] ss:$8 sm:$0x7] %vm253, %v521
    %524 = vst.msk [vmem:[%s522] ss:$8 sm:$0x0] %vm253, %v521
    %s525 = scalar_lea.vmem [#allocation10], %s519
    %v526 = vld [vmem:[%s525] ss:$8 sm:$0x7]
    %s527 = scalar_lea.vmem [#allocation3], 169
    %528 = vst.msk [vmem:[%s527] ss:$8 sm:$0x7] %vm253, %v526
    %529 = vst.msk [vmem:[%s527] ss:$8 sm:$0x0] %vm253, %v526
    %v530 = vld [vmem:[#allocation12] sm:$0xff]
    %v531 = vld [vmem:[#allocation12 + $0x8] sm:$0xf]
    %v532 = vld [vmem:[#allocation12 + $0xc] sm:$0xff]
    %v533 = vld [vmem:[#allocation12 + $0x14] sm:$0xf]
    %v534 = vld [vmem:[#allocation12 + $0x18] sm:$0xff]
    %v535 = vld [vmem:[#allocation12 + $0x20] sm:$0xf]
    %v536 = vld [vmem:[#allocation12 + $0x24] sm:$0xff]
    %v537 = vld [vmem:[#allocation12 + $0x2c] sm:$0xf]
    %v538 = vld [vmem:[#allocation12 + $0x30] sm:$0xff]
    %v539 = vld [vmem:[#allocation12 + $0x38] sm:$0xf]
    %v540 = vld [vmem:[#allocation12 + $0x3c] sm:$0xff]
    %v541 = vld [vmem:[#allocation12 + $0x44] sm:$0xf]
    %v542 = vld [vmem:[#allocation12 + $0x48] sm:$0xff]
    %v543 = vld [vmem:[#allocation12 + $0x50] sm:$0xf]
    %v544 = vld [vmem:[#allocation12 + $0x54] sm:$0xff]
    %v545 = vld [vmem:[#allocation12 + $0x5c] sm:$0xf]
    %v546 = vld [vmem:[#allocation12 + $0x60] sm:$0xff]
    %v547 = vld [vmem:[#allocation12 + $0x68] sm:$0xf]
    %v548 = vld [vmem:[#allocation12 + $0x6c] sm:$0xff]
    %v549 = vld [vmem:[#allocation12 + $0x74] sm:$0xf]
    %v550 = vld [vmem:[#allocation12 + $0x78] sm:$0xff]
    %v551 = vld [vmem:[#allocation12 + $0x80] sm:$0xf]
    %v552 = vld [vmem:[#allocation12 + $0x84] sm:$0xff]
    %v553 = vld [vmem:[#allocation12 + $0x8c] sm:$0xf]
    %v554 = vld [vmem:[#allocation12 + $0x90] sm:$0xff]
    %v555 = vld [vmem:[#allocation12 + $0x98] sm:$0xf]
    %v556 = vld [vmem:[#allocation12 + $0x9c] sm:$0xff]
    %v557 = vld [vmem:[#allocation12 + $0xa4] sm:$0xf]
    %v558 = vld [vmem:[#allocation12 + $0xa8] sm:$0xff]
    %v559 = vld [vmem:[#allocation12 + $0xb0] sm:$0xf]
    %v560 = vld [vmem:[#allocation12 + $0xb4] sm:$0xff]
    %v561 = vld [vmem:[#allocation12 + $0xbc] sm:$0xf]
    %v562 = vld [vmem:[%s4] sm:$0x1]
    %v564 = vlaneseq
    %v565 = vshrl.u32 %v564, 7
    %v566 = vsub.s32 0, %v565
    %v567 = vrot.slane %v562, %v566
    %v569 = vld [vmem:[#allocation2] sm:$0xff]
    %v570 = vld [vmem:[#allocation2 + $0x8] sm:$0xff]
    %v571 = vld [vmem:[#allocation2 + $0x10] sm:$0xff]
    %v572 = vld [vmem:[#allocation3 + $0xa8] sm:$0xff]
    %v573 = vld [vmem:[#allocation3 + $0xb0] sm:$0xff]
    %v574 = vld [vmem:[#allocation3 + $0xb8] sm:$0xff]
    %v575 = vadd.f32 %v569, %v572
    %v576 = vadd.f32 %v570, %v573
    %v577 = vadd.f32 %v571, %v574
    %v610 = vunpack.c.l.b16 %v530
    %v611 = vunpack.c.h.b16 %v530
    %v612 = vunpack.c.l.b16 %v531
    %v613 = vunpack.c.l.b16 %v532
    %v614 = vunpack.c.h.b16 %v532
    %v615 = vunpack.c.l.b16 %v533
    %v616 = vunpack.c.l.b16 %v534
    %v617 = vunpack.c.h.b16 %v534
    %v618 = vunpack.c.l.b16 %v535
    %v619 = vunpack.c.l.b16 %v536
    %v620 = vunpack.c.h.b16 %v536
    %v621 = vunpack.c.l.b16 %v537
    %v622 = vunpack.c.l.b16 %v538
    %v623 = vunpack.c.h.b16 %v538
    %v624 = vunpack.c.l.b16 %v539
    %v625 = vunpack.c.l.b16 %v540
    %v626 = vunpack.c.h.b16 %v540
    %v627 = vunpack.c.l.b16 %v541
    %v628 = vunpack.c.l.b16 %v542
    %v629 = vunpack.c.h.b16 %v542
    %v630 = vunpack.c.l.b16 %v543
    %v631 = vunpack.c.l.b16 %v544
    %v632 = vunpack.c.h.b16 %v544
    %v633 = vunpack.c.l.b16 %v545
    %v634 = vunpack.c.l.b16 %v546
    %v635 = vunpack.c.h.b16 %v546
    %v636 = vunpack.c.l.b16 %v547
    %v637 = vunpack.c.l.b16 %v548
    %v638 = vunpack.c.h.b16 %v548
    %v639 = vunpack.c.l.b16 %v549
    %v640 = vunpack.c.l.b16 %v550
    %v641 = vunpack.c.h.b16 %v550
    %v642 = vunpack.c.l.b16 %v551
    %v643 = vunpack.c.l.b16 %v552
    %v644 = vunpack.c.h.b16 %v552
    %v645 = vunpack.c.l.b16 %v553
    %v646 = vunpack.c.l.b16 %v554
    %v647 = vunpack.c.h.b16 %v554
    %v648 = vunpack.c.l.b16 %v555
    %v649 = vunpack.c.l.b16 %v556
    %v650 = vunpack.c.h.b16 %v556
    %v651 = vunpack.c.l.b16 %v557
    %v652 = vunpack.c.l.b16 %v558
    %v653 = vunpack.c.h.b16 %v558
    %v654 = vunpack.c.l.b16 %v559
    %v655 = vunpack.c.l.b16 %v560
    %v656 = vunpack.c.h.b16 %v560
    %v657 = vunpack.c.l.b16 %v561
    %v658 = vpack.c.b16 %v613, %v610
    %v659 = vpack.c.b16 %v614, %v611
    %v660 = vpack.c.b16 %v615, %v612
    %v661 = vpack.c.b16 %v619, %v616
    %v662 = vpack.c.b16 %v620, %v617
    %v663 = vpack.c.b16 %v621, %v618
    %v664 = vpack.c.b16 %v625, %v622
    %v665 = vpack.c.b16 %v626, %v623
    %v666 = vpack.c.b16 %v627, %v624
    %v667 = vpack.c.b16 %v631, %v628
    %v668 = vpack.c.b16 %v632, %v629
    %v669 = vpack.c.b16 %v633, %v630
    %v670 = vpack.c.b16 %v637, %v634
    %v671 = vpack.c.b16 %v638, %v635
    %v672 = vpack.c.b16 %v639, %v636
    %v673 = vpack.c.b16 %v643, %v640
    %v674 = vpack.c.b16 %v644, %v641
    %v675 = vpack.c.b16 %v645, %v642
    %v676 = vpack.c.b16 %v649, %v646
    %v677 = vpack.c.b16 %v650, %v647
    %v678 = vpack.c.b16 %v651, %v648
    %v679 = vpack.c.b16 %v655, %v652
    %v680 = vpack.c.b16 %v656, %v653
    %v681 = vpack.c.b16 %v657, %v654
    %706 = vmatprep.subr.bf16.mxu0 %v659
    %707 = vmatpush1.bf16.msra.mxu0 %v658
    %708 = vmatprep.subr.bf16.mxu0 %v662
    %709 = vmatpush1.bf16.msra.mxu0 %v661
    %710 = vmatprep.subr.bf16.mxu0 %v665
    %711 = vmatpush1.bf16.msra.mxu0 %v664
    %712 = vmatprep.subr.bf16.mxu0 %v668
    %713 = vmatpush1.bf16.msra.mxu0 %v667
    %714 = vmatprep.subr.bf16.mxu0 %v671
    %715 = vmatpush1.bf16.msra.mxu0 %v670
    %716 = vmatprep.subr.bf16.mxu0 %v674
    %717 = vmatpush1.bf16.msra.mxu0 %v673
    %718 = vmatprep.subr.bf16.mxu0 %v677
    %719 = vmatpush1.bf16.msra.mxu0 %v676
    %720 = vmatprep.subr.bf16.mxu0 %v680
    %721 = vmatpush1.bf16.msra.mxu0 %v679
    %722 = vmatprep.subr.bf16.mxu0 0
    %723 = vmatpush1.bf16.msra.mxu0 0
    %724 = vmatprep.subr.bf16.mxu0 0
    %725 = vmatpush1.bf16.msra.mxu0 0
    %726 = vmatprep.subr.bf16.mxu0 0
    %727 = vmatpush1.bf16.msra.mxu0 0
    %728 = vmatprep.subr.bf16.mxu0 0
    %729 = vmatpush1.bf16.msra.mxu0 0
    %730 = vmatprep.subr.bf16.mxu0 0
    %731 = vmatpush1.bf16.msra.mxu0 0
    %732 = vmatprep.subr.bf16.mxu0 0
    %733 = vmatpush1.bf16.msra.mxu0 0
    %734 = vmatprep.subr.bf16.mxu0 0
    %735 = vmatpush1.bf16.msra.mxu0 0
    %736 = vmatprep.subr.bf16.mxu0 0
    %737 = vmatpush1.bf16.msra.mxu0 0
    %738 = vmatprep.mubr.bf16.mxu0 0
    %739 = vmatmul.mubr.bf16.gmra.mrb[0].mxu0 0
    %v740 = vpop.f32.mrb[0].mxu0
    %v741 = vadd.f32 0.0, %v740
    %v742 = vpop.f32.mrb[0].mxu0
    %v743 = vadd.f32 0.0, %v742
    %v744 = vpop.f32.mrb[0].mxu0
    %v745 = vpop.f32.mrb[0].mxu0
    %746 = vdwg.mxu0
    %747 = vmatprep.subr.bf16.mxu0 0
    %748 = vmatpush1.bf16.msra.mxu0 %v660
    %749 = vmatprep.subr.bf16.mxu0 0
    %750 = vmatpush1.bf16.msra.mxu0 %v663
    %751 = vmatprep.subr.bf16.mxu0 0
    %752 = vmatpush1.bf16.msra.mxu0 %v666
    %753 = vmatprep.subr.bf16.mxu0 0
    %754 = vmatpush1.bf16.msra.mxu0 %v669
    %755 = vmatprep.subr.bf16.mxu0 0
    %756 = vmatpush1.bf16.msra.mxu0 %v672
    %757 = vmatprep.subr.bf16.mxu0 0
    %758 = vmatpush1.bf16.msra.mxu0 %v675
    %759 = vmatprep.subr.bf16.mxu0 0
    %760 = vmatpush1.bf16.msra.mxu0 %v678
    %761 = vmatprep.subr.bf16.mxu0 0
    %762 = vmatpush1.bf16.msra.mxu0 %v681
    %763 = vmatprep.subr.bf16.mxu0 0
    %764 = vmatpush1.bf16.msra.mxu0 0
    %765 = vmatprep.subr.bf16.mxu0 0
    %766 = vmatpush1.bf16.msra.mxu0 0
    %767 = vmatprep.subr.bf16.mxu0 0
    %768 = vmatpush1.bf16.msra.mxu0 0
    %769 = vmatprep.subr.bf16.mxu0 0
    %770 = vmatpush1.bf16.msra.mxu0 0
    %771 = vmatprep.subr.bf16.mxu0 0
    %772 = vmatpush1.bf16.msra.mxu0 0
    %773 = vmatprep.subr.bf16.mxu0 0
    %774 = vmatpush1.bf16.msra.mxu0 0
    %775 = vmatprep.subr.bf16.mxu0 0
    %776 = vmatpush1.bf16.msra.mxu0 0
    %777 = vmatprep.subr.bf16.mxu0 0
    %778 = vmatpush1.bf16.msra.mxu0 0
    %779 = vmatprep.mubr.bf16.mxu0 0
    %780 = vmatmul.mubr.bf16.gmra.mrb[0].mxu0 0
    %v781 = vpop.f32.mrb[0].mxu0
    %v782 = vadd.f32 0.0, %v781
    %v783 = vpop.f32.mrb[0].mxu0
    %v784 = vpop.f32.mrb[0].mxu0
    %v785 = vpop.f32.mrb[0].mxu0
    %786 = vdwg.mxu0
    %v787 = vadd.f32 %v575, %v741
    %v788 = vadd.f32 %v576, %v743
    %v789 = vxor.u32 %v787, 2147483648
    %v790 = vxor.u32 %v788, 2147483648
    %v791 = vmul.f32 %v789, 1.442695
    %v792 = vpow.pop %v791
    %v793 = vmul.f32 %v790, 1.442695
    %v794 = vpow.pop %v793
    %v795 = vadd.f32 %v792, 1.0
    %v796 = vadd.f32 %v794, 1.0
    %v797 = vrcp.pop %v795
    %v798 = vmul.f32 1.0, %v797
    %v799 = vrcp.pop %v796
    %v800 = vmul.f32 1.0, %v799
    %v801 = vadd.f32 %v782, %v567
    %v802 = vmul.f32 %v798, %v801
    %v803 = vadd.f32 %v577, %v802
    %v804 = vtanh.pop %v803
    %v805 = vsub.f32 1.0, %v800
    %v806 = vmul.f32 %v805, %v804
    %v807 = vmul.f32 %v800, 0.0
    %v808 = vadd.f32 %v806, %v807
    %809 = vst [vmem:[#allocation4] sm:$0xff] %v808
    %v810 = vld [vmem:[#allocation2 + $0x18] sm:$0xff]
    %v811 = vld [vmem:[#allocation2 + $0x20] sm:$0xff]
    %v812 = vld [vmem:[#allocation2 + $0x28] sm:$0xff]
    %v813 = vld [vmem:[#allocation3 + $0x90] sm:$0xff]
    %v814 = vld [vmem:[#allocation3 + $0x98] sm:$0xff]
    %v815 = vld [vmem:[#allocation3 + $0xa0] sm:$0xff]
    %v816 = vadd.f32 %v810, %v813
    %v817 = vadd.f32 %v811, %v814
    %v818 = vadd.f32 %v812, %v815
    %v819 = vpack.c.bf16 %v808, %v808
    %820 = vmatprep.subr.bf16.mxu0 %v659
    %821 = vmatpush1.bf16.msra.mxu0 %v658
    %822 = vmatprep.subr.bf16.mxu0 %v662
    %823 = vmatpush1.bf16.msra.mxu0 %v661
    %824 = vmatprep.subr.bf16.mxu0 %v665
    %825 = vmatpush1.bf16.msra.mxu0 %v664
    %826 = vmatprep.subr.bf16.mxu0 %v668
    %827 = vmatpush1.bf16.msra.mxu0 %v667
    %828 = vmatprep.subr.bf16.mxu0 %v671
    %829 = vmatpush1.bf16.msra.mxu0 %v670
    %830 = vmatprep.subr.bf16.mxu0 %v674
    %831 = vmatpush1.bf16.msra.mxu0 %v673
    %832 = vmatprep.subr.bf16.mxu0 %v677
    %833 = vmatpush1.bf16.msra.mxu0 %v676
    %834 = vmatprep.subr.bf16.mxu0 %v680
    %835 = vmatpush1.bf16.msra.mxu0 %v679
    %836 = vmatprep.subr.bf16.mxu0 0
    %837 = vmatpush1.bf16.msra.mxu0 0
    %838 = vmatprep.subr.bf16.mxu0 0
    %839 = vmatpush1.bf16.msra.mxu0 0
    %840 = vmatprep.subr.bf16.mxu0 0
    %841 = vmatpush1.bf16.msra.mxu0 0
    %842 = vmatprep.subr.bf16.mxu0 0
    %843 = vmatpush1.bf16.msra.mxu0 0
    %844 = vmatprep.subr.bf16.mxu0 0
    %845 = vmatpush1.bf16.msra.mxu0 0
    %846 = vmatprep.subr.bf16.mxu0 0
    %847 = vmatpush1.bf16.msra.mxu0 0
    %848 = vmatprep.subr.bf16.mxu0 0
    %849 = vmatpush1.bf16.msra.mxu0 0
    %850 = vmatprep.subr.bf16.mxu0 0
    %851 = vmatpush1.bf16.msra.mxu0 0
    %852 = vmatprep.mubr.bf16.mxu0 0
    %853 = vmatmul.mubr.bf16.gmra.mrb[0].mxu0 %v819
    %v854 = vpop.f32.mrb[0].mxu0
    %v855 = vadd.f32 0.0, %v854
    %v856 = vpop.f32.mrb[0].mxu0
    %v857 = vadd.f32 0.0, %v856
    %v858 = vpop.f32.mrb[0].mxu0
    %v859 = vpop.f32.mrb[0].mxu0
    %860 = vdwg.mxu0
    %861 = vmatprep.subr.bf16.mxu0 0
    %862 = vmatpush1.bf16.msra.mxu0 %v660
    %863 = vmatprep.subr.bf16.mxu0 0
    %864 = vmatpush1.bf16.msra.mxu0 %v663
    %865 = vmatprep.subr.bf16.mxu0 0
    %866 = vmatpush1.bf16.msra.mxu0 %v666
    %867 = vmatprep.subr.bf16.mxu0 0
    %868 = vmatpush1.bf16.msra.mxu0 %v669
    %869 = vmatprep.subr.bf16.mxu0 0
    %870 = vmatpush1.bf16.msra.mxu0 %v672
    %871 = vmatprep.subr.bf16.mxu0 0
    %872 = vmatpush1.bf16.msra.mxu0 %v675
    %873 = vmatprep.subr.bf16.mxu0 0
    %874 = vmatpush1.bf16.msra.mxu0 %v678
    %875 = vmatprep.subr.bf16.mxu0 0
    %876 = vmatpush1.bf16.msra.mxu0 %v681
    %877 = vmatprep.subr.bf16.mxu0 0
    %878 = vmatpush1.bf16.msra.mxu0 0
    %879 = vmatprep.subr.bf16.mxu0 0
    %880 = vmatpush1.bf16.msra.mxu0 0
    %881 = vmatprep.subr.bf16.mxu0 0
    %882 = vmatpush1.bf16.msra.mxu0 0
    %883 = vmatprep.subr.bf16.mxu0 0
    %884 = vmatpush1.bf16.msra.mxu0 0
    %885 = vmatprep.subr.bf16.mxu0 0
    %886 = vmatpush1.bf16.msra.mxu0 0
    %887 = vmatprep.subr.bf16.mxu0 0
    %888 = vmatpush1.bf16.msra.mxu0 0
    %889 = vmatprep.subr.bf16.mxu0 0
    %890 = vmatpush1.bf16.msra.mxu0 0
    %891 = vmatprep.subr.bf16.mxu0 0
    %892 = vmatpush1.bf16.msra.mxu0 0
    %893 = vmatprep.mubr.bf16.mxu0 0
    %894 = vmatmul.mubr.bf16.gmra.mrb[0].mxu0 %v819
    %v895 = vpop.f32.mrb[0].mxu0
    %v896 = vadd.f32 0.0, %v895
    %v897 = vpop.f32.mrb[0].mxu0
    %v898 = vpop.f32.mrb[0].mxu0
    %v899 = vpop.f32.mrb[0].mxu0
    %900 = vdwg.mxu0
    %v901 = vadd.f32 %v816, %v855
    %v902 = vadd.f32 %v817, %v857
    %v903 = vxor.u32 %v901, 2147483648
    %v904 = vxor.u32 %v902, 2147483648
    %v905 = vmul.f32 %v903, 1.442695
    %v906 = vpow.pop %v905
    %v907 = vmul.f32 %v904, 1.442695
    %v908 = vpow.pop %v907
    %v909 = vadd.f32 %v906, 1.0
    %v910 = vadd.f32 %v908, 1.0
    %v911 = vrcp.pop %v909
    %v912 = vmul.f32 1.0, %v911
    %v913 = vrcp.pop %v910
    %v914 = vmul.f32 1.0, %v913
    %v915 = vadd.f32 %v896, %v567
    %v916 = vmul.f32 %v912, %v915
    %v917 = vadd.f32 %v818, %v916
    %v918 = vtanh.pop %v917
    %v919 = vsub.f32 1.0, %v914
    %v920 = vmul.f32 %v919, %v918
    %v921 = vmul.f32 %v914, %v808
    %v922 = vadd.f32 %v920, %v921
    %923 = vst [vmem:[#allocation4 + $0x8] sm:$0xff] %v922
    %v924 = vld [vmem:[#allocation2 + $0x30] sm:$0xff]
    %v925 = vld [vmem:[#allocation2 + $0x38] sm:$0xff]
    %v926 = vld [vmem:[#allocation2 + $0x40] sm:$0xff]
    %v927 = vld [vmem:[#allocation3 + $0x78] sm:$0xff]
    %v928 = vld [vmem:[#allocation3 + $0x80] sm:$0xff]
    %v929 = vld [vmem:[#allocation3 + $0x88] sm:$0xff]
    %v930 = vadd.f32 %v924, %v927
    %v931 = vadd.f32 %v925, %v928
    %v932 = vadd.f32 %v926, %v929
    %v933 = vpack.c.bf16 %v922, %v922
    %934 = vmatprep.subr.bf16.mxu0 %v659
    %935 = vmatpush1.bf16.msra.mxu0 %v658
    %936 = vmatprep.subr.bf16.mxu0 %v662
    %937 = vmatpush1.bf16.msra.mxu0 %v661
    %938 = vmatprep.subr.bf16.mxu0 %v665
    %939 = vmatpush1.bf16.msra.mxu0 %v664
    %940 = vmatprep.subr.bf16.mxu0 %v668
    %941 = vmatpush1.bf16.msra.mxu0 %v667
    %942 = vmatprep.subr.bf16.mxu0 %v671
    %943 = vmatpush1.bf16.msra.mxu0 %v670
    %944 = vmatprep.subr.bf16.mxu0 %v674
    %945 = vmatpush1.bf16.msra.mxu0 %v673
    %946 = vmatprep.subr.bf16.mxu0 %v677
    %947 = vmatpush1.bf16.msra.mxu0 %v676
    %948 = vmatprep.subr.bf16.mxu0 %v680
    %949 = vmatpush1.bf16.msra.mxu0 %v679
    %950 = vmatprep.subr.bf16.mxu0 0
    %951 = vmatpush1.bf16.msra.mxu0 0
    %952 = vmatprep.subr.bf16.mxu0 0
    %953 = vmatpush1.bf16.msra.mxu0 0
    %954 = vmatprep.subr.bf16.mxu0 0
    %955 = vmatpush1.bf16.msra.mxu0 0
    %956 = vmatprep.subr.bf16.mxu0 0
    %957 = vmatpush1.bf16.msra.mxu0 0
    %958 = vmatprep.subr.bf16.mxu0 0
    %959 = vmatpush1.bf16.msra.mxu0 0
    %960 = vmatprep.subr.bf16.mxu0 0
    %961 = vmatpush1.bf16.msra.mxu0 0
    %962 = vmatprep.subr.bf16.mxu0 0
    %963 = vmatpush1.bf16.msra.mxu0 0
    %964 = vmatprep.subr.bf16.mxu0 0
    %965 = vmatpush1.bf16.msra.mxu0 0
    %966 = vmatprep.mubr.bf16.mxu0 0
    %967 = vmatmul.mubr.bf16.gmra.mrb[0].mxu0 %v933
    %v968 = vpop.f32.mrb[0].mxu0
    %v969 = vadd.f32 0.0, %v968
    %v970 = vpop.f32.mrb[0].mxu0
    %v971 = vadd.f32 0.0, %v970
    %v972 = vpop.f32.mrb[0].mxu0
    %v973 = vpop.f32.mrb[0].mxu0
    %974 = vdwg.mxu0
    %975 = vmatprep.subr.bf16.mxu0 0
    %976 = vmatpush1.bf16.msra.mxu0 %v660
    %977 = vmatprep.subr.bf16.mxu0 0
    %978 = vmatpush1.bf16.msra.mxu0 %v663
    %979 = vmatprep.subr.bf16.mxu0 0
    %980 = vmatpush1.bf16.msra.mxu0 %v666
    %981 = vmatprep.subr.bf16.mxu0 0
    %982 = vmatpush1.bf16.msra.mxu0 %v669
    %983 = vmatprep.subr.bf16.mxu0 0
    %984 = vmatpush1.bf16.msra.mxu0 %v672
    %985 = vmatprep.subr.bf16.mxu0 0
    %986 = vmatpush1.bf16.msra.mxu0 %v675
    %987 = vmatprep.subr.bf16.mxu0 0
    %988 = vmatpush1.bf16.msra.mxu0 %v678
    %989 = vmatprep.subr.bf16.mxu0 0
    %990 = vmatpush1.bf16.msra.mxu0 %v681
    %991 = vmatprep.subr.bf16.mxu0 0
    %992 = vmatpush1.bf16.msra.mxu0 0
    %993 = vmatprep.subr.bf16.mxu0 0
    %994 = vmatpush1.bf16.msra.mxu0 0
    %995 = vmatprep.subr.bf16.mxu0 0
    %996 = vmatpush1.bf16.msra.mxu0 0
    %997 = vmatprep.subr.bf16.mxu0 0
    %998 = vmatpush1.bf16.msra.mxu0 0
    %999 = vmatprep.subr.bf16.mxu0 0
    %1000 = vmatpush1.bf16.msra.mxu0 0
    %1001 = vmatprep.subr.bf16.mxu0 0
    %1002 = vmatpush1.bf16.msra.mxu0 0
    %1003 = vmatprep.subr.bf16.mxu0 0
    %1004 = vmatpush1.bf16.msra.mxu0 0
    %1005 = vmatprep.subr.bf16.mxu0 0
    %1006 = vmatpush1.bf16.msra.mxu0 0
    %1007 = vmatprep.mubr.bf16.mxu0 0
    %1008 = vmatmul.mubr.bf16.gmra.mrb[0].mxu0 %v933
    %v1009 = vpop.f32.mrb[0].mxu0
    %v1010 = vadd.f32 0.0, %v1009
    %v1011 = vpop.f32.mrb[0].mxu0
    %v1012 = vpop.f32.mrb[0].mxu0
    %v1013 = vpop.f32.mrb[0].mxu0
    %1014 = vdwg.mxu0
    %v1015 = vadd.f32 %v930, %v969
    %v1016 = vadd.f32 %v931, %v971
    %v1017 = vxor.u32 %v1015, 2147483648
    %v1018 = vxor.u32 %v1016, 2147483648
    %v1019 = vmul.f32 %v1017, 1.442695
    %v1020 = vpow.pop %v1019
    %v1021 = vmul.f32 %v1018, 1.442695
    %v1022 = vpow.pop %v1021
    %v1023 = vadd.f32 %v1020, 1.0
    %v1024 = vadd.f32 %v1022, 1.0
    %v1025 = vrcp.pop %v1023
    %v1026 = vmul.f32 1.0, %v1025
    %v1027 = vrcp.pop %v1024
    %v1028 = vmul.f32 1.0, %v1027
    %v1029 = vadd.f32 %v1010, %v567
    %v1030 = vmul.f32 %v1026, %v1029
    %v1031 = vadd.f32 %v932, %v1030
    %v1032 = vtanh.pop %v1031
    %v1033 = vsub.f32 1.0, %v1028
    %v1034 = vmul.f32 %v1033, %v1032
    %v1035 = vmul.f32 %v1028, %v922
    %v1036 = vadd.f32 %v1034, %v1035
    %1037 = vst [vmem:[#allocation4 + $0x10] sm:$0xff] %v1036
    %v1038 = vld [vmem:[#allocation2 + $0x48] sm:$0xff]
    %v1039 = vld [vmem:[#allocation2 + $0x50] sm:$0xff]
    %v1040 = vld [vmem:[#allocation2 + $0x58] sm:$0xff]
    %v1041 = vld [vmem:[#allocation3 + $0x60] sm:$0xff]
    %v1042 = vld [vmem:[#allocation3 + $0x68] sm:$0xff]
    %v1043 = vld [vmem:[#allocation3 + $0x70] sm:$0xff]
    %v1044 = vadd.f32 %v1038, %v1041
    %v1045 = vadd.f32 %v1039, %v1042
    %v1046 = vadd.f32 %v1040, %v1043
    %v1047 = vpack.c.bf16 %v1036, %v1036
    %1048 = vmatprep.subr.bf16.mxu0 %v659
    %1049 = vmatpush1.bf16.msra.mxu0 %v658
    %1050 = vmatprep.subr.bf16.mxu0 %v662
    %1051 = vmatpush1.bf16.msra.mxu0 %v661
    %1052 = vmatprep.subr.bf16.mxu0 %v665
    %1053 = vmatpush1.bf16.msra.mxu0 %v664
    %1054 = vmatprep.subr.bf16.mxu0 %v668
    %1055 = vmatpush1.bf16.msra.mxu0 %v667
    %1056 = vmatprep.subr.bf16.mxu0 %v671
    %1057 = vmatpush1.bf16.msra.mxu0 %v670
    %1058 = vmatprep.subr.bf16.mxu0 %v674
    %1059 = vmatpush1.bf16.msra.mxu0 %v673
    %1060 = vmatprep.subr.bf16.mxu0 %v677
    %1061 = vmatpush1.bf16.msra.mxu0 %v676
    %1062 = vmatprep.subr.bf16.mxu0 %v680
    %1063 = vmatpush1.bf16.msra.mxu0 %v679
    %1064 = vmatprep.subr.bf16.mxu0 0
    %1065 = vmatpush1.bf16.msra.mxu0 0
    %1066 = vmatprep.subr.bf16.mxu0 0
    %1067 = vmatpush1.bf16.msra.mxu0 0
    %1068 = vmatprep.subr.bf16.mxu0 0
    %1069 = vmatpush1.bf16.msra.mxu0 0
    %1070 = vmatprep.subr.bf16.mxu0 0
    %1071 = vmatpush1.bf16.msra.mxu0 0
    %1072 = vmatprep.subr.bf16.mxu0 0
    %1073 = vmatpush1.bf16.msra.mxu0 0
    %1074 = vmatprep.subr.bf16.mxu0 0
    %1075 = vmatpush1.bf16.msra.mxu0 0
    %1076 = vmatprep.subr.bf16.mxu0 0
    %1077 = vmatpush1.bf16.msra.mxu0 0
    %1078 = vmatprep.subr.bf16.mxu0 0
    %1079 = vmatpush1.bf16.msra.mxu0 0
    %1080 = vmatprep.mubr.bf16.mxu0 0
    %1081 = vmatmul.mubr.bf16.gmra.mrb[0].mxu0 %v1047
    %v1082 = vpop.f32.mrb[0].mxu0
    %v1083 = vadd.f32 0.0, %v1082
    %v1084 = vpop.f32.mrb[0].mxu0
    %v1085 = vadd.f32 0.0, %v1084
    %v1086 = vpop.f32.mrb[0].mxu0
    %v1087 = vpop.f32.mrb[0].mxu0
    %1088 = vdwg.mxu0
    %1089 = vmatprep.subr.bf16.mxu0 0
    %1090 = vmatpush1.bf16.msra.mxu0 %v660
    %1091 = vmatprep.subr.bf16.mxu0 0
    %1092 = vmatpush1.bf16.msra.mxu0 %v663
    %1093 = vmatprep.subr.bf16.mxu0 0
    %1094 = vmatpush1.bf16.msra.mxu0 %v666
    %1095 = vmatprep.subr.bf16.mxu0 0
    %1096 = vmatpush1.bf16.msra.mxu0 %v669
    %1097 = vmatprep.subr.bf16.mxu0 0
    %1098 = vmatpush1.bf16.msra.mxu0 %v672
    %1099 = vmatprep.subr.bf16.mxu0 0
    %1100 = vmatpush1.bf16.msra.mxu0 %v675
    %1101 = vmatprep.subr.bf16.mxu0 0
    %1102 = vmatpush1.bf16.msra.mxu0 %v678
    %1103 = vmatprep.subr.bf16.mxu0 0
    %1104 = vmatpush1.bf16.msra.mxu0 %v681
    %1105 = vmatprep.subr.bf16.mxu0 0
    %1106 = vmatpush1.bf16.msra.mxu0 0
    %1107 = vmatprep.subr.bf16.mxu0 0
    %1108 = vmatpush1.bf16.msra.mxu0 0
    %1109 = vmatprep.subr.bf16.mxu0 0
    %1110 = vmatpush1.bf16.msra.mxu0 0
    %1111 = vmatprep.subr.bf16.mxu0 0
    %1112 = vmatpush1.bf16.msra.mxu0 0
    %1113 = vmatprep.subr.bf16.mxu0 0
    %1114 = vmatpush1.bf16.msra.mxu0 0
    %1115 = vmatprep.subr.bf16.mxu0 0
    %1116 = vmatpush1.bf16.msra.mxu0 0
    %1117 = vmatprep.subr.bf16.mxu0 0
    %1118 = vmatpush1.bf16.msra.mxu0 0
    %1119 = vmatprep.subr.bf16.mxu0 0
    %1120 = vmatpush1.bf16.msra.mxu0 0
    %1121 = vmatprep.mubr.bf16.mxu0 0
    %1122 = vmatmul.mubr.bf16.gmra.mrb[0].mxu0 %v1047
    %v1123 = vpop.f32.mrb[0].mxu0
    %v1124 = vadd.f32 0.0, %v1123
    %v1125 = vpop.f32.mrb[0].mxu0
    %v1126 = vpop.f32.mrb[0].mxu0
    %v1127 = vpop.f32.mrb[0].mxu0
    %1128 = vdwg.mxu0
    %v1129 = vadd.f32 %v1044, %v1083
    %v1130 = vadd.f32 %v1045, %v1085
    %v1131 = vxor.u32 %v1129, 2147483648
    %v1132 = vxor.u32 %v1130, 2147483648
    %v1133 = vmul.f32 %v1131, 1.442695
    %v1134 = vpow.pop %v1133
    %v1135 = vmul.f32 %v1132, 1.442695
    %v1136 = vpow.pop %v1135
    %v1137 = vadd.f32 %v1134, 1.0
    %v1138 = vadd.f32 %v1136, 1.0
    %v1139 = vrcp.pop %v1137
    %v1140 = vmul.f32 1.0, %v1139
    %v1141 = vrcp.pop %v1138
    %v1142 = vmul.f32 1.0, %v1141
    %v1143 = vadd.f32 %v1124, %v567
    %v1144 = vmul.f32 %v1140, %v1143
    %v1145 = vadd.f32 %v1046, %v1144
    %v1146 = vtanh.pop %v1145
    %v1147 = vsub.f32 1.0, %v1142
    %v1148 = vmul.f32 %v1147, %v1146
    %v1149 = vmul.f32 %v1142, %v1036
    %v1150 = vadd.f32 %v1148, %v1149
    %1151 = vst [vmem:[#allocation4 + $0x18] sm:$0xff] %v1150
    %v1152 = vld [vmem:[#allocation2 + $0x60] sm:$0xff]
    %v1153 = vld [vmem:[#allocation2 + $0x68] sm:$0xff]
    %v1154 = vld [vmem:[#allocation2 + $0x70] sm:$0xff]
    %v1155 = vld [vmem:[#allocation3 + $0x48] sm:$0xff]
    %v1156 = vld [vmem:[#allocation3 + $0x50] sm:$0xff]
    %v1157 = vld [vmem:[#allocation3 + $0x58] sm:$0xff]
    %v1158 = vadd.f32 %v1152, %v1155
    %v1159 = vadd.f32 %v1153, %v1156
    %v1160 = vadd.f32 %v1154, %v1157
    %v1161 = vpack.c.bf16 %v1150, %v1150
    %1162 = vmatprep.subr.bf16.mxu0 %v659
    %1163 = vmatpush1.bf16.msra.mxu0 %v658
    %1164 = vmatprep.subr.bf16.mxu0 %v662
    %1165 = vmatpush1.bf16.msra.mxu0 %v661
    %1166 = vmatprep.subr.bf16.mxu0 %v665
    %1167 = vmatpush1.bf16.msra.mxu0 %v664
    %1168 = vmatprep.subr.bf16.mxu0 %v668
    %1169 = vmatpush1.bf16.msra.mxu0 %v667
    %1170 = vmatprep.subr.bf16.mxu0 %v671
    %1171 = vmatpush1.bf16.msra.mxu0 %v670
    %1172 = vmatprep.subr.bf16.mxu0 %v674
    %1173 = vmatpush1.bf16.msra.mxu0 %v673
    %1174 = vmatprep.subr.bf16.mxu0 %v677
    %1175 = vmatpush1.bf16.msra.mxu0 %v676
    %1176 = vmatprep.subr.bf16.mxu0 %v680
    %1177 = vmatpush1.bf16.msra.mxu0 %v679
    %1178 = vmatprep.subr.bf16.mxu0 0
    %1179 = vmatpush1.bf16.msra.mxu0 0
    %1180 = vmatprep.subr.bf16.mxu0 0
    %1181 = vmatpush1.bf16.msra.mxu0 0
    %1182 = vmatprep.subr.bf16.mxu0 0
    %1183 = vmatpush1.bf16.msra.mxu0 0
    %1184 = vmatprep.subr.bf16.mxu0 0
    %1185 = vmatpush1.bf16.msra.mxu0 0
    %1186 = vmatprep.subr.bf16.mxu0 0
    %1187 = vmatpush1.bf16.msra.mxu0 0
    %1188 = vmatprep.subr.bf16.mxu0 0
    %1189 = vmatpush1.bf16.msra.mxu0 0
    %1190 = vmatprep.subr.bf16.mxu0 0
    %1191 = vmatpush1.bf16.msra.mxu0 0
    %1192 = vmatprep.subr.bf16.mxu0 0
    %1193 = vmatpush1.bf16.msra.mxu0 0
    %1194 = vmatprep.mubr.bf16.mxu0 0
    %1195 = vmatmul.mubr.bf16.gmra.mrb[0].mxu0 %v1161
    %v1196 = vpop.f32.mrb[0].mxu0
    %v1197 = vadd.f32 0.0, %v1196
    %v1198 = vpop.f32.mrb[0].mxu0
    %v1199 = vadd.f32 0.0, %v1198
    %v1200 = vpop.f32.mrb[0].mxu0
    %v1201 = vpop.f32.mrb[0].mxu0
    %1202 = vdwg.mxu0
    %1203 = vmatprep.subr.bf16.mxu0 0
    %1204 = vmatpush1.bf16.msra.mxu0 %v660
    %1205 = vmatprep.subr.bf16.mxu0 0
    %1206 = vmatpush1.bf16.msra.mxu0 %v663
    %1207 = vmatprep.subr.bf16.mxu0 0
    %1208 = vmatpush1.bf16.msra.mxu0 %v666
    %1209 = vmatprep.subr.bf16.mxu0 0
    %1210 = vmatpush1.bf16.msra.mxu0 %v669
    %1211 = vmatprep.subr.bf16.mxu0 0
    %1212 = vmatpush1.bf16.msra.mxu0 %v672
    %1213 = vmatprep.subr.bf16.mxu0 0
    %1214 = vmatpush1.bf16.msra.mxu0 %v675
    %1215 = vmatprep.subr.bf16.mxu0 0
    %1216 = vmatpush1.bf16.msra.mxu0 %v678
    %1217 = vmatprep.subr.bf16.mxu0 0
    %1218 = vmatpush1.bf16.msra.mxu0 %v681
    %1219 = vmatprep.subr.bf16.mxu0 0
    %1220 = vmatpush1.bf16.msra.mxu0 0
    %1221 = vmatprep.subr.bf16.mxu0 0
    %1222 = vmatpush1.bf16.msra.mxu0 0
    %1223 = vmatprep.subr.bf16.mxu0 0
    %1224 = vmatpush1.bf16.msra.mxu0 0
    %1225 = vmatprep.subr.bf16.mxu0 0
    %1226 = vmatpush1.bf16.msra.mxu0 0
    %1227 = vmatprep.subr.bf16.mxu0 0
    %1228 = vmatpush1.bf16.msra.mxu0 0
    %1229 = vmatprep.subr.bf16.mxu0 0
    %1230 = vmatpush1.bf16.msra.mxu0 0
    %1231 = vmatprep.subr.bf16.mxu0 0
    %1232 = vmatpush1.bf16.msra.mxu0 0
    %1233 = vmatprep.subr.bf16.mxu0 0
    %1234 = vmatpush1.bf16.msra.mxu0 0
    %1235 = vmatprep.mubr.bf16.mxu0 0
    %1236 = vmatmul.mubr.bf16.gmra.mrb[0].mxu0 %v1161
    %v1237 = vpop.f32.mrb[0].mxu0
    %v1238 = vadd.f32 0.0, %v1237
    %v1239 = vpop.f32.mrb[0].mxu0
    %v1240 = vpop.f32.mrb[0].mxu0
    %v1241 = vpop.f32.mrb[0].mxu0
    %1242 = vdwg.mxu0
    %v1243 = vadd.f32 %v1158, %v1197
    %v1244 = vadd.f32 %v1159, %v1199
    %v1245 = vxor.u32 %v1243, 2147483648
    %v1246 = vxor.u32 %v1244, 2147483648
    %v1247 = vmul.f32 %v1245, 1.442695
    %v1248 = vpow.pop %v1247
    %v1249 = vmul.f32 %v1246, 1.442695
    %v1250 = vpow.pop %v1249
    %v1251 = vadd.f32 %v1248, 1.0
    %v1252 = vadd.f32 %v1250, 1.0
    %v1253 = vrcp.pop %v1251
    %v1254 = vmul.f32 1.0, %v1253
    %v1255 = vrcp.pop %v1252
    %v1256 = vmul.f32 1.0, %v1255
    %v1257 = vadd.f32 %v1238, %v567
    %v1258 = vmul.f32 %v1254, %v1257
    %v1259 = vadd.f32 %v1160, %v1258
    %v1260 = vtanh.pop %v1259
    %v1261 = vsub.f32 1.0, %v1256
    %v1262 = vmul.f32 %v1261, %v1260
    %v1263 = vmul.f32 %v1256, %v1150
    %v1264 = vadd.f32 %v1262, %v1263
    %1265 = vst [vmem:[#allocation4 + $0x20] sm:$0xff] %v1264
    %v1266 = vld [vmem:[#allocation2 + $0x78] sm:$0xff]
    %v1267 = vld [vmem:[#allocation2 + $0x80] sm:$0xff]
    %v1268 = vld [vmem:[#allocation2 + $0x88] sm:$0xff]
    %v1269 = vld [vmem:[#allocation3 + $0x30] sm:$0xff]
    %v1270 = vld [vmem:[#allocation3 + $0x38] sm:$0xff]
    %v1271 = vld [vmem:[#allocation3 + $0x40] sm:$0xff]
    %v1272 = vadd.f32 %v1266, %v1269
    %v1273 = vadd.f32 %v1267, %v1270
    %v1274 = vadd.f32 %v1268, %v1271
    %v1275 = vpack.c.bf16 %v1264, %v1264
    %1276 = vmatprep.subr.bf16.mxu0 %v659
    %1277 = vmatpush1.bf16.msra.mxu0 %v658
    %1278 = vmatprep.subr.bf16.mxu0 %v662
    %1279 = vmatpush1.bf16.msra.mxu0 %v661
    %1280 = vmatprep.subr.bf16.mxu0 %v665
    %1281 = vmatpush1.bf16.msra.mxu0 %v664
    %1282 = vmatprep.subr.bf16.mxu0 %v668
    %1283 = vmatpush1.bf16.msra.mxu0 %v667
    %1284 = vmatprep.subr.bf16.mxu0 %v671
    %1285 = vmatpush1.bf16.msra.mxu0 %v670
    %1286 = vmatprep.subr.bf16.mxu0 %v674
    %1287 = vmatpush1.bf16.msra.mxu0 %v673
    %1288 = vmatprep.subr.bf16.mxu0 %v677
    %1289 = vmatpush1.bf16.msra.mxu0 %v676
    %1290 = vmatprep.subr.bf16.mxu0 %v680
    %1291 = vmatpush1.bf16.msra.mxu0 %v679
    %1292 = vmatprep.subr.bf16.mxu0 0
    %1293 = vmatpush1.bf16.msra.mxu0 0
    %1294 = vmatprep.subr.bf16.mxu0 0
    %1295 = vmatpush1.bf16.msra.mxu0 0
    %1296 = vmatprep.subr.bf16.mxu0 0
    %1297 = vmatpush1.bf16.msra.mxu0 0
    %1298 = vmatprep.subr.bf16.mxu0 0
    %1299 = vmatpush1.bf16.msra.mxu0 0
    %1300 = vmatprep.subr.bf16.mxu0 0
    %1301 = vmatpush1.bf16.msra.mxu0 0
    %1302 = vmatprep.subr.bf16.mxu0 0
    %1303 = vmatpush1.bf16.msra.mxu0 0
    %1304 = vmatprep.subr.bf16.mxu0 0
    %1305 = vmatpush1.bf16.msra.mxu0 0
    %1306 = vmatprep.subr.bf16.mxu0 0
    %1307 = vmatpush1.bf16.msra.mxu0 0
    %1308 = vmatprep.mubr.bf16.mxu0 0
    %1309 = vmatmul.mubr.bf16.gmra.mrb[0].mxu0 %v1275
    %v1310 = vpop.f32.mrb[0].mxu0
    %v1311 = vadd.f32 0.0, %v1310
    %v1312 = vpop.f32.mrb[0].mxu0
    %v1313 = vadd.f32 0.0, %v1312
    %v1314 = vpop.f32.mrb[0].mxu0
    %v1315 = vpop.f32.mrb[0].mxu0
    %1316 = vdwg.mxu0
    %1317 = vmatprep.subr.bf16.mxu0 0
    %1318 = vmatpush1.bf16.msra.mxu0 %v660
    %1319 = vmatprep.subr.bf16.mxu0 0
    %1320 = vmatpush1.bf16.msra.mxu0 %v663
    %1321 = vmatprep.subr.bf16.mxu0 0
    %1322 = vmatpush1.bf16.msra.mxu0 %v666
    %1323 = vmatprep.subr.bf16.mxu0 0
    %1324 = vmatpush1.bf16.msra.mxu0 %v669
    %1325 = vmatprep.subr.bf16.mxu0 0
    %1326 = vmatpush1.bf16.msra.mxu0 %v672
    %1327 = vmatprep.subr.bf16.mxu0 0
    %1328 = vmatpush1.bf16.msra.mxu0 %v675
    %1329 = vmatprep.subr.bf16.mxu0 0
    %1330 = vmatpush1.bf16.msra.mxu0 %v678
    %1331 = vmatprep.subr.bf16.mxu0 0
    %1332 = vmatpush1.bf16.msra.mxu0 %v681
    %1333 = vmatprep.subr.bf16.mxu0 0
    %1334 = vmatpush1.bf16.msra.mxu0 0
    %1335 = vmatprep.subr.bf16.mxu0 0
    %1336 = vmatpush1.bf16.msra.mxu0 0
    %1337 = vmatprep.subr.bf16.mxu0 0
    %1338 = vmatpush1.bf16.msra.mxu0 0
    %1339 = vmatprep.subr.bf16.mxu0 0
    %1340 = vmatpush1.bf16.msra.mxu0 0
    %1341 = vmatprep.subr.bf16.mxu0 0
    %1342 = vmatpush1.bf16.msra.mxu0 0
    %1343 = vmatprep.subr.bf16.mxu0 0
    %1344 = vmatpush1.bf16.msra.mxu0 0
    %1345 = vmatprep.subr.bf16.mxu0 0
    %1346 = vmatpush1.bf16.msra.mxu0 0
    %1347 = vmatprep.subr.bf16.mxu0 0
    %1348 = vmatpush1.bf16.msra.mxu0 0
    %1349 = vmatprep.mubr.bf16.mxu0 0
    %1350 = vmatmul.mubr.bf16.gmra.mrb[0].mxu0 %v1275
    %v1351 = vpop.f32.mrb[0].mxu0
    %v1352 = vadd.f32 0.0, %v1351
    %v1353 = vpop.f32.mrb[0].mxu0
    %v1354 = vpop.f32.mrb[0].mxu0
    %v1355 = vpop.f32.mrb[0].mxu0
    %1356 = vdwg.mxu0
    %v1357 = vadd.f32 %v1272, %v1311
    %v1358 = vadd.f32 %v1273, %v1313
    %v1359 = vxor.u32 %v1357, 2147483648
    %v1360 = vxor.u32 %v1358, 2147483648
    %v1361 = vmul.f32 %v1359, 1.442695
    %v1362 = vpow.pop %v1361
    %v1363 = vmul.f32 %v1360, 1.442695
    %v1364 = vpow.pop %v1363
    %v1365 = vadd.f32 %v1362, 1.0
    %v1366 = vadd.f32 %v1364, 1.0
    %v1367 = vrcp.pop %v1365
    %v1368 = vmul.f32 1.0, %v1367
    %v1369 = vrcp.pop %v1366
    %v1370 = vmul.f32 1.0, %v1369
    %v1371 = vadd.f32 %v1352, %v567
    %v1372 = vmul.f32 %v1368, %v1371
    %v1373 = vadd.f32 %v1274, %v1372
    %v1374 = vtanh.pop %v1373
    %v1375 = vsub.f32 1.0, %v1370
    %v1376 = vmul.f32 %v1375, %v1374
    %v1377 = vmul.f32 %v1370, %v1264
    %v1378 = vadd.f32 %v1376, %v1377
    %1379 = vst [vmem:[#allocation4 + $0x28] sm:$0xff] %v1378
    %v1380 = vld [vmem:[#allocation2 + $0x90] sm:$0xff]
    %v1381 = vld [vmem:[#allocation2 + $0x98] sm:$0xff]
    %v1382 = vld [vmem:[#allocation2 + $0xa0] sm:$0xff]
    %v1383 = vld [vmem:[#allocation3 + $0x18] sm:$0xff]
    %v1384 = vld [vmem:[#allocation3 + $0x20] sm:$0xff]
    %v1385 = vld [vmem:[#allocation3 + $0x28] sm:$0xff]
    %v1386 = vadd.f32 %v1380, %v1383
    %v1387 = vadd.f32 %v1381, %v1384
    %v1388 = vadd.f32 %v1382, %v1385
    %v1389 = vpack.c.bf16 %v1378, %v1378
    %1390 = vmatprep.subr.bf16.mxu0 %v659
    %1391 = vmatpush1.bf16.msra.mxu0 %v658
    %1392 = vmatprep.subr.bf16.mxu0 %v662
    %1393 = vmatpush1.bf16.msra.mxu0 %v661
    %1394 = vmatprep.subr.bf16.mxu0 %v665
    %1395 = vmatpush1.bf16.msra.mxu0 %v664
    %1396 = vmatprep.subr.bf16.mxu0 %v668
    %1397 = vmatpush1.bf16.msra.mxu0 %v667
    %1398 = vmatprep.subr.bf16.mxu0 %v671
    %1399 = vmatpush1.bf16.msra.mxu0 %v670
    %1400 = vmatprep.subr.bf16.mxu0 %v674
    %1401 = vmatpush1.bf16.msra.mxu0 %v673
    %1402 = vmatprep.subr.bf16.mxu0 %v677
    %1403 = vmatpush1.bf16.msra.mxu0 %v676
    %1404 = vmatprep.subr.bf16.mxu0 %v680
    %1405 = vmatpush1.bf16.msra.mxu0 %v679
    %1406 = vmatprep.subr.bf16.mxu0 0
    %1407 = vmatpush1.bf16.msra.mxu0 0
    %1408 = vmatprep.subr.bf16.mxu0 0
    %1409 = vmatpush1.bf16.msra.mxu0 0
    %1410 = vmatprep.subr.bf16.mxu0 0
    %1411 = vmatpush1.bf16.msra.mxu0 0
    %1412 = vmatprep.subr.bf16.mxu0 0
    %1413 = vmatpush1.bf16.msra.mxu0 0
    %1414 = vmatprep.subr.bf16.mxu0 0
    %1415 = vmatpush1.bf16.msra.mxu0 0
    %1416 = vmatprep.subr.bf16.mxu0 0
    %1417 = vmatpush1.bf16.msra.mxu0 0
    %1418 = vmatprep.subr.bf16.mxu0 0
    %1419 = vmatpush1.bf16.msra.mxu0 0
    %1420 = vmatprep.subr.bf16.mxu0 0
    %1421 = vmatpush1.bf16.msra.mxu0 0
    %1422 = vmatprep.mubr.bf16.mxu0 0
    %1423 = vmatmul.mubr.bf16.gmra.mrb[0].mxu0 %v1389
    %v1424 = vpop.f32.mrb[0].mxu0
    %v1425 = vadd.f32 0.0, %v1424
    %v1426 = vpop.f32.mrb[0].mxu0
    %v1427 = vadd.f32 0.0, %v1426
    %v1428 = vpop.f32.mrb[0].mxu0
    %v1429 = vpop.f32.mrb[0].mxu0
    %1430 = vdwg.mxu0
    %1431 = vmatprep.subr.bf16.mxu0 0
    %1432 = vmatpush1.bf16.msra.mxu0 %v660
    %1433 = vmatprep.subr.bf16.mxu0 0
    %1434 = vmatpush1.bf16.msra.mxu0 %v663
    %1435 = vmatprep.subr.bf16.mxu0 0
    %1436 = vmatpush1.bf16.msra.mxu0 %v666
    %1437 = vmatprep.subr.bf16.mxu0 0
    %1438 = vmatpush1.bf16.msra.mxu0 %v669
    %1439 = vmatprep.subr.bf16.mxu0 0
    %1440 = vmatpush1.bf16.msra.mxu0 %v672
    %1441 = vmatprep.subr.bf16.mxu0 0
    %1442 = vmatpush1.bf16.msra.mxu0 %v675
    %1443 = vmatprep.subr.bf16.mxu0 0
    %1444 = vmatpush1.bf16.msra.mxu0 %v678
    %1445 = vmatprep.subr.bf16.mxu0 0
    %1446 = vmatpush1.bf16.msra.mxu0 %v681
    %1447 = vmatprep.subr.bf16.mxu0 0
    %1448 = vmatpush1.bf16.msra.mxu0 0
    %1449 = vmatprep.subr.bf16.mxu0 0
    %1450 = vmatpush1.bf16.msra.mxu0 0
    %1451 = vmatprep.subr.bf16.mxu0 0
    %1452 = vmatpush1.bf16.msra.mxu0 0
    %1453 = vmatprep.subr.bf16.mxu0 0
    %1454 = vmatpush1.bf16.msra.mxu0 0
    %1455 = vmatprep.subr.bf16.mxu0 0
    %1456 = vmatpush1.bf16.msra.mxu0 0
    %1457 = vmatprep.subr.bf16.mxu0 0
    %1458 = vmatpush1.bf16.msra.mxu0 0
    %1459 = vmatprep.subr.bf16.mxu0 0
    %1460 = vmatpush1.bf16.msra.mxu0 0
    %1461 = vmatprep.subr.bf16.mxu0 0
    %1462 = vmatpush1.bf16.msra.mxu0 0
    %1463 = vmatprep.mubr.bf16.mxu0 0
    %1464 = vmatmul.mubr.bf16.gmra.mrb[0].mxu0 %v1389
    %v1465 = vpop.f32.mrb[0].mxu0
    %v1466 = vadd.f32 0.0, %v1465
    %v1467 = vpop.f32.mrb[0].mxu0
    %v1468 = vpop.f32.mrb[0].mxu0
    %v1469 = vpop.f32.mrb[0].mxu0
    %1470 = vdwg.mxu0
    %v1471 = vadd.f32 %v1386, %v1425
    %v1472 = vadd.f32 %v1387, %v1427
    %v1473 = vxor.u32 %v1471, 2147483648
    %v1474 = vxor.u32 %v1472, 2147483648
    %v1475 = vmul.f32 %v1473, 1.442695
    %v1476 = vpow.pop %v1475
    %v1477 = vmul.f32 %v1474, 1.442695
    %v1478 = vpow.pop %v1477
    %v1479 = vadd.f32 %v1476, 1.0
    %v1480 = vadd.f32 %v1478, 1.0
    %v1481 = vrcp.pop %v1479
    %v1482 = vmul.f32 1.0, %v1481
    %v1483 = vrcp.pop %v1480
    %v1484 = vmul.f32 1.0, %v1483
    %v1485 = vadd.f32 %v1466, %v567
    %v1486 = vmul.f32 %v1482, %v1485
    %v1487 = vadd.f32 %v1388, %v1486
    %v1488 = vtanh.pop %v1487
    %v1489 = vsub.f32 1.0, %v1484
    %v1490 = vmul.f32 %v1489, %v1488
    %v1491 = vmul.f32 %v1484, %v1378
    %v1492 = vadd.f32 %v1490, %v1491
    %1493 = vst [vmem:[#allocation4 + $0x30] sm:$0xff] %v1492
    %v1494 = vld [vmem:[#allocation2 + $0xa8] sm:$0xff]
    %v1495 = vld [vmem:[#allocation2 + $0xb0] sm:$0xff]
    %v1496 = vld [vmem:[#allocation2 + $0xb8] sm:$0xff]
    %v1497 = vld [vmem:[#allocation3] sm:$0xff]
    %v1498 = vld [vmem:[#allocation3 + $0x8] sm:$0xff]
    %v1499 = vld [vmem:[#allocation3 + $0x10] sm:$0xff]
    %v1500 = vadd.f32 %v1494, %v1497
    %v1501 = vadd.f32 %v1495, %v1498
    %v1502 = vadd.f32 %v1496, %v1499
    %v1503 = vpack.c.bf16 %v1492, %v1492
    %1504 = vmatprep.subr.bf16.mxu0 %v659
    %1505 = vmatpush1.bf16.msra.mxu0 %v658
    %1506 = vmatprep.subr.bf16.mxu0 %v662
    %1507 = vmatpush1.bf16.msra.mxu0 %v661
    %1508 = vmatprep.subr.bf16.mxu0 %v665
    %1509 = vmatpush1.bf16.msra.mxu0 %v664
    %1510 = vmatprep.subr.bf16.mxu0 %v668
    %1511 = vmatpush1.bf16.msra.mxu0 %v667
    %1512 = vmatprep.subr.bf16.mxu0 %v671
    %1513 = vmatpush1.bf16.msra.mxu0 %v670
    %1514 = vmatprep.subr.bf16.mxu0 %v674
    %1515 = vmatpush1.bf16.msra.mxu0 %v673
    %1516 = vmatprep.subr.bf16.mxu0 %v677
    %1517 = vmatpush1.bf16.msra.mxu0 %v676
    %1518 = vmatprep.subr.bf16.mxu0 %v680
    %1519 = vmatpush1.bf16.msra.mxu0 %v679
    %1520 = vmatprep.subr.bf16.mxu0 0
    %1521 = vmatpush1.bf16.msra.mxu0 0
    %1522 = vmatprep.subr.bf16.mxu0 0
    %1523 = vmatpush1.bf16.msra.mxu0 0
    %1524 = vmatprep.subr.bf16.mxu0 0
    %1525 = vmatpush1.bf16.msra.mxu0 0
    %1526 = vmatprep.subr.bf16.mxu0 0
    %1527 = vmatpush1.bf16.msra.mxu0 0
    %1528 = vmatprep.subr.bf16.mxu0 0
    %1529 = vmatpush1.bf16.msra.mxu0 0
    %1530 = vmatprep.subr.bf16.mxu0 0
    %1531 = vmatpush1.bf16.msra.mxu0 0
    %1532 = vmatprep.subr.bf16.mxu0 0
    %1533 = vmatpush1.bf16.msra.mxu0 0
    %1534 = vmatprep.subr.bf16.mxu0 0
    %1535 = vmatpush1.bf16.msra.mxu0 0
    %1536 = vmatprep.mubr.bf16.mxu0 0
    %1537 = vmatmul.mubr.bf16.gmra.mrb[0].mxu0 %v1503
    %v1538 = vpop.f32.mrb[0].mxu0
    %v1539 = vadd.f32 0.0, %v1538
    %v1540 = vpop.f32.mrb[0].mxu0
    %v1541 = vadd.f32 0.0, %v1540
    %v1542 = vpop.f32.mrb[0].mxu0
    %v1543 = vpop.f32.mrb[0].mxu0
    %1544 = vdwg.mxu0
    %1545 = vmatprep.subr.bf16.mxu0 0
    %1546 = vmatpush1.bf16.msra.mxu0 %v660
    %1547 = vmatprep.subr.bf16.mxu0 0
    %1548 = vmatpush1.bf16.msra.mxu0 %v663
    %1549 = vmatprep.subr.bf16.mxu0 0
    %1550 = vmatpush1.bf16.msra.mxu0 %v666
    %1551 = vmatprep.subr.bf16.mxu0 0
    %1552 = vmatpush1.bf16.msra.mxu0 %v669
    %1553 = vmatprep.subr.bf16.mxu0 0
    %1554 = vmatpush1.bf16.msra.mxu0 %v672
    %1555 = vmatprep.subr.bf16.mxu0 0
    %1556 = vmatpush1.bf16.msra.mxu0 %v675
    %1557 = vmatprep.subr.bf16.mxu0 0
    %1558 = vmatpush1.bf16.msra.mxu0 %v678
    %1559 = vmatprep.subr.bf16.mxu0 0
    %1560 = vmatpush1.bf16.msra.mxu0 %v681
    %1561 = vmatprep.subr.bf16.mxu0 0
    %1562 = vmatpush1.bf16.msra.mxu0 0
    %1563 = vmatprep.subr.bf16.mxu0 0
    %1564 = vmatpush1.bf16.msra.mxu0 0
    %1565 = vmatprep.subr.bf16.mxu0 0
    %1566 = vmatpush1.bf16.msra.mxu0 0
    %1567 = vmatprep.subr.bf16.mxu0 0
    %1568 = vmatpush1.bf16.msra.mxu0 0
    %1569 = vmatprep.subr.bf16.mxu0 0
    %1570 = vmatpush1.bf16.msra.mxu0 0
    %1571 = vmatprep.subr.bf16.mxu0 0
    %1572 = vmatpush1.bf16.msra.mxu0 0
    %1573 = vmatprep.subr.bf16.mxu0 0
    %1574 = vmatpush1.bf16.msra.mxu0 0
    %1575 = vmatprep.subr.bf16.mxu0 0
    %1576 = vmatpush1.bf16.msra.mxu0 0
    %1577 = vmatprep.mubr.bf16.mxu0 0
    %1578 = vmatmul.mubr.bf16.gmra.mrb[0].mxu0 %v1503
    %v1579 = vpop.f32.mrb[0].mxu0
    %v1580 = vadd.f32 0.0, %v1579
    %v1581 = vpop.f32.mrb[0].mxu0
    %v1582 = vpop.f32.mrb[0].mxu0
    %v1583 = vpop.f32.mrb[0].mxu0
    %1584 = vdwg.mxu0
    %v1585 = vadd.f32 %v1500, %v1539
    %v1586 = vadd.f32 %v1501, %v1541
    %v1587 = vxor.u32 %v1585, 2147483648
    %v1588 = vxor.u32 %v1586, 2147483648
    %v1589 = vmul.f32 %v1587, 1.442695
    %v1590 = vpow.pop %v1589
    %v1591 = vmul.f32 %v1588, 1.442695
    %v1592 = vpow.pop %v1591
    %v1593 = vadd.f32 %v1590, 1.0
    %v1594 = vadd.f32 %v1592, 1.0
    %v1595 = vrcp.pop %v1593
    %v1596 = vmul.f32 1.0, %v1595
    %v1597 = vrcp.pop %v1594
    %v1598 = vmul.f32 1.0, %v1597
    %v1599 = vadd.f32 %v1580, %v567
    %v1600 = vmul.f32 %v1596, %v1599
    %v1601 = vadd.f32 %v1502, %v1600
    %v1602 = vtanh.pop %v1601
    %v1603 = vsub.f32 1.0, %v1598
    %v1604 = vmul.f32 %v1603, %v1602
    %v1605 = vmul.f32 %v1598, %v1492
    %v1606 = vadd.f32 %v1604, %v1605
    %1607 = vst [vmem:[#allocation4 + $0x38] sm:$0xff] %v1606
    %v1608 = vld [vmem:[#allocation4] sm:$0xff]
    %v1609 = vld [vmem:[#allocation4 + $0x8] sm:$0xff]
    %v1610 = vld [vmem:[#allocation4 + $0x10] sm:$0xff]
    %v1611 = vld [vmem:[#allocation4 + $0x18] sm:$0xff]
    %v1612 = vld [vmem:[#allocation4 + $0x20] sm:$0xff]
    %v1613 = vld [vmem:[#allocation4 + $0x28] sm:$0xff]
    %v1614 = vld [vmem:[#allocation4 + $0x30] sm:$0xff]
    %v1615 = vld [vmem:[#allocation4 + $0x38] sm:$0xff]
    %v1616 = vpack.c.bf16 %v1609, %v1608
    %v1617 = vpack.c.bf16 %v1611, %v1610
    %v1618 = vpack.c.bf16 %v1613, %v1612
    %v1619 = vpack.c.bf16 %v1615, %v1614
    %v1620 = vld [vmem:[#allocation13] sm:$0xff]
    %v1621 = vld [vmem:[#allocation13 + $0x8] sm:$0xf]
    %v1622 = vld [vmem:[#allocation13 + $0xc] sm:$0xff]
    %v1623 = vld [vmem:[#allocation13 + $0x14] sm:$0xf]
    %v1624 = vld [vmem:[#allocation13 + $0x18] sm:$0xff]
    %v1625 = vld [vmem:[#allocation13 + $0x20] sm:$0xf]
    %v1626 = vld [vmem:[#allocation13 + $0x24] sm:$0xff]
    %v1627 = vld [vmem:[#allocation13 + $0x2c] sm:$0xf]
    %v1628 = vld [vmem:[#allocation13 + $0x30] sm:$0xff]
    %v1629 = vld [vmem:[#allocation13 + $0x38] sm:$0xf]
    %v1630 = vld [vmem:[#allocation13 + $0x3c] sm:$0xff]
    %v1631 = vld [vmem:[#allocation13 + $0x44] sm:$0xf]
    %v1632 = vld [vmem:[#allocation13 + $0x48] sm:$0xff]
    %v1633 = vld [vmem:[#allocation13 + $0x50] sm:$0xf]
    %v1634 = vld [vmem:[#allocation13 + $0x54] sm:$0xff]
    %v1635 = vld [vmem:[#allocation13 + $0x5c] sm:$0xf]
    %v1636 = vld [vmem:[#allocation13 + $0x60] sm:$0xff]
    %v1637 = vld [vmem:[#allocation13 + $0x68] sm:$0xf]
    %v1638 = vld [vmem:[#allocation13 + $0x6c] sm:$0xff]
    %v1639 = vld [vmem:[#allocation13 + $0x74] sm:$0xf]
    %v1640 = vld [vmem:[#allocation13 + $0x78] sm:$0xff]
    %v1641 = vld [vmem:[#allocation13 + $0x80] sm:$0xf]
    %v1642 = vld [vmem:[#allocation13 + $0x84] sm:$0xff]
    %v1643 = vld [vmem:[#allocation13 + $0x8c] sm:$0xf]
    %v1644 = vld [vmem:[#allocation13 + $0x90] sm:$0xff]
    %v1645 = vld [vmem:[#allocation13 + $0x98] sm:$0xf]
    %v1646 = vld [vmem:[#allocation13 + $0x9c] sm:$0xff]
    %v1647 = vld [vmem:[#allocation13 + $0xa4] sm:$0xf]
    %v1648 = vld [vmem:[#allocation13 + $0xa8] sm:$0xff]
    %v1649 = vld [vmem:[#allocation13 + $0xb0] sm:$0xf]
    %v1650 = vld [vmem:[#allocation13 + $0xb4] sm:$0xff]
    %v1651 = vld [vmem:[#allocation13 + $0xbc] sm:$0xf]
    %v1652 = vld [vmem:[%s7] sm:$0x7]
    %v1654 = vlaneseq
    %v1655 = vshrl.u32 %v1654, 7
    %v1656 = vsub.s32 0, %v1655
    %v1657 = vrot.slane %v1652, %v1656
    %v1658 = vlaneseq
    %v1659 = vshrl.u32 %v1658, 7
    %v1660 = vsub.s32 1, %v1659
    %v1661 = vrot.slane %v1652, %v1660
    %v1662 = vlaneseq
    %v1663 = vshrl.u32 %v1662, 7
    %v1664 = vsub.s32 2, %v1663
    %v1665 = vrot.slane %v1652, %v1664
    %v1701 = vunpack.c.l.b16 %v1620
    %v1702 = vunpack.c.h.b16 %v1620
    %v1703 = vunpack.c.l.b16 %v1621
    %v1704 = vunpack.c.l.b16 %v1622
    %v1705 = vunpack.c.h.b16 %v1622
    %v1706 = vunpack.c.l.b16 %v1623
    %v1707 = vunpack.c.l.b16 %v1624
    %v1708 = vunpack.c.h.b16 %v1624
    %v1709 = vunpack.c.l.b16 %v1625
    %v1710 = vunpack.c.l.b16 %v1626
    %v1711 = vunpack.c.h.b16 %v1626
    %v1712 = vunpack.c.l.b16 %v1627
    %v1713 = vunpack.c.l.b16 %v1628
    %v1714 = vunpack.c.h.b16 %v1628
    %v1715 = vunpack.c.l.b16 %v1629
    %v1716 = vunpack.c.l.b16 %v1630
    %v1717 = vunpack.c.h.b16 %v1630
    %v1718 = vunpack.c.l.b16 %v1631
    %v1719 = vunpack.c.l.b16 %v1632
    %v1720 = vunpack.c.h.b16 %v1632
    %v1721 = vunpack.c.l.b16 %v1633
    %v1722 = vunpack.c.l.b16 %v1634
    %v1723 = vunpack.c.h.b16 %v1634
    %v1724 = vunpack.c.l.b16 %v1635
    %v1725 = vunpack.c.l.b16 %v1636
    %v1726 = vunpack.c.h.b16 %v1636
    %v1727 = vunpack.c.l.b16 %v1637
    %v1728 = vunpack.c.l.b16 %v1638
    %v1729 = vunpack.c.h.b16 %v1638
    %v1730 = vunpack.c.l.b16 %v1639
    %v1731 = vunpack.c.l.b16 %v1640
    %v1732 = vunpack.c.h.b16 %v1640
    %v1733 = vunpack.c.l.b16 %v1641
    %v1734 = vunpack.c.l.b16 %v1642
    %v1735 = vunpack.c.h.b16 %v1642
    %v1736 = vunpack.c.l.b16 %v1643
    %v1737 = vunpack.c.l.b16 %v1644
    %v1738 = vunpack.c.h.b16 %v1644
    %v1739 = vunpack.c.l.b16 %v1645
    %v1740 = vunpack.c.l.b16 %v1646
    %v1741 = vunpack.c.h.b16 %v1646
    %v1742 = vunpack.c.l.b16 %v1647
    %v1743 = vunpack.c.l.b16 %v1648
    %v1744 = vunpack.c.h.b16 %v1648
    %v1745 = vunpack.c.l.b16 %v1649
    %v1746 = vunpack.c.l.b16 %v1650
    %v1747 = vunpack.c.h.b16 %v1650
    %v1748 = vunpack.c.l.b16 %v1651
    %v1749 = vpack.c.b16 %v1704, %v1701
    %v1750 = vpack.c.b16 %v1705, %v1702
    %v1751 = vpack.c.b16 %v1706, %v1703
    %v1752 = vpack.c.b16 %v1710, %v1707
    %v1753 = vpack.c.b16 %v1711, %v1708
    %v1754 = vpack.c.b16 %v1712, %v1709
    %v1755 = vpack.c.b16 %v1716, %v1713
    %v1756 = vpack.c.b16 %v1717, %v1714
    %v1757 = vpack.c.b16 %v1718, %v1715
    %v1758 = vpack.c.b16 %v1722, %v1719
    %v1759 = vpack.c.b16 %v1723, %v1720
    %v1760 = vpack.c.b16 %v1724, %v1721
    %v1761 = vpack.c.b16 %v1728, %v1725
    %v1762 = vpack.c.b16 %v1729, %v1726
    %v1763 = vpack.c.b16 %v1730, %v1727
    %v1764 = vpack.c.b16 %v1734, %v1731
    %v1765 = vpack.c.b16 %v1735, %v1732
    %v1766 = vpack.c.b16 %v1736, %v1733
    %v1767 = vpack.c.b16 %v1740, %v1737
    %v1768 = vpack.c.b16 %v1741, %v1738
    %v1769 = vpack.c.b16 %v1742, %v1739
    %v1770 = vpack.c.b16 %v1746, %v1743
    %v1771 = vpack.c.b16 %v1747, %v1744
    %v1772 = vpack.c.b16 %v1748, %v1745
    %1797 = vmatprep.subr.bf16.mxu0 %v1750
    %1798 = vmatpush1.bf16.msra.mxu0 %v1749
    %1799 = vmatprep.subr.bf16.mxu0 %v1753
    %1800 = vmatpush1.bf16.msra.mxu0 %v1752
    %1801 = vmatprep.subr.bf16.mxu0 %v1756
    %1802 = vmatpush1.bf16.msra.mxu0 %v1755
    %1803 = vmatprep.subr.bf16.mxu0 %v1759
    %1804 = vmatpush1.bf16.msra.mxu0 %v1758
    %1805 = vmatprep.subr.bf16.mxu0 %v1762
    %1806 = vmatpush1.bf16.msra.mxu0 %v1761
    %1807 = vmatprep.subr.bf16.mxu0 %v1765
    %1808 = vmatpush1.bf16.msra.mxu0 %v1764
    %1809 = vmatprep.subr.bf16.mxu0 %v1768
    %1810 = vmatpush1.bf16.msra.mxu0 %v1767
    %1811 = vmatprep.subr.bf16.mxu0 %v1771
    %1812 = vmatpush1.bf16.msra.mxu0 %v1770
    %1813 = vmatprep.subr.bf16.mxu0 0
    %1814 = vmatpush1.bf16.msra.mxu0 0
    %1815 = vmatprep.subr.bf16.mxu0 0
    %1816 = vmatpush1.bf16.msra.mxu0 0
    %1817 = vmatprep.subr.bf16.mxu0 0
    %1818 = vmatpush1.bf16.msra.mxu0 0
    %1819 = vmatprep.subr.bf16.mxu0 0
    %1820 = vmatpush1.bf16.msra.mxu0 0
    %1821 = vmatprep.subr.bf16.mxu0 0
    %1822 = vmatpush1.bf16.msra.mxu0 0
    %1823 = vmatprep.subr.bf16.mxu0 0
    %1824 = vmatpush1.bf16.msra.mxu0 0
    %1825 = vmatprep.subr.bf16.mxu0 0
    %1826 = vmatpush1.bf16.msra.mxu0 0
    %1827 = vmatprep.subr.bf16.mxu0 0
    %1828 = vmatpush1.bf16.msra.mxu0 0
    %1829 = vmatprep.mubr.bf16.mxu0 0
    %1830 = vmatmul.mubr.bf16.gmra.mrb[0].mxu0 %v1616
    %v1831 = vpop.f32.mrb[0].mxu0
    %v1832 = vadd.f32 %v1657, %v1831
    %v1833 = vpop.f32.mrb[0].mxu0
    %v1834 = vadd.f32 %v1661, %v1833
    %v1835 = vpop.f32.mrb[0].mxu0
    %v1836 = vadd.f32 %v1657, %v1835
    %v1837 = vpop.f32.mrb[0].mxu0
    %v1838 = vadd.f32 %v1661, %v1837
    %1839 = vmatprep.mubr.bf16.mxu0 0
    %1840 = vmatmul.mubr.bf16.gmra.mrb[0].mxu0 %v1617
    %v1841 = vpop.f32.mrb[0].mxu0
    %v1842 = vadd.f32 %v1657, %v1841
    %v1843 = vpop.f32.mrb[0].mxu0
    %v1844 = vadd.f32 %v1661, %v1843
    %v1845 = vpop.f32.mrb[0].mxu0
    %v1846 = vadd.f32 %v1657, %v1845
    %v1847 = vpop.f32.mrb[0].mxu0
    %v1848 = vadd.f32 %v1661, %v1847
    %1849 = vmatprep.mubr.bf16.mxu0 0
    %1850 = vmatmul.mubr.bf16.gmra.mrb[0].mxu0 %v1618
    %v1851 = vpop.f32.mrb[0].mxu0
    %v1852 = vadd.f32 %v1657, %v1851
    %v1853 = vpop.f32.mrb[0].mxu0
    %v1854 = vadd.f32 %v1661, %v1853
    %v1855 = vpop.f32.mrb[0].mxu0
    %v1856 = vadd.f32 %v1657, %v1855
    %v1857 = vpop.f32.mrb[0].mxu0
    %v1858 = vadd.f32 %v1661, %v1857
    %1859 = vmatprep.mubr.bf16.mxu0 0
    %1860 = vmatmul.mubr.bf16.gmra.mrb[0].mxu0 %v1619
    %v1861 = vpop.f32.mrb[0].mxu0
    %v1862 = vadd.f32 %v1657, %v1861
    %v1863 = vpop.f32.mrb[0].mxu0
    %v1864 = vadd.f32 %v1661, %v1863
    %v1865 = vpop.f32.mrb[0].mxu0
    %v1866 = vadd.f32 %v1657, %v1865
    %v1867 = vpop.f32.mrb[0].mxu0
    %v1868 = vadd.f32 %v1661, %v1867
    %1869 = vdwg.mxu0
    %1870 = vmatprep.subr.bf16.mxu0 0
    %1871 = vmatpush1.bf16.msra.mxu0 %v1751
    %1872 = vmatprep.subr.bf16.mxu0 0
    %1873 = vmatpush1.bf16.msra.mxu0 %v1754
    %1874 = vmatprep.subr.bf16.mxu0 0
    %1875 = vmatpush1.bf16.msra.mxu0 %v1757
    %1876 = vmatprep.subr.bf16.mxu0 0
    %1877 = vmatpush1.bf16.msra.mxu0 %v1760
    %1878 = vmatprep.subr.bf16.mxu0 0
    %1879 = vmatpush1.bf16.msra.mxu0 %v1763
    %1880 = vmatprep.subr.bf16.mxu0 0
    %1881 = vmatpush1.bf16.msra.mxu0 %v1766
    %1882 = vmatprep.subr.bf16.mxu0 0
    %1883 = vmatpush1.bf16.msra.mxu0 %v1769
    %1884 = vmatprep.subr.bf16.mxu0 0
    %1885 = vmatpush1.bf16.msra.mxu0 %v1772
    %1886 = vmatprep.subr.bf16.mxu0 0
    %1887 = vmatpush1.bf16.msra.mxu0 0
    %1888 = vmatprep.subr.bf16.mxu0 0
    %1889 = vmatpush1.bf16.msra.mxu0 0
    %1890 = vmatprep.subr.bf16.mxu0 0
    %1891 = vmatpush1.bf16.msra.mxu0 0
    %1892 = vmatprep.subr.bf16.mxu0 0
    %1893 = vmatpush1.bf16.msra.mxu0 0
    %1894 = vmatprep.subr.bf16.mxu0 0
    %1895 = vmatpush1.bf16.msra.mxu0 0
    %1896 = vmatprep.subr.bf16.mxu0 0
    %1897 = vmatpush1.bf16.msra.mxu0 0
    %1898 = vmatprep.subr.bf16.mxu0 0
    %1899 = vmatpush1.bf16.msra.mxu0 0
    %1900 = vmatprep.subr.bf16.mxu0 0
    %1901 = vmatpush1.bf16.msra.mxu0 0
    %1902 = vmatprep.mubr.bf16.mxu0 0
    %1903 = vmatmul.mubr.bf16.gmra.mrb[0].mxu0 %v1616
    %v1904 = vpop.f32.mrb[0].mxu0
    %v1905 = vadd.f32 %v1665, %v1904
    %v1906 = vpop.f32.mrb[0].mxu0
    %v1907 = vpop.f32.mrb[0].mxu0
    %v1908 = vadd.f32 %v1665, %v1907
    %v1909 = vpop.f32.mrb[0].mxu0
    %1910 = vmatprep.mubr.bf16.mxu0 0
    %1911 = vmatmul.mubr.bf16.gmra.mrb[0].mxu0 %v1617
    %v1912 = vpop.f32.mrb[0].mxu0
    %v1913 = vadd.f32 %v1665, %v1912
    %v1914 = vpop.f32.mrb[0].mxu0
    %v1915 = vpop.f32.mrb[0].mxu0
    %v1916 = vadd.f32 %v1665, %v1915
    %v1917 = vpop.f32.mrb[0].mxu0
    %1918 = vmatprep.mubr.bf16.mxu0 0
    %1919 = vmatmul.mubr.bf16.gmra.mrb[0].mxu0 %v1618
    %v1920 = vpop.f32.mrb[0].mxu0
    %v1921 = vadd.f32 %v1665, %v1920
    %v1922 = vpop.f32.mrb[0].mxu0
    %v1923 = vpop.f32.mrb[0].mxu0
    %v1924 = vadd.f32 %v1665, %v1923
    %v1925 = vpop.f32.mrb[0].mxu0
    %1926 = vmatprep.mubr.bf16.mxu0 0
    %1927 = vmatmul.mubr.bf16.gmra.mrb[0].mxu0 %v1619
    %v1928 = vpop.f32.mrb[0].mxu0
    %v1929 = vadd.f32 %v1665, %v1928
    %v1930 = vpop.f32.mrb[0].mxu0
    %v1931 = vpop.f32.mrb[0].mxu0
    %v1932 = vadd.f32 %v1665, %v1931
    %v1933 = vpop.f32.mrb[0].mxu0
    %1934 = vdwg.mxu0
    %1935 = vst [vmem:[#allocation2] sm:$0xff] %v1832
    %1936 = vst [vmem:[#allocation2 + $0x8] sm:$0xff] %v1834
    %1937 = vst [vmem:[#allocation2 + $0x10] sm:$0xff] %v1905
    %1938 = vst [vmem:[#allocation2 + $0x18] sm:$0xff] %v1836
    %1939 = vst [vmem:[#allocation2 + $0x20] sm:$0xff] %v1838
    %1940 = vst [vmem:[#allocation2 + $0x28] sm:$0xff] %v1908
    %1941 = vst [vmem:[#allocation2 + $0x30] sm:$0xff] %v1842
    %1942 = vst [vmem:[#allocation2 + $0x38] sm:$0xff] %v1844
    %1943 = vst [vmem:[#allocation2 + $0x40] sm:$0xff] %v1913
    %1944 = vst [vmem:[#allocation2 + $0x48] sm:$0xff] %v1846
    %1945 = vst [vmem:[#allocation2 + $0x50] sm:$0xff] %v1848
    %1946 = vst [vmem:[#allocation2 + $0x58] sm:$0xff] %v1916
    %1947 = vst [vmem:[#allocation2 + $0x60] sm:$0xff] %v1852
    %1948 = vst [vmem:[#allocation2 + $0x68] sm:$0xff] %v1854
    %1949 = vst [vmem:[#allocation2 + $0x70] sm:$0xff] %v1921
    %1950 = vst [vmem:[#allocation2 + $0x78] sm:$0xff] %v1856
    %1951 = vst [vmem:[#allocation2 + $0x80] sm:$0xff] %v1858
    %1952 = vst [vmem:[#allocation2 + $0x88] sm:$0xff] %v1924
    %1953 = vst [vmem:[#allocation2 + $0x90] sm:$0xff] %v1862
    %1954 = vst [vmem:[#allocation2 + $0x98] sm:$0xff] %v1864
    %1955 = vst [vmem:[#allocation2 + $0xa0] sm:$0xff] %v1929
    %1956 = vst [vmem:[#allocation2 + $0xa8] sm:$0xff] %v1866
    %1957 = vst [vmem:[#allocation2 + $0xb0] sm:$0xff] %v1868
    %1958 = vst [vmem:[#allocation2 + $0xb8] sm:$0xff] %v1932
    %v1959 = vld [vmem:[#allocation15] sm:$0xff]
    %v1960 = vld [vmem:[#allocation15 + $0x8] sm:$0xf]
    %v1961 = vld [vmem:[#allocation15 + $0xc] sm:$0xff]
    %v1962 = vld [vmem:[#allocation15 + $0x14] sm:$0xf]
    %v1963 = vld [vmem:[#allocation15 + $0x18] sm:$0xff]
    %v1964 = vld [vmem:[#allocation15 + $0x20] sm:$0xf]
    %v1965 = vld [vmem:[#allocation15 + $0x24] sm:$0xff]
    %v1966 = vld [vmem:[#allocation15 + $0x2c] sm:$0xf]
    %v1967 = vld [vmem:[#allocation15 + $0x30] sm:$0xff]
    %v1968 = vld [vmem:[#allocation15 + $0x38] sm:$0xf]
    %v1969 = vld [vmem:[#allocation15 + $0x3c] sm:$0xff]
    %v1970 = vld [vmem:[#allocation15 + $0x44] sm:$0xf]
    %v1971 = vld [vmem:[#allocation15 + $0x48] sm:$0xff]
    %v1972 = vld [vmem:[#allocation15 + $0x50] sm:$0xf]
    %v1973 = vld [vmem:[#allocation15 + $0x54] sm:$0xff]
    %v1974 = vld [vmem:[#allocation15 + $0x5c] sm:$0xf]
    %v1975 = vld [vmem:[#allocation15 + $0x60] sm:$0xff]
    %v1976 = vld [vmem:[#allocation15 + $0x68] sm:$0xf]
    %v1977 = vld [vmem:[#allocation15 + $0x6c] sm:$0xff]
    %v1978 = vld [vmem:[#allocation15 + $0x74] sm:$0xf]
    %v1979 = vld [vmem:[#allocation15 + $0x78] sm:$0xff]
    %v1980 = vld [vmem:[#allocation15 + $0x80] sm:$0xf]
    %v1981 = vld [vmem:[#allocation15 + $0x84] sm:$0xff]
    %v1982 = vld [vmem:[#allocation15 + $0x8c] sm:$0xf]
    %v1983 = vld [vmem:[#allocation15 + $0x90] sm:$0xff]
    %v1984 = vld [vmem:[#allocation15 + $0x98] sm:$0xf]
    %v1985 = vld [vmem:[#allocation15 + $0x9c] sm:$0xff]
    %v1986 = vld [vmem:[#allocation15 + $0xa4] sm:$0xf]
    %v1987 = vld [vmem:[#allocation15 + $0xa8] sm:$0xff]
    %v1988 = vld [vmem:[#allocation15 + $0xb0] sm:$0xf]
    %v1989 = vld [vmem:[#allocation15 + $0xb4] sm:$0xff]
    %v1990 = vld [vmem:[#allocation15 + $0xbc] sm:$0xf]
    %v2023 = vunpack.c.l.b16 %v1959
    %v2024 = vunpack.c.h.b16 %v1959
    %v2025 = vunpack.c.l.b16 %v1960
    %v2026 = vunpack.c.l.b16 %v1961
    %v2027 = vunpack.c.h.b16 %v1961
    %v2028 = vunpack.c.l.b16 %v1962
    %v2029 = vunpack.c.l.b16 %v1963
    %v2030 = vunpack.c.h.b16 %v1963
    %v2031 = vunpack.c.l.b16 %v1964
    %v2032 = vunpack.c.l.b16 %v1965
    %v2033 = vunpack.c.h.b16 %v1965
    %v2034 = vunpack.c.l.b16 %v1966
    %v2035 = vunpack.c.l.b16 %v1967
    %v2036 = vunpack.c.h.b16 %v1967
    %v2037 = vunpack.c.l.b16 %v1968
    %v2038 = vunpack.c.l.b16 %v1969
    %v2039 = vunpack.c.h.b16 %v1969
    %v2040 = vunpack.c.l.b16 %v1970
    %v2041 = vunpack.c.l.b16 %v1971
    %v2042 = vunpack.c.h.b16 %v1971
    %v2043 = vunpack.c.l.b16 %v1972
    %v2044 = vunpack.c.l.b16 %v1973
    %v2045 = vunpack.c.h.b16 %v1973
    %v2046 = vunpack.c.l.b16 %v1974
    %v2047 = vunpack.c.l.b16 %v1975
    %v2048 = vunpack.c.h.b16 %v1975
    %v2049 = vunpack.c.l.b16 %v1976
    %v2050 = vunpack.c.l.b16 %v1977
    %v2051 = vunpack.c.h.b16 %v1977
    %v2052 = vunpack.c.l.b16 %v1978
    %v2053 = vunpack.c.l.b16 %v1979
    %v2054 = vunpack.c.h.b16 %v1979
    %v2055 = vunpack.c.l.b16 %v1980
    %v2056 = vunpack.c.l.b16 %v1981
    %v2057 = vunpack.c.h.b16 %v1981
    %v2058 = vunpack.c.l.b16 %v1982
    %v2059 = vunpack.c.l.b16 %v1983
    %v2060 = vunpack.c.h.b16 %v1983
    %v2061 = vunpack.c.l.b16 %v1984
    %v2062 = vunpack.c.l.b16 %v1985
    %v2063 = vunpack.c.h.b16 %v1985
    %v2064 = vunpack.c.l.b16 %v1986
    %v2065 = vunpack.c.l.b16 %v1987
    %v2066 = vunpack.c.h.b16 %v1987
    %v2067 = vunpack.c.l.b16 %v1988
    %v2068 = vunpack.c.l.b16 %v1989
    %v2069 = vunpack.c.h.b16 %v1989
    %v2070 = vunpack.c.l.b16 %v1990
    %v2071 = vpack.c.b16 %v2026, %v2023
    %v2072 = vpack.c.b16 %v2027, %v2024
    %v2073 = vpack.c.b16 %v2028, %v2025
    %v2074 = vpack.c.b16 %v2032, %v2029
    %v2075 = vpack.c.b16 %v2033, %v2030
    %v2076 = vpack.c.b16 %v2034, %v2031
    %v2077 = vpack.c.b16 %v2038, %v2035
    %v2078 = vpack.c.b16 %v2039, %v2036
    %v2079 = vpack.c.b16 %v2040, %v2037
    %v2080 = vpack.c.b16 %v2044, %v2041
    %v2081 = vpack.c.b16 %v2045, %v2042
    %v2082 = vpack.c.b16 %v2046, %v2043
    %v2083 = vpack.c.b16 %v2050, %v2047
    %v2084 = vpack.c.b16 %v2051, %v2048
    %v2085 = vpack.c.b16 %v2052, %v2049
    %v2086 = vpack.c.b16 %v2056, %v2053
    %v2087 = vpack.c.b16 %v2057, %v2054
    %v2088 = vpack.c.b16 %v2058, %v2055
    %v2089 = vpack.c.b16 %v2062, %v2059
    %v2090 = vpack.c.b16 %v2063, %v2060
    %v2091 = vpack.c.b16 %v2064, %v2061
    %v2092 = vpack.c.b16 %v2068, %v2065
    %v2093 = vpack.c.b16 %v2069, %v2066
    %v2094 = vpack.c.b16 %v2070, %v2067
    %2119 = vmatprep.subr.bf16.mxu0 %v2072
    %2120 = vmatpush1.bf16.msra.mxu0 %v2071
    %2121 = vmatprep.subr.bf16.mxu0 %v2075
    %2122 = vmatpush1.bf16.msra.mxu0 %v2074
    %2123 = vmatprep.subr.bf16.mxu0 %v2078
    %2124 = vmatpush1.bf16.msra.mxu0 %v2077
    %2125 = vmatprep.subr.bf16.mxu0 %v2081
    %2126 = vmatpush1.bf16.msra.mxu0 %v2080
    %2127 = vmatprep.subr.bf16.mxu0 %v2084
    %2128 = vmatpush1.bf16.msra.mxu0 %v2083
    %2129 = vmatprep.subr.bf16.mxu0 %v2087
    %2130 = vmatpush1.bf16.msra.mxu0 %v2086
    %2131 = vmatprep.subr.bf16.mxu0 %v2090
    %2132 = vmatpush1.bf16.msra.mxu0 %v2089
    %2133 = vmatprep.subr.bf16.mxu0 %v2093
    %2134 = vmatpush1.bf16.msra.mxu0 %v2092
    %2135 = vmatprep.subr.bf16.mxu0 0
    %2136 = vmatpush1.bf16.msra.mxu0 0
    %2137 = vmatprep.subr.bf16.mxu0 0
    %2138 = vmatpush1.bf16.msra.mxu0 0
    %2139 = vmatprep.subr.bf16.mxu0 0
    %2140 = vmatpush1.bf16.msra.mxu0 0
    %2141 = vmatprep.subr.bf16.mxu0 0
    %2142 = vmatpush1.bf16.msra.mxu0 0
    %2143 = vmatprep.subr.bf16.mxu0 0
    %2144 = vmatpush1.bf16.msra.mxu0 0
    %2145 = vmatprep.subr.bf16.mxu0 0
    %2146 = vmatpush1.bf16.msra.mxu0 0
    %2147 = vmatprep.subr.bf16.mxu0 0
    %2148 = vmatpush1.bf16.msra.mxu0 0
    %2149 = vmatprep.subr.bf16.mxu0 0
    %2150 = vmatpush1.bf16.msra.mxu0 0
    %2151 = vmatprep.mubr.bf16.mxu0 0
    %2152 = vmatmul.mubr.bf16.gmra.mrb[0].mxu0 %v1616
    %v2153 = vpop.f32.mrb[0].mxu0
    %v2154 = vadd.f32 0.0, %v2153
    %v2155 = vpop.f32.mrb[0].mxu0
    %v2156 = vadd.f32 0.0, %v2155
    %v2157 = vpop.f32.mrb[0].mxu0
    %v2158 = vadd.f32 0.0, %v2157
    %v2159 = vpop.f32.mrb[0].mxu0
    %v2160 = vadd.f32 0.0, %v2159
    %2161 = vmatprep.mubr.bf16.mxu0 0
    %2162 = vmatmul.mubr.bf16.gmra.mrb[0].mxu0 %v1617
    %v2163 = vpop.f32.mrb[0].mxu0
    %v2164 = vadd.f32 0.0, %v2163
    %v2165 = vpop.f32.mrb[0].mxu0
    %v2166 = vadd.f32 0.0, %v2165
    %v2167 = vpop.f32.mrb[0].mxu0
    %v2168 = vadd.f32 0.0, %v2167
    %v2169 = vpop.f32.mrb[0].mxu0
    %v2170 = vadd.f32 0.0, %v2169
    %2171 = vmatprep.mubr.bf16.mxu0 0
    %2172 = vmatmul.mubr.bf16.gmra.mrb[0].mxu0 %v1618
    %v2173 = vpop.f32.mrb[0].mxu0
    %v2174 = vadd.f32 0.0, %v2173
    %v2175 = vpop.f32.mrb[0].mxu0
    %v2176 = vadd.f32 0.0, %v2175
    %v2177 = vpop.f32.mrb[0].mxu0
    %v2178 = vadd.f32 0.0, %v2177
    %v2179 = vpop.f32.mrb[0].mxu0
    %v2180 = vadd.f32 0.0, %v2179
    %2181 = vmatprep.mubr.bf16.mxu0 0
    %2182 = vmatmul.mubr.bf16.gmra.mrb[0].mxu0 %v1619
    %v2183 = vpop.f32.mrb[0].mxu0
    %v2184 = vadd.f32 0.0, %v2183
    %v2185 = vpop.f32.mrb[0].mxu0
    %v2186 = vadd.f32 0.0, %v2185
    %v2187 = vpop.f32.mrb[0].mxu0
    %v2188 = vadd.f32 0.0, %v2187
    %v2189 = vpop.f32.mrb[0].mxu0
    %v2190 = vadd.f32 0.0, %v2189
    %2191 = vdwg.mxu0
    %2192 = vmatprep.subr.bf16.mxu0 0
    %2193 = vmatpush1.bf16.msra.mxu0 %v2073
    %2194 = vmatprep.subr.bf16.mxu0 0
    %2195 = vmatpush1.bf16.msra.mxu0 %v2076
    %2196 = vmatprep.subr.bf16.mxu0 0
    %2197 = vmatpush1.bf16.msra.mxu0 %v2079
    %2198 = vmatprep.subr.bf16.mxu0 0
    %2199 = vmatpush1.bf16.msra.mxu0 %v2082
    %2200 = vmatprep.subr.bf16.mxu0 0
    %2201 = vmatpush1.bf16.msra.mxu0 %v2085
    %2202 = vmatprep.subr.bf16.mxu0 0
    %2203 = vmatpush1.bf16.msra.mxu0 %v2088
    %2204 = vmatprep.subr.bf16.mxu0 0
    %2205 = vmatpush1.bf16.msra.mxu0 %v2091
    %2206 = vmatprep.subr.bf16.mxu0 0
    %2207 = vmatpush1.bf16.msra.mxu0 %v2094
    %2208 = vmatprep.subr.bf16.mxu0 0
    %2209 = vmatpush1.bf16.msra.mxu0 0
    %2210 = vmatprep.subr.bf16.mxu0 0
    %2211 = vmatpush1.bf16.msra.mxu0 0
    %2212 = vmatprep.subr.bf16.mxu0 0
    %2213 = vmatpush1.bf16.msra.mxu0 0
    %2214 = vmatprep.subr.bf16.mxu0 0
    %2215 = vmatpush1.bf16.msra.mxu0 0
    %2216 = vmatprep.subr.bf16.mxu0 0
    %2217 = vmatpush1.bf16.msra.mxu0 0
    %2218 = vmatprep.subr.bf16.mxu0 0
    %2219 = vmatpush1.bf16.msra.mxu0 0
    %2220 = vmatprep.subr.bf16.mxu0 0
    %2221 = vmatpush1.bf16.msra.mxu0 0
    %2222 = vmatprep.subr.bf16.mxu0 0
    %2223 = vmatpush1.bf16.msra.mxu0 0
    %2224 = vmatprep.mubr.bf16.mxu0 0
    %2225 = vmatmul.mubr.bf16.gmra.mrb[0].mxu0 %v1616
    %v2226 = vpop.f32.mrb[0].mxu0
    %v2227 = vadd.f32 0.0, %v2226
    %v2228 = vpop.f32.mrb[0].mxu0
    %v2229 = vpop.f32.mrb[0].mxu0
    %v2230 = vadd.f32 0.0, %v2229
    %v2231 = vpop.f32.mrb[0].mxu0
    %2232 = vmatprep.mubr.bf16.mxu0 0
    %2233 = vmatmul.mubr.bf16.gmra.mrb[0].mxu0 %v1617
    %v2234 = vpop.f32.mrb[0].mxu0
    %v2235 = vadd.f32 0.0, %v2234
    %v2236 = vpop.f32.mrb[0].mxu0
    %v2237 = vpop.f32.mrb[0].mxu0
    %v2238 = vadd.f32 0.0, %v2237
    %v2239 = vpop.f32.mrb[0].mxu0
    %2240 = vmatprep.mubr.bf16.mxu0 0
    %2241 = vmatmul.mubr.bf16.gmra.mrb[0].mxu0 %v1618
    %v2242 = vpop.f32.mrb[0].mxu0
    %v2243 = vadd.f32 0.0, %v2242
    %v2244 = vpop.f32.mrb[0].mxu0
    %v2245 = vpop.f32.mrb[0].mxu0
    %v2246 = vadd.f32 0.0, %v2245
    %v2247 = vpop.f32.mrb[0].mxu0
    %2248 = vmatprep.mubr.bf16.mxu0 0
    %2249 = vmatmul.mubr.bf16.gmra.mrb[0].mxu0 %v1619
    %v2250 = vpop.f32.mrb[0].mxu0
    %v2251 = vadd.f32 0.0, %v2250
    %v2252 = vpop.f32.mrb[0].mxu0
    %v2253 = vpop.f32.mrb[0].mxu0
    %v2254 = vadd.f32 0.0, %v2253
    %v2255 = vpop.f32.mrb[0].mxu0
    %2256 = vdwg.mxu0
    %2257 = vst [vmem:[#allocation3] sm:$0xff] %v2154
    %2258 = vst [vmem:[#allocation3 + $0x8] sm:$0xff] %v2156
    %2259 = vst [vmem:[#allocation3 + $0x10] sm:$0xff] %v2227
    %2260 = vst [vmem:[#allocation3 + $0x18] sm:$0xff] %v2158
    %2261 = vst [vmem:[#allocation3 + $0x20] sm:$0xff] %v2160
    %2262 = vst [vmem:[#allocation3 + $0x28] sm:$0xff] %v2230
    %2263 = vst [vmem:[#allocation3 + $0x30] sm:$0xff] %v2164
    %2264 = vst [vmem:[#allocation3 + $0x38] sm:$0xff] %v2166
    %2265 = vst [vmem:[#allocation3 + $0x40] sm:$0xff] %v2235
    %2266 = vst [vmem:[#allocation3 + $0x48] sm:$0xff] %v2168
    %2267 = vst [vmem:[#allocation3 + $0x50] sm:$0xff] %v2170
    %2268 = vst [vmem:[#allocation3 + $0x58] sm:$0xff] %v2238
    %2269 = vst [vmem:[#allocation3 + $0x60] sm:$0xff] %v2174
    %2270 = vst [vmem:[#allocation3 + $0x68] sm:$0xff] %v2176
    %2271 = vst [vmem:[#allocation3 + $0x70] sm:$0xff] %v2243
    %2272 = vst [vmem:[#allocation3 + $0x78] sm:$0xff] %v2178
    %2273 = vst [vmem:[#allocation3 + $0x80] sm:$0xff] %v2180
    %2274 = vst [vmem:[#allocation3 + $0x88] sm:$0xff] %v2246
    %2275 = vst [vmem:[#allocation3 + $0x90] sm:$0xff] %v2184
    %2276 = vst [vmem:[#allocation3 + $0x98] sm:$0xff] %v2186
    %2277 = vst [vmem:[#allocation3 + $0xa0] sm:$0xff] %v2251
    %2278 = vst [vmem:[#allocation3 + $0xa8] sm:$0xff] %v2188
    %2279 = vst [vmem:[#allocation3 + $0xb0] sm:$0xff] %v2190
    %2280 = vst [vmem:[#allocation3 + $0xb8] sm:$0xff] %v2254
    %v2281 = vld [vmem:[#allocation16] sm:$0xff]
    %v2282 = vld [vmem:[#allocation16 + $0x8] sm:$0xf]
    %v2283 = vld [vmem:[#allocation16 + $0xc] sm:$0xff]
    %v2284 = vld [vmem:[#allocation16 + $0x14] sm:$0xf]
    %v2285 = vld [vmem:[#allocation16 + $0x18] sm:$0xff]
    %v2286 = vld [vmem:[#allocation16 + $0x20] sm:$0xf]
    %v2287 = vld [vmem:[#allocation16 + $0x24] sm:$0xff]
    %v2288 = vld [vmem:[#allocation16 + $0x2c] sm:$0xf]
    %v2289 = vld [vmem:[#allocation16 + $0x30] sm:$0xff]
    %v2290 = vld [vmem:[#allocation16 + $0x38] sm:$0xf]
    %v2291 = vld [vmem:[#allocation16 + $0x3c] sm:$0xff]
    %v2292 = vld [vmem:[#allocation16 + $0x44] sm:$0xf]
    %v2293 = vld [vmem:[#allocation16 + $0x48] sm:$0xff]
    %v2294 = vld [vmem:[#allocation16 + $0x50] sm:$0xf]
    %v2295 = vld [vmem:[#allocation16 + $0x54] sm:$0xff]
    %v2296 = vld [vmem:[#allocation16 + $0x5c] sm:$0xf]
    %v2297 = vld [vmem:[#allocation16 + $0x60] sm:$0xff]
    %v2298 = vld [vmem:[#allocation16 + $0x68] sm:$0xf]
    %v2299 = vld [vmem:[#allocation16 + $0x6c] sm:$0xff]
    %v2300 = vld [vmem:[#allocation16 + $0x74] sm:$0xf]
    %v2301 = vld [vmem:[#allocation16 + $0x78] sm:$0xff]
    %v2302 = vld [vmem:[#allocation16 + $0x80] sm:$0xf]
    %v2303 = vld [vmem:[#allocation16 + $0x84] sm:$0xff]
    %v2304 = vld [vmem:[#allocation16 + $0x8c] sm:$0xf]
    %v2305 = vld [vmem:[#allocation16 + $0x90] sm:$0xff]
    %v2306 = vld [vmem:[#allocation16 + $0x98] sm:$0xf]
    %v2307 = vld [vmem:[#allocation16 + $0x9c] sm:$0xff]
    %v2308 = vld [vmem:[#allocation16 + $0xa4] sm:$0xf]
    %v2309 = vld [vmem:[#allocation16 + $0xa8] sm:$0xff]
    %v2310 = vld [vmem:[#allocation16 + $0xb0] sm:$0xf]
    %v2311 = vld [vmem:[#allocation16 + $0xb4] sm:$0xff]
    %v2312 = vld [vmem:[#allocation16 + $0xbc] sm:$0xf]
    %v2313 = vld [vmem:[%s9] sm:$0x1]
    %v2315 = vlaneseq
    %v2316 = vshrl.u32 %v2315, 7
    %v2317 = vsub.s32 0, %v2316
    %v2318 = vrot.slane %v2313, %v2317
    %v2320 = vld [vmem:[#allocation2] sm:$0xff]
    %v2321 = vld [vmem:[#allocation2 + $0x8] sm:$0xff]
    %v2322 = vld [vmem:[#allocation2 + $0x10] sm:$0xff]
    %v2323 = vld [vmem:[#allocation3 + $0xa8] sm:$0xff]
    %v2324 = vld [vmem:[#allocation3 + $0xb0] sm:$0xff]
    %v2325 = vld [vmem:[#allocation3 + $0xb8] sm:$0xff]
    %v2326 = vadd.f32 %v2320, %v2323
    %v2327 = vadd.f32 %v2321, %v2324
    %v2328 = vadd.f32 %v2322, %v2325
    %v2361 = vunpack.c.l.b16 %v2281
    %v2362 = vunpack.c.h.b16 %v2281
    %v2363 = vunpack.c.l.b16 %v2282
    %v2364 = vunpack.c.l.b16 %v2283
    %v2365 = vunpack.c.h.b16 %v2283
    %v2366 = vunpack.c.l.b16 %v2284
    %v2367 = vunpack.c.l.b16 %v2285
    %v2368 = vunpack.c.h.b16 %v2285
    %v2369 = vunpack.c.l.b16 %v2286
    %v2370 = vunpack.c.l.b16 %v2287
    %v2371 = vunpack.c.h.b16 %v2287
    %v2372 = vunpack.c.l.b16 %v2288
    %v2373 = vunpack.c.l.b16 %v2289
    %v2374 = vunpack.c.h.b16 %v2289
    %v2375 = vunpack.c.l.b16 %v2290
    %v2376 = vunpack.c.l.b16 %v2291
    %v2377 = vunpack.c.h.b16 %v2291
    %v2378 = vunpack.c.l.b16 %v2292
    %v2379 = vunpack.c.l.b16 %v2293
    %v2380 = vunpack.c.h.b16 %v2293
    %v2381 = vunpack.c.l.b16 %v2294
    %v2382 = vunpack.c.l.b16 %v2295
    %v2383 = vunpack.c.h.b16 %v2295
    %v2384 = vunpack.c.l.b16 %v2296
    %v2385 = vunpack.c.l.b16 %v2297
    %v2386 = vunpack.c.h.b16 %v2297
    %v2387 = vunpack.c.l.b16 %v2298
    %v2388 = vunpack.c.l.b16 %v2299
    %v2389 = vunpack.c.h.b16 %v2299
    %v2390 = vunpack.c.l.b16 %v2300
    %v2391 = vunpack.c.l.b16 %v2301
    %v2392 = vunpack.c.h.b16 %v2301
    %v2393 = vunpack.c.l.b16 %v2302
    %v2394 = vunpack.c.l.b16 %v2303
    %v2395 = vunpack.c.h.b16 %v2303
    %v2396 = vunpack.c.l.b16 %v2304
    %v2397 = vunpack.c.l.b16 %v2305
    %v2398 = vunpack.c.h.b16 %v2305
    %v2399 = vunpack.c.l.b16 %v2306
    %v2400 = vunpack.c.l.b16 %v2307
    %v2401 = vunpack.c.h.b16 %v2307
    %v2402 = vunpack.c.l.b16 %v2308
    %v2403 = vunpack.c.l.b16 %v2309
    %v2404 = vunpack.c.h.b16 %v2309
    %v2405 = vunpack.c.l.b16 %v2310
    %v2406 = vunpack.c.l.b16 %v2311
    %v2407 = vunpack.c.h.b16 %v2311
    %v2408 = vunpack.c.l.b16 %v2312
    %v2409 = vpack.c.b16 %v2364, %v2361
    %v2410 = vpack.c.b16 %v2365, %v2362
    %v2411 = vpack.c.b16 %v2366, %v2363
    %v2412 = vpack.c.b16 %v2370, %v2367
    %v2413 = vpack.c.b16 %v2371, %v2368
    %v2414 = vpack.c.b16 %v2372, %v2369
    %v2415 = vpack.c.b16 %v2376, %v2373
    %v2416 = vpack.c.b16 %v2377, %v2374
    %v2417 = vpack.c.b16 %v2378, %v2375
    %v2418 = vpack.c.b16 %v2382, %v2379
    %v2419 = vpack.c.b16 %v2383, %v2380
    %v2420 = vpack.c.b16 %v2384, %v2381
    %v2421 = vpack.c.b16 %v2388, %v2385
    %v2422 = vpack.c.b16 %v2389, %v2386
    %v2423 = vpack.c.b16 %v2390, %v2387
    %v2424 = vpack.c.b16 %v2394, %v2391
    %v2425 = vpack.c.b16 %v2395, %v2392
    %v2426 = vpack.c.b16 %v2396, %v2393
    %v2427 = vpack.c.b16 %v2400, %v2397
    %v2428 = vpack.c.b16 %v2401, %v2398
    %v2429 = vpack.c.b16 %v2402, %v2399
    %v2430 = vpack.c.b16 %v2406, %v2403
    %v2431 = vpack.c.b16 %v2407, %v2404
    %v2432 = vpack.c.b16 %v2408, %v2405
    %2457 = vmatprep.subr.bf16.mxu0 %v2410
    %2458 = vmatpush1.bf16.msra.mxu0 %v2409
    %2459 = vmatprep.subr.bf16.mxu0 %v2413
    %2460 = vmatpush1.bf16.msra.mxu0 %v2412
    %2461 = vmatprep.subr.bf16.mxu0 %v2416
    %2462 = vmatpush1.bf16.msra.mxu0 %v2415
    %2463 = vmatprep.subr.bf16.mxu0 %v2419
    %2464 = vmatpush1.bf16.msra.mxu0 %v2418
    %2465 = vmatprep.subr.bf16.mxu0 %v2422
    %2466 = vmatpush1.bf16.msra.mxu0 %v2421
    %2467 = vmatprep.subr.bf16.mxu0 %v2425
    %2468 = vmatpush1.bf16.msra.mxu0 %v2424
    %2469 = vmatprep.subr.bf16.mxu0 %v2428
    %2470 = vmatpush1.bf16.msra.mxu0 %v2427
    %2471 = vmatprep.subr.bf16.mxu0 %v2431
    %2472 = vmatpush1.bf16.msra.mxu0 %v2430
    %2473 = vmatprep.subr.bf16.mxu0 0
    %2474 = vmatpush1.bf16.msra.mxu0 0
    %2475 = vmatprep.subr.bf16.mxu0 0
    %2476 = vmatpush1.bf16.msra.mxu0 0
    %2477 = vmatprep.subr.bf16.mxu0 0
    %2478 = vmatpush1.bf16.msra.mxu0 0
    %2479 = vmatprep.subr.bf16.mxu0 0
    %2480 = vmatpush1.bf16.msra.mxu0 0
    %2481 = vmatprep.subr.bf16.mxu0 0
    %2482 = vmatpush1.bf16.msra.mxu0 0
    %2483 = vmatprep.subr.bf16.mxu0 0
    %2484 = vmatpush1.bf16.msra.mxu0 0
    %2485 = vmatprep.subr.bf16.mxu0 0
    %2486 = vmatpush1.bf16.msra.mxu0 0
    %2487 = vmatprep.subr.bf16.mxu0 0
    %2488 = vmatpush1.bf16.msra.mxu0 0
    %2489 = vmatprep.mubr.bf16.mxu0 0
    %2490 = vmatmul.mubr.bf16.gmra.mrb[0].mxu0 0
    %v2491 = vpop.f32.mrb[0].mxu0
    %v2492 = vadd.f32 0.0, %v2491
    %v2493 = vpop.f32.mrb[0].mxu0
    %v2494 = vadd.f32 0.0, %v2493
    %v2495 = vpop.f32.mrb[0].mxu0
    %v2496 = vpop.f32.mrb[0].mxu0
    %2497 = vdwg.mxu0
    %2498 = vmatprep.subr.bf16.mxu0 0
    %2499 = vmatpush1.bf16.msra.mxu0 %v2411
    %2500 = vmatprep.subr.bf16.mxu0 0
    %2501 = vmatpush1.bf16.msra.mxu0 %v2414
    %2502 = vmatprep.subr.bf16.mxu0 0
    %2503 = vmatpush1.bf16.msra.mxu0 %v2417
    %2504 = vmatprep.subr.bf16.mxu0 0
    %2505 = vmatpush1.bf16.msra.mxu0 %v2420
    %2506 = vmatprep.subr.bf16.mxu0 0
    %2507 = vmatpush1.bf16.msra.mxu0 %v2423
    %2508 = vmatprep.subr.bf16.mxu0 0
    %2509 = vmatpush1.bf16.msra.mxu0 %v2426
    %2510 = vmatprep.subr.bf16.mxu0 0
    %2511 = vmatpush1.bf16.msra.mxu0 %v2429
    %2512 = vmatprep.subr.bf16.mxu0 0
    %2513 = vmatpush1.bf16.msra.mxu0 %v2432
    %2514 = vmatprep.subr.bf16.mxu0 0
    %2515 = vmatpush1.bf16.msra.mxu0 0
    %2516 = vmatprep.subr.bf16.mxu0 0
    %2517 = vmatpush1.bf16.msra.mxu0 0
    %2518 = vmatprep.subr.bf16.mxu0 0
    %2519 = vmatpush1.bf16.msra.mxu0 0
    %2520 = vmatprep.subr.bf16.mxu0 0
    %2521 = vmatpush1.bf16.msra.mxu0 0
    %2522 = vmatprep.subr.bf16.mxu0 0
    %2523 = vmatpush1.bf16.msra.mxu0 0
    %2524 = vmatprep.subr.bf16.mxu0 0
    %2525 = vmatpush1.bf16.msra.mxu0 0
    %2526 = vmatprep.subr.bf16.mxu0 0
    %2527 = vmatpush1.bf16.msra.mxu0 0
    %2528 = vmatprep.subr.bf16.mxu0 0
    %2529 = vmatpush1.bf16.msra.mxu0 0
    %2530 = vmatprep.mubr.bf16.mxu0 0
    %2531 = vmatmul.mubr.bf16.gmra.mrb[0].mxu0 0
    %v2532 = vpop.f32.mrb[0].mxu0
    %v2533 = vadd.f32 0.0, %v2532
    %v2534 = vpop.f32.mrb[0].mxu0
    %v2535 = vpop.f32.mrb[0].mxu0
    %v2536 = vpop.f32.mrb[0].mxu0
    %2537 = vdwg.mxu0
    %v2538 = vadd.f32 %v2326, %v2492
    %v2539 = vadd.f32 %v2327, %v2494
    %v2540 = vxor.u32 %v2538, 2147483648
    %v2541 = vxor.u32 %v2539, 2147483648
    %v2542 = vmul.f32 %v2540, 1.442695
    %v2543 = vpow.pop %v2542
    %v2544 = vmul.f32 %v2541, 1.442695
    %v2545 = vpow.pop %v2544
    %v2546 = vadd.f32 %v2543, 1.0
    %v2547 = vadd.f32 %v2545, 1.0
    %v2548 = vrcp.pop %v2546
    %v2549 = vmul.f32 1.0, %v2548
    %v2550 = vrcp.pop %v2547
    %v2551 = vmul.f32 1.0, %v2550
    %v2552 = vadd.f32 %v2533, %v2318
    %v2553 = vmul.f32 %v2549, %v2552
    %v2554 = vadd.f32 %v2328, %v2553
    %v2555 = vtanh.pop %v2554
    %v2556 = vsub.f32 1.0, %v2551
    %v2557 = vmul.f32 %v2556, %v2555
    %v2558 = vmul.f32 %v2551, 0.0
    %v2559 = vadd.f32 %v2557, %v2558
    %2560 = vst [vmem:[#allocation4] sm:$0xff] %v2559
    %v2561 = vld [vmem:[#allocation2 + $0x18] sm:$0xff]
    %v2562 = vld [vmem:[#allocation2 + $0x20] sm:$0xff]
    %v2563 = vld [vmem:[#allocation2 + $0x28] sm:$0xff]
    %v2564 = vld [vmem:[#allocation3 + $0x90] sm:$0xff]
    %v2565 = vld [vmem:[#allocation3 + $0x98] sm:$0xff]
    %v2566 = vld [vmem:[#allocation3 + $0xa0] sm:$0xff]
    %v2567 = vadd.f32 %v2561, %v2564
    %v2568 = vadd.f32 %v2562, %v2565
    %v2569 = vadd.f32 %v2563, %v2566
    %v2570 = vpack.c.bf16 %v2559, %v2559
    %2571 = vmatprep.subr.bf16.mxu0 %v2410
    %2572 = vmatpush1.bf16.msra.mxu0 %v2409
    %2573 = vmatprep.subr.bf16.mxu0 %v2413
    %2574 = vmatpush1.bf16.msra.mxu0 %v2412
    %2575 = vmatprep.subr.bf16.mxu0 %v2416
    %2576 = vmatpush1.bf16.msra.mxu0 %v2415
    %2577 = vmatprep.subr.bf16.mxu0 %v2419
    %2578 = vmatpush1.bf16.msra.mxu0 %v2418
    %2579 = vmatprep.subr.bf16.mxu0 %v2422
    %2580 = vmatpush1.bf16.msra.mxu0 %v2421
    %2581 = vmatprep.subr.bf16.mxu0 %v2425
    %2582 = vmatpush1.bf16.msra.mxu0 %v2424
    %2583 = vmatprep.subr.bf16.mxu0 %v2428
    %2584 = vmatpush1.bf16.msra.mxu0 %v2427
    %2585 = vmatprep.subr.bf16.mxu0 %v2431
    %2586 = vmatpush1.bf16.msra.mxu0 %v2430
    %2587 = vmatprep.subr.bf16.mxu0 0
    %2588 = vmatpush1.bf16.msra.mxu0 0
    %2589 = vmatprep.subr.bf16.mxu0 0
    %2590 = vmatpush1.bf16.msra.mxu0 0
    %2591 = vmatprep.subr.bf16.mxu0 0
    %2592 = vmatpush1.bf16.msra.mxu0 0
    %2593 = vmatprep.subr.bf16.mxu0 0
    %2594 = vmatpush1.bf16.msra.mxu0 0
    %2595 = vmatprep.subr.bf16.mxu0 0
    %2596 = vmatpush1.bf16.msra.mxu0 0
    %2597 = vmatprep.subr.bf16.mxu0 0
    %2598 = vmatpush1.bf16.msra.mxu0 0
    %2599 = vmatprep.subr.bf16.mxu0 0
    %2600 = vmatpush1.bf16.msra.mxu0 0
    %2601 = vmatprep.subr.bf16.mxu0 0
    %2602 = vmatpush1.bf16.msra.mxu0 0
    %2603 = vmatprep.mubr.bf16.mxu0 0
    %2604 = vmatmul.mubr.bf16.gmra.mrb[0].mxu0 %v2570
    %v2605 = vpop.f32.mrb[0].mxu0
    %v2606 = vadd.f32 0.0, %v2605
    %v2607 = vpop.f32.mrb[0].mxu0
    %v2608 = vadd.f32 0.0, %v2607
    %v2609 = vpop.f32.mrb[0].mxu0
    %v2610 = vpop.f32.mrb[0].mxu0
    %2611 = vdwg.mxu0
    %2612 = vmatprep.subr.bf16.mxu0 0
    %2613 = vmatpush1.bf16.msra.mxu0 %v2411
    %2614 = vmatprep.subr.bf16.mxu0 0
    %2615 = vmatpush1.bf16.msra.mxu0 %v2414
    %2616 = vmatprep.subr.bf16.mxu0 0
    %2617 = vmatpush1.bf16.msra.mxu0 %v2417
    %2618 = vmatprep.subr.bf16.mxu0 0
    %2619 = vmatpush1.bf16.msra.mxu0 %v2420
    %2620 = vmatprep.subr.bf16.mxu0 0
    %2621 = vmatpush1.bf16.msra.mxu0 %v2423
    %2622 = vmatprep.subr.bf16.mxu0 0
    %2623 = vmatpush1.bf16.msra.mxu0 %v2426
    %2624 = vmatprep.subr.bf16.mxu0 0
    %2625 = vmatpush1.bf16.msra.mxu0 %v2429
    %2626 = vmatprep.subr.bf16.mxu0 0
    %2627 = vmatpush1.bf16.msra.mxu0 %v2432
    %2628 = vmatprep.subr.bf16.mxu0 0
    %2629 = vmatpush1.bf16.msra.mxu0 0
    %2630 = vmatprep.subr.bf16.mxu0 0
    %2631 = vmatpush1.bf16.msra.mxu0 0
    %2632 = vmatprep.subr.bf16.mxu0 0
    %2633 = vmatpush1.bf16.msra.mxu0 0
    %2634 = vmatprep.subr.bf16.mxu0 0
    %2635 = vmatpush1.bf16.msra.mxu0 0
    %2636 = vmatprep.subr.bf16.mxu0 0
    %2637 = vmatpush1.bf16.msra.mxu0 0
    %2638 = vmatprep.subr.bf16.mxu0 0
    %2639 = vmatpush1.bf16.msra.mxu0 0
    %2640 = vmatprep.subr.bf16.mxu0 0
    %2641 = vmatpush1.bf16.msra.mxu0 0
    %2642 = vmatprep.subr.bf16.mxu0 0
    %2643 = vmatpush1.bf16.msra.mxu0 0
    %2644 = vmatprep.mubr.bf16.mxu0 0
    %2645 = vmatmul.mubr.bf16.gmra.mrb[0].mxu0 %v2570
    %v2646 = vpop.f32.mrb[0].mxu0
    %v2647 = vadd.f32 0.0, %v2646
    %v2648 = vpop.f32.mrb[0].mxu0
    %v2649 = vpop.f32.mrb[0].mxu0
    %v2650 = vpop.f32.mrb[0].mxu0
    %2651 = vdwg.mxu0
    %v2652 = vadd.f32 %v2567, %v2606
    %v2653 = vadd.f32 %v2568, %v2608
    %v2654 = vxor.u32 %v2652, 2147483648
    %v2655 = vxor.u32 %v2653, 2147483648
    %v2656 = vmul.f32 %v2654, 1.442695
    %v2657 = vpow.pop %v2656
    %v2658 = vmul.f32 %v2655, 1.442695
    %v2659 = vpow.pop %v2658
    %v2660 = vadd.f32 %v2657, 1.0
    %v2661 = vadd.f32 %v2659, 1.0
    %v2662 = vrcp.pop %v2660
    %v2663 = vmul.f32 1.0, %v2662
    %v2664 = vrcp.pop %v2661
    %v2665 = vmul.f32 1.0, %v2664
    %v2666 = vadd.f32 %v2647, %v2318
    %v2667 = vmul.f32 %v2663, %v2666
    %v2668 = vadd.f32 %v2569, %v2667
    %v2669 = vtanh.pop %v2668
    %v2670 = vsub.f32 1.0, %v2665
    %v2671 = vmul.f32 %v2670, %v2669
    %v2672 = vmul.f32 %v2665, %v2559
    %v2673 = vadd.f32 %v2671, %v2672
    %2674 = vst [vmem:[#allocation4 + $0x8] sm:$0xff] %v2673
    %v2675 = vld [vmem:[#allocation2 + $0x30] sm:$0xff]
    %v2676 = vld [vmem:[#allocation2 + $0x38] sm:$0xff]
    %v2677 = vld [vmem:[#allocation2 + $0x40] sm:$0xff]
    %v2678 = vld [vmem:[#allocation3 + $0x78] sm:$0xff]
    %v2679 = vld [vmem:[#allocation3 + $0x80] sm:$0xff]
    %v2680 = vld [vmem:[#allocation3 + $0x88] sm:$0xff]
    %v2681 = vadd.f32 %v2675, %v2678
    %v2682 = vadd.f32 %v2676, %v2679
    %v2683 = vadd.f32 %v2677, %v2680
    %v2684 = vpack.c.bf16 %v2673, %v2673
    %2685 = vmatprep.subr.bf16.mxu0 %v2410
    %2686 = vmatpush1.bf16.msra.mxu0 %v2409
    %2687 = vmatprep.subr.bf16.mxu0 %v2413
    %2688 = vmatpush1.bf16.msra.mxu0 %v2412
    %2689 = vmatprep.subr.bf16.mxu0 %v2416
    %2690 = vmatpush1.bf16.msra.mxu0 %v2415
    %2691 = vmatprep.subr.bf16.mxu0 %v2419
    %2692 = vmatpush1.bf16.msra.mxu0 %v2418
    %2693 = vmatprep.subr.bf16.mxu0 %v2422
    %2694 = vmatpush1.bf16.msra.mxu0 %v2421
    %2695 = vmatprep.subr.bf16.mxu0 %v2425
    %2696 = vmatpush1.bf16.msra.mxu0 %v2424
    %2697 = vmatprep.subr.bf16.mxu0 %v2428
    %2698 = vmatpush1.bf16.msra.mxu0 %v2427
    %2699 = vmatprep.subr.bf16.mxu0 %v2431
    %2700 = vmatpush1.bf16.msra.mxu0 %v2430
    %2701 = vmatprep.subr.bf16.mxu0 0
    %2702 = vmatpush1.bf16.msra.mxu0 0
    %2703 = vmatprep.subr.bf16.mxu0 0
    %2704 = vmatpush1.bf16.msra.mxu0 0
    %2705 = vmatprep.subr.bf16.mxu0 0
    %2706 = vmatpush1.bf16.msra.mxu0 0
    %2707 = vmatprep.subr.bf16.mxu0 0
    %2708 = vmatpush1.bf16.msra.mxu0 0
    %2709 = vmatprep.subr.bf16.mxu0 0
    %2710 = vmatpush1.bf16.msra.mxu0 0
    %2711 = vmatprep.subr.bf16.mxu0 0
    %2712 = vmatpush1.bf16.msra.mxu0 0
    %2713 = vmatprep.subr.bf16.mxu0 0
    %2714 = vmatpush1.bf16.msra.mxu0 0
    %2715 = vmatprep.subr.bf16.mxu0 0
    %2716 = vmatpush1.bf16.msra.mxu0 0
    %2717 = vmatprep.mubr.bf16.mxu0 0
    %2718 = vmatmul.mubr.bf16.gmra.mrb[0].mxu0 %v2684
    %v2719 = vpop.f32.mrb[0].mxu0
    %v2720 = vadd.f32 0.0, %v2719
    %v2721 = vpop.f32.mrb[0].mxu0
    %v2722 = vadd.f32 0.0, %v2721
    %v2723 = vpop.f32.mrb[0].mxu0
    %v2724 = vpop.f32.mrb[0].mxu0
    %2725 = vdwg.mxu0
    %2726 = vmatprep.subr.bf16.mxu0 0
    %2727 = vmatpush1.bf16.msra.mxu0 %v2411
    %2728 = vmatprep.subr.bf16.mxu0 0
    %2729 = vmatpush1.bf16.msra.mxu0 %v2414
    %2730 = vmatprep.subr.bf16.mxu0 0
    %2731 = vmatpush1.bf16.msra.mxu0 %v2417
    %2732 = vmatprep.subr.bf16.mxu0 0
    %2733 = vmatpush1.bf16.msra.mxu0 %v2420
    %2734 = vmatprep.subr.bf16.mxu0 0
    %2735 = vmatpush1.bf16.msra.mxu0 %v2423
    %2736 = vmatprep.subr.bf16.mxu0 0
    %2737 = vmatpush1.bf16.msra.mxu0 %v2426
    %2738 = vmatprep.subr.bf16.mxu0 0
    %2739 = vmatpush1.bf16.msra.mxu0 %v2429
    %2740 = vmatprep.subr.bf16.mxu0 0
    %2741 = vmatpush1.bf16.msra.mxu0 %v2432
    %2742 = vmatprep.subr.bf16.mxu0 0
    %2743 = vmatpush1.bf16.msra.mxu0 0
    %2744 = vmatprep.subr.bf16.mxu0 0
    %2745 = vmatpush1.bf16.msra.mxu0 0
    %2746 = vmatprep.subr.bf16.mxu0 0
    %2747 = vmatpush1.bf16.msra.mxu0 0
    %2748 = vmatprep.subr.bf16.mxu0 0
    %2749 = vmatpush1.bf16.msra.mxu0 0
    %2750 = vmatprep.subr.bf16.mxu0 0
    %2751 = vmatpush1.bf16.msra.mxu0 0
    %2752 = vmatprep.subr.bf16.mxu0 0
    %2753 = vmatpush1.bf16.msra.mxu0 0
    %2754 = vmatprep.subr.bf16.mxu0 0
    %2755 = vmatpush1.bf16.msra.mxu0 0
    %2756 = vmatprep.subr.bf16.mxu0 0
    %2757 = vmatpush1.bf16.msra.mxu0 0
    %2758 = vmatprep.mubr.bf16.mxu0 0
    %2759 = vmatmul.mubr.bf16.gmra.mrb[0].mxu0 %v2684
    %v2760 = vpop.f32.mrb[0].mxu0
    %v2761 = vadd.f32 0.0, %v2760
    %v2762 = vpop.f32.mrb[0].mxu0
    %v2763 = vpop.f32.mrb[0].mxu0
    %v2764 = vpop.f32.mrb[0].mxu0
    %2765 = vdwg.mxu0
    %v2766 = vadd.f32 %v2681, %v2720
    %v2767 = vadd.f32 %v2682, %v2722
    %v2768 = vxor.u32 %v2766, 2147483648
    %v2769 = vxor.u32 %v2767, 2147483648
    %v2770 = vmul.f32 %v2768, 1.442695
    %v2771 = vpow.pop %v2770
    %v2772 = vmul.f32 %v2769, 1.442695
    %v2773 = vpow.pop %v2772
    %v2774 = vadd.f32 %v2771, 1.0
    %v2775 = vadd.f32 %v2773, 1.0
    %v2776 = vrcp.pop %v2774
    %v2777 = vmul.f32 1.0, %v2776
    %v2778 = vrcp.pop %v2775
    %v2779 = vmul.f32 1.0, %v2778
    %v2780 = vadd.f32 %v2761, %v2318
    %v2781 = vmul.f32 %v2777, %v2780
    %v2782 = vadd.f32 %v2683, %v2781
    %v2783 = vtanh.pop %v2782
    %v2784 = vsub.f32 1.0, %v2779
    %v2785 = vmul.f32 %v2784, %v2783
    %v2786 = vmul.f32 %v2779, %v2673
    %v2787 = vadd.f32 %v2785, %v2786
    %2788 = vst [vmem:[#allocation4 + $0x10] sm:$0xff] %v2787
    %v2789 = vld [vmem:[#allocation2 + $0x48] sm:$0xff]
    %v2790 = vld [vmem:[#allocation2 + $0x50] sm:$0xff]
    %v2791 = vld [vmem:[#allocation2 + $0x58] sm:$0xff]
    %v2792 = vld [vmem:[#allocation3 + $0x60] sm:$0xff]
    %v2793 = vld [vmem:[#allocation3 + $0x68] sm:$0xff]
    %v2794 = vld [vmem:[#allocation3 + $0x70] sm:$0xff]
    %v2795 = vadd.f32 %v2789, %v2792
    %v2796 = vadd.f32 %v2790, %v2793
    %v2797 = vadd.f32 %v2791, %v2794
    %v2798 = vpack.c.bf16 %v2787, %v2787
    %2799 = vmatprep.subr.bf16.mxu0 %v2410
    %2800 = vmatpush1.bf16.msra.mxu0 %v2409
    %2801 = vmatprep.subr.bf16.mxu0 %v2413
    %2802 = vmatpush1.bf16.msra.mxu0 %v2412
    %2803 = vmatprep.subr.bf16.mxu0 %v2416
    %2804 = vmatpush1.bf16.msra.mxu0 %v2415
    %2805 = vmatprep.subr.bf16.mxu0 %v2419
    %2806 = vmatpush1.bf16.msra.mxu0 %v2418
    %2807 = vmatprep.subr.bf16.mxu0 %v2422
    %2808 = vmatpush1.bf16.msra.mxu0 %v2421
    %2809 = vmatprep.subr.bf16.mxu0 %v2425
    %2810 = vmatpush1.bf16.msra.mxu0 %v2424
    %2811 = vmatprep.subr.bf16.mxu0 %v2428
    %2812 = vmatpush1.bf16.msra.mxu0 %v2427
    %2813 = vmatprep.subr.bf16.mxu0 %v2431
    %2814 = vmatpush1.bf16.msra.mxu0 %v2430
    %2815 = vmatprep.subr.bf16.mxu0 0
    %2816 = vmatpush1.bf16.msra.mxu0 0
    %2817 = vmatprep.subr.bf16.mxu0 0
    %2818 = vmatpush1.bf16.msra.mxu0 0
    %2819 = vmatprep.subr.bf16.mxu0 0
    %2820 = vmatpush1.bf16.msra.mxu0 0
    %2821 = vmatprep.subr.bf16.mxu0 0
    %2822 = vmatpush1.bf16.msra.mxu0 0
    %2823 = vmatprep.subr.bf16.mxu0 0
    %2824 = vmatpush1.bf16.msra.mxu0 0
    %2825 = vmatprep.subr.bf16.mxu0 0
    %2826 = vmatpush1.bf16.msra.mxu0 0
    %2827 = vmatprep.subr.bf16.mxu0 0
    %2828 = vmatpush1.bf16.msra.mxu0 0
    %2829 = vmatprep.subr.bf16.mxu0 0
    %2830 = vmatpush1.bf16.msra.mxu0 0
    %2831 = vmatprep.mubr.bf16.mxu0 0
    %2832 = vmatmul.mubr.bf16.gmra.mrb[0].mxu0 %v2798
    %v2833 = vpop.f32.mrb[0].mxu0
    %v2834 = vadd.f32 0.0, %v2833
    %v2835 = vpop.f32.mrb[0].mxu0
    %v2836 = vadd.f32 0.0, %v2835
    %v2837 = vpop.f32.mrb[0].mxu0
    %v2838 = vpop.f32.mrb[0].mxu0
    %2839 = vdwg.mxu0
    %2840 = vmatprep.subr.bf16.mxu0 0
    %2841 = vmatpush1.bf16.msra.mxu0 %v2411
    %2842 = vmatprep.subr.bf16.mxu0 0
    %2843 = vmatpush1.bf16.msra.mxu0 %v2414
    %2844 = vmatprep.subr.bf16.mxu0 0
    %2845 = vmatpush1.bf16.msra.mxu0 %v2417
    %2846 = vmatprep.subr.bf16.mxu0 0
    %2847 = vmatpush1.bf16.msra.mxu0 %v2420
    %2848 = vmatprep.subr.bf16.mxu0 0
    %2849 = vmatpush1.bf16.msra.mxu0 %v2423
    %2850 = vmatprep.subr.bf16.mxu0 0
    %2851 = vmatpush1.bf16.msra.mxu0 %v2426
    %2852 = vmatprep.subr.bf16.mxu0 0
    %2853 = vmatpush1.bf16.msra.mxu0 %v2429
    %2854 = vmatprep.subr.bf16.mxu0 0
    %2855 = vmatpush1.bf16.msra.mxu0 %v2432
    %2856 = vmatprep.subr.bf16.mxu0 0
    %2857 = vmatpush1.bf16.msra.mxu0 0
    %2858 = vmatprep.subr.bf16.mxu0 0
    %2859 = vmatpush1.bf16.msra.mxu0 0
    %2860 = vmatprep.subr.bf16.mxu0 0
    %2861 = vmatpush1.bf16.msra.mxu0 0
    %2862 = vmatprep.subr.bf16.mxu0 0
    %2863 = vmatpush1.bf16.msra.mxu0 0
    %2864 = vmatprep.subr.bf16.mxu0 0
    %2865 = vmatpush1.bf16.msra.mxu0 0
    %2866 = vmatprep.subr.bf16.mxu0 0
    %2867 = vmatpush1.bf16.msra.mxu0 0
    %2868 = vmatprep.subr.bf16.mxu0 0
    %2869 = vmatpush1.bf16.msra.mxu0 0
    %2870 = vmatprep.subr.bf16.mxu0 0
    %2871 = vmatpush1.bf16.msra.mxu0 0
    %2872 = vmatprep.mubr.bf16.mxu0 0
    %2873 = vmatmul.mubr.bf16.gmra.mrb[0].mxu0 %v2798
    %v2874 = vpop.f32.mrb[0].mxu0
    %v2875 = vadd.f32 0.0, %v2874
    %v2876 = vpop.f32.mrb[0].mxu0
    %v2877 = vpop.f32.mrb[0].mxu0
    %v2878 = vpop.f32.mrb[0].mxu0
    %2879 = vdwg.mxu0
    %v2880 = vadd.f32 %v2795, %v2834
    %v2881 = vadd.f32 %v2796, %v2836
    %v2882 = vxor.u32 %v2880, 2147483648
    %v2883 = vxor.u32 %v2881, 2147483648
    %v2884 = vmul.f32 %v2882, 1.442695
    %v2885 = vpow.pop %v2884
    %v2886 = vmul.f32 %v2883, 1.442695
    %v2887 = vpow.pop %v2886
    %v2888 = vadd.f32 %v2885, 1.0
    %v2889 = vadd.f32 %v2887, 1.0
    %v2890 = vrcp.pop %v2888
    %v2891 = vmul.f32 1.0, %v2890
    %v2892 = vrcp.pop %v2889
    %v2893 = vmul.f32 1.0, %v2892
    %v2894 = vadd.f32 %v2875, %v2318
    %v2895 = vmul.f32 %v2891, %v2894
    %v2896 = vadd.f32 %v2797, %v2895
    %v2897 = vtanh.pop %v2896
    %v2898 = vsub.f32 1.0, %v2893
    %v2899 = vmul.f32 %v2898, %v2897
    %v2900 = vmul.f32 %v2893, %v2787
    %v2901 = vadd.f32 %v2899, %v2900
    %2902 = vst [vmem:[#allocation4 + $0x18] sm:$0xff] %v2901
    %v2903 = vld [vmem:[#allocation2 + $0x60] sm:$0xff]
    %v2904 = vld [vmem:[#allocation2 + $0x68] sm:$0xff]
    %v2905 = vld [vmem:[#allocation2 + $0x70] sm:$0xff]
    %v2906 = vld [vmem:[#allocation3 + $0x48] sm:$0xff]
    %v2907 = vld [vmem:[#allocation3 + $0x50] sm:$0xff]
    %v2908 = vld [vmem:[#allocation3 + $0x58] sm:$0xff]
    %v2909 = vadd.f32 %v2903, %v2906
    %v2910 = vadd.f32 %v2904, %v2907
    %v2911 = vadd.f32 %v2905, %v2908
    %v2912 = vpack.c.bf16 %v2901, %v2901
    %2913 = vmatprep.subr.bf16.mxu0 %v2410
    %2914 = vmatpush1.bf16.msra.mxu0 %v2409
    %2915 = vmatprep.subr.bf16.mxu0 %v2413
    %2916 = vmatpush1.bf16.msra.mxu0 %v2412
    %2917 = vmatprep.subr.bf16.mxu0 %v2416
    %2918 = vmatpush1.bf16.msra.mxu0 %v2415
    %2919 = vmatprep.subr.bf16.mxu0 %v2419
    %2920 = vmatpush1.bf16.msra.mxu0 %v2418
    %2921 = vmatprep.subr.bf16.mxu0 %v2422
    %2922 = vmatpush1.bf16.msra.mxu0 %v2421
    %2923 = vmatprep.subr.bf16.mxu0 %v2425
    %2924 = vmatpush1.bf16.msra.mxu0 %v2424
    %2925 = vmatprep.subr.bf16.mxu0 %v2428
    %2926 = vmatpush1.bf16.msra.mxu0 %v2427
    %2927 = vmatprep.subr.bf16.mxu0 %v2431
    %2928 = vmatpush1.bf16.msra.mxu0 %v2430
    %2929 = vmatprep.subr.bf16.mxu0 0
    %2930 = vmatpush1.bf16.msra.mxu0 0
    %2931 = vmatprep.subr.bf16.mxu0 0
    %2932 = vmatpush1.bf16.msra.mxu0 0
    %2933 = vmatprep.subr.bf16.mxu0 0
    %2934 = vmatpush1.bf16.msra.mxu0 0
    %2935 = vmatprep.subr.bf16.mxu0 0
    %2936 = vmatpush1.bf16.msra.mxu0 0
    %2937 = vmatprep.subr.bf16.mxu0 0
    %2938 = vmatpush1.bf16.msra.mxu0 0
    %2939 = vmatprep.subr.bf16.mxu0 0
    %2940 = vmatpush1.bf16.msra.mxu0 0
    %2941 = vmatprep.subr.bf16.mxu0 0
    %2942 = vmatpush1.bf16.msra.mxu0 0
    %2943 = vmatprep.subr.bf16.mxu0 0
    %2944 = vmatpush1.bf16.msra.mxu0 0
    %2945 = vmatprep.mubr.bf16.mxu0 0
    %2946 = vmatmul.mubr.bf16.gmra.mrb[0].mxu0 %v2912
    %v2947 = vpop.f32.mrb[0].mxu0
    %v2948 = vadd.f32 0.0, %v2947
    %v2949 = vpop.f32.mrb[0].mxu0
    %v2950 = vadd.f32 0.0, %v2949
    %v2951 = vpop.f32.mrb[0].mxu0
    %v2952 = vpop.f32.mrb[0].mxu0
    %2953 = vdwg.mxu0
    %2954 = vmatprep.subr.bf16.mxu0 0
    %2955 = vmatpush1.bf16.msra.mxu0 %v2411
    %2956 = vmatprep.subr.bf16.mxu0 0
    %2957 = vmatpush1.bf16.msra.mxu0 %v2414
    %2958 = vmatprep.subr.bf16.mxu0 0
    %2959 = vmatpush1.bf16.msra.mxu0 %v2417
    %2960 = vmatprep.subr.bf16.mxu0 0
    %2961 = vmatpush1.bf16.msra.mxu0 %v2420
    %2962 = vmatprep.subr.bf16.mxu0 0
    %2963 = vmatpush1.bf16.msra.mxu0 %v2423
    %2964 = vmatprep.subr.bf16.mxu0 0
    %2965 = vmatpush1.bf16.msra.mxu0 %v2426
    %2966 = vmatprep.subr.bf16.mxu0 0
    %2967 = vmatpush1.bf16.msra.mxu0 %v2429
    %2968 = vmatprep.subr.bf16.mxu0 0
    %2969 = vmatpush1.bf16.msra.mxu0 %v2432
    %2970 = vmatprep.subr.bf16.mxu0 0
    %2971 = vmatpush1.bf16.msra.mxu0 0
    %2972 = vmatprep.subr.bf16.mxu0 0
    %2973 = vmatpush1.bf16.msra.mxu0 0
    %2974 = vmatprep.subr.bf16.mxu0 0
    %2975 = vmatpush1.bf16.msra.mxu0 0
    %2976 = vmatprep.subr.bf16.mxu0 0
    %2977 = vmatpush1.bf16.msra.mxu0 0
    %2978 = vmatprep.subr.bf16.mxu0 0
    %2979 = vmatpush1.bf16.msra.mxu0 0
    %2980 = vmatprep.subr.bf16.mxu0 0
    %2981 = vmatpush1.bf16.msra.mxu0 0
    %2982 = vmatprep.subr.bf16.mxu0 0
    %2983 = vmatpush1.bf16.msra.mxu0 0
    %2984 = vmatprep.subr.bf16.mxu0 0
    %2985 = vmatpush1.bf16.msra.mxu0 0
    %2986 = vmatprep.mubr.bf16.mxu0 0
    %2987 = vmatmul.mubr.bf16.gmra.mrb[0].mxu0 %v2912
    %v2988 = vpop.f32.mrb[0].mxu0
    %v2989 = vadd.f32 0.0, %v2988
    %v2990 = vpop.f32.mrb[0].mxu0
    %v2991 = vpop.f32.mrb[0].mxu0
    %v2992 = vpop.f32.mrb[0].mxu0
    %2993 = vdwg.mxu0
    %v2994 = vadd.f32 %v2909, %v2948
    %v2995 = vadd.f32 %v2910, %v2950
    %v2996 = vxor.u32 %v2994, 2147483648
    %v2997 = vxor.u32 %v2995, 2147483648
    %v2998 = vmul.f32 %v2996, 1.442695
    %v2999 = vpow.pop %v2998
    %v3000 = vmul.f32 %v2997, 1.442695
    %v3001 = vpow.pop %v3000
    %v3002 = vadd.f32 %v2999, 1.0
    %v3003 = vadd.f32 %v3001, 1.0
    %v3004 = vrcp.pop %v3002
    %v3005 = vmul.f32 1.0, %v3004
    %v3006 = vrcp.pop %v3003
    %v3007 = vmul.f32 1.0, %v3006
    %v3008 = vadd.f32 %v2989, %v2318
    %v3009 = vmul.f32 %v3005, %v3008
    %v3010 = vadd.f32 %v2911, %v3009
    %v3011 = vtanh.pop %v3010
    %v3012 = vsub.f32 1.0, %v3007
    %v3013 = vmul.f32 %v3012, %v3011
    %v3014 = vmul.f32 %v3007, %v2901
    %v3015 = vadd.f32 %v3013, %v3014
    %3016 = vst [vmem:[#allocation4 + $0x20] sm:$0xff] %v3015
    %v3017 = vld [vmem:[#allocation2 + $0x78] sm:$0xff]
    %v3018 = vld [vmem:[#allocation2 + $0x80] sm:$0xff]
    %v3019 = vld [vmem:[#allocation2 + $0x88] sm:$0xff]
    %v3020 = vld [vmem:[#allocation3 + $0x30] sm:$0xff]
    %v3021 = vld [vmem:[#allocation3 + $0x38] sm:$0xff]
    %v3022 = vld [vmem:[#allocation3 + $0x40] sm:$0xff]
    %v3023 = vadd.f32 %v3017, %v3020
    %v3024 = vadd.f32 %v3018, %v3021
    %v3025 = vadd.f32 %v3019, %v3022
    %v3026 = vpack.c.bf16 %v3015, %v3015
    %3027 = vmatprep.subr.bf16.mxu0 %v2410
    %3028 = vmatpush1.bf16.msra.mxu0 %v2409
    %3029 = vmatprep.subr.bf16.mxu0 %v2413
    %3030 = vmatpush1.bf16.msra.mxu0 %v2412
    %3031 = vmatprep.subr.bf16.mxu0 %v2416
    %3032 = vmatpush1.bf16.msra.mxu0 %v2415
    %3033 = vmatprep.subr.bf16.mxu0 %v2419
    %3034 = vmatpush1.bf16.msra.mxu0 %v2418
    %3035 = vmatprep.subr.bf16.mxu0 %v2422
    %3036 = vmatpush1.bf16.msra.mxu0 %v2421
    %3037 = vmatprep.subr.bf16.mxu0 %v2425
    %3038 = vmatpush1.bf16.msra.mxu0 %v2424
    %3039 = vmatprep.subr.bf16.mxu0 %v2428
    %3040 = vmatpush1.bf16.msra.mxu0 %v2427
    %3041 = vmatprep.subr.bf16.mxu0 %v2431
    %3042 = vmatpush1.bf16.msra.mxu0 %v2430
    %3043 = vmatprep.subr.bf16.mxu0 0
    %3044 = vmatpush1.bf16.msra.mxu0 0
    %3045 = vmatprep.subr.bf16.mxu0 0
    %3046 = vmatpush1.bf16.msra.mxu0 0
    %3047 = vmatprep.subr.bf16.mxu0 0
    %3048 = vmatpush1.bf16.msra.mxu0 0
    %3049 = vmatprep.subr.bf16.mxu0 0
    %3050 = vmatpush1.bf16.msra.mxu0 0
    %3051 = vmatprep.subr.bf16.mxu0 0
    %3052 = vmatpush1.bf16.msra.mxu0 0
    %3053 = vmatprep.subr.bf16.mxu0 0
    %3054 = vmatpush1.bf16.msra.mxu0 0
    %3055 = vmatprep.subr.bf16.mxu0 0
    %3056 = vmatpush1.bf16.msra.mxu0 0
    %3057 = vmatprep.subr.bf16.mxu0 0
    %3058 = vmatpush1.bf16.msra.mxu0 0
    %3059 = vmatprep.mubr.bf16.mxu0 0
    %3060 = vmatmul.mubr.bf16.gmra.mrb[0].mxu0 %v3026
    %v3061 = vpop.f32.mrb[0].mxu0
    %v3062 = vadd.f32 0.0, %v3061
    %v3063 = vpop.f32.mrb[0].mxu0
    %v3064 = vadd.f32 0.0, %v3063
    %v3065 = vpop.f32.mrb[0].mxu0
    %v3066 = vpop.f32.mrb[0].mxu0
    %3067 = vdwg.mxu0
    %3068 = vmatprep.subr.bf16.mxu0 0
    %3069 = vmatpush1.bf16.msra.mxu0 %v2411
    %3070 = vmatprep.subr.bf16.mxu0 0
    %3071 = vmatpush1.bf16.msra.mxu0 %v2414
    %3072 = vmatprep.subr.bf16.mxu0 0
    %3073 = vmatpush1.bf16.msra.mxu0 %v2417
    %3074 = vmatprep.subr.bf16.mxu0 0
    %3075 = vmatpush1.bf16.msra.mxu0 %v2420
    %3076 = vmatprep.subr.bf16.mxu0 0
    %3077 = vmatpush1.bf16.msra.mxu0 %v2423
    %3078 = vmatprep.subr.bf16.mxu0 0
    %3079 = vmatpush1.bf16.msra.mxu0 %v2426
    %3080 = vmatprep.subr.bf16.mxu0 0
    %3081 = vmatpush1.bf16.msra.mxu0 %v2429
    %3082 = vmatprep.subr.bf16.mxu0 0
    %3083 = vmatpush1.bf16.msra.mxu0 %v2432
    %3084 = vmatprep.subr.bf16.mxu0 0
    %3085 = vmatpush1.bf16.msra.mxu0 0
    %3086 = vmatprep.subr.bf16.mxu0 0
    %3087 = vmatpush1.bf16.msra.mxu0 0
    %3088 = vmatprep.subr.bf16.mxu0 0
    %3089 = vmatpush1.bf16.msra.mxu0 0
    %3090 = vmatprep.subr.bf16.mxu0 0
    %3091 = vmatpush1.bf16.msra.mxu0 0
    %3092 = vmatprep.subr.bf16.mxu0 0
    %3093 = vmatpush1.bf16.msra.mxu0 0
    %3094 = vmatprep.subr.bf16.mxu0 0
    %3095 = vmatpush1.bf16.msra.mxu0 0
    %3096 = vmatprep.subr.bf16.mxu0 0
    %3097 = vmatpush1.bf16.msra.mxu0 0
    %3098 = vmatprep.subr.bf16.mxu0 0
    %3099 = vmatpush1.bf16.msra.mxu0 0
    %3100 = vmatprep.mubr.bf16.mxu0 0
    %3101 = vmatmul.mubr.bf16.gmra.mrb[0].mxu0 %v3026
    %v3102 = vpop.f32.mrb[0].mxu0
    %v3103 = vadd.f32 0.0, %v3102
    %v3104 = vpop.f32.mrb[0].mxu0
    %v3105 = vpop.f32.mrb[0].mxu0
    %v3106 = vpop.f32.mrb[0].mxu0
    %3107 = vdwg.mxu0
    %v3108 = vadd.f32 %v3023, %v3062
    %v3109 = vadd.f32 %v3024, %v3064
    %v3110 = vxor.u32 %v3108, 2147483648
    %v3111 = vxor.u32 %v3109, 2147483648
    %v3112 = vmul.f32 %v3110, 1.442695
    %v3113 = vpow.pop %v3112
    %v3114 = vmul.f32 %v3111, 1.442695
    %v3115 = vpow.pop %v3114
    %v3116 = vadd.f32 %v3113, 1.0
    %v3117 = vadd.f32 %v3115, 1.0
    %v3118 = vrcp.pop %v3116
    %v3119 = vmul.f32 1.0, %v3118
    %v3120 = vrcp.pop %v3117
    %v3121 = vmul.f32 1.0, %v3120
    %v3122 = vadd.f32 %v3103, %v2318
    %v3123 = vmul.f32 %v3119, %v3122
    %v3124 = vadd.f32 %v3025, %v3123
    %v3125 = vtanh.pop %v3124
    %v3126 = vsub.f32 1.0, %v3121
    %v3127 = vmul.f32 %v3126, %v3125
    %v3128 = vmul.f32 %v3121, %v3015
    %v3129 = vadd.f32 %v3127, %v3128
    %3130 = vst [vmem:[#allocation4 + $0x28] sm:$0xff] %v3129
    %v3131 = vld [vmem:[#allocation2 + $0x90] sm:$0xff]
    %v3132 = vld [vmem:[#allocation2 + $0x98] sm:$0xff]
    %v3133 = vld [vmem:[#allocation2 + $0xa0] sm:$0xff]
    %v3134 = vld [vmem:[#allocation3 + $0x18] sm:$0xff]
    %v3135 = vld [vmem:[#allocation3 + $0x20] sm:$0xff]
    %v3136 = vld [vmem:[#allocation3 + $0x28] sm:$0xff]
    %v3137 = vadd.f32 %v3131, %v3134
    %v3138 = vadd.f32 %v3132, %v3135
    %v3139 = vadd.f32 %v3133, %v3136
    %v3140 = vpack.c.bf16 %v3129, %v3129
    %3141 = vmatprep.subr.bf16.mxu0 %v2410
    %3142 = vmatpush1.bf16.msra.mxu0 %v2409
    %3143 = vmatprep.subr.bf16.mxu0 %v2413
    %3144 = vmatpush1.bf16.msra.mxu0 %v2412
    %3145 = vmatprep.subr.bf16.mxu0 %v2416
    %3146 = vmatpush1.bf16.msra.mxu0 %v2415
    %3147 = vmatprep.subr.bf16.mxu0 %v2419
    %3148 = vmatpush1.bf16.msra.mxu0 %v2418
    %3149 = vmatprep.subr.bf16.mxu0 %v2422
    %3150 = vmatpush1.bf16.msra.mxu0 %v2421
    %3151 = vmatprep.subr.bf16.mxu0 %v2425
    %3152 = vmatpush1.bf16.msra.mxu0 %v2424
    %3153 = vmatprep.subr.bf16.mxu0 %v2428
    %3154 = vmatpush1.bf16.msra.mxu0 %v2427
    %3155 = vmatprep.subr.bf16.mxu0 %v2431
    %3156 = vmatpush1.bf16.msra.mxu0 %v2430
    %3157 = vmatprep.subr.bf16.mxu0 0
    %3158 = vmatpush1.bf16.msra.mxu0 0
    %3159 = vmatprep.subr.bf16.mxu0 0
    %3160 = vmatpush1.bf16.msra.mxu0 0
    %3161 = vmatprep.subr.bf16.mxu0 0
    %3162 = vmatpush1.bf16.msra.mxu0 0
    %3163 = vmatprep.subr.bf16.mxu0 0
    %3164 = vmatpush1.bf16.msra.mxu0 0
    %3165 = vmatprep.subr.bf16.mxu0 0
    %3166 = vmatpush1.bf16.msra.mxu0 0
    %3167 = vmatprep.subr.bf16.mxu0 0
    %3168 = vmatpush1.bf16.msra.mxu0 0
    %3169 = vmatprep.subr.bf16.mxu0 0
    %3170 = vmatpush1.bf16.msra.mxu0 0
    %3171 = vmatprep.subr.bf16.mxu0 0
    %3172 = vmatpush1.bf16.msra.mxu0 0
    %3173 = vmatprep.mubr.bf16.mxu0 0
    %3174 = vmatmul.mubr.bf16.gmra.mrb[0].mxu0 %v3140
    %v3175 = vpop.f32.mrb[0].mxu0
    %v3176 = vadd.f32 0.0, %v3175
    %v3177 = vpop.f32.mrb[0].mxu0
    %v3178 = vadd.f32 0.0, %v3177
    %v3179 = vpop.f32.mrb[0].mxu0
    %v3180 = vpop.f32.mrb[0].mxu0
    %3181 = vdwg.mxu0
    %3182 = vmatprep.subr.bf16.mxu0 0
    %3183 = vmatpush1.bf16.msra.mxu0 %v2411
    %3184 = vmatprep.subr.bf16.mxu0 0
    %3185 = vmatpush1.bf16.msra.mxu0 %v2414
    %3186 = vmatprep.subr.bf16.mxu0 0
    %3187 = vmatpush1.bf16.msra.mxu0 %v2417
    %3188 = vmatprep.subr.bf16.mxu0 0
    %3189 = vmatpush1.bf16.msra.mxu0 %v2420
    %3190 = vmatprep.subr.bf16.mxu0 0
    %3191 = vmatpush1.bf16.msra.mxu0 %v2423
    %3192 = vmatprep.subr.bf16.mxu0 0
    %3193 = vmatpush1.bf16.msra.mxu0 %v2426
    %3194 = vmatprep.subr.bf16.mxu0 0
    %3195 = vmatpush1.bf16.msra.mxu0 %v2429
    %3196 = vmatprep.subr.bf16.mxu0 0
    %3197 = vmatpush1.bf16.msra.mxu0 %v2432
    %3198 = vmatprep.subr.bf16.mxu0 0
    %3199 = vmatpush1.bf16.msra.mxu0 0
    %3200 = vmatprep.subr.bf16.mxu0 0
    %3201 = vmatpush1.bf16.msra.mxu0 0
    %3202 = vmatprep.subr.bf16.mxu0 0
    %3203 = vmatpush1.bf16.msra.mxu0 0
    %3204 = vmatprep.subr.bf16.mxu0 0
    %3205 = vmatpush1.bf16.msra.mxu0 0
    %3206 = vmatprep.subr.bf16.mxu0 0
    %3207 = vmatpush1.bf16.msra.mxu0 0
    %3208 = vmatprep.subr.bf16.mxu0 0
    %3209 = vmatpush1.bf16.msra.mxu0 0
    %3210 = vmatprep.subr.bf16.mxu0 0
    %3211 = vmatpush1.bf16.msra.mxu0 0
    %3212 = vmatprep.subr.bf16.mxu0 0
    %3213 = vmatpush1.bf16.msra.mxu0 0
    %3214 = vmatprep.mubr.bf16.mxu0 0
    %3215 = vmatmul.mubr.bf16.gmra.mrb[0].mxu0 %v3140
    %v3216 = vpop.f32.mrb[0].mxu0
    %v3217 = vadd.f32 0.0, %v3216
    %v3218 = vpop.f32.mrb[0].mxu0
    %v3219 = vpop.f32.mrb[0].mxu0
    %v3220 = vpop.f32.mrb[0].mxu0
    %3221 = vdwg.mxu0
    %v3222 = vadd.f32 %v3137, %v3176
    %v3223 = vadd.f32 %v3138, %v3178
    %v3224 = vxor.u32 %v3222, 2147483648
    %v3225 = vxor.u32 %v3223, 2147483648
    %v3226 = vmul.f32 %v3224, 1.442695
    %v3227 = vpow.pop %v3226
    %v3228 = vmul.f32 %v3225, 1.442695
    %v3229 = vpow.pop %v3228
    %v3230 = vadd.f32 %v3227, 1.0
    %v3231 = vadd.f32 %v3229, 1.0
    %v3232 = vrcp.pop %v3230
    %v3233 = vmul.f32 1.0, %v3232
    %v3234 = vrcp.pop %v3231
    %v3235 = vmul.f32 1.0, %v3234
    %v3236 = vadd.f32 %v3217, %v2318
    %v3237 = vmul.f32 %v3233, %v3236
    %v3238 = vadd.f32 %v3139, %v3237
    %v3239 = vtanh.pop %v3238
    %v3240 = vsub.f32 1.0, %v3235
    %v3241 = vmul.f32 %v3240, %v3239
    %v3242 = vmul.f32 %v3235, %v3129
    %v3243 = vadd.f32 %v3241, %v3242
    %3244 = vst [vmem:[#allocation4 + $0x30] sm:$0xff] %v3243
    %v3245 = vld [vmem:[#allocation2 + $0xa8] sm:$0xff]
    %v3246 = vld [vmem:[#allocation2 + $0xb0] sm:$0xff]
    %v3247 = vld [vmem:[#allocation2 + $0xb8] sm:$0xff]
    %v3248 = vld [vmem:[#allocation3] sm:$0xff]
    %v3249 = vld [vmem:[#allocation3 + $0x8] sm:$0xff]
    %v3250 = vld [vmem:[#allocation3 + $0x10] sm:$0xff]
    %v3251 = vadd.f32 %v3245, %v3248
    %v3252 = vadd.f32 %v3246, %v3249
    %v3253 = vadd.f32 %v3247, %v3250
    %v3254 = vpack.c.bf16 %v3243, %v3243
    %3255 = vmatprep.subr.bf16.mxu0 %v2410
    %3256 = vmatpush1.bf16.msra.mxu0 %v2409
    %3257 = vmatprep.subr.bf16.mxu0 %v2413
    %3258 = vmatpush1.bf16.msra.mxu0 %v2412
    %3259 = vmatprep.subr.bf16.mxu0 %v2416
    %3260 = vmatpush1.bf16.msra.mxu0 %v2415
    %3261 = vmatprep.subr.bf16.mxu0 %v2419
    %3262 = vmatpush1.bf16.msra.mxu0 %v2418
    %3263 = vmatprep.subr.bf16.mxu0 %v2422
    %3264 = vmatpush1.bf16.msra.mxu0 %v2421
    %3265 = vmatprep.subr.bf16.mxu0 %v2425
    %3266 = vmatpush1.bf16.msra.mxu0 %v2424
    %3267 = vmatprep.subr.bf16.mxu0 %v2428
    %3268 = vmatpush1.bf16.msra.mxu0 %v2427
    %3269 = vmatprep.subr.bf16.mxu0 %v2431
    %3270 = vmatpush1.bf16.msra.mxu0 %v2430
    %3271 = vmatprep.subr.bf16.mxu0 0
    %3272 = vmatpush1.bf16.msra.mxu0 0
    %3273 = vmatprep.subr.bf16.mxu0 0
    %3274 = vmatpush1.bf16.msra.mxu0 0
    %3275 = vmatprep.subr.bf16.mxu0 0
    %3276 = vmatpush1.bf16.msra.mxu0 0
    %3277 = vmatprep.subr.bf16.mxu0 0
    %3278 = vmatpush1.bf16.msra.mxu0 0
    %3279 = vmatprep.subr.bf16.mxu0 0
    %3280 = vmatpush1.bf16.msra.mxu0 0
    %3281 = vmatprep.subr.bf16.mxu0 0
    %3282 = vmatpush1.bf16.msra.mxu0 0
    %3283 = vmatprep.subr.bf16.mxu0 0
    %3284 = vmatpush1.bf16.msra.mxu0 0
    %3285 = vmatprep.subr.bf16.mxu0 0
    %3286 = vmatpush1.bf16.msra.mxu0 0
    %3287 = vmatprep.mubr.bf16.mxu0 0
    %3288 = vmatmul.mubr.bf16.gmra.mrb[0].mxu0 %v3254
    %v3289 = vpop.f32.mrb[0].mxu0
    %v3290 = vadd.f32 0.0, %v3289
    %v3291 = vpop.f32.mrb[0].mxu0
    %v3292 = vadd.f32 0.0, %v3291
    %v3293 = vpop.f32.mrb[0].mxu0
    %v3294 = vpop.f32.mrb[0].mxu0
    %3295 = vdwg.mxu0
    %3296 = vmatprep.subr.bf16.mxu0 0
    %3297 = vmatpush1.bf16.msra.mxu0 %v2411
    %3298 = vmatprep.subr.bf16.mxu0 0
    %3299 = vmatpush1.bf16.msra.mxu0 %v2414
    %3300 = vmatprep.subr.bf16.mxu0 0
    %3301 = vmatpush1.bf16.msra.mxu0 %v2417
    %3302 = vmatprep.subr.bf16.mxu0 0
    %3303 = vmatpush1.bf16.msra.mxu0 %v2420
    %3304 = vmatprep.subr.bf16.mxu0 0
    %3305 = vmatpush1.bf16.msra.mxu0 %v2423
    %3306 = vmatprep.subr.bf16.mxu0 0
    %3307 = vmatpush1.bf16.msra.mxu0 %v2426
    %3308 = vmatprep.subr.bf16.mxu0 0
    %3309 = vmatpush1.bf16.msra.mxu0 %v2429
    %3310 = vmatprep.subr.bf16.mxu0 0
    %3311 = vmatpush1.bf16.msra.mxu0 %v2432
    %3312 = vmatprep.subr.bf16.mxu0 0
    %3313 = vmatpush1.bf16.msra.mxu0 0
    %3314 = vmatprep.subr.bf16.mxu0 0
    %3315 = vmatpush1.bf16.msra.mxu0 0
    %3316 = vmatprep.subr.bf16.mxu0 0
    %3317 = vmatpush1.bf16.msra.mxu0 0
    %3318 = vmatprep.subr.bf16.mxu0 0
    %3319 = vmatpush1.bf16.msra.mxu0 0
    %3320 = vmatprep.subr.bf16.mxu0 0
    %3321 = vmatpush1.bf16.msra.mxu0 0
    %3322 = vmatprep.subr.bf16.mxu0 0
    %3323 = vmatpush1.bf16.msra.mxu0 0
    %3324 = vmatprep.subr.bf16.mxu0 0
    %3325 = vmatpush1.bf16.msra.mxu0 0
    %3326 = vmatprep.subr.bf16.mxu0 0
    %3327 = vmatpush1.bf16.msra.mxu0 0
    %3328 = vmatprep.mubr.bf16.mxu0 0
    %3329 = vmatmul.mubr.bf16.gmra.mrb[0].mxu0 %v3254
    %v3330 = vpop.f32.mrb[0].mxu0
    %v3331 = vadd.f32 0.0, %v3330
    %v3332 = vpop.f32.mrb[0].mxu0
    %v3333 = vpop.f32.mrb[0].mxu0
    %v3334 = vpop.f32.mrb[0].mxu0
    %3335 = vdwg.mxu0
    %v3336 = vadd.f32 %v3251, %v3290
    %v3337 = vadd.f32 %v3252, %v3292
    %v3338 = vxor.u32 %v3336, 2147483648
    %v3339 = vxor.u32 %v3337, 2147483648
    %v3340 = vmul.f32 %v3338, 1.442695
    %v3341 = vpow.pop %v3340
    %v3342 = vmul.f32 %v3339, 1.442695
    %v3343 = vpow.pop %v3342
    %v3344 = vadd.f32 %v3341, 1.0
    %v3345 = vadd.f32 %v3343, 1.0
    %v3346 = vrcp.pop %v3344
    %v3347 = vmul.f32 1.0, %v3346
    %v3348 = vrcp.pop %v3345
    %v3349 = vmul.f32 1.0, %v3348
    %v3350 = vadd.f32 %v3331, %v2318
    %v3351 = vmul.f32 %v3347, %v3350
    %v3352 = vadd.f32 %v3253, %v3351
    %v3353 = vtanh.pop %v3352
    %v3354 = vsub.f32 1.0, %v3349
    %v3355 = vmul.f32 %v3354, %v3353
    %v3356 = vmul.f32 %v3349, %v3243
    %v3357 = vadd.f32 %v3355, %v3356
    %3358 = vst [vmem:[#allocation4 + $0x38] sm:$0xff] %v3357
    %v3359 = vld [vmem:[#allocation4] sm:$0xff]
    %v3360 = vld [vmem:[#allocation4 + $0x8] sm:$0xff]
    %v3361 = vld [vmem:[#allocation4 + $0x10] sm:$0xff]
    %v3362 = vld [vmem:[#allocation4 + $0x18] sm:$0xff]
    %v3363 = vld [vmem:[#allocation4 + $0x20] sm:$0xff]
    %v3364 = vld [vmem:[#allocation4 + $0x28] sm:$0xff]
    %v3365 = vld [vmem:[#allocation4 + $0x30] sm:$0xff]
    %v3366 = vld [vmem:[#allocation4 + $0x38] sm:$0xff]
    %v3367 = vpack.c.bf16 %v3360, %v3359
    %v3368 = vpack.c.bf16 %v3362, %v3361
    %v3369 = vpack.c.bf16 %v3364, %v3363
    %v3370 = vpack.c.bf16 %v3366, %v3365
    %v3371 = vld [vmem:[#allocation18] sm:$0xff]
    %v3372 = vld [vmem:[#allocation18 + $0x8] sm:$0xf]
    %v3373 = vld [vmem:[#allocation18 + $0xc] sm:$0xff]
    %v3374 = vld [vmem:[#allocation18 + $0x14] sm:$0xf]
    %v3375 = vld [vmem:[#allocation18 + $0x18] sm:$0xff]
    %v3376 = vld [vmem:[#allocation18 + $0x20] sm:$0xf]
    %v3377 = vld [vmem:[#allocation18 + $0x24] sm:$0xff]
    %v3378 = vld [vmem:[#allocation18 + $0x2c] sm:$0xf]
    %v3379 = vld [vmem:[#allocation18 + $0x30] sm:$0xff]
    %v3380 = vld [vmem:[#allocation18 + $0x38] sm:$0xf]
    %v3381 = vld [vmem:[#allocation18 + $0x3c] sm:$0xff]
    %v3382 = vld [vmem:[#allocation18 + $0x44] sm:$0xf]
    %v3383 = vld [vmem:[#allocation18 + $0x48] sm:$0xff]
    %v3384 = vld [vmem:[#allocation18 + $0x50] sm:$0xf]
    %v3385 = vld [vmem:[#allocation18 + $0x54] sm:$0xff]
    %v3386 = vld [vmem:[#allocation18 + $0x5c] sm:$0xf]
    %v3387 = vld [vmem:[#allocation18 + $0x60] sm:$0xff]
    %v3388 = vld [vmem:[#allocation18 + $0x68] sm:$0xf]
    %v3389 = vld [vmem:[#allocation18 + $0x6c] sm:$0xff]
    %v3390 = vld [vmem:[#allocation18 + $0x74] sm:$0xf]
    %v3391 = vld [vmem:[#allocation18 + $0x78] sm:$0xff]
    %v3392 = vld [vmem:[#allocation18 + $0x80] sm:$0xf]
    %v3393 = vld [vmem:[#allocation18 + $0x84] sm:$0xff]
    %v3394 = vld [vmem:[#allocation18 + $0x8c] sm:$0xf]
    %v3395 = vld [vmem:[#allocation18 + $0x90] sm:$0xff]
    %v3396 = vld [vmem:[#allocation18 + $0x98] sm:$0xf]
    %v3397 = vld [vmem:[#allocation18 + $0x9c] sm:$0xff]
    %v3398 = vld [vmem:[#allocation18 + $0xa4] sm:$0xf]
    %v3399 = vld [vmem:[#allocation18 + $0xa8] sm:$0xff]
    %v3400 = vld [vmem:[#allocation18 + $0xb0] sm:$0xf]
    %v3401 = vld [vmem:[#allocation18 + $0xb4] sm:$0xff]
    %v3402 = vld [vmem:[#allocation18 + $0xbc] sm:$0xf]
    %v3403 = vld [vmem:[%s12] sm:$0x7]
    %v3405 = vlaneseq
    %v3406 = vshrl.u32 %v3405, 7
    %v3407 = vsub.s32 0, %v3406
    %v3408 = vrot.slane %v3403, %v3407
    %v3409 = vlaneseq
    %v3410 = vshrl.u32 %v3409, 7
    %v3411 = vsub.s32 1, %v3410
    %v3412 = vrot.slane %v3403, %v3411
    %v3413 = vlaneseq
    %v3414 = vshrl.u32 %v3413, 7
    %v3415 = vsub.s32 2, %v3414
    %v3416 = vrot.slane %v3403, %v3415
    %v3452 = vunpack.c.l.b16 %v3371
    %v3453 = vunpack.c.h.b16 %v3371
    %v3454 = vunpack.c.l.b16 %v3372
    %v3455 = vunpack.c.l.b16 %v3373
    %v3456 = vunpack.c.h.b16 %v3373
    %v3457 = vunpack.c.l.b16 %v3374
    %v3458 = vunpack.c.l.b16 %v3375
    %v3459 = vunpack.c.h.b16 %v3375
    %v3460 = vunpack.c.l.b16 %v3376
    %v3461 = vunpack.c.l.b16 %v3377
    %v3462 = vunpack.c.h.b16 %v3377
    %v3463 = vunpack.c.l.b16 %v3378
    %v3464 = vunpack.c.l.b16 %v3379
    %v3465 = vunpack.c.h.b16 %v3379
    %v3466 = vunpack.c.l.b16 %v3380
    %v3467 = vunpack.c.l.b16 %v3381
    %v3468 = vunpack.c.h.b16 %v3381
    %v3469 = vunpack.c.l.b16 %v3382
    %v3470 = vunpack.c.l.b16 %v3383
    %v3471 = vunpack.c.h.b16 %v3383
    %v3472 = vunpack.c.l.b16 %v3384
    %v3473 = vunpack.c.l.b16 %v3385
    %v3474 = vunpack.c.h.b16 %v3385
    %v3475 = vunpack.c.l.b16 %v3386
    %v3476 = vunpack.c.l.b16 %v3387
    %v3477 = vunpack.c.h.b16 %v3387
    %v3478 = vunpack.c.l.b16 %v3388
    %v3479 = vunpack.c.l.b16 %v3389
    %v3480 = vunpack.c.h.b16 %v3389
    %v3481 = vunpack.c.l.b16 %v3390
    %v3482 = vunpack.c.l.b16 %v3391
    %v3483 = vunpack.c.h.b16 %v3391
    %v3484 = vunpack.c.l.b16 %v3392
    %v3485 = vunpack.c.l.b16 %v3393
    %v3486 = vunpack.c.h.b16 %v3393
    %v3487 = vunpack.c.l.b16 %v3394
    %v3488 = vunpack.c.l.b16 %v3395
    %v3489 = vunpack.c.h.b16 %v3395
    %v3490 = vunpack.c.l.b16 %v3396
    %v3491 = vunpack.c.l.b16 %v3397
    %v3492 = vunpack.c.h.b16 %v3397
    %v3493 = vunpack.c.l.b16 %v3398
    %v3494 = vunpack.c.l.b16 %v3399
    %v3495 = vunpack.c.h.b16 %v3399
    %v3496 = vunpack.c.l.b16 %v3400
    %v3497 = vunpack.c.l.b16 %v3401
    %v3498 = vunpack.c.h.b16 %v3401
    %v3499 = vunpack.c.l.b16 %v3402
    %v3500 = vpack.c.b16 %v3455, %v3452
    %v3501 = vpack.c.b16 %v3456, %v3453
    %v3502 = vpack.c.b16 %v3457, %v3454
    %v3503 = vpack.c.b16 %v3461, %v3458
    %v3504 = vpack.c.b16 %v3462, %v3459
    %v3505 = vpack.c.b16 %v3463, %v3460
    %v3506 = vpack.c.b16 %v3467, %v3464
    %v3507 = vpack.c.b16 %v3468, %v3465
    %v3508 = vpack.c.b16 %v3469, %v3466
    %v3509 = vpack.c.b16 %v3473, %v3470
    %v3510 = vpack.c.b16 %v3474, %v3471
    %v3511 = vpack.c.b16 %v3475, %v3472
    %v3512 = vpack.c.b16 %v3479, %v3476
    %v3513 = vpack.c.b16 %v3480, %v3477
    %v3514 = vpack.c.b16 %v3481, %v3478
    %v3515 = vpack.c.b16 %v3485, %v3482
    %v3516 = vpack.c.b16 %v3486, %v3483
    %v3517 = vpack.c.b16 %v3487, %v3484
    %v3518 = vpack.c.b16 %v3491, %v3488
    %v3519 = vpack.c.b16 %v3492, %v3489
    %v3520 = vpack.c.b16 %v3493, %v3490
    %v3521 = vpack.c.b16 %v3497, %v3494
    %v3522 = vpack.c.b16 %v3498, %v3495
    %v3523 = vpack.c.b16 %v3499, %v3496
    %3548 = vmatprep.subr.bf16.mxu0 %v3501
    %3549 = vmatpush1.bf16.msra.mxu0 %v3500
    %3550 = vmatprep.subr.bf16.mxu0 %v3504
    %3551 = vmatpush1.bf16.msra.mxu0 %v3503
    %3552 = vmatprep.subr.bf16.mxu0 %v3507
    %3553 = vmatpush1.bf16.msra.mxu0 %v3506
    %3554 = vmatprep.subr.bf16.mxu0 %v3510
    %3555 = vmatpush1.bf16.msra.mxu0 %v3509
    %3556 = vmatprep.subr.bf16.mxu0 %v3513
    %3557 = vmatpush1.bf16.msra.mxu0 %v3512
    %3558 = vmatprep.subr.bf16.mxu0 %v3516
    %3559 = vmatpush1.bf16.msra.mxu0 %v3515
    %3560 = vmatprep.subr.bf16.mxu0 %v3519
    %3561 = vmatpush1.bf16.msra.mxu0 %v3518
    %3562 = vmatprep.subr.bf16.mxu0 %v3522
    %3563 = vmatpush1.bf16.msra.mxu0 %v3521
    %3564 = vmatprep.subr.bf16.mxu0 0
    %3565 = vmatpush1.bf16.msra.mxu0 0
    %3566 = vmatprep.subr.bf16.mxu0 0
    %3567 = vmatpush1.bf16.msra.mxu0 0
    %3568 = vmatprep.subr.bf16.mxu0 0
    %3569 = vmatpush1.bf16.msra.mxu0 0
    %3570 = vmatprep.subr.bf16.mxu0 0
    %3571 = vmatpush1.bf16.msra.mxu0 0
    %3572 = vmatprep.subr.bf16.mxu0 0
    %3573 = vmatpush1.bf16.msra.mxu0 0
    %3574 = vmatprep.subr.bf16.mxu0 0
    %3575 = vmatpush1.bf16.msra.mxu0 0
    %3576 = vmatprep.subr.bf16.mxu0 0
    %3577 = vmatpush1.bf16.msra.mxu0 0
    %3578 = vmatprep.subr.bf16.mxu0 0
    %3579 = vmatpush1.bf16.msra.mxu0 0
    %3580 = vmatprep.mubr.bf16.mxu0 0
    %3581 = vmatmul.mubr.bf16.gmra.mrb[0].mxu0 %v3367
    %v3582 = vpop.f32.mrb[0].mxu0
    %v3583 = vadd.f32 %v3408, %v3582
    %v3584 = vpop.f32.mrb[0].mxu0
    %v3585 = vadd.f32 %v3412, %v3584
    %v3586 = vpop.f32.mrb[0].mxu0
    %v3587 = vadd.f32 %v3408, %v3586
    %v3588 = vpop.f32.mrb[0].mxu0
    %v3589 = vadd.f32 %v3412, %v3588
    %3590 = vmatprep.mubr.bf16.mxu0 0
    %3591 = vmatmul.mubr.bf16.gmra.mrb[0].mxu0 %v3368
    %v3592 = vpop.f32.mrb[0].mxu0
    %v3593 = vadd.f32 %v3408, %v3592
    %v3594 = vpop.f32.mrb[0].mxu0
    %v3595 = vadd.f32 %v3412, %v3594
    %v3596 = vpop.f32.mrb[0].mxu0
    %v3597 = vadd.f32 %v3408, %v3596
    %v3598 = vpop.f32.mrb[0].mxu0
    %v3599 = vadd.f32 %v3412, %v3598
    %3600 = vmatprep.mubr.bf16.mxu0 0
    %3601 = vmatmul.mubr.bf16.gmra.mrb[0].mxu0 %v3369
    %v3602 = vpop.f32.mrb[0].mxu0
    %v3603 = vadd.f32 %v3408, %v3602
    %v3604 = vpop.f32.mrb[0].mxu0
    %v3605 = vadd.f32 %v3412, %v3604
    %v3606 = vpop.f32.mrb[0].mxu0
    %v3607 = vadd.f32 %v3408, %v3606
    %v3608 = vpop.f32.mrb[0].mxu0
    %v3609 = vadd.f32 %v3412, %v3608
    %3610 = vmatprep.mubr.bf16.mxu0 0
    %3611 = vmatmul.mubr.bf16.gmra.mrb[0].mxu0 %v3370
    %v3612 = vpop.f32.mrb[0].mxu0
    %v3613 = vadd.f32 %v3408, %v3612
    %v3614 = vpop.f32.mrb[0].mxu0
    %v3615 = vadd.f32 %v3412, %v3614
    %v3616 = vpop.f32.mrb[0].mxu0
    %v3617 = vadd.f32 %v3408, %v3616
    %v3618 = vpop.f32.mrb[0].mxu0
    %v3619 = vadd.f32 %v3412, %v3618
    %3620 = vdwg.mxu0
    %3621 = vmatprep.subr.bf16.mxu0 0
    %3622 = vmatpush1.bf16.msra.mxu0 %v3502
    %3623 = vmatprep.subr.bf16.mxu0 0
    %3624 = vmatpush1.bf16.msra.mxu0 %v3505
    %3625 = vmatprep.subr.bf16.mxu0 0
    %3626 = vmatpush1.bf16.msra.mxu0 %v3508
    %3627 = vmatprep.subr.bf16.mxu0 0
    %3628 = vmatpush1.bf16.msra.mxu0 %v3511
    %3629 = vmatprep.subr.bf16.mxu0 0
    %3630 = vmatpush1.bf16.msra.mxu0 %v3514
    %3631 = vmatprep.subr.bf16.mxu0 0
    %3632 = vmatpush1.bf16.msra.mxu0 %v3517
    %3633 = vmatprep.subr.bf16.mxu0 0
    %3634 = vmatpush1.bf16.msra.mxu0 %v3520
    %3635 = vmatprep.subr.bf16.mxu0 0
    %3636 = vmatpush1.bf16.msra.mxu0 %v3523
    %3637 = vmatprep.subr.bf16.mxu0 0
    %3638 = vmatpush1.bf16.msra.mxu0 0
    %3639 = vmatprep.subr.bf16.mxu0 0
    %3640 = vmatpush1.bf16.msra.mxu0 0
    %3641 = vmatprep.subr.bf16.mxu0 0
    %3642 = vmatpush1.bf16.msra.mxu0 0
    %3643 = vmatprep.subr.bf16.mxu0 0
    %3644 = vmatpush1.bf16.msra.mxu0 0
    %3645 = vmatprep.subr.bf16.mxu0 0
    %3646 = vmatpush1.bf16.msra.mxu0 0
    %3647 = vmatprep.subr.bf16.mxu0 0
    %3648 = vmatpush1.bf16.msra.mxu0 0
    %3649 = vmatprep.subr.bf16.mxu0 0
    %3650 = vmatpush1.bf16.msra.mxu0 0
    %3651 = vmatprep.subr.bf16.mxu0 0
    %3652 = vmatpush1.bf16.msra.mxu0 0
    %3653 = vmatprep.mubr.bf16.mxu0 0
    %3654 = vmatmul.mubr.bf16.gmra.mrb[0].mxu0 %v3367
    %v3655 = vpop.f32.mrb[0].mxu0
    %v3656 = vadd.f32 %v3416, %v3655
    %v3657 = vpop.f32.mrb[0].mxu0
    %v3658 = vpop.f32.mrb[0].mxu0
    %v3659 = vadd.f32 %v3416, %v3658
    %v3660 = vpop.f32.mrb[0].mxu0
    %3661 = vmatprep.mubr.bf16.mxu0 0
    %3662 = vmatmul.mubr.bf16.gmra.mrb[0].mxu0 %v3368
    %v3663 = vpop.f32.mrb[0].mxu0
    %v3664 = vadd.f32 %v3416, %v3663
    %v3665 = vpop.f32.mrb[0].mxu0
    %v3666 = vpop.f32.mrb[0].mxu0
    %v3667 = vadd.f32 %v3416, %v3666
    %v3668 = vpop.f32.mrb[0].mxu0
    %3669 = vmatprep.mubr.bf16.mxu0 0
    %3670 = vmatmul.mubr.bf16.gmra.mrb[0].mxu0 %v3369
    %v3671 = vpop.f32.mrb[0].mxu0
    %v3672 = vadd.f32 %v3416, %v3671
    %v3673 = vpop.f32.mrb[0].mxu0
    %v3674 = vpop.f32.mrb[0].mxu0
    %v3675 = vadd.f32 %v3416, %v3674
    %v3676 = vpop.f32.mrb[0].mxu0
    %3677 = vmatprep.mubr.bf16.mxu0 0
    %3678 = vmatmul.mubr.bf16.gmra.mrb[0].mxu0 %v3370
    %v3679 = vpop.f32.mrb[0].mxu0
    %v3680 = vadd.f32 %v3416, %v3679
    %v3681 = vpop.f32.mrb[0].mxu0
    %v3682 = vpop.f32.mrb[0].mxu0
    %v3683 = vadd.f32 %v3416, %v3682
    %v3684 = vpop.f32.mrb[0].mxu0
    %3685 = vdwg.mxu0
    %3686 = vst [vmem:[#allocation2] sm:$0xff] %v3583
    %3687 = vst [vmem:[#allocation2 + $0x8] sm:$0xff] %v3585
    %3688 = vst [vmem:[#allocation2 + $0x10] sm:$0xff] %v3656
    %3689 = vst [vmem:[#allocation2 + $0x18] sm:$0xff] %v3587
    %3690 = vst [vmem:[#allocation2 + $0x20] sm:$0xff] %v3589
    %3691 = vst [vmem:[#allocation2 + $0x28] sm:$0xff] %v3659
    %3692 = vst [vmem:[#allocation2 + $0x30] sm:$0xff] %v3593
    %3693 = vst [vmem:[#allocation2 + $0x38] sm:$0xff] %v3595
    %3694 = vst [vmem:[#allocation2 + $0x40] sm:$0xff] %v3664
    %3695 = vst [vmem:[#allocation2 + $0x48] sm:$0xff] %v3597
    %3696 = vst [vmem:[#allocation2 + $0x50] sm:$0xff] %v3599
    %3697 = vst [vmem:[#allocation2 + $0x58] sm:$0xff] %v3667
    %3698 = vst [vmem:[#allocation2 + $0x60] sm:$0xff] %v3603
    %3699 = vst [vmem:[#allocation2 + $0x68] sm:$0xff] %v3605
    %3700 = vst [vmem:[#allocation2 + $0x70] sm:$0xff] %v3672
    %3701 = vst [vmem:[#allocation2 + $0x78] sm:$0xff] %v3607
    %3702 = vst [vmem:[#allocation2 + $0x80] sm:$0xff] %v3609
    %3703 = vst [vmem:[#allocation2 + $0x88] sm:$0xff] %v3675
    %3704 = vst [vmem:[#allocation2 + $0x90] sm:$0xff] %v3613
    %3705 = vst [vmem:[#allocation2 + $0x98] sm:$0xff] %v3615
    %3706 = vst [vmem:[#allocation2 + $0xa0] sm:$0xff] %v3680
    %3707 = vst [vmem:[#allocation2 + $0xa8] sm:$0xff] %v3617
    %3708 = vst [vmem:[#allocation2 + $0xb0] sm:$0xff] %v3619
    %3709 = vst [vmem:[#allocation2 + $0xb8] sm:$0xff] %v3683
    %v3710 = vld [vmem:[#allocation19] sm:$0xff]
    %v3711 = vld [vmem:[#allocation19 + $0x8] sm:$0xf]
    %v3712 = vld [vmem:[#allocation19 + $0xc] sm:$0xff]
    %v3713 = vld [vmem:[#allocation19 + $0x14] sm:$0xf]
    %v3714 = vld [vmem:[#allocation19 + $0x18] sm:$0xff]
    %v3715 = vld [vmem:[#allocation19 + $0x20] sm:$0xf]
    %v3716 = vld [vmem:[#allocation19 + $0x24] sm:$0xff]
    %v3717 = vld [vmem:[#allocation19 + $0x2c] sm:$0xf]
    %v3718 = vld [vmem:[#allocation19 + $0x30] sm:$0xff]
    %v3719 = vld [vmem:[#allocation19 + $0x38] sm:$0xf]
    %v3720 = vld [vmem:[#allocation19 + $0x3c] sm:$0xff]
    %v3721 = vld [vmem:[#allocation19 + $0x44] sm:$0xf]
    %v3722 = vld [vmem:[#allocation19 + $0x48] sm:$0xff]
    %v3723 = vld [vmem:[#allocation19 + $0x50] sm:$0xf]
    %v3724 = vld [vmem:[#allocation19 + $0x54] sm:$0xff]
    %v3725 = vld [vmem:[#allocation19 + $0x5c] sm:$0xf]
    %v3726 = vld [vmem:[#allocation19 + $0x60] sm:$0xff]
    %v3727 = vld [vmem:[#allocation19 + $0x68] sm:$0xf]
    %v3728 = vld [vmem:[#allocation19 + $0x6c] sm:$0xff]
    %v3729 = vld [vmem:[#allocation19 + $0x74] sm:$0xf]
    %v3730 = vld [vmem:[#allocation19 + $0x78] sm:$0xff]
    %v3731 = vld [vmem:[#allocation19 + $0x80] sm:$0xf]
    %v3732 = vld [vmem:[#allocation19 + $0x84] sm:$0xff]
    %v3733 = vld [vmem:[#allocation19 + $0x8c] sm:$0xf]
    %v3734 = vld [vmem:[#allocation19 + $0x90] sm:$0xff]
    %v3735 = vld [vmem:[#allocation19 + $0x98] sm:$0xf]
    %v3736 = vld [vmem:[#allocation19 + $0x9c] sm:$0xff]
    %v3737 = vld [vmem:[#allocation19 + $0xa4] sm:$0xf]
    %v3738 = vld [vmem:[#allocation19 + $0xa8] sm:$0xff]
    %v3739 = vld [vmem:[#allocation19 + $0xb0] sm:$0xf]
    %v3740 = vld [vmem:[#allocation19 + $0xb4] sm:$0xff]
    %v3741 = vld [vmem:[#allocation19 + $0xbc] sm:$0xf]
    %v3774 = vunpack.c.l.b16 %v3710
    %v3775 = vunpack.c.h.b16 %v3710
    %v3776 = vunpack.c.l.b16 %v3711
    %v3777 = vunpack.c.l.b16 %v3712
    %v3778 = vunpack.c.h.b16 %v3712
    %v3779 = vunpack.c.l.b16 %v3713
    %v3780 = vunpack.c.l.b16 %v3714
    %v3781 = vunpack.c.h.b16 %v3714
    %v3782 = vunpack.c.l.b16 %v3715
    %v3783 = vunpack.c.l.b16 %v3716
    %v3784 = vunpack.c.h.b16 %v3716
    %v3785 = vunpack.c.l.b16 %v3717
    %v3786 = vunpack.c.l.b16 %v3718
    %v3787 = vunpack.c.h.b16 %v3718
    %v3788 = vunpack.c.l.b16 %v3719
    %v3789 = vunpack.c.l.b16 %v3720
    %v3790 = vunpack.c.h.b16 %v3720
    %v3791 = vunpack.c.l.b16 %v3721
    %v3792 = vunpack.c.l.b16 %v3722
    %v3793 = vunpack.c.h.b16 %v3722
    %v3794 = vunpack.c.l.b16 %v3723
    %v3795 = vunpack.c.l.b16 %v3724
    %v3796 = vunpack.c.h.b16 %v3724
    %v3797 = vunpack.c.l.b16 %v3725
    %v3798 = vunpack.c.l.b16 %v3726
    %v3799 = vunpack.c.h.b16 %v3726
    %v3800 = vunpack.c.l.b16 %v3727
    %v3801 = vunpack.c.l.b16 %v3728
    %v3802 = vunpack.c.h.b16 %v3728
    %v3803 = vunpack.c.l.b16 %v3729
    %v3804 = vunpack.c.l.b16 %v3730
    %v3805 = vunpack.c.h.b16 %v3730
    %v3806 = vunpack.c.l.b16 %v3731
    %v3807 = vunpack.c.l.b16 %v3732
    %v3808 = vunpack.c.h.b16 %v3732
    %v3809 = vunpack.c.l.b16 %v3733
    %v3810 = vunpack.c.l.b16 %v3734
    %v3811 = vunpack.c.h.b16 %v3734
    %v3812 = vunpack.c.l.b16 %v3735
    %v3813 = vunpack.c.l.b16 %v3736
    %v3814 = vunpack.c.h.b16 %v3736
    %v3815 = vunpack.c.l.b16 %v3737
    %v3816 = vunpack.c.l.b16 %v3738
    %v3817 = vunpack.c.h.b16 %v3738
    %v3818 = vunpack.c.l.b16 %v3739
    %v3819 = vunpack.c.l.b16 %v3740
    %v3820 = vunpack.c.h.b16 %v3740
    %v3821 = vunpack.c.l.b16 %v3741
    %v3822 = vpack.c.b16 %v3777, %v3774
    %v3823 = vpack.c.b16 %v3778, %v3775
    %v3824 = vpack.c.b16 %v3779, %v3776
    %v3825 = vpack.c.b16 %v3783, %v3780
    %v3826 = vpack.c.b16 %v3784, %v3781
    %v3827 = vpack.c.b16 %v3785, %v3782
    %v3828 = vpack.c.b16 %v3789, %v3786
    %v3829 = vpack.c.b16 %v3790, %v3787
    %v3830 = vpack.c.b16 %v3791, %v3788
    %v3831 = vpack.c.b16 %v3795, %v3792
    %v3832 = vpack.c.b16 %v3796, %v3793
    %v3833 = vpack.c.b16 %v3797, %v3794
    %v3834 = vpack.c.b16 %v3801, %v3798
    %v3835 = vpack.c.b16 %v3802, %v3799
    %v3836 = vpack.c.b16 %v3803, %v3800
    %v3837 = vpack.c.b16 %v3807, %v3804
    %v3838 = vpack.c.b16 %v3808, %v3805
    %v3839 = vpack.c.b16 %v3809, %v3806
    %v3840 = vpack.c.b16 %v3813, %v3810
    %v3841 = vpack.c.b16 %v3814, %v3811
    %v3842 = vpack.c.b16 %v3815, %v3812
    %v3843 = vpack.c.b16 %v3819, %v3816
    %v3844 = vpack.c.b16 %v3820, %v3817
    %v3845 = vpack.c.b16 %v3821, %v3818
    %3870 = vmatprep.subr.bf16.mxu0 %v3823
    %3871 = vmatpush1.bf16.msra.mxu0 %v3822
    %3872 = vmatprep.subr.bf16.mxu0 %v3826
    %3873 = vmatpush1.bf16.msra.mxu0 %v3825
    %3874 = vmatprep.subr.bf16.mxu0 %v3829
    %3875 = vmatpush1.bf16.msra.mxu0 %v3828
    %3876 = vmatprep.subr.bf16.mxu0 %v3832
    %3877 = vmatpush1.bf16.msra.mxu0 %v3831
    %3878 = vmatprep.subr.bf16.mxu0 %v3835
    %3879 = vmatpush1.bf16.msra.mxu0 %v3834
    %3880 = vmatprep.subr.bf16.mxu0 %v3838
    %3881 = vmatpush1.bf16.msra.mxu0 %v3837
    %3882 = vmatprep.subr.bf16.mxu0 %v3841
    %3883 = vmatpush1.bf16.msra.mxu0 %v3840
    %3884 = vmatprep.subr.bf16.mxu0 %v3844
    %3885 = vmatpush1.bf16.msra.mxu0 %v3843
    %3886 = vmatprep.subr.bf16.mxu0 0
    %3887 = vmatpush1.bf16.msra.mxu0 0
    %3888 = vmatprep.subr.bf16.mxu0 0
    %3889 = vmatpush1.bf16.msra.mxu0 0
    %3890 = vmatprep.subr.bf16.mxu0 0
    %3891 = vmatpush1.bf16.msra.mxu0 0
    %3892 = vmatprep.subr.bf16.mxu0 0
    %3893 = vmatpush1.bf16.msra.mxu0 0
    %3894 = vmatprep.subr.bf16.mxu0 0
    %3895 = vmatpush1.bf16.msra.mxu0 0
    %3896 = vmatprep.subr.bf16.mxu0 0
    %3897 = vmatpush1.bf16.msra.mxu0 0
    %3898 = vmatprep.subr.bf16.mxu0 0
    %3899 = vmatpush1.bf16.msra.mxu0 0
    %3900 = vmatprep.subr.bf16.mxu0 0
    %3901 = vmatpush1.bf16.msra.mxu0 0
    %3902 = vmatprep.mubr.bf16.mxu0 0
    %3903 = vmatmul.mubr.bf16.gmra.mrb[0].mxu0 %v3367
    %v3904 = vpop.f32.mrb[0].mxu0
    %v3905 = vadd.f32 0.0, %v3904
    %v3906 = vpop.f32.mrb[0].mxu0
    %v3907 = vadd.f32 0.0, %v3906
    %v3908 = vpop.f32.mrb[0].mxu0
    %v3909 = vadd.f32 0.0, %v3908
    %v3910 = vpop.f32.mrb[0].mxu0
    %v3911 = vadd.f32 0.0, %v3910
    %3912 = vmatprep.mubr.bf16.mxu0 0
    %3913 = vmatmul.mubr.bf16.gmra.mrb[0].mxu0 %v3368
    %v3914 = vpop.f32.mrb[0].mxu0
    %v3915 = vadd.f32 0.0, %v3914
    %v3916 = vpop.f32.mrb[0].mxu0
    %v3917 = vadd.f32 0.0, %v3916
    %v3918 = vpop.f32.mrb[0].mxu0
    %v3919 = vadd.f32 0.0, %v3918
    %v3920 = vpop.f32.mrb[0].mxu0
    %v3921 = vadd.f32 0.0, %v3920
    %3922 = vmatprep.mubr.bf16.mxu0 0
    %3923 = vmatmul.mubr.bf16.gmra.mrb[0].mxu0 %v3369
    %v3924 = vpop.f32.mrb[0].mxu0
    %v3925 = vadd.f32 0.0, %v3924
    %v3926 = vpop.f32.mrb[0].mxu0
    %v3927 = vadd.f32 0.0, %v3926
    %v3928 = vpop.f32.mrb[0].mxu0
    %v3929 = vadd.f32 0.0, %v3928
    %v3930 = vpop.f32.mrb[0].mxu0
    %v3931 = vadd.f32 0.0, %v3930
    %3932 = vmatprep.mubr.bf16.mxu0 0
    %3933 = vmatmul.mubr.bf16.gmra.mrb[0].mxu0 %v3370
    %v3934 = vpop.f32.mrb[0].mxu0
    %v3935 = vadd.f32 0.0, %v3934
    %v3936 = vpop.f32.mrb[0].mxu0
    %v3937 = vadd.f32 0.0, %v3936
    %v3938 = vpop.f32.mrb[0].mxu0
    %v3939 = vadd.f32 0.0, %v3938
    %v3940 = vpop.f32.mrb[0].mxu0
    %v3941 = vadd.f32 0.0, %v3940
    %3942 = vdwg.mxu0
    %3943 = vmatprep.subr.bf16.mxu0 0
    %3944 = vmatpush1.bf16.msra.mxu0 %v3824
    %3945 = vmatprep.subr.bf16.mxu0 0
    %3946 = vmatpush1.bf16.msra.mxu0 %v3827
    %3947 = vmatprep.subr.bf16.mxu0 0
    %3948 = vmatpush1.bf16.msra.mxu0 %v3830
    %3949 = vmatprep.subr.bf16.mxu0 0
    %3950 = vmatpush1.bf16.msra.mxu0 %v3833
    %3951 = vmatprep.subr.bf16.mxu0 0
    %3952 = vmatpush1.bf16.msra.mxu0 %v3836
    %3953 = vmatprep.subr.bf16.mxu0 0
    %3954 = vmatpush1.bf16.msra.mxu0 %v3839
    %3955 = vmatprep.subr.bf16.mxu0 0
    %3956 = vmatpush1.bf16.msra.mxu0 %v3842
    %3957 = vmatprep.subr.bf16.mxu0 0
    %3958 = vmatpush1.bf16.msra.mxu0 %v3845
    %3959 = vmatprep.subr.bf16.mxu0 0
    %3960 = vmatpush1.bf16.msra.mxu0 0
    %3961 = vmatprep.subr.bf16.mxu0 0
    %3962 = vmatpush1.bf16.msra.mxu0 0
    %3963 = vmatprep.subr.bf16.mxu0 0
    %3964 = vmatpush1.bf16.msra.mxu0 0
    %3965 = vmatprep.subr.bf16.mxu0 0
    %3966 = vmatpush1.bf16.msra.mxu0 0
    %3967 = vmatprep.subr.bf16.mxu0 0
    %3968 = vmatpush1.bf16.msra.mxu0 0
    %3969 = vmatprep.subr.bf16.mxu0 0
    %3970 = vmatpush1.bf16.msra.mxu0 0
    %3971 = vmatprep.subr.bf16.mxu0 0
    %3972 = vmatpush1.bf16.msra.mxu0 0
    %3973 = vmatprep.subr.bf16.mxu0 0
    %3974 = vmatpush1.bf16.msra.mxu0 0
    %3975 = vmatprep.mubr.bf16.mxu0 0
    %3976 = vmatmul.mubr.bf16.gmra.mrb[0].mxu0 %v3367
    %v3977 = vpop.f32.mrb[0].mxu0
    %v3978 = vadd.f32 0.0, %v3977
    %v3979 = vpop.f32.mrb[0].mxu0
    %v3980 = vpop.f32.mrb[0].mxu0
    %v3981 = vadd.f32 0.0, %v3980
    %v3982 = vpop.f32.mrb[0].mxu0
    %3983 = vmatprep.mubr.bf16.mxu0 0
    %3984 = vmatmul.mubr.bf16.gmra.mrb[0].mxu0 %v3368
    %v3985 = vpop.f32.mrb[0].mxu0
    %v3986 = vadd.f32 0.0, %v3985
    %v3987 = vpop.f32.mrb[0].mxu0
    %v3988 = vpop.f32.mrb[0].mxu0
    %v3989 = vadd.f32 0.0, %v3988
    %v3990 = vpop.f32.mrb[0].mxu0
    %3991 = vmatprep.mubr.bf16.mxu0 0
    %3992 = vmatmul.mubr.bf16.gmra.mrb[0].mxu0 %v3369
    %v3993 = vpop.f32.mrb[0].mxu0
    %v3994 = vadd.f32 0.0, %v3993
    %v3995 = vpop.f32.mrb[0].mxu0
    %v3996 = vpop.f32.mrb[0].mxu0
    %v3997 = vadd.f32 0.0, %v3996
    %v3998 = vpop.f32.mrb[0].mxu0
    %3999 = vmatprep.mubr.bf16.mxu0 0
    %4000 = vmatmul.mubr.bf16.gmra.mrb[0].mxu0 %v3370
    %v4001 = vpop.f32.mrb[0].mxu0
    %v4002 = vadd.f32 0.0, %v4001
    %v4003 = vpop.f32.mrb[0].mxu0
    %v4004 = vpop.f32.mrb[0].mxu0
    %v4005 = vadd.f32 0.0, %v4004
    %v4006 = vpop.f32.mrb[0].mxu0
    %4007 = vdwg.mxu0
    %4008 = vst [vmem:[#allocation3] sm:$0xff] %v3905
    %4009 = vst [vmem:[#allocation3 + $0x8] sm:$0xff] %v3907
    %4010 = vst [vmem:[#allocation3 + $0x10] sm:$0xff] %v3978
    %4011 = vst [vmem:[#allocation3 + $0x18] sm:$0xff] %v3909
    %4012 = vst [vmem:[#allocation3 + $0x20] sm:$0xff] %v3911
    %4013 = vst [vmem:[#allocation3 + $0x28] sm:$0xff] %v3981
    %4014 = vst [vmem:[#allocation3 + $0x30] sm:$0xff] %v3915
    %4015 = vst [vmem:[#allocation3 + $0x38] sm:$0xff] %v3917
    %4016 = vst [vmem:[#allocation3 + $0x40] sm:$0xff] %v3986
    %4017 = vst [vmem:[#allocation3 + $0x48] sm:$0xff] %v3919
    %4018 = vst [vmem:[#allocation3 + $0x50] sm:$0xff] %v3921
    %4019 = vst [vmem:[#allocation3 + $0x58] sm:$0xff] %v3989
    %4020 = vst [vmem:[#allocation3 + $0x60] sm:$0xff] %v3925
    %4021 = vst [vmem:[#allocation3 + $0x68] sm:$0xff] %v3927
    %4022 = vst [vmem:[#allocation3 + $0x70] sm:$0xff] %v3994
    %4023 = vst [vmem:[#allocation3 + $0x78] sm:$0xff] %v3929
    %4024 = vst [vmem:[#allocation3 + $0x80] sm:$0xff] %v3931
    %4025 = vst [vmem:[#allocation3 + $0x88] sm:$0xff] %v3997
    %4026 = vst [vmem:[#allocation3 + $0x90] sm:$0xff] %v3935
    %4027 = vst [vmem:[#allocation3 + $0x98] sm:$0xff] %v3937
    %4028 = vst [vmem:[#allocation3 + $0xa0] sm:$0xff] %v4002
    %4029 = vst [vmem:[#allocation3 + $0xa8] sm:$0xff] %v3939
    %4030 = vst [vmem:[#allocation3 + $0xb0] sm:$0xff] %v3941
    %4031 = vst [vmem:[#allocation3 + $0xb8] sm:$0xff] %v4005
    %v4032 = vld [vmem:[#allocation21] sm:$0xff]
    %v4033 = vld [vmem:[#allocation21 + $0x8] sm:$0xf]
    %v4034 = vld [vmem:[#allocation21 + $0xc] sm:$0xff]
    %v4035 = vld [vmem:[#allocation21 + $0x14] sm:$0xf]
    %v4036 = vld [vmem:[#allocation21 + $0x18] sm:$0xff]
    %v4037 = vld [vmem:[#allocation21 + $0x20] sm:$0xf]
    %v4038 = vld [vmem:[#allocation21 + $0x24] sm:$0xff]
    %v4039 = vld [vmem:[#allocation21 + $0x2c] sm:$0xf]
    %v4040 = vld [vmem:[#allocation21 + $0x30] sm:$0xff]
    %v4041 = vld [vmem:[#allocation21 + $0x38] sm:$0xf]
    %v4042 = vld [vmem:[#allocation21 + $0x3c] sm:$0xff]
    %v4043 = vld [vmem:[#allocation21 + $0x44] sm:$0xf]
    %v4044 = vld [vmem:[#allocation21 + $0x48] sm:$0xff]
    %v4045 = vld [vmem:[#allocation21 + $0x50] sm:$0xf]
    %v4046 = vld [vmem:[#allocation21 + $0x54] sm:$0xff]
    %v4047 = vld [vmem:[#allocation21 + $0x5c] sm:$0xf]
    %v4048 = vld [vmem:[#allocation21 + $0x60] sm:$0xff]
    %v4049 = vld [vmem:[#allocation21 + $0x68] sm:$0xf]
    %v4050 = vld [vmem:[#allocation21 + $0x6c] sm:$0xff]
    %v4051 = vld [vmem:[#allocation21 + $0x74] sm:$0xf]
    %v4052 = vld [vmem:[#allocation21 + $0x78] sm:$0xff]
    %v4053 = vld [vmem:[#allocation21 + $0x80] sm:$0xf]
    %v4054 = vld [vmem:[#allocation21 + $0x84] sm:$0xff]
    %v4055 = vld [vmem:[#allocation21 + $0x8c] sm:$0xf]
    %v4056 = vld [vmem:[#allocation21 + $0x90] sm:$0xff]
    %v4057 = vld [vmem:[#allocation21 + $0x98] sm:$0xf]
    %v4058 = vld [vmem:[#allocation21 + $0x9c] sm:$0xff]
    %v4059 = vld [vmem:[#allocation21 + $0xa4] sm:$0xf]
    %v4060 = vld [vmem:[#allocation21 + $0xa8] sm:$0xff]
    %v4061 = vld [vmem:[#allocation21 + $0xb0] sm:$0xf]
    %v4062 = vld [vmem:[#allocation21 + $0xb4] sm:$0xff]
    %v4063 = vld [vmem:[#allocation21 + $0xbc] sm:$0xf]
    %v4064 = vld [vmem:[%s14] sm:$0x1]
    %v4066 = vlaneseq
    %v4067 = vshrl.u32 %v4066, 7
    %v4068 = vsub.s32 0, %v4067
    %v4069 = vrot.slane %v4064, %v4068
    %v4071 = vld [vmem:[#allocation2] sm:$0xff]
    %v4072 = vld [vmem:[#allocation2 + $0x8] sm:$0xff]
    %v4073 = vld [vmem:[#allocation2 + $0x10] sm:$0xff]
    %v4074 = vld [vmem:[#allocation3 + $0xa8] sm:$0xff]
    %v4075 = vld [vmem:[#allocation3 + $0xb0] sm:$0xff]
    %v4076 = vld [vmem:[#allocation3 + $0xb8] sm:$0xff]
    %v4077 = vadd.f32 %v4071, %v4074
    %v4078 = vadd.f32 %v4072, %v4075
    %v4079 = vadd.f32 %v4073, %v4076
    %v4112 = vunpack.c.l.b16 %v4032
    %v4113 = vunpack.c.h.b16 %v4032
    %v4114 = vunpack.c.l.b16 %v4033
    %v4115 = vunpack.c.l.b16 %v4034
    %v4116 = vunpack.c.h.b16 %v4034
    %v4117 = vunpack.c.l.b16 %v4035
    %v4118 = vunpack.c.l.b16 %v4036
    %v4119 = vunpack.c.h.b16 %v4036
    %v4120 = vunpack.c.l.b16 %v4037
    %v4121 = vunpack.c.l.b16 %v4038
    %v4122 = vunpack.c.h.b16 %v4038
    %v4123 = vunpack.c.l.b16 %v4039
    %v4124 = vunpack.c.l.b16 %v4040
    %v4125 = vunpack.c.h.b16 %v4040
    %v4126 = vunpack.c.l.b16 %v4041
    %v4127 = vunpack.c.l.b16 %v4042
    %v4128 = vunpack.c.h.b16 %v4042
    %v4129 = vunpack.c.l.b16 %v4043
    %v4130 = vunpack.c.l.b16 %v4044
    %v4131 = vunpack.c.h.b16 %v4044
    %v4132 = vunpack.c.l.b16 %v4045
    %v4133 = vunpack.c.l.b16 %v4046
    %v4134 = vunpack.c.h.b16 %v4046
    %v4135 = vunpack.c.l.b16 %v4047
    %v4136 = vunpack.c.l.b16 %v4048
    %v4137 = vunpack.c.h.b16 %v4048
    %v4138 = vunpack.c.l.b16 %v4049
    %v4139 = vunpack.c.l.b16 %v4050
    %v4140 = vunpack.c.h.b16 %v4050
    %v4141 = vunpack.c.l.b16 %v4051
    %v4142 = vunpack.c.l.b16 %v4052
    %v4143 = vunpack.c.h.b16 %v4052
    %v4144 = vunpack.c.l.b16 %v4053
    %v4145 = vunpack.c.l.b16 %v4054
    %v4146 = vunpack.c.h.b16 %v4054
    %v4147 = vunpack.c.l.b16 %v4055
    %v4148 = vunpack.c.l.b16 %v4056
    %v4149 = vunpack.c.h.b16 %v4056
    %v4150 = vunpack.c.l.b16 %v4057
    %v4151 = vunpack.c.l.b16 %v4058
    %v4152 = vunpack.c.h.b16 %v4058
    %v4153 = vunpack.c.l.b16 %v4059
    %v4154 = vunpack.c.l.b16 %v4060
    %v4155 = vunpack.c.h.b16 %v4060
    %v4156 = vunpack.c.l.b16 %v4061
    %v4157 = vunpack.c.l.b16 %v4062
    %v4158 = vunpack.c.h.b16 %v4062
    %v4159 = vunpack.c.l.b16 %v4063
    %v4160 = vpack.c.b16 %v4115, %v4112
    %v4161 = vpack.c.b16 %v4116, %v4113
    %v4162 = vpack.c.b16 %v4117, %v4114
    %v4163 = vpack.c.b16 %v4121, %v4118
    %v4164 = vpack.c.b16 %v4122, %v4119
    %v4165 = vpack.c.b16 %v4123, %v4120
    %v4166 = vpack.c.b16 %v4127, %v4124
    %v4167 = vpack.c.b16 %v4128, %v4125
    %v4168 = vpack.c.b16 %v4129, %v4126
    %v4169 = vpack.c.b16 %v4133, %v4130
    %v4170 = vpack.c.b16 %v4134, %v4131
    %v4171 = vpack.c.b16 %v4135, %v4132
    %v4172 = vpack.c.b16 %v4139, %v4136
    %v4173 = vpack.c.b16 %v4140, %v4137
    %v4174 = vpack.c.b16 %v4141, %v4138
    %v4175 = vpack.c.b16 %v4145, %v4142
    %v4176 = vpack.c.b16 %v4146, %v4143
    %v4177 = vpack.c.b16 %v4147, %v4144
    %v4178 = vpack.c.b16 %v4151, %v4148
    %v4179 = vpack.c.b16 %v4152, %v4149
    %v4180 = vpack.c.b16 %v4153, %v4150
    %v4181 = vpack.c.b16 %v4157, %v4154
    %v4182 = vpack.c.b16 %v4158, %v4155
    %v4183 = vpack.c.b16 %v4159, %v4156
    %4208 = vmatprep.subr.bf16.mxu0 %v4161
    %4209 = vmatpush1.bf16.msra.mxu0 %v4160
    %4210 = vmatprep.subr.bf16.mxu0 %v4164
    %4211 = vmatpush1.bf16.msra.mxu0 %v4163
    %4212 = vmatprep.subr.bf16.mxu0 %v4167
    %4213 = vmatpush1.bf16.msra.mxu0 %v4166
    %4214 = vmatprep.subr.bf16.mxu0 %v4170
    %4215 = vmatpush1.bf16.msra.mxu0 %v4169
    %4216 = vmatprep.subr.bf16.mxu0 %v4173
    %4217 = vmatpush1.bf16.msra.mxu0 %v4172
    %4218 = vmatprep.subr.bf16.mxu0 %v4176
    %4219 = vmatpush1.bf16.msra.mxu0 %v4175
    %4220 = vmatprep.subr.bf16.mxu0 %v4179
    %4221 = vmatpush1.bf16.msra.mxu0 %v4178
    %4222 = vmatprep.subr.bf16.mxu0 %v4182
    %4223 = vmatpush1.bf16.msra.mxu0 %v4181
    %4224 = vmatprep.subr.bf16.mxu0 0
    %4225 = vmatpush1.bf16.msra.mxu0 0
    %4226 = vmatprep.subr.bf16.mxu0 0
    %4227 = vmatpush1.bf16.msra.mxu0 0
    %4228 = vmatprep.subr.bf16.mxu0 0
    %4229 = vmatpush1.bf16.msra.mxu0 0
    %4230 = vmatprep.subr.bf16.mxu0 0
    %4231 = vmatpush1.bf16.msra.mxu0 0
    %4232 = vmatprep.subr.bf16.mxu0 0
    %4233 = vmatpush1.bf16.msra.mxu0 0
    %4234 = vmatprep.subr.bf16.mxu0 0
    %4235 = vmatpush1.bf16.msra.mxu0 0
    %4236 = vmatprep.subr.bf16.mxu0 0
    %4237 = vmatpush1.bf16.msra.mxu0 0
    %4238 = vmatprep.subr.bf16.mxu0 0
    %4239 = vmatpush1.bf16.msra.mxu0 0
    %4240 = vmatprep.mubr.bf16.mxu0 0
    %4241 = vmatmul.mubr.bf16.gmra.mrb[0].mxu0 0
    %v4242 = vpop.f32.mrb[0].mxu0
    %v4243 = vadd.f32 0.0, %v4242
    %v4244 = vpop.f32.mrb[0].mxu0
    %v4245 = vadd.f32 0.0, %v4244
    %v4246 = vpop.f32.mrb[0].mxu0
    %v4247 = vpop.f32.mrb[0].mxu0
    %4248 = vdwg.mxu0
    %4249 = vmatprep.subr.bf16.mxu0 0
    %4250 = vmatpush1.bf16.msra.mxu0 %v4162
    %4251 = vmatprep.subr.bf16.mxu0 0
    %4252 = vmatpush1.bf16.msra.mxu0 %v4165
    %4253 = vmatprep.subr.bf16.mxu0 0
    %4254 = vmatpush1.bf16.msra.mxu0 %v4168
    %4255 = vmatprep.subr.bf16.mxu0 0
    %4256 = vmatpush1.bf16.msra.mxu0 %v4171
    %4257 = vmatprep.subr.bf16.mxu0 0
    %4258 = vmatpush1.bf16.msra.mxu0 %v4174
    %4259 = vmatprep.subr.bf16.mxu0 0
    %4260 = vmatpush1.bf16.msra.mxu0 %v4177
    %4261 = vmatprep.subr.bf16.mxu0 0
    %4262 = vmatpush1.bf16.msra.mxu0 %v4180
    %4263 = vmatprep.subr.bf16.mxu0 0
    %4264 = vmatpush1.bf16.msra.mxu0 %v4183
    %4265 = vmatprep.subr.bf16.mxu0 0
    %4266 = vmatpush1.bf16.msra.mxu0 0
    %4267 = vmatprep.subr.bf16.mxu0 0
    %4268 = vmatpush1.bf16.msra.mxu0 0
    %4269 = vmatprep.subr.bf16.mxu0 0
    %4270 = vmatpush1.bf16.msra.mxu0 0
    %4271 = vmatprep.subr.bf16.mxu0 0
    %4272 = vmatpush1.bf16.msra.mxu0 0
    %4273 = vmatprep.subr.bf16.mxu0 0
    %4274 = vmatpush1.bf16.msra.mxu0 0
    %4275 = vmatprep.subr.bf16.mxu0 0
    %4276 = vmatpush1.bf16.msra.mxu0 0
    %4277 = vmatprep.subr.bf16.mxu0 0
    %4278 = vmatpush1.bf16.msra.mxu0 0
    %4279 = vmatprep.subr.bf16.mxu0 0
    %4280 = vmatpush1.bf16.msra.mxu0 0
    %4281 = vmatprep.mubr.bf16.mxu0 0
    %4282 = vmatmul.mubr.bf16.gmra.mrb[0].mxu0 0
    %v4283 = vpop.f32.mrb[0].mxu0
    %v4284 = vadd.f32 0.0, %v4283
    %v4285 = vpop.f32.mrb[0].mxu0
    %v4286 = vpop.f32.mrb[0].mxu0
    %v4287 = vpop.f32.mrb[0].mxu0
    %4288 = vdwg.mxu0
    %v4289 = vadd.f32 %v4077, %v4243
    %v4290 = vadd.f32 %v4078, %v4245
    %v4291 = vxor.u32 %v4289, 2147483648
    %v4292 = vxor.u32 %v4290, 2147483648
    %v4293 = vmul.f32 %v4291, 1.442695
    %v4294 = vpow.pop %v4293
    %v4295 = vmul.f32 %v4292, 1.442695
    %v4296 = vpow.pop %v4295
    %v4297 = vadd.f32 %v4294, 1.0
    %v4298 = vadd.f32 %v4296, 1.0
    %v4299 = vrcp.pop %v4297
    %v4300 = vmul.f32 1.0, %v4299
    %v4301 = vrcp.pop %v4298
    %v4302 = vmul.f32 1.0, %v4301
    %v4303 = vadd.f32 %v4284, %v4069
    %v4304 = vmul.f32 %v4300, %v4303
    %v4305 = vadd.f32 %v4079, %v4304
    %v4306 = vtanh.pop %v4305
    %v4307 = vsub.f32 1.0, %v4302
    %v4308 = vmul.f32 %v4307, %v4306
    %v4309 = vmul.f32 %v4302, 0.0
    %v4310 = vadd.f32 %v4308, %v4309
    %4311 = vst [vmem:[#allocation4] sm:$0xff] %v4310
    %v4312 = vld [vmem:[#allocation2 + $0x18] sm:$0xff]
    %v4313 = vld [vmem:[#allocation2 + $0x20] sm:$0xff]
    %v4314 = vld [vmem:[#allocation2 + $0x28] sm:$0xff]
    %v4315 = vld [vmem:[#allocation3 + $0x90] sm:$0xff]
    %v4316 = vld [vmem:[#allocation3 + $0x98] sm:$0xff]
    %v4317 = vld [vmem:[#allocation3 + $0xa0] sm:$0xff]
    %v4318 = vadd.f32 %v4312, %v4315
    %v4319 = vadd.f32 %v4313, %v4316
    %v4320 = vadd.f32 %v4314, %v4317
    %v4321 = vpack.c.bf16 %v4310, %v4310
    %4322 = vmatprep.subr.bf16.mxu0 %v4161
    %4323 = vmatpush1.bf16.msra.mxu0 %v4160
    %4324 = vmatprep.subr.bf16.mxu0 %v4164
    %4325 = vmatpush1.bf16.msra.mxu0 %v4163
    %4326 = vmatprep.subr.bf16.mxu0 %v4167
    %4327 = vmatpush1.bf16.msra.mxu0 %v4166
    %4328 = vmatprep.subr.bf16.mxu0 %v4170
    %4329 = vmatpush1.bf16.msra.mxu0 %v4169
    %4330 = vmatprep.subr.bf16.mxu0 %v4173
    %4331 = vmatpush1.bf16.msra.mxu0 %v4172
    %4332 = vmatprep.subr.bf16.mxu0 %v4176
    %4333 = vmatpush1.bf16.msra.mxu0 %v4175
    %4334 = vmatprep.subr.bf16.mxu0 %v4179
    %4335 = vmatpush1.bf16.msra.mxu0 %v4178
    %4336 = vmatprep.subr.bf16.mxu0 %v4182
    %4337 = vmatpush1.bf16.msra.mxu0 %v4181
    %4338 = vmatprep.subr.bf16.mxu0 0
    %4339 = vmatpush1.bf16.msra.mxu0 0
    %4340 = vmatprep.subr.bf16.mxu0 0
    %4341 = vmatpush1.bf16.msra.mxu0 0
    %4342 = vmatprep.subr.bf16.mxu0 0
    %4343 = vmatpush1.bf16.msra.mxu0 0
    %4344 = vmatprep.subr.bf16.mxu0 0
    %4345 = vmatpush1.bf16.msra.mxu0 0
    %4346 = vmatprep.subr.bf16.mxu0 0
    %4347 = vmatpush1.bf16.msra.mxu0 0
    %4348 = vmatprep.subr.bf16.mxu0 0
    %4349 = vmatpush1.bf16.msra.mxu0 0
    %4350 = vmatprep.subr.bf16.mxu0 0
    %4351 = vmatpush1.bf16.msra.mxu0 0
    %4352 = vmatprep.subr.bf16.mxu0 0
    %4353 = vmatpush1.bf16.msra.mxu0 0
    %4354 = vmatprep.mubr.bf16.mxu0 0
    %4355 = vmatmul.mubr.bf16.gmra.mrb[0].mxu0 %v4321
    %v4356 = vpop.f32.mrb[0].mxu0
    %v4357 = vadd.f32 0.0, %v4356
    %v4358 = vpop.f32.mrb[0].mxu0
    %v4359 = vadd.f32 0.0, %v4358
    %v4360 = vpop.f32.mrb[0].mxu0
    %v4361 = vpop.f32.mrb[0].mxu0
    %4362 = vdwg.mxu0
    %4363 = vmatprep.subr.bf16.mxu0 0
    %4364 = vmatpush1.bf16.msra.mxu0 %v4162
    %4365 = vmatprep.subr.bf16.mxu0 0
    %4366 = vmatpush1.bf16.msra.mxu0 %v4165
    %4367 = vmatprep.subr.bf16.mxu0 0
    %4368 = vmatpush1.bf16.msra.mxu0 %v4168
    %4369 = vmatprep.subr.bf16.mxu0 0
    %4370 = vmatpush1.bf16.msra.mxu0 %v4171
    %4371 = vmatprep.subr.bf16.mxu0 0
    %4372 = vmatpush1.bf16.msra.mxu0 %v4174
    %4373 = vmatprep.subr.bf16.mxu0 0
    %4374 = vmatpush1.bf16.msra.mxu0 %v4177
    %4375 = vmatprep.subr.bf16.mxu0 0
    %4376 = vmatpush1.bf16.msra.mxu0 %v4180
    %4377 = vmatprep.subr.bf16.mxu0 0
    %4378 = vmatpush1.bf16.msra.mxu0 %v4183
    %4379 = vmatprep.subr.bf16.mxu0 0
    %4380 = vmatpush1.bf16.msra.mxu0 0
    %4381 = vmatprep.subr.bf16.mxu0 0
    %4382 = vmatpush1.bf16.msra.mxu0 0
    %4383 = vmatprep.subr.bf16.mxu0 0
    %4384 = vmatpush1.bf16.msra.mxu0 0
    %4385 = vmatprep.subr.bf16.mxu0 0
    %4386 = vmatpush1.bf16.msra.mxu0 0
    %4387 = vmatprep.subr.bf16.mxu0 0
    %4388 = vmatpush1.bf16.msra.mxu0 0
    %4389 = vmatprep.subr.bf16.mxu0 0
    %4390 = vmatpush1.bf16.msra.mxu0 0
    %4391 = vmatprep.subr.bf16.mxu0 0
    %4392 = vmatpush1.bf16.msra.mxu0 0
    %4393 = vmatprep.subr.bf16.mxu0 0
    %4394 = vmatpush1.bf16.msra.mxu0 0
    %4395 = vmatprep.mubr.bf16.mxu0 0
    %4396 = vmatmul.mubr.bf16.gmra.mrb[0].mxu0 %v4321
    %v4397 = vpop.f32.mrb[0].mxu0
    %v4398 = vadd.f32 0.0, %v4397
    %v4399 = vpop.f32.mrb[0].mxu0
    %v4400 = vpop.f32.mrb[0].mxu0
    %v4401 = vpop.f32.mrb[0].mxu0
    %4402 = vdwg.mxu0
    %v4403 = vadd.f32 %v4318, %v4357
    %v4404 = vadd.f32 %v4319, %v4359
    %v4405 = vxor.u32 %v4403, 2147483648
    %v4406 = vxor.u32 %v4404, 2147483648
    %v4407 = vmul.f32 %v4405, 1.442695
    %v4408 = vpow.pop %v4407
    %v4409 = vmul.f32 %v4406, 1.442695
    %v4410 = vpow.pop %v4409
    %v4411 = vadd.f32 %v4408, 1.0
    %v4412 = vadd.f32 %v4410, 1.0
    %v4413 = vrcp.pop %v4411
    %v4414 = vmul.f32 1.0, %v4413
    %v4415 = vrcp.pop %v4412
    %v4416 = vmul.f32 1.0, %v4415
    %v4417 = vadd.f32 %v4398, %v4069
    %v4418 = vmul.f32 %v4414, %v4417
    %v4419 = vadd.f32 %v4320, %v4418
    %v4420 = vtanh.pop %v4419
    %v4421 = vsub.f32 1.0, %v4416
    %v4422 = vmul.f32 %v4421, %v4420
    %v4423 = vmul.f32 %v4416, %v4310
    %v4424 = vadd.f32 %v4422, %v4423
    %4425 = vst [vmem:[#allocation4 + $0x8] sm:$0xff] %v4424
    %v4426 = vld [vmem:[#allocation2 + $0x30] sm:$0xff]
    %v4427 = vld [vmem:[#allocation2 + $0x38] sm:$0xff]
    %v4428 = vld [vmem:[#allocation2 + $0x40] sm:$0xff]
    %v4429 = vld [vmem:[#allocation3 + $0x78] sm:$0xff]
    %v4430 = vld [vmem:[#allocation3 + $0x80] sm:$0xff]
    %v4431 = vld [vmem:[#allocation3 + $0x88] sm:$0xff]
    %v4432 = vadd.f32 %v4426, %v4429
    %v4433 = vadd.f32 %v4427, %v4430
    %v4434 = vadd.f32 %v4428, %v4431
    %v4435 = vpack.c.bf16 %v4424, %v4424
    %4436 = vmatprep.subr.bf16.mxu0 %v4161
    %4437 = vmatpush1.bf16.msra.mxu0 %v4160
    %4438 = vmatprep.subr.bf16.mxu0 %v4164
    %4439 = vmatpush1.bf16.msra.mxu0 %v4163
    %4440 = vmatprep.subr.bf16.mxu0 %v4167
    %4441 = vmatpush1.bf16.msra.mxu0 %v4166
    %4442 = vmatprep.subr.bf16.mxu0 %v4170
    %4443 = vmatpush1.bf16.msra.mxu0 %v4169
    %4444 = vmatprep.subr.bf16.mxu0 %v4173
    %4445 = vmatpush1.bf16.msra.mxu0 %v4172
    %4446 = vmatprep.subr.bf16.mxu0 %v4176
    %4447 = vmatpush1.bf16.msra.mxu0 %v4175
    %4448 = vmatprep.subr.bf16.mxu0 %v4179
    %4449 = vmatpush1.bf16.msra.mxu0 %v4178
    %4450 = vmatprep.subr.bf16.mxu0 %v4182
    %4451 = vmatpush1.bf16.msra.mxu0 %v4181
    %4452 = vmatprep.subr.bf16.mxu0 0
    %4453 = vmatpush1.bf16.msra.mxu0 0
    %4454 = vmatprep.subr.bf16.mxu0 0
    %4455 = vmatpush1.bf16.msra.mxu0 0
    %4456 = vmatprep.subr.bf16.mxu0 0
    %4457 = vmatpush1.bf16.msra.mxu0 0
    %4458 = vmatprep.subr.bf16.mxu0 0
    %4459 = vmatpush1.bf16.msra.mxu0 0
    %4460 = vmatprep.subr.bf16.mxu0 0
    %4461 = vmatpush1.bf16.msra.mxu0 0
    %4462 = vmatprep.subr.bf16.mxu0 0
    %4463 = vmatpush1.bf16.msra.mxu0 0
    %4464 = vmatprep.subr.bf16.mxu0 0
    %4465 = vmatpush1.bf16.msra.mxu0 0
    %4466 = vmatprep.subr.bf16.mxu0 0
    %4467 = vmatpush1.bf16.msra.mxu0 0
    %4468 = vmatprep.mubr.bf16.mxu0 0
    %4469 = vmatmul.mubr.bf16.gmra.mrb[0].mxu0 %v4435
    %v4470 = vpop.f32.mrb[0].mxu0
    %v4471 = vadd.f32 0.0, %v4470
    %v4472 = vpop.f32.mrb[0].mxu0
    %v4473 = vadd.f32 0.0, %v4472
    %v4474 = vpop.f32.mrb[0].mxu0
    %v4475 = vpop.f32.mrb[0].mxu0
    %4476 = vdwg.mxu0
    %4477 = vmatprep.subr.bf16.mxu0 0
    %4478 = vmatpush1.bf16.msra.mxu0 %v4162
    %4479 = vmatprep.subr.bf16.mxu0 0
    %4480 = vmatpush1.bf16.msra.mxu0 %v4165
    %4481 = vmatprep.subr.bf16.mxu0 0
    %4482 = vmatpush1.bf16.msra.mxu0 %v4168
    %4483 = vmatprep.subr.bf16.mxu0 0
    %4484 = vmatpush1.bf16.msra.mxu0 %v4171
    %4485 = vmatprep.subr.bf16.mxu0 0
    %4486 = vmatpush1.bf16.msra.mxu0 %v4174
    %4487 = vmatprep.subr.bf16.mxu0 0
    %4488 = vmatpush1.bf16.msra.mxu0 %v4177
    %4489 = vmatprep.subr.bf16.mxu0 0
    %4490 = vmatpush1.bf16.msra.mxu0 %v4180
    %4491 = vmatprep.subr.bf16.mxu0 0
    %4492 = vmatpush1.bf16.msra.mxu0 %v4183
    %4493 = vmatprep.subr.bf16.mxu0 0
    %4494 = vmatpush1.bf16.msra.mxu0 0
    %4495 = vmatprep.subr.bf16.mxu0 0
    %4496 = vmatpush1.bf16.msra.mxu0 0
    %4497 = vmatprep.subr.bf16.mxu0 0
    %4498 = vmatpush1.bf16.msra.mxu0 0
    %4499 = vmatprep.subr.bf16.mxu0 0
    %4500 = vmatpush1.bf16.msra.mxu0 0
    %4501 = vmatprep.subr.bf16.mxu0 0
    %4502 = vmatpush1.bf16.msra.mxu0 0
    %4503 = vmatprep.subr.bf16.mxu0 0
    %4504 = vmatpush1.bf16.msra.mxu0 0
    %4505 = vmatprep.subr.bf16.mxu0 0
    %4506 = vmatpush1.bf16.msra.mxu0 0
    %4507 = vmatprep.subr.bf16.mxu0 0
    %4508 = vmatpush1.bf16.msra.mxu0 0
    %4509 = vmatprep.mubr.bf16.mxu0 0
    %4510 = vmatmul.mubr.bf16.gmra.mrb[0].mxu0 %v4435
    %v4511 = vpop.f32.mrb[0].mxu0
    %v4512 = vadd.f32 0.0, %v4511
    %v4513 = vpop.f32.mrb[0].mxu0
    %v4514 = vpop.f32.mrb[0].mxu0
    %v4515 = vpop.f32.mrb[0].mxu0
    %4516 = vdwg.mxu0
    %v4517 = vadd.f32 %v4432, %v4471
    %v4518 = vadd.f32 %v4433, %v4473
    %v4519 = vxor.u32 %v4517, 2147483648
    %v4520 = vxor.u32 %v4518, 2147483648
    %v4521 = vmul.f32 %v4519, 1.442695
    %v4522 = vpow.pop %v4521
    %v4523 = vmul.f32 %v4520, 1.442695
    %v4524 = vpow.pop %v4523
    %v4525 = vadd.f32 %v4522, 1.0
    %v4526 = vadd.f32 %v4524, 1.0
    %v4527 = vrcp.pop %v4525
    %v4528 = vmul.f32 1.0, %v4527
    %v4529 = vrcp.pop %v4526
    %v4530 = vmul.f32 1.0, %v4529
    %v4531 = vadd.f32 %v4512, %v4069
    %v4532 = vmul.f32 %v4528, %v4531
    %v4533 = vadd.f32 %v4434, %v4532
    %v4534 = vtanh.pop %v4533
    %v4535 = vsub.f32 1.0, %v4530
    %v4536 = vmul.f32 %v4535, %v4534
    %v4537 = vmul.f32 %v4530, %v4424
    %v4538 = vadd.f32 %v4536, %v4537
    %4539 = vst [vmem:[#allocation4 + $0x10] sm:$0xff] %v4538
    %v4540 = vld [vmem:[#allocation2 + $0x48] sm:$0xff]
    %v4541 = vld [vmem:[#allocation2 + $0x50] sm:$0xff]
    %v4542 = vld [vmem:[#allocation2 + $0x58] sm:$0xff]
    %v4543 = vld [vmem:[#allocation3 + $0x60] sm:$0xff]
    %v4544 = vld [vmem:[#allocation3 + $0x68] sm:$0xff]
    %v4545 = vld [vmem:[#allocation3 + $0x70] sm:$0xff]
    %v4546 = vadd.f32 %v4540, %v4543
    %v4547 = vadd.f32 %v4541, %v4544
    %v4548 = vadd.f32 %v4542, %v4545
    %v4549 = vpack.c.bf16 %v4538, %v4538
    %4550 = vmatprep.subr.bf16.mxu0 %v4161
    %4551 = vmatpush1.bf16.msra.mxu0 %v4160
    %4552 = vmatprep.subr.bf16.mxu0 %v4164
    %4553 = vmatpush1.bf16.msra.mxu0 %v4163
    %4554 = vmatprep.subr.bf16.mxu0 %v4167
    %4555 = vmatpush1.bf16.msra.mxu0 %v4166
    %4556 = vmatprep.subr.bf16.mxu0 %v4170
    %4557 = vmatpush1.bf16.msra.mxu0 %v4169
    %4558 = vmatprep.subr.bf16.mxu0 %v4173
    %4559 = vmatpush1.bf16.msra.mxu0 %v4172
    %4560 = vmatprep.subr.bf16.mxu0 %v4176
    %4561 = vmatpush1.bf16.msra.mxu0 %v4175
    %4562 = vmatprep.subr.bf16.mxu0 %v4179
    %4563 = vmatpush1.bf16.msra.mxu0 %v4178
    %4564 = vmatprep.subr.bf16.mxu0 %v4182
    %4565 = vmatpush1.bf16.msra.mxu0 %v4181
    %4566 = vmatprep.subr.bf16.mxu0 0
    %4567 = vmatpush1.bf16.msra.mxu0 0
    %4568 = vmatprep.subr.bf16.mxu0 0
    %4569 = vmatpush1.bf16.msra.mxu0 0
    %4570 = vmatprep.subr.bf16.mxu0 0
    %4571 = vmatpush1.bf16.msra.mxu0 0
    %4572 = vmatprep.subr.bf16.mxu0 0
    %4573 = vmatpush1.bf16.msra.mxu0 0
    %4574 = vmatprep.subr.bf16.mxu0 0
    %4575 = vmatpush1.bf16.msra.mxu0 0
    %4576 = vmatprep.subr.bf16.mxu0 0
    %4577 = vmatpush1.bf16.msra.mxu0 0
    %4578 = vmatprep.subr.bf16.mxu0 0
    %4579 = vmatpush1.bf16.msra.mxu0 0
    %4580 = vmatprep.subr.bf16.mxu0 0
    %4581 = vmatpush1.bf16.msra.mxu0 0
    %4582 = vmatprep.mubr.bf16.mxu0 0
    %4583 = vmatmul.mubr.bf16.gmra.mrb[0].mxu0 %v4549
    %v4584 = vpop.f32.mrb[0].mxu0
    %v4585 = vadd.f32 0.0, %v4584
    %v4586 = vpop.f32.mrb[0].mxu0
    %v4587 = vadd.f32 0.0, %v4586
    %v4588 = vpop.f32.mrb[0].mxu0
    %v4589 = vpop.f32.mrb[0].mxu0
    %4590 = vdwg.mxu0
    %4591 = vmatprep.subr.bf16.mxu0 0
    %4592 = vmatpush1.bf16.msra.mxu0 %v4162
    %4593 = vmatprep.subr.bf16.mxu0 0
    %4594 = vmatpush1.bf16.msra.mxu0 %v4165
    %4595 = vmatprep.subr.bf16.mxu0 0
    %4596 = vmatpush1.bf16.msra.mxu0 %v4168
    %4597 = vmatprep.subr.bf16.mxu0 0
    %4598 = vmatpush1.bf16.msra.mxu0 %v4171
    %4599 = vmatprep.subr.bf16.mxu0 0
    %4600 = vmatpush1.bf16.msra.mxu0 %v4174
    %4601 = vmatprep.subr.bf16.mxu0 0
    %4602 = vmatpush1.bf16.msra.mxu0 %v4177
    %4603 = vmatprep.subr.bf16.mxu0 0
    %4604 = vmatpush1.bf16.msra.mxu0 %v4180
    %4605 = vmatprep.subr.bf16.mxu0 0
    %4606 = vmatpush1.bf16.msra.mxu0 %v4183
    %4607 = vmatprep.subr.bf16.mxu0 0
    %4608 = vmatpush1.bf16.msra.mxu0 0
    %4609 = vmatprep.subr.bf16.mxu0 0
    %4610 = vmatpush1.bf16.msra.mxu0 0
    %4611 = vmatprep.subr.bf16.mxu0 0
    %4612 = vmatpush1.bf16.msra.mxu0 0
    %4613 = vmatprep.subr.bf16.mxu0 0
    %4614 = vmatpush1.bf16.msra.mxu0 0
    %4615 = vmatprep.subr.bf16.mxu0 0
    %4616 = vmatpush1.bf16.msra.mxu0 0
    %4617 = vmatprep.subr.bf16.mxu0 0
    %4618 = vmatpush1.bf16.msra.mxu0 0
    %4619 = vmatprep.subr.bf16.mxu0 0
    %4620 = vmatpush1.bf16.msra.mxu0 0
    %4621 = vmatprep.subr.bf16.mxu0 0
    %4622 = vmatpush1.bf16.msra.mxu0 0
    %4623 = vmatprep.mubr.bf16.mxu0 0
    %4624 = vmatmul.mubr.bf16.gmra.mrb[0].mxu0 %v4549
    %v4625 = vpop.f32.mrb[0].mxu0
    %v4626 = vadd.f32 0.0, %v4625
    %v4627 = vpop.f32.mrb[0].mxu0
    %v4628 = vpop.f32.mrb[0].mxu0
    %v4629 = vpop.f32.mrb[0].mxu0
    %4630 = vdwg.mxu0
    %v4631 = vadd.f32 %v4546, %v4585
    %v4632 = vadd.f32 %v4547, %v4587
    %v4633 = vxor.u32 %v4631, 2147483648
    %v4634 = vxor.u32 %v4632, 2147483648
    %v4635 = vmul.f32 %v4633, 1.442695
    %v4636 = vpow.pop %v4635
    %v4637 = vmul.f32 %v4634, 1.442695
    %v4638 = vpow.pop %v4637
    %v4639 = vadd.f32 %v4636, 1.0
    %v4640 = vadd.f32 %v4638, 1.0
    %v4641 = vrcp.pop %v4639
    %v4642 = vmul.f32 1.0, %v4641
    %v4643 = vrcp.pop %v4640
    %v4644 = vmul.f32 1.0, %v4643
    %v4645 = vadd.f32 %v4626, %v4069
    %v4646 = vmul.f32 %v4642, %v4645
    %v4647 = vadd.f32 %v4548, %v4646
    %v4648 = vtanh.pop %v4647
    %v4649 = vsub.f32 1.0, %v4644
    %v4650 = vmul.f32 %v4649, %v4648
    %v4651 = vmul.f32 %v4644, %v4538
    %v4652 = vadd.f32 %v4650, %v4651
    %4653 = vst [vmem:[#allocation4 + $0x18] sm:$0xff] %v4652
    %v4654 = vld [vmem:[#allocation2 + $0x60] sm:$0xff]
    %v4655 = vld [vmem:[#allocation2 + $0x68] sm:$0xff]
    %v4656 = vld [vmem:[#allocation2 + $0x70] sm:$0xff]
    %v4657 = vld [vmem:[#allocation3 + $0x48] sm:$0xff]
    %v4658 = vld [vmem:[#allocation3 + $0x50] sm:$0xff]
    %v4659 = vld [vmem:[#allocation3 + $0x58] sm:$0xff]
    %v4660 = vadd.f32 %v4654, %v4657
    %v4661 = vadd.f32 %v4655, %v4658
    %v4662 = vadd.f32 %v4656, %v4659
    %v4663 = vpack.c.bf16 %v4652, %v4652
    %4664 = vmatprep.subr.bf16.mxu0 %v4161
    %4665 = vmatpush1.bf16.msra.mxu0 %v4160
    %4666 = vmatprep.subr.bf16.mxu0 %v4164
    %4667 = vmatpush1.bf16.msra.mxu0 %v4163
    %4668 = vmatprep.subr.bf16.mxu0 %v4167
    %4669 = vmatpush1.bf16.msra.mxu0 %v4166
    %4670 = vmatprep.subr.bf16.mxu0 %v4170
    %4671 = vmatpush1.bf16.msra.mxu0 %v4169
    %4672 = vmatprep.subr.bf16.mxu0 %v4173
    %4673 = vmatpush1.bf16.msra.mxu0 %v4172
    %4674 = vmatprep.subr.bf16.mxu0 %v4176
    %4675 = vmatpush1.bf16.msra.mxu0 %v4175
    %4676 = vmatprep.subr.bf16.mxu0 %v4179
    %4677 = vmatpush1.bf16.msra.mxu0 %v4178
    %4678 = vmatprep.subr.bf16.mxu0 %v4182
    %4679 = vmatpush1.bf16.msra.mxu0 %v4181
    %4680 = vmatprep.subr.bf16.mxu0 0
    %4681 = vmatpush1.bf16.msra.mxu0 0
    %4682 = vmatprep.subr.bf16.mxu0 0
    %4683 = vmatpush1.bf16.msra.mxu0 0
    %4684 = vmatprep.subr.bf16.mxu0 0
    %4685 = vmatpush1.bf16.msra.mxu0 0
    %4686 = vmatprep.subr.bf16.mxu0 0
    %4687 = vmatpush1.bf16.msra.mxu0 0
    %4688 = vmatprep.subr.bf16.mxu0 0
    %4689 = vmatpush1.bf16.msra.mxu0 0
    %4690 = vmatprep.subr.bf16.mxu0 0
    %4691 = vmatpush1.bf16.msra.mxu0 0
    %4692 = vmatprep.subr.bf16.mxu0 0
    %4693 = vmatpush1.bf16.msra.mxu0 0
    %4694 = vmatprep.subr.bf16.mxu0 0
    %4695 = vmatpush1.bf16.msra.mxu0 0
    %4696 = vmatprep.mubr.bf16.mxu0 0
    %4697 = vmatmul.mubr.bf16.gmra.mrb[0].mxu0 %v4663
    %v4698 = vpop.f32.mrb[0].mxu0
    %v4699 = vadd.f32 0.0, %v4698
    %v4700 = vpop.f32.mrb[0].mxu0
    %v4701 = vadd.f32 0.0, %v4700
    %v4702 = vpop.f32.mrb[0].mxu0
    %v4703 = vpop.f32.mrb[0].mxu0
    %4704 = vdwg.mxu0
    %4705 = vmatprep.subr.bf16.mxu0 0
    %4706 = vmatpush1.bf16.msra.mxu0 %v4162
    %4707 = vmatprep.subr.bf16.mxu0 0
    %4708 = vmatpush1.bf16.msra.mxu0 %v4165
    %4709 = vmatprep.subr.bf16.mxu0 0
    %4710 = vmatpush1.bf16.msra.mxu0 %v4168
    %4711 = vmatprep.subr.bf16.mxu0 0
    %4712 = vmatpush1.bf16.msra.mxu0 %v4171
    %4713 = vmatprep.subr.bf16.mxu0 0
    %4714 = vmatpush1.bf16.msra.mxu0 %v4174
    %4715 = vmatprep.subr.bf16.mxu0 0
    %4716 = vmatpush1.bf16.msra.mxu0 %v4177
    %4717 = vmatprep.subr.bf16.mxu0 0
    %4718 = vmatpush1.bf16.msra.mxu0 %v4180
    %4719 = vmatprep.subr.bf16.mxu0 0
    %4720 = vmatpush1.bf16.msra.mxu0 %v4183
    %4721 = vmatprep.subr.bf16.mxu0 0
    %4722 = vmatpush1.bf16.msra.mxu0 0
    %4723 = vmatprep.subr.bf16.mxu0 0
    %4724 = vmatpush1.bf16.msra.mxu0 0
    %4725 = vmatprep.subr.bf16.mxu0 0
    %4726 = vmatpush1.bf16.msra.mxu0 0
    %4727 = vmatprep.subr.bf16.mxu0 0
    %4728 = vmatpush1.bf16.msra.mxu0 0
    %4729 = vmatprep.subr.bf16.mxu0 0
    %4730 = vmatpush1.bf16.msra.mxu0 0
    %4731 = vmatprep.subr.bf16.mxu0 0
    %4732 = vmatpush1.bf16.msra.mxu0 0
    %4733 = vmatprep.subr.bf16.mxu0 0
    %4734 = vmatpush1.bf16.msra.mxu0 0
    %4735 = vmatprep.subr.bf16.mxu0 0
    %4736 = vmatpush1.bf16.msra.mxu0 0
    %4737 = vmatprep.mubr.bf16.mxu0 0
    %4738 = vmatmul.mubr.bf16.gmra.mrb[0].mxu0 %v4663
    %v4739 = vpop.f32.mrb[0].mxu0
    %v4740 = vadd.f32 0.0, %v4739
    %v4741 = vpop.f32.mrb[0].mxu0
    %v4742 = vpop.f32.mrb[0].mxu0
    %v4743 = vpop.f32.mrb[0].mxu0
    %4744 = vdwg.mxu0
    %v4745 = vadd.f32 %v4660, %v4699
    %v4746 = vadd.f32 %v4661, %v4701
    %v4747 = vxor.u32 %v4745, 2147483648
    %v4748 = vxor.u32 %v4746, 2147483648
    %v4749 = vmul.f32 %v4747, 1.442695
    %v4750 = vpow.pop %v4749
    %v4751 = vmul.f32 %v4748, 1.442695
    %v4752 = vpow.pop %v4751
    %v4753 = vadd.f32 %v4750, 1.0
    %v4754 = vadd.f32 %v4752, 1.0
    %v4755 = vrcp.pop %v4753
    %v4756 = vmul.f32 1.0, %v4755
    %v4757 = vrcp.pop %v4754
    %v4758 = vmul.f32 1.0, %v4757
    %v4759 = vadd.f32 %v4740, %v4069
    %v4760 = vmul.f32 %v4756, %v4759
    %v4761 = vadd.f32 %v4662, %v4760
    %v4762 = vtanh.pop %v4761
    %v4763 = vsub.f32 1.0, %v4758
    %v4764 = vmul.f32 %v4763, %v4762
    %v4765 = vmul.f32 %v4758, %v4652
    %v4766 = vadd.f32 %v4764, %v4765
    %4767 = vst [vmem:[#allocation4 + $0x20] sm:$0xff] %v4766
    %v4768 = vld [vmem:[#allocation2 + $0x78] sm:$0xff]
    %v4769 = vld [vmem:[#allocation2 + $0x80] sm:$0xff]
    %v4770 = vld [vmem:[#allocation2 + $0x88] sm:$0xff]
    %v4771 = vld [vmem:[#allocation3 + $0x30] sm:$0xff]
    %v4772 = vld [vmem:[#allocation3 + $0x38] sm:$0xff]
    %v4773 = vld [vmem:[#allocation3 + $0x40] sm:$0xff]
    %v4774 = vadd.f32 %v4768, %v4771
    %v4775 = vadd.f32 %v4769, %v4772
    %v4776 = vadd.f32 %v4770, %v4773
    %v4777 = vpack.c.bf16 %v4766, %v4766
    %4778 = vmatprep.subr.bf16.mxu0 %v4161
    %4779 = vmatpush1.bf16.msra.mxu0 %v4160
    %4780 = vmatprep.subr.bf16.mxu0 %v4164
    %4781 = vmatpush1.bf16.msra.mxu0 %v4163
    %4782 = vmatprep.subr.bf16.mxu0 %v4167
    %4783 = vmatpush1.bf16.msra.mxu0 %v4166
    %4784 = vmatprep.subr.bf16.mxu0 %v4170
    %4785 = vmatpush1.bf16.msra.mxu0 %v4169
    %4786 = vmatprep.subr.bf16.mxu0 %v4173
    %4787 = vmatpush1.bf16.msra.mxu0 %v4172
    %4788 = vmatprep.subr.bf16.mxu0 %v4176
    %4789 = vmatpush1.bf16.msra.mxu0 %v4175
    %4790 = vmatprep.subr.bf16.mxu0 %v4179
    %4791 = vmatpush1.bf16.msra.mxu0 %v4178
    %4792 = vmatprep.subr.bf16.mxu0 %v4182
    %4793 = vmatpush1.bf16.msra.mxu0 %v4181
    %4794 = vmatprep.subr.bf16.mxu0 0
    %4795 = vmatpush1.bf16.msra.mxu0 0
    %4796 = vmatprep.subr.bf16.mxu0 0
    %4797 = vmatpush1.bf16.msra.mxu0 0
    %4798 = vmatprep.subr.bf16.mxu0 0
    %4799 = vmatpush1.bf16.msra.mxu0 0
    %4800 = vmatprep.subr.bf16.mxu0 0
    %4801 = vmatpush1.bf16.msra.mxu0 0
    %4802 = vmatprep.subr.bf16.mxu0 0
    %4803 = vmatpush1.bf16.msra.mxu0 0
    %4804 = vmatprep.subr.bf16.mxu0 0
    %4805 = vmatpush1.bf16.msra.mxu0 0
    %4806 = vmatprep.subr.bf16.mxu0 0
    %4807 = vmatpush1.bf16.msra.mxu0 0
    %4808 = vmatprep.subr.bf16.mxu0 0
    %4809 = vmatpush1.bf16.msra.mxu0 0
    %4810 = vmatprep.mubr.bf16.mxu0 0
    %4811 = vmatmul.mubr.bf16.gmra.mrb[0].mxu0 %v4777
    %v4812 = vpop.f32.mrb[0].mxu0
    %v4813 = vadd.f32 0.0, %v4812
    %v4814 = vpop.f32.mrb[0].mxu0
    %v4815 = vadd.f32 0.0, %v4814
    %v4816 = vpop.f32.mrb[0].mxu0
    %v4817 = vpop.f32.mrb[0].mxu0
    %4818 = vdwg.mxu0
    %4819 = vmatprep.subr.bf16.mxu0 0
    %4820 = vmatpush1.bf16.msra.mxu0 %v4162
    %4821 = vmatprep.subr.bf16.mxu0 0
    %4822 = vmatpush1.bf16.msra.mxu0 %v4165
    %4823 = vmatprep.subr.bf16.mxu0 0
    %4824 = vmatpush1.bf16.msra.mxu0 %v4168
    %4825 = vmatprep.subr.bf16.mxu0 0
    %4826 = vmatpush1.bf16.msra.mxu0 %v4171
    %4827 = vmatprep.subr.bf16.mxu0 0
    %4828 = vmatpush1.bf16.msra.mxu0 %v4174
    %4829 = vmatprep.subr.bf16.mxu0 0
    %4830 = vmatpush1.bf16.msra.mxu0 %v4177
    %4831 = vmatprep.subr.bf16.mxu0 0
    %4832 = vmatpush1.bf16.msra.mxu0 %v4180
    %4833 = vmatprep.subr.bf16.mxu0 0
    %4834 = vmatpush1.bf16.msra.mxu0 %v4183
    %4835 = vmatprep.subr.bf16.mxu0 0
    %4836 = vmatpush1.bf16.msra.mxu0 0
    %4837 = vmatprep.subr.bf16.mxu0 0
    %4838 = vmatpush1.bf16.msra.mxu0 0
    %4839 = vmatprep.subr.bf16.mxu0 0
    %4840 = vmatpush1.bf16.msra.mxu0 0
    %4841 = vmatprep.subr.bf16.mxu0 0
    %4842 = vmatpush1.bf16.msra.mxu0 0
    %4843 = vmatprep.subr.bf16.mxu0 0
    %4844 = vmatpush1.bf16.msra.mxu0 0
    %4845 = vmatprep.subr.bf16.mxu0 0
    %4846 = vmatpush1.bf16.msra.mxu0 0
    %4847 = vmatprep.subr.bf16.mxu0 0
    %4848 = vmatpush1.bf16.msra.mxu0 0
    %4849 = vmatprep.subr.bf16.mxu0 0
    %4850 = vmatpush1.bf16.msra.mxu0 0
    %4851 = vmatprep.mubr.bf16.mxu0 0
    %4852 = vmatmul.mubr.bf16.gmra.mrb[0].mxu0 %v4777
    %v4853 = vpop.f32.mrb[0].mxu0
    %v4854 = vadd.f32 0.0, %v4853
    %v4855 = vpop.f32.mrb[0].mxu0
    %v4856 = vpop.f32.mrb[0].mxu0
    %v4857 = vpop.f32.mrb[0].mxu0
    %4858 = vdwg.mxu0
    %v4859 = vadd.f32 %v4774, %v4813
    %v4860 = vadd.f32 %v4775, %v4815
    %v4861 = vxor.u32 %v4859, 2147483648
    %v4862 = vxor.u32 %v4860, 2147483648
    %v4863 = vmul.f32 %v4861, 1.442695
    %v4864 = vpow.pop %v4863
    %v4865 = vmul.f32 %v4862, 1.442695
    %v4866 = vpow.pop %v4865
    %v4867 = vadd.f32 %v4864, 1.0
    %v4868 = vadd.f32 %v4866, 1.0
    %v4869 = vrcp.pop %v4867
    %v4870 = vmul.f32 1.0, %v4869
    %v4871 = vrcp.pop %v4868
    %v4872 = vmul.f32 1.0, %v4871
    %v4873 = vadd.f32 %v4854, %v4069
    %v4874 = vmul.f32 %v4870, %v4873
    %v4875 = vadd.f32 %v4776, %v4874
    %v4876 = vtanh.pop %v4875
    %v4877 = vsub.f32 1.0, %v4872
    %v4878 = vmul.f32 %v4877, %v4876
    %v4879 = vmul.f32 %v4872, %v4766
    %v4880 = vadd.f32 %v4878, %v4879
    %4881 = vst [vmem:[#allocation4 + $0x28] sm:$0xff] %v4880
    %v4882 = vld [vmem:[#allocation2 + $0x90] sm:$0xff]
    %v4883 = vld [vmem:[#allocation2 + $0x98] sm:$0xff]
    %v4884 = vld [vmem:[#allocation2 + $0xa0] sm:$0xff]
    %v4885 = vld [vmem:[#allocation3 + $0x18] sm:$0xff]
    %v4886 = vld [vmem:[#allocation3 + $0x20] sm:$0xff]
    %v4887 = vld [vmem:[#allocation3 + $0x28] sm:$0xff]
    %v4888 = vadd.f32 %v4882, %v4885
    %v4889 = vadd.f32 %v4883, %v4886
    %v4890 = vadd.f32 %v4884, %v4887
    %v4891 = vpack.c.bf16 %v4880, %v4880
    %4892 = vmatprep.subr.bf16.mxu0 %v4161
    %4893 = vmatpush1.bf16.msra.mxu0 %v4160
    %4894 = vmatprep.subr.bf16.mxu0 %v4164
    %4895 = vmatpush1.bf16.msra.mxu0 %v4163
    %4896 = vmatprep.subr.bf16.mxu0 %v4167
    %4897 = vmatpush1.bf16.msra.mxu0 %v4166
    %4898 = vmatprep.subr.bf16.mxu0 %v4170
    %4899 = vmatpush1.bf16.msra.mxu0 %v4169
    %4900 = vmatprep.subr.bf16.mxu0 %v4173
    %4901 = vmatpush1.bf16.msra.mxu0 %v4172
    %4902 = vmatprep.subr.bf16.mxu0 %v4176
    %4903 = vmatpush1.bf16.msra.mxu0 %v4175
    %4904 = vmatprep.subr.bf16.mxu0 %v4179
    %4905 = vmatpush1.bf16.msra.mxu0 %v4178
    %4906 = vmatprep.subr.bf16.mxu0 %v4182
    %4907 = vmatpush1.bf16.msra.mxu0 %v4181
    %4908 = vmatprep.subr.bf16.mxu0 0
    %4909 = vmatpush1.bf16.msra.mxu0 0
    %4910 = vmatprep.subr.bf16.mxu0 0
    %4911 = vmatpush1.bf16.msra.mxu0 0
    %4912 = vmatprep.subr.bf16.mxu0 0
    %4913 = vmatpush1.bf16.msra.mxu0 0
    %4914 = vmatprep.subr.bf16.mxu0 0
    %4915 = vmatpush1.bf16.msra.mxu0 0
    %4916 = vmatprep.subr.bf16.mxu0 0
    %4917 = vmatpush1.bf16.msra.mxu0 0
    %4918 = vmatprep.subr.bf16.mxu0 0
    %4919 = vmatpush1.bf16.msra.mxu0 0
    %4920 = vmatprep.subr.bf16.mxu0 0
    %4921 = vmatpush1.bf16.msra.mxu0 0
    %4922 = vmatprep.subr.bf16.mxu0 0
    %4923 = vmatpush1.bf16.msra.mxu0 0
    %4924 = vmatprep.mubr.bf16.mxu0 0
    %4925 = vmatmul.mubr.bf16.gmra.mrb[0].mxu0 %v4891
    %v4926 = vpop.f32.mrb[0].mxu0
    %v4927 = vadd.f32 0.0, %v4926
    %v4928 = vpop.f32.mrb[0].mxu0
    %v4929 = vadd.f32 0.0, %v4928
    %v4930 = vpop.f32.mrb[0].mxu0
    %v4931 = vpop.f32.mrb[0].mxu0
    %4932 = vdwg.mxu0
    %4933 = vmatprep.subr.bf16.mxu0 0
    %4934 = vmatpush1.bf16.msra.mxu0 %v4162
    %4935 = vmatprep.subr.bf16.mxu0 0
    %4936 = vmatpush1.bf16.msra.mxu0 %v4165
    %4937 = vmatprep.subr.bf16.mxu0 0
    %4938 = vmatpush1.bf16.msra.mxu0 %v4168
    %4939 = vmatprep.subr.bf16.mxu0 0
    %4940 = vmatpush1.bf16.msra.mxu0 %v4171
    %4941 = vmatprep.subr.bf16.mxu0 0
    %4942 = vmatpush1.bf16.msra.mxu0 %v4174
    %4943 = vmatprep.subr.bf16.mxu0 0
    %4944 = vmatpush1.bf16.msra.mxu0 %v4177
    %4945 = vmatprep.subr.bf16.mxu0 0
    %4946 = vmatpush1.bf16.msra.mxu0 %v4180
    %4947 = vmatprep.subr.bf16.mxu0 0
    %4948 = vmatpush1.bf16.msra.mxu0 %v4183
    %4949 = vmatprep.subr.bf16.mxu0 0
    %4950 = vmatpush1.bf16.msra.mxu0 0
    %4951 = vmatprep.subr.bf16.mxu0 0
    %4952 = vmatpush1.bf16.msra.mxu0 0
    %4953 = vmatprep.subr.bf16.mxu0 0
    %4954 = vmatpush1.bf16.msra.mxu0 0
    %4955 = vmatprep.subr.bf16.mxu0 0
    %4956 = vmatpush1.bf16.msra.mxu0 0
    %4957 = vmatprep.subr.bf16.mxu0 0
    %4958 = vmatpush1.bf16.msra.mxu0 0
    %4959 = vmatprep.subr.bf16.mxu0 0
    %4960 = vmatpush1.bf16.msra.mxu0 0
    %4961 = vmatprep.subr.bf16.mxu0 0
    %4962 = vmatpush1.bf16.msra.mxu0 0
    %4963 = vmatprep.subr.bf16.mxu0 0
    %4964 = vmatpush1.bf16.msra.mxu0 0
    %4965 = vmatprep.mubr.bf16.mxu0 0
    %4966 = vmatmul.mubr.bf16.gmra.mrb[0].mxu0 %v4891
    %v4967 = vpop.f32.mrb[0].mxu0
    %v4968 = vadd.f32 0.0, %v4967
    %v4969 = vpop.f32.mrb[0].mxu0
    %v4970 = vpop.f32.mrb[0].mxu0
    %v4971 = vpop.f32.mrb[0].mxu0
    %4972 = vdwg.mxu0
    %v4973 = vadd.f32 %v4888, %v4927
    %v4974 = vadd.f32 %v4889, %v4929
    %v4975 = vxor.u32 %v4973, 2147483648
    %v4976 = vxor.u32 %v4974, 2147483648
    %v4977 = vmul.f32 %v4975, 1.442695
    %v4978 = vpow.pop %v4977
    %v4979 = vmul.f32 %v4976, 1.442695
    %v4980 = vpow.pop %v4979
    %v4981 = vadd.f32 %v4978, 1.0
    %v4982 = vadd.f32 %v4980, 1.0
    %v4983 = vrcp.pop %v4981
    %v4984 = vmul.f32 1.0, %v4983
    %v4985 = vrcp.pop %v4982
    %v4986 = vmul.f32 1.0, %v4985
    %v4987 = vadd.f32 %v4968, %v4069
    %v4988 = vmul.f32 %v4984, %v4987
    %v4989 = vadd.f32 %v4890, %v4988
    %v4990 = vtanh.pop %v4989
    %v4991 = vsub.f32 1.0, %v4986
    %v4992 = vmul.f32 %v4991, %v4990
    %v4993 = vmul.f32 %v4986, %v4880
    %v4994 = vadd.f32 %v4992, %v4993
    %4995 = vst [vmem:[#allocation4 + $0x30] sm:$0xff] %v4994
    %v4996 = vld [vmem:[#allocation2 + $0xa8] sm:$0xff]
    %v4997 = vld [vmem:[#allocation2 + $0xb0] sm:$0xff]
    %v4998 = vld [vmem:[#allocation2 + $0xb8] sm:$0xff]
    %v4999 = vld [vmem:[#allocation3] sm:$0xff]
    %v5000 = vld [vmem:[#allocation3 + $0x8] sm:$0xff]
    %v5001 = vld [vmem:[#allocation3 + $0x10] sm:$0xff]
    %v5002 = vadd.f32 %v4996, %v4999
    %v5003 = vadd.f32 %v4997, %v5000
    %v5004 = vadd.f32 %v4998, %v5001
    %v5005 = vpack.c.bf16 %v4994, %v4994
    %5006 = vmatprep.subr.bf16.mxu0 %v4161
    %5007 = vmatpush1.bf16.msra.mxu0 %v4160
    %5008 = vmatprep.subr.bf16.mxu0 %v4164
    %5009 = vmatpush1.bf16.msra.mxu0 %v4163
    %5010 = vmatprep.subr.bf16.mxu0 %v4167
    %5011 = vmatpush1.bf16.msra.mxu0 %v4166
    %5012 = vmatprep.subr.bf16.mxu0 %v4170
    %5013 = vmatpush1.bf16.msra.mxu0 %v4169
    %5014 = vmatprep.subr.bf16.mxu0 %v4173
    %5015 = vmatpush1.bf16.msra.mxu0 %v4172
    %5016 = vmatprep.subr.bf16.mxu0 %v4176
    %5017 = vmatpush1.bf16.msra.mxu0 %v4175
    %5018 = vmatprep.subr.bf16.mxu0 %v4179
    %5019 = vmatpush1.bf16.msra.mxu0 %v4178
    %5020 = vmatprep.subr.bf16.mxu0 %v4182
    %5021 = vmatpush1.bf16.msra.mxu0 %v4181
    %5022 = vmatprep.subr.bf16.mxu0 0
    %5023 = vmatpush1.bf16.msra.mxu0 0
    %5024 = vmatprep.subr.bf16.mxu0 0
    %5025 = vmatpush1.bf16.msra.mxu0 0
    %5026 = vmatprep.subr.bf16.mxu0 0
    %5027 = vmatpush1.bf16.msra.mxu0 0
    %5028 = vmatprep.subr.bf16.mxu0 0
    %5029 = vmatpush1.bf16.msra.mxu0 0
    %5030 = vmatprep.subr.bf16.mxu0 0
    %5031 = vmatpush1.bf16.msra.mxu0 0
    %5032 = vmatprep.subr.bf16.mxu0 0
    %5033 = vmatpush1.bf16.msra.mxu0 0
    %5034 = vmatprep.subr.bf16.mxu0 0
    %5035 = vmatpush1.bf16.msra.mxu0 0
    %5036 = vmatprep.subr.bf16.mxu0 0
    %5037 = vmatpush1.bf16.msra.mxu0 0
    %5038 = vmatprep.mubr.bf16.mxu0 0
    %5039 = vmatmul.mubr.bf16.gmra.mrb[0].mxu0 %v5005
    %v5040 = vpop.f32.mrb[0].mxu0
    %v5041 = vadd.f32 0.0, %v5040
    %v5042 = vpop.f32.mrb[0].mxu0
    %v5043 = vadd.f32 0.0, %v5042
    %v5044 = vpop.f32.mrb[0].mxu0
    %v5045 = vpop.f32.mrb[0].mxu0
    %5046 = vdwg.mxu0
    %5047 = vmatprep.subr.bf16.mxu0 0
    %5048 = vmatpush1.bf16.msra.mxu0 %v4162
    %5049 = vmatprep.subr.bf16.mxu0 0
    %5050 = vmatpush1.bf16.msra.mxu0 %v4165
    %5051 = vmatprep.subr.bf16.mxu0 0
    %5052 = vmatpush1.bf16.msra.mxu0 %v4168
    %5053 = vmatprep.subr.bf16.mxu0 0
    %5054 = vmatpush1.bf16.msra.mxu0 %v4171
    %5055 = vmatprep.subr.bf16.mxu0 0
    %5056 = vmatpush1.bf16.msra.mxu0 %v4174
    %5057 = vmatprep.subr.bf16.mxu0 0
    %5058 = vmatpush1.bf16.msra.mxu0 %v4177
    %5059 = vmatprep.subr.bf16.mxu0 0
    %5060 = vmatpush1.bf16.msra.mxu0 %v4180
    %5061 = vmatprep.subr.bf16.mxu0 0
    %5062 = vmatpush1.bf16.msra.mxu0 %v4183
    %5063 = vmatprep.subr.bf16.mxu0 0
    %5064 = vmatpush1.bf16.msra.mxu0 0
    %5065 = vmatprep.subr.bf16.mxu0 0
    %5066 = vmatpush1.bf16.msra.mxu0 0
    %5067 = vmatprep.subr.bf16.mxu0 0
    %5068 = vmatpush1.bf16.msra.mxu0 0
    %5069 = vmatprep.subr.bf16.mxu0 0
    %5070 = vmatpush1.bf16.msra.mxu0 0
    %5071 = vmatprep.subr.bf16.mxu0 0
    %5072 = vmatpush1.bf16.msra.mxu0 0
    %5073 = vmatprep.subr.bf16.mxu0 0
    %5074 = vmatpush1.bf16.msra.mxu0 0
    %5075 = vmatprep.subr.bf16.mxu0 0
    %5076 = vmatpush1.bf16.msra.mxu0 0
    %5077 = vmatprep.subr.bf16.mxu0 0
    %5078 = vmatpush1.bf16.msra.mxu0 0
    %5079 = vmatprep.mubr.bf16.mxu0 0
    %5080 = vmatmul.mubr.bf16.gmra.mrb[0].mxu0 %v5005
    %v5081 = vpop.f32.mrb[0].mxu0
    %v5082 = vadd.f32 0.0, %v5081
    %v5083 = vpop.f32.mrb[0].mxu0
    %v5084 = vpop.f32.mrb[0].mxu0
    %v5085 = vpop.f32.mrb[0].mxu0
    %5086 = vdwg.mxu0
    %v5087 = vadd.f32 %v5002, %v5041
    %v5088 = vadd.f32 %v5003, %v5043
    %v5089 = vxor.u32 %v5087, 2147483648
    %v5090 = vxor.u32 %v5088, 2147483648
    %v5091 = vmul.f32 %v5089, 1.442695
    %v5092 = vpow.pop %v5091
    %v5093 = vmul.f32 %v5090, 1.442695
    %v5094 = vpow.pop %v5093
    %v5095 = vadd.f32 %v5092, 1.0
    %v5096 = vadd.f32 %v5094, 1.0
    %v5097 = vrcp.pop %v5095
    %v5098 = vmul.f32 1.0, %v5097
    %v5099 = vrcp.pop %v5096
    %v5100 = vmul.f32 1.0, %v5099
    %v5101 = vadd.f32 %v5082, %v4069
    %v5102 = vmul.f32 %v5098, %v5101
    %v5103 = vadd.f32 %v5004, %v5102
    %v5104 = vtanh.pop %v5103
    %v5105 = vsub.f32 1.0, %v5100
    %v5106 = vmul.f32 %v5105, %v5104
    %v5107 = vmul.f32 %v5100, %v4994
    %v5108 = vadd.f32 %v5106, %v5107
    %5109 = vst [vmem:[#allocation4 + $0x38] sm:$0xff] %v5108
    %v5110 = vld [vmem:[#allocation4] sm:$0xff]
    %v5111 = vld [vmem:[#allocation4 + $0x8] sm:$0xff]
    %v5112 = vld [vmem:[#allocation4 + $0x10] sm:$0xff]
    %v5113 = vld [vmem:[#allocation4 + $0x18] sm:$0xff]
    %v5114 = vld [vmem:[#allocation4 + $0x20] sm:$0xff]
    %v5115 = vld [vmem:[#allocation4 + $0x28] sm:$0xff]
    %v5116 = vld [vmem:[#allocation4 + $0x30] sm:$0xff]
    %v5117 = vld [vmem:[#allocation4 + $0x38] sm:$0xff]
    %v5118 = vadd.f32 %v5110, %v5111
    %v5119 = vadd.f32 %v5118, %v5112
    %v5120 = vadd.f32 %v5119, %v5113
    %v5121 = vadd.f32 %v5120, %v5114
    %v5122 = vadd.f32 %v5121, %v5115
    %v5123 = vadd.f32 %v5122, %v5116
    %v5124 = vadd.f32 %v5123, %v5117
    %v5125 = vmul.f32 %v5124, 0.125
    %v5126 = vld [vmem:[%s15] sm:$0x1]
    %v5128 = vlaneseq
    %v5129 = vshrl.u32 %v5128, 7
    %v5130 = vsub.s32 0, %v5129
    %v5131 = vrot.slane %v5126, %v5130
    %v5133 = vmul.f32 %v5125, %v5131
    %5134 = vadd.xlane.f32.xlu0 %v5133
    %v5135 = vpop.xlane.xlu0 %5134
    %v5136 = vld [vmem:[#allocation5] sm:$0x1]
    %v5138 = vlaneseq
    %v5139 = vshrl.u32 %v5138, 7
    %v5140 = vsub.s32 0, %v5139
    %v5141 = vrot.slane %v5136, %v5140
    %v5143 = vadd.f32 %v5135, %v5141
    %vm5144 = vcmask 1024
    %5145 = vst.msk [vmem:[%s17] sm:$0x3] %vm5144, %v5143
    // Predicated region
    $region110: #{rnn_forward.1} parent=1 // pred_check
      _
    $region111: #{rnn_forward.1} parent=1 // pred_check_branch
      %5147 = sbr.rel (0) target = $region113
    $region112: #{rnn_forward.1} parent=1 // pred_region
      _
    $region113: #{rnn_forward.1} parent=1 // pred_fallthru
      _
    // Predicated region
    $region114: #{rnn_forward.1} parent=1 // pred_check
      _
    $region115: #{rnn_forward.1} parent=1 // pred_check_branch
      %5149 = sbr.rel (0) target = $region117
    $region116: #{rnn_forward.1} parent=1 // pred_region
      _
    $region117: #{rnn_forward.1} parent=1 // pred_fallthru
      _
    %5150 = vsyncpa [#allocation7], 1
    %5151 = vsyncpa [#allocation11], 1
    %5152 = vsyncpa [#allocation14], 1
    %5153 = vsyncpa [#allocation17], 1
    %5154 = vsyncpa [#allocation20], 1
    %5155 = vsyncpa [#allocation8], 1

</llo_original>
